<compile_context>
chip_gen: v7x
topology: tpu7x:2x2x1
jax: 0.10.0
libtpu: 0.0.40
codegen_flags: <defaults>
</compile_context>

<pallas_src>
import functools

import jax
import jax.numpy as jnp
from jax import lax
from jax.experimental import pallas as pl
from jax.experimental.pallas import tpu as pltpu


def _axis_terms(idx, size):
    """Per-axis loaded-row start + weights for rows [start, start+1].

    Reproduces grid_sample(align_corners=True, padding_mode='zeros') exactly:
    out-of-range corners get zero weight, and weights are remapped onto the
    clamped rows that the kernel actually loads.
    """
    i0f = jnp.floor(idx)
    i0 = i0f.astype(jnp.int32)
    frac = idx - i0f
    v0 = (i0 >= 0) & (i0 <= size - 1)
    v1 = (i0 + 1 >= 0) & (i0 + 1 <= size - 1)
    w0 = jnp.where(v0, 1.0 - frac, 0.0)
    w1 = jnp.where(v1, frac, 0.0)
    start = jnp.clip(i0, 0, size - 2)
    lw0 = jnp.where(i0 == start, w0, 0.0) + jnp.where(i0 + 1 == start, w1, 0.0)
    lw1 = (jnp.where(i0 == start + 1, w0, 0.0)
           + jnp.where(i0 + 1 == start + 1, w1, 0.0))
    return start, lw0, lw1


def _grid_sample_kernel(wi_ref, wf_ref, grid_ref, sel_ref, out_ref, *,
                        h_size, c, dh, wc):
    # wi_ref  : (tile_n, 2) int32  VMEM  [row0 (base row into D*H), w_start]
    # wf_ref  : (tile_n, 6) f32    VMEM  [cw00, cw01, cw10, cw11, ww0, ww1]
    # grid_ref: (D*H, W*C)  f32    VMEM  voxel grid (resident across steps)
    # sel_ref : (W*C, C)    f32    VMEM  constant channel-selection matrix
    # out_ref : (tile_n, C) f32    VMEM  one batched output block per step
    tile_n = out_ref.shape[0]
    row0 = wi_ref[:, 0:1]
    wstart = wi_ref[:, 1:2]
    cw00 = wf_ref[:, 0:1]
    cw01 = wf_ref[:, 1:2]
    cw10 = wf_ref[:, 2:3]
    cw11 = wf_ref[:, 3:4]
    ww0 = wf_ref[:, 4:5]
    ww1 = wf_ref[:, 5:6]

    # 4-hot (d,h)-corner weight matrix; the one-hot matmul is the TPU gather.
    iota_dh = lax.broadcasted_iota(jnp.int32, (tile_n, dh), 1)
    w_dh = (jnp.where(iota_dh == row0, cw00, 0.0)
            + jnp.where(iota_dh == row0 + 1, cw01, 0.0)
            + jnp.where(iota_dh == row0 + h_size, cw10, 0.0)
            + jnp.where(iota_dh == row0 + h_size + 1, cw11, 0.0))
    # (tile_n, D*H) @ (D*H, W*C) -> (tile_n, W*C), full-f32 MXU passes.
    p = jnp.dot(w_dh, grid_ref[...],
                preferred_element_type=jnp.float32,
                precision=jax.lax.Precision.HIGHEST)

    # 2-hot W-axis weights expanded over the fused (W*C) lane axis
    # (range compares against [wstart*C, wstart*C + 2C) — no int div needed).
    iota_wc = lax.broadcasted_iota(jnp.int32, (tile_n, wc), 1)
    lo = wstart * c
    w_sel = (jnp.where((iota_wc >= lo) & (iota_wc < lo + c), ww0, 0.0)
             + jnp.where((iota_wc >= lo + c) & (iota_wc < lo + 2 * c), ww1, 0.0))
    weighted = p * w_sel

    # Contract the W axis (stride-C lanes) with a constant selection matrix:
    # out[n, j] = sum_w weighted[n, w*C + j].
    out_ref[...] = jnp.dot(weighted, sel_ref[...],
                           preferred_element_type=jnp.float32,
                           precision=jax.lax.Precision.HIGHEST)


def dense_grid_forward(grid, xyz, xyz_min, xyz_max, *, tile_n=256):
    """Pallas implementation of DenseGrid.forward.

    grid: (1, C, D, H, W) float32 voxel grid (the nn.Parameter).
    xyz : (..., 3) query coordinates.
    Returns (*xyz.shape[:-1], C)  (channel dim squeezed if C == 1).
    """
    _, C, D, H, W = grid.shape
    assert min(D, H, W) >= 2, "world_size must be >= 2 along every axis"
    shape = xyz.shape[:-1]
    pts = xyz.reshape(-1, 3).astype(jnp.float32)
    N = pts.shape[0]

    xyz_min = jnp.asarray(xyz_min, jnp.float32)
    xyz_max = jnp.asarray(xyz_max, jnp.float32)
    # flip(-1)*2-1 + grid_sample(align_corners=True) collapses to:
    # axis k of world_size is indexed by t[..., k] * (world_size[k] - 1).
    t = (pts - xyz_min) / (xyz_max - xyz_min)
    sizes = jnp.asarray([D, H, W], jnp.float32)
    idx = t * (sizes - 1.0)                      # continuous voxel coordinates

    d_start, lwd0, lwd1 = _axis_terms(idx[:, 0], D)
    h_start, lwh0, lwh1 = _axis_terms(idx[:, 1], H)
    w_start, lww0, lww1 = _axis_terms(idx[:, 2], W)

    row0 = d_start * H + h_start                 # base row in (D*H, W*C)
    wi = jnp.stack([row0, w_start], axis=-1).astype(jnp.int32)       # (N, 2)
    wf = jnp.stack([lwd0 * lwh0, lwd0 * lwh1, lwd1 * lwh0, lwd1 * lwh1,
                    lww0, lww1], axis=-1).astype(jnp.float32)        # (N, 6)

    # Pad point count to a multiple of tile_n (padded points have zero weight).
    n_pad = (-N) % tile_n
    if n_pad:
        wi = jnp.pad(wi, ((0, n_pad), (0, 0)))
        wf = jnp.pad(wf, ((0, n_pad), (0, 0)))
    n_total = N + n_pad
    num_chunks = n_total // tile_n

    # (D*H, W*C): fused W*C on lanes, fused D*H contracted on the MXU.
    grid_flat = jnp.transpose(grid[0], (1, 2, 3, 0)).reshape(D * H, W * C)
    grid_flat = grid_flat.astype(jnp.float32)
    # Constant channel-selection matrix: sel[w*C + i, j] = (i == j).
    sel = jnp.tile(jnp.eye(C, dtype=jnp.float32), (W, 1))            # (W*C, C)

    kernel = functools.partial(_grid_sample_kernel, h_size=H, c=C,
                               dh=D * H, wc=W * C)

    out = pl.pallas_call(
        kernel,
        out_shape=jax.ShapeDtypeStruct((n_total, C), jnp.float32),
        grid=(num_chunks,),
        in_specs=[pl.BlockSpec((tile_n, 2), lambda g: (g, 0)),
                  pl.BlockSpec((tile_n, 6), lambda g: (g, 0)),
                  pl.BlockSpec((D * H, W * C), lambda g: (0, 0)),
                  pl.BlockSpec((W * C, C), lambda g: (0, 0))],
        out_specs=pl.BlockSpec((tile_n, C), lambda g: (g, 0)),
        compiler_params=pltpu.CompilerParams(
            dimension_semantics=("parallel",)),
    )(wi, wf, grid_flat, sel)

    out = out[:N].reshape(*shape, C)
    if C == 1:
        out = out.reshape(*shape)
    return out


def reference_forward(grid, xyz, xyz_min, xyz_max):
    """Pure-JAX reference: trilinear grid_sample, zeros padding, align_corners."""
    _, C, D, H, W = grid.shape
    shape = xyz.shape[:-1]
    pts = xyz.reshape(-1, 3).astype(jnp.float32)
    t = (pts - jnp.asarray(xyz_min, jnp.float32)) / (
        jnp.asarray(xyz_max, jnp.float32) - jnp.asarray(xyz_min, jnp.float32))
    sizes_f = jnp.asarray([D, H, W], jnp.float32)
    sizes_i = jnp.asarray([D, H, W], jnp.int32)
    idx = t * (sizes_f - 1.0)
    i0f = jnp.floor(idx)
    frac = idx - i0f
    i0 = i0f.astype(jnp.int32)
    g = grid[0]                                     # (C, D, H, W)
    out = jnp.zeros((pts.shape[0], C), jnp.float32)
    for dd in (0, 1):
        for hh in (0, 1):
            for ww in (0, 1):
                corner = i0 + jnp.asarray([dd, hh, ww], jnp.int32)
                valid = jnp.all((corner >= 0) & (corner < sizes_i), axis=-1)
                cc = jnp.clip(corner, 0, sizes_i - 1)
                vals = g[:, cc[:, 0], cc[:, 1], cc[:, 2]].T   # (N, C)
                wgt = ((frac[:, 0] if dd else 1.0 - frac[:, 0]) *
                       (frac[:, 1] if hh else 1.0 - frac[:, 1]) *
                       (frac[:, 2] if ww else 1.0 - frac[:, 2]))
                out = out + (wgt * valid)[:, None] * vals
    out = out.reshape(*shape, C)
    if C == 1:
        out = out.reshape(*shape)
    return out


if __name__ == "__main__":
    channels = 4
    world_size = (16, 16, 16)
    xyz_min = jnp.asarray([-1.0, -1.0, -1.0], jnp.float32)
    xyz_max = jnp.asarray([1.0, 1.0, 1.0], jnp.float32)

    key = jax.random.PRNGKey(0)
    k_grid, k_pts = jax.random.split(key)
    # The module initializes the grid to zeros; use random values so the
    # correctness check is meaningful.
    grid = jax.random.normal(k_grid, (1, channels, *world_size), jnp.float32)
    # Mostly-inside query points, some slightly outside (exercises zero padding).
    xyz = jax.random.uniform(k_pts, (2, 256, 3), jnp.float32,
                             minval=-1.15, maxval=1.15)

    out = dense_grid_forward(grid, xyz, xyz_min, xyz_max, tile_n=256)
    out = jax.block_until_ready(out)

    ref = reference_forward(grid, xyz, xyz_min, xyz_max)
    assert out.shape == (2, 256, channels) and out.dtype == jnp.float32
    assert jnp.allclose(out, ref, atol=1e-5, rtol=1e-5), "mismatch vs reference"

    print("KERNEL_OK")
</pallas_src>

<mosaic_0001>
module attributes {stable_mosaic.version = 11 : i64} {
  func.func @_grid_sample_kernel(%arg0: i32, %arg1: memref<256x2xi32, #tpu.memory_space<vmem>>, %arg2: memref<256x6xf32, #tpu.memory_space<vmem>>, %arg3: memref<256x64xf32, #tpu.memory_space<vmem>>, %arg4: memref<64x4xf32, #tpu.memory_space<vmem>>, %arg5: memref<256x4xf32, #tpu.memory_space<vmem>>) attributes {dimension_semantics = [#tpu.dimension_semantics<parallel>], iteration_bounds = array<i64: 2>, scalar_prefetch = 0 : i64, scratch_operands = 0 : i64, tpu.core_type = #tpu.core_type<tc>, window_params = [{transform_indices = @transform_0, window_bounds = array<i64: 256, 2>}, {transform_indices = @transform_1, window_bounds = array<i64: 256, 6>}, {pipeline_mode = #tpu.pipeline_mode<synchronous>, transform_indices = @transform_2, window_bounds = array<i64: 256, 64>}, {pipeline_mode = #tpu.pipeline_mode<synchronous>, transform_indices = @transform_3, window_bounds = array<i64: 64, 4>}, {transform_indices = @transform_4, window_bounds = array<i64: 256, 4>}]} {
    %c0 = arith.constant 0 : index
    %c0_0 = arith.constant 0 : index
    %0 = vector.load %arg1[%c0, %c0_0] : memref<256x2xi32, #tpu.memory_space<vmem>>, vector<256x1xi32>
    %c0_1 = arith.constant 0 : index
    %c1 = arith.constant 1 : index
    %1 = vector.load %arg1[%c0_1, %c1] : memref<256x2xi32, #tpu.memory_space<vmem>>, vector<256x1xi32>
    %c0_2 = arith.constant 0 : index
    %c0_3 = arith.constant 0 : index
    %2 = vector.load %arg2[%c0_2, %c0_3] : memref<256x6xf32, #tpu.memory_space<vmem>>, vector<256x1xf32>
    %c0_4 = arith.constant 0 : index
    %c1_5 = arith.constant 1 : index
    %3 = vector.load %arg2[%c0_4, %c1_5] : memref<256x6xf32, #tpu.memory_space<vmem>>, vector<256x1xf32>
    %c0_6 = arith.constant 0 : index
    %c2 = arith.constant 2 : index
    %4 = vector.load %arg2[%c0_6, %c2] : memref<256x6xf32, #tpu.memory_space<vmem>>, vector<256x1xf32>
    %c0_7 = arith.constant 0 : index
    %c3 = arith.constant 3 : index
    %5 = vector.load %arg2[%c0_7, %c3] : memref<256x6xf32, #tpu.memory_space<vmem>>, vector<256x1xf32>
    %c0_8 = arith.constant 0 : index
    %c4 = arith.constant 4 : index
    %6 = vector.load %arg2[%c0_8, %c4] : memref<256x6xf32, #tpu.memory_space<vmem>>, vector<256x1xf32>
    %c0_9 = arith.constant 0 : index
    %c5 = arith.constant 5 : index
    %7 = vector.load %arg2[%c0_9, %c5] : memref<256x6xf32, #tpu.memory_space<vmem>>, vector<256x1xf32>
    %8 = tpu.iota {dimensions = array<i32: 1>} : vector<256x256xi32>
    %9 = vector.broadcast %0 : vector<256x1xi32> to vector<256x256xi32>
    %10 = arith.cmpi eq, %8, %9 : vector<256x256xi32>
    %cst = arith.constant 0.000000e+00 : f32
    %11 = vector.shape_cast %2 : vector<256x1xf32> to vector<256x1xf32>
    %12 = vector.broadcast %11 : vector<256x1xf32> to vector<256x256xf32>
    %13 = vector.broadcast %cst : f32 to vector<256x256xf32>
    %14 = arith.select %10, %12, %13 : vector<256x256xi1>, vector<256x256xf32>
    %c1_i32 = arith.constant 1 : i32
    %15 = vector.broadcast %c1_i32 : i32 to vector<256x1xi32>
    %16 = arith.addi %0, %15 : vector<256x1xi32>
    %17 = vector.broadcast %16 : vector<256x1xi32> to vector<256x256xi32>
    %18 = arith.cmpi eq, %8, %17 : vector<256x256xi32>
    %cst_10 = arith.constant 0.000000e+00 : f32
    %19 = vector.shape_cast %3 : vector<256x1xf32> to vector<256x1xf32>
    %20 = vector.broadcast %19 : vector<256x1xf32> to vector<256x256xf32>
    %21 = vector.broadcast %cst_10 : f32 to vector<256x256xf32>
    %22 = arith.select %18, %20, %21 : vector<256x256xi1>, vector<256x256xf32>
    %23 = arith.addf %14, %22 : vector<256x256xf32>
    %c16_i32 = arith.constant 16 : i32
    %24 = vector.broadcast %c16_i32 : i32 to vector<256x1xi32>
    %25 = arith.addi %0, %24 : vector<256x1xi32>
    %26 = vector.broadcast %25 : vector<256x1xi32> to vector<256x256xi32>
    %27 = arith.cmpi eq, %8, %26 : vector<256x256xi32>
    %cst_11 = arith.constant 0.000000e+00 : f32
    %28 = vector.shape_cast %4 : vector<256x1xf32> to vector<256x1xf32>
    %29 = vector.broadcast %28 : vector<256x1xf32> to vector<256x256xf32>
    %30 = vector.broadcast %cst_11 : f32 to vector<256x256xf32>
    %31 = arith.select %27, %29, %30 : vector<256x256xi1>, vector<256x256xf32>
    %32 = arith.addf %23, %31 : vector<256x256xf32>
    %c16_i32_12 = arith.constant 16 : i32
    %33 = vector.broadcast %c16_i32_12 : i32 to vector<256x1xi32>
    %34 = arith.addi %0, %33 : vector<256x1xi32>
    %c1_i32_13 = arith.constant 1 : i32
    %35 = vector.broadcast %c1_i32_13 : i32 to vector<256x1xi32>
    %36 = arith.addi %34, %35 : vector<256x1xi32>
    %37 = vector.broadcast %36 : vector<256x1xi32> to vector<256x256xi32>
    %38 = arith.cmpi eq, %8, %37 : vector<256x256xi32>
    %cst_14 = arith.constant 0.000000e+00 : f32
    %39 = vector.shape_cast %5 : vector<256x1xf32> to vector<256x1xf32>
    %40 = vector.broadcast %39 : vector<256x1xf32> to vector<256x256xf32>
    %41 = vector.broadcast %cst_14 : f32 to vector<256x256xf32>
    %42 = arith.select %38, %40, %41 : vector<256x256xi1>, vector<256x256xf32>
    %43 = arith.addf %32, %42 : vector<256x256xf32>
    %c0_15 = arith.constant 0 : index
    %c0_16 = arith.constant 0 : index
    %44 = vector.load %arg3[%c0_15, %c0_16] : memref<256x64xf32, #tpu.memory_space<vmem>>, vector<256x64xf32>
    %cst_17 = arith.constant dense<0.000000e+00> : vector<256x64xf32>
    %45 = tpu.matmul %43, %44, %cst_17 {dimension_numbers = #tpu.dot_dimension_numbers<[1], [0], [0], [1], [0, 0, 1, 1], [], []>, precision = #tpu.contract_precision<fp32>} : vector<256x256xf32>, vector<256x64xf32>, vector<256x64xf32> -> vector<256x64xf32>
    %46 = tpu.iota {dimensions = array<i32: 1>} : vector<256x64xi32>
    %c4_i32 = arith.constant 4 : i32
    %47 = vector.broadcast %c4_i32 : i32 to vector<256x1xi32>
    %48 = arith.muli %1, %47 : vector<256x1xi32>
    %49 = vector.broadcast %48 : vector<256x1xi32> to vector<256x64xi32>
    %50 = arith.cmpi sge, %46, %49 : vector<256x64xi32>
    %c4_i32_18 = arith.constant 4 : i32
    %51 = vector.broadcast %c4_i32_18 : i32 to vector<256x1xi32>
    %52 = arith.addi %48, %51 : vector<256x1xi32>
    %53 = vector.broadcast %52 : vector<256x1xi32> to vector<256x64xi32>
    %54 = arith.cmpi slt, %46, %53 : vector<256x64xi32>
    %55 = arith.andi %50, %54 : vector<256x64xi1>
    %cst_19 = arith.constant 0.000000e+00 : f32
    %56 = vector.shape_cast %6 : vector<256x1xf32> to vector<256x1xf32>
    %57 = vector.broadcast %56 : vector<256x1xf32> to vector<256x64xf32>
    %58 = vector.broadcast %cst_19 : f32 to vector<256x64xf32>
    %59 = arith.select %55, %57, %58 : vector<256x64xi1>, vector<256x64xf32>
    %c4_i32_20 = arith.constant 4 : i32
    %60 = vector.broadcast %c4_i32_20 : i32 to vector<256x1xi32>
    %61 = arith.addi %48, %60 : vector<256x1xi32>
    %62 = vector.broadcast %61 : vector<256x1xi32> to vector<256x64xi32>
    %63 = arith.cmpi sge, %46, %62 : vector<256x64xi32>
    %c8_i32 = arith.constant 8 : i32
    %64 = vector.broadcast %c8_i32 : i32 to vector<256x1xi32>
    %65 = arith.addi %48, %64 : vector<256x1xi32>
    %66 = vector.broadcast %65 : vector<256x1xi32> to vector<256x64xi32>
    %67 = arith.cmpi slt, %46, %66 : vector<256x64xi32>
    %68 = arith.andi %63, %67 : vector<256x64xi1>
    %cst_21 = arith.constant 0.000000e+00 : f32
    %69 = vector.shape_cast %7 : vector<256x1xf32> to vector<256x1xf32>
    %70 = vector.broadcast %69 : vector<256x1xf32> to vector<256x64xf32>
    %71 = vector.broadcast %cst_21 : f32 to vector<256x64xf32>
    %72 = arith.select %68, %70, %71 : vector<256x64xi1>, vector<256x64xf32>
    %73 = arith.addf %59, %72 : vector<256x64xf32>
    %74 = arith.mulf %45, %73 : vector<256x64xf32>
    %c0_22 = arith.constant 0 : index
    %c0_23 = arith.constant 0 : index
    %75 = vector.load %arg4[%c0_22, %c0_23] : memref<64x4xf32, #tpu.memory_space<vmem>>, vector<64x4xf32>
    %cst_24 = arith.constant dense<0.000000e+00> : vector<256x4xf32>
    %76 = tpu.matmul %74, %75, %cst_24 {dimension_numbers = #tpu.dot_dimension_numbers<[1], [0], [0], [1], [0, 0, 1, 1], [], []>, precision = #tpu.contract_precision<fp32>} : vector<256x64xf32>, vector<64x4xf32>, vector<256x4xf32> -> vector<256x4xf32>
    %c0_25 = arith.constant 0 : index
    %c0_26 = arith.constant 0 : index
    %77 = vector.load %arg5[%c0_25, %c0_26] : memref<256x4xf32, #tpu.memory_space<vmem>>, vector<256x4xf32>
    tpu.vector_store %arg5[%c0_25, %c0_26], %76 {strides = array<i32>} : memref<256x4xf32, #tpu.memory_space<vmem>>, vector<256x4xf32>,
    return
  }
  func.func @transform_0(%arg0: i32) -> (i32, i32) {
    %c0_i32 = arith.constant 0 : i32
    %c0_i32_0 = arith.constant 0 : i32
    return %arg0, %c0_i32 : i32, i32
  }
  func.func @transform_1(%arg0: i32) -> (i32, i32) {
    %c0_i32 = arith.constant 0 : i32
    %c0_i32_0 = arith.constant 0 : i32
    return %arg0, %c0_i32 : i32, i32
  }
  func.func @transform_2(%arg0: i32) -> (i32, i32) {
    %c0_i32 = arith.constant 0 : i32
    %c0_i32_0 = arith.constant 0 : i32
    %c0_i32_1 = arith.constant 0 : i32
    return %c0_i32, %c0_i32_0 : i32, i32
  }
  func.func @transform_3(%arg0: i32) -> (i32, i32) {
    %c0_i32 = arith.constant 0 : i32
    %c0_i32_0 = arith.constant 0 : i32
    %c0_i32_1 = arith.constant 0 : i32
    return %c0_i32, %c0_i32_0 : i32, i32
  }
  func.func @transform_4(%arg0: i32) -> (i32, i32) {
    %c0_i32 = arith.constant 0 : i32
    %c0_i32_0 = arith.constant 0 : i32
    return %arg0, %c0_i32 : i32, i32
  }
}

</mosaic_0001>

<llo_original>
// kernel: tpu_custom_call.1
$region0: #{tpu_custom_call.1}
  #allocation0 [shape = 'u32[]', space=smem, size = 0x4, offset = 0x4, fixed_abs, tag = 'smem constant byte address 0x4 - core index']
  #allocation1 [shape = 'u32[144,128]{1,0:T(1,128)}', space=vmem, size = 0x12000, scoped, tag = 'internal scratch']
  %s0 = inlined_call_operand.vmem [shape: s32[512,2], index: 0, kind: input, shape index: {}]
  %s1 = inlined_call_operand.vmem [shape: f32[512,6], index: 1, kind: input, shape index: {}]
  %s2 = inlined_call_operand.vmem [shape: f32[256,64], index: 2, kind: input, shape index: {}]
  %s3 = inlined_call_operand.vmem [shape: f32[64,4], index: 3, kind: input, shape index: {}]
  %s4 = inlined_call_operand.vmem [shape: f32[512,4], index: 4, kind: output, shape index: {}]
  %s5 = sld [smem:[#allocation0]]
  $region49: #{tpu_custom_call.1} parent=0
    _
  %s7 = ssub.s32 1, %s5
  %s8 = scalar_select 0, %s7, %s5
  loop: start=0, step=1, limit=4
  $region2: #{tpu_custom_call.1} parent=0 // loop_pre_header
    _
  $region3: #{tpu_custom_call.1} parent=0 // loop_header
    %s10 = sphi 0, %s14
    %p11 = scmp.ge.s32.totalorder %s10, 4
    %s20 = sphi 0, %s22
    %s23 = sphi 0, %s20
    %s24 = sphi 0, %s23
    %s40 = sphi 0, %s24
    %s46 = sphi 0, %s48
    %s49 = sphi 0, %s46
    %s50 = sphi 0, %s49
    %s66 = sphi 0, %s50
    %s70 = sphi 0, %s70
    %s72 = sphi 0, %s70
    %s73 = sphi 0, %s72
    %s87 = sphi 0, %s73
    %s91 = sphi 0, %s91
    %s93 = sphi 0, %s91
    %s94 = sphi 0, %s93
    %s108 = sphi 0, %s94
    %s114 = sphi 0, %s116
    %s117 = sphi 0, %s114
    %s118 = sphi 0, %s117
    %s134 = sphi 0, %s118
  $region4: #{tpu_custom_call.1} parent=0 // loop_header_branch
    %13 = sbr.rel (%p11) target = $region8
  $region5: #{tpu_custom_call.1} parent=0 // loop_body
    %s15 = ssub.s32 %s10, 1
    %s16 = ssub.s32 %s10, 2
    %s17 = sadd.s32 %s10, 1
    %s18 = ssub.s32 %s10, %s17
    %p19 = scmp.eq.s32.totalorder %s18, 0
    %s21 = sadd.s32 %s20, 1
    %s22 = scalar_select %p19, %s20, %s21
    %p25 = pneg %p19
    %p26 = scmp.eq.s32.totalorder %s10, 1
    %p27 = por %p25, %p26
    %p28 = scmp.ne.s32.totalorder %s20, %s23
    %p29 = scmp.eq.s32.totalorder %s10, 0
    %p30 = por %p28, %p29
    %p31 = scmp.ne.s32.totalorder %s20, %s23
    %p32 = scmp.eq.s32.totalorder %s15, 1
    %p33 = por %p31, %p32
    %p34 = scmp.ne.s32.totalorder %s23, %s24
    %p35 = scmp.eq.s32.totalorder %s15, 0
    %p36 = por %p34, %p35
    %p37 = scmp.ne.s32.totalorder %s23, %s24
    %p38 = scmp.eq.s32.totalorder %s16, 1
    %p39 = por %p37, %p38
    %p41 = scmp.ne.s32.totalorder %s24, %s40
    %p42 = scmp.eq.s32.totalorder %s16, 0
    %p43 = por %p41, %p42
    %s44 = ssub.s32 %s10, %s17
    %p45 = scmp.eq.s32.totalorder %s44, 0
    %s47 = sadd.s32 %s46, 1
    %s48 = scalar_select %p45, %s46, %s47
    %p51 = pneg %p45
    %p52 = scmp.eq.s32.totalorder %s10, 1
    %p53 = por %p51, %p52
    %p54 = scmp.ne.s32.totalorder %s46, %s49
    %p55 = scmp.eq.s32.totalorder %s10, 0
    %p56 = por %p54, %p55
    %p57 = scmp.ne.s32.totalorder %s46, %s49
    %p58 = scmp.eq.s32.totalorder %s15, 1
    %p59 = por %p57, %p58
    %p60 = scmp.ne.s32.totalorder %s49, %s50
    %p61 = scmp.eq.s32.totalorder %s15, 0
    %p62 = por %p60, %p61
    %p63 = scmp.ne.s32.totalorder %s49, %s50
    %p64 = scmp.eq.s32.totalorder %s16, 1
    %p65 = por %p63, %p64
    %p67 = scmp.ne.s32.totalorder %s50, %s66
    %p68 = scmp.eq.s32.totalorder %s16, 0
    %p69 = por %p67, %p68
    %s71 = sadd.s32 %s70, 1
    %p74 = scmp.eq.s32.totalorder %s10, 1
    %p75 = scmp.ne.s32.totalorder %s70, %s72
    %p76 = scmp.eq.s32.totalorder %s10, 0
    %p77 = por %p75, %p76
    %p78 = scmp.ne.s32.totalorder %s70, %s72
    %p79 = scmp.eq.s32.totalorder %s15, 1
    %p80 = por %p78, %p79
    %p81 = scmp.ne.s32.totalorder %s72, %s73
    %p82 = scmp.eq.s32.totalorder %s15, 0
    %p83 = por %p81, %p82
    %p84 = scmp.ne.s32.totalorder %s72, %s73
    %p85 = scmp.eq.s32.totalorder %s16, 1
    %p86 = por %p84, %p85
    %p88 = scmp.ne.s32.totalorder %s73, %s87
    %p89 = scmp.eq.s32.totalorder %s16, 0
    %p90 = por %p88, %p89
    %s92 = sadd.s32 %s91, 1
    %p95 = scmp.eq.s32.totalorder %s10, 1
    %p96 = scmp.ne.s32.totalorder %s91, %s93
    %p97 = scmp.eq.s32.totalorder %s10, 0
    %p98 = por %p96, %p97
    %p99 = scmp.ne.s32.totalorder %s91, %s93
    %p100 = scmp.eq.s32.totalorder %s15, 1
    %p101 = por %p99, %p100
    %p102 = scmp.ne.s32.totalorder %s93, %s94
    %p103 = scmp.eq.s32.totalorder %s15, 0
    %p104 = por %p102, %p103
    %p105 = scmp.ne.s32.totalorder %s93, %s94
    %p106 = scmp.eq.s32.totalorder %s16, 1
    %p107 = por %p105, %p106
    %p109 = scmp.ne.s32.totalorder %s94, %s108
    %p110 = scmp.eq.s32.totalorder %s16, 0
    %p111 = por %p109, %p110
    %s112 = ssub.s32 %s10, %s17
    %p113 = scmp.eq.s32.totalorder %s112, 0
    %s115 = sadd.s32 %s114, 1
    %s116 = scalar_select %p113, %s114, %s115
    %p119 = pneg %p113
    %p120 = scmp.eq.s32.totalorder %s10, 1
    %p121 = por %p119, %p120
    %p122 = scmp.ne.s32.totalorder %s114, %s117
    %p123 = scmp.eq.s32.totalorder %s10, 0
    %p124 = por %p122, %p123
    %p125 = scmp.ne.s32.totalorder %s114, %s117
    %p126 = scmp.eq.s32.totalorder %s15, 1
    %p127 = por %p125, %p126
    %p128 = scmp.ne.s32.totalorder %s117, %s118
    %p129 = scmp.eq.s32.totalorder %s15, 0
    %p130 = por %p128, %p129
    %p131 = scmp.ne.s32.totalorder %s117, %s118
    %p132 = scmp.eq.s32.totalorder %s16, 1
    %p133 = por %p131, %p132
    %p135 = scmp.ne.s32.totalorder %s118, %s134
    %p136 = scmp.eq.s32.totalorder %s16, 0
    %p137 = por %p135, %p136
    %p138 = scmp.le.s32.totalorder 1, %s10
    %p139 = scmp.lt.s32.totalorder %s10, 3
    %p140 = pnand %p138, %p139
    %p141 = pneg %p140
    // Predicated region
    $region9: #{tpu_custom_call.1} parent=5 // pred_check
      _
    $region10: #{tpu_custom_call.1} parent=5 // pred_check_branch
      %143 = sbr.rel (%p140) target = $region12
    $region11: #{tpu_custom_call.1} parent=5 // pred_region
      %s144 = ssub.s32 %s10, 1
      // Predicated region
      $region13: #{tpu_custom_call.1} parent=11 // pred_check
        %p145 = pneg %p83
      $region14: #{tpu_custom_call.1} parent=11 // pred_check_branch
        %147 = sbr.rel (%p145) target = $region16
      $region15: #{tpu_custom_call.1} parent=11 // pred_region
        _
      $region16: #{tpu_custom_call.1} parent=11 // pred_fallthru
        _
      // Predicated region
      $region17: #{tpu_custom_call.1} parent=11 // pred_check
        %p148 = pneg %p104
      $region18: #{tpu_custom_call.1} parent=11 // pred_check_branch
        %150 = sbr.rel (%p148) target = $region20
      $region19: #{tpu_custom_call.1} parent=11 // pred_region
        _
      $region20: #{tpu_custom_call.1} parent=11 // pred_fallthru
        _
    $region12: #{tpu_custom_call.1} parent=5 // pred_fallthru
      _
    %p151 = scmp.lt.s32.totalorder %s10, 2
    // Predicated region
    $region21: #{tpu_custom_call.1} parent=5 // pred_check
      %p152 = pneg %p151
    $region22: #{tpu_custom_call.1} parent=5 // pred_check_branch
      %154 = sbr.rel (%p152) target = $region24
    $region23: #{tpu_custom_call.1} parent=5 // pred_region
      // Predicated region
      $region25: #{tpu_custom_call.1} parent=23 // pred_check
        %p155 = pneg %p30
      $region26: #{tpu_custom_call.1} parent=23 // pred_check_branch
        %157 = sbr.rel (%p155) target = $region28
      $region27: #{tpu_custom_call.1} parent=23 // pred_region
        %s158 = smul.u32 32, %s10
        %p159 = scmp.lt.s32.totalorder %s158, 63
        %s160 = scalar_select %p159, %s158, 63
        %s161 = smul.addr %s160, 8
        %s162 = scalar_lea.vmem %s0, %s161
        %s163 = smul.u32 32, %s10
      $region28: #{tpu_custom_call.1} parent=23 // pred_fallthru
        _
      // Predicated region
      $region29: #{tpu_custom_call.1} parent=23 // pred_check
        %p164 = pneg %p56
      $region30: #{tpu_custom_call.1} parent=23 // pred_check_branch
        %166 = sbr.rel (%p164) target = $region32
      $region31: #{tpu_custom_call.1} parent=23 // pred_region
        %s167 = smul.u32 32, %s10
        %p168 = scmp.lt.s32.totalorder %s167, 63
        %s169 = scalar_select %p168, %s167, 63
        %s170 = smul.addr %s169, 8
        %s171 = scalar_lea.vmem %s1, %s170
        %s172 = smul.u32 32, %s10
      $region32: #{tpu_custom_call.1} parent=23 // pred_fallthru
        _
    $region24: #{tpu_custom_call.1} parent=5 // pred_fallthru
      _
    %p173 = scmp.le.s32.totalorder 1, %s10
    %p174 = scmp.lt.s32.totalorder %s10, 3
    %p175 = pnand %p173, %p174
    %p176 = pneg %p175
    // Predicated region
    $region33: #{tpu_custom_call.1} parent=5 // pred_check
      _
    $region34: #{tpu_custom_call.1} parent=5 // pred_check_branch
      %178 = sbr.rel (%p175) target = $region36
    $region35: #{tpu_custom_call.1} parent=5 // pred_region
      %s179 = ssub.s32 %s10, 1
      %s180 = smul.u32 32, %s15
      %p181 = scmp.lt.s32.totalorder %s180, 63
      %s182 = scalar_select %p181, %s180, 63
      %s183 = smul.addr %s182, 8
      %s184 = scalar_lea.vmem %s0, %s183
      %p185 = pneg %p36
      %p186 = pneg %p33
      %s187 = smul.u32 32, %s15
      %p188 = scmp.lt.s32.totalorder %s187, 63
      %s189 = scalar_select %p188, %s187, 63
      %s190 = smul.addr %s189, 8
      %s191 = scalar_lea.vmem %s1, %s190
      %p192 = pneg %p62
      %p193 = pneg %p59
      %p194 = pneg %p83
      %p195 = pneg %p80
      %p196 = pneg %p104
      %p197 = pneg %p101
      %p198 = pneg %p130
      %p199 = pneg %p127
      %s200 = smul.u32 32, %s15
      %p201 = scmp.lt.s32.totalorder %s200, 63
      %s202 = scalar_select %p201, %s200, 63
      %s203 = smul.addr %s202, 8
      %s204 = scalar_lea.vmem %s4, %s203
      %s205 = smul.u32 32, %s15
      %p206 = scmp.lt.s32.totalorder %s205, 63
      %s207 = scalar_select %p206, %s205, 63
      %s208 = smul.addr %s207, 8
      %s209 = scalar_lea.vmem %s0, %s208
      %s210 = smul.u32 32, %s15
      %s211 = smul.u32 32, %s15
      %p212 = scmp.lt.s32.totalorder %s211, 63
      %s213 = scalar_select %p212, %s211, 63
      %s214 = smul.addr %s213, 8
      %s215 = scalar_lea.vmem %s1, %s214
      %s216 = smul.u32 32, %s15
      %s217 = smul.u32 32, %s15
      %p218 = scmp.lt.s32.totalorder %s217, 63
      %s219 = scalar_select %p218, %s217, 63
      %s220 = smul.addr %s219, 8
      %s221 = scalar_lea.vmem %s4, %s220
      %s222 = smul.u32 32, %s15
      %v223 = vld [vmem:[%s209] sm:$0xff]
      %v224 = vld [vmem:[%s209 + $0x8] sm:$0xff]
      %v225 = vld [vmem:[%s209 + $0x10] sm:$0xff]
      %v226 = vld [vmem:[%s209 + $0x18] sm:$0xff]
      %v227 = vld [vmem:[%s209 + $0x20] sm:$0xff]
      %v228 = vld [vmem:[%s209 + $0x28] sm:$0xff]
      %v229 = vld [vmem:[%s209 + $0x30] sm:$0xff]
      %v230 = vld [vmem:[%s209 + $0x38] sm:$0xff]
      %v231 = vld [vmem:[%s209 + $0x40] sm:$0xff]
      %v232 = vld [vmem:[%s209 + $0x48] sm:$0xff]
      %v233 = vld [vmem:[%s209 + $0x50] sm:$0xff]
      %v234 = vld [vmem:[%s209 + $0x58] sm:$0xff]
      %v235 = vld [vmem:[%s209 + $0x60] sm:$0xff]
      %v236 = vld [vmem:[%s209 + $0x68] sm:$0xff]
      %v237 = vld [vmem:[%s209 + $0x70] sm:$0xff]
      %v238 = vld [vmem:[%s209 + $0x78] sm:$0xff]
      %v239 = vld [vmem:[%s209 + $0x80] sm:$0xff]
      %v240 = vld [vmem:[%s209 + $0x88] sm:$0xff]
      %v241 = vld [vmem:[%s209 + $0x90] sm:$0xff]
      %v242 = vld [vmem:[%s209 + $0x98] sm:$0xff]
      %v243 = vld [vmem:[%s209 + $0xa0] sm:$0xff]
      %v244 = vld [vmem:[%s209 + $0xa8] sm:$0xff]
      %v245 = vld [vmem:[%s209 + $0xb0] sm:$0xff]
      %v246 = vld [vmem:[%s209 + $0xb8] sm:$0xff]
      %v247 = vld [vmem:[%s209 + $0xc0] sm:$0xff]
      %v248 = vld [vmem:[%s209 + $0xc8] sm:$0xff]
      %v249 = vld [vmem:[%s209 + $0xd0] sm:$0xff]
      %v250 = vld [vmem:[%s209 + $0xd8] sm:$0xff]
      %v251 = vld [vmem:[%s209 + $0xe0] sm:$0xff]
      %v252 = vld [vmem:[%s209 + $0xe8] sm:$0xff]
      %v253 = vld [vmem:[%s209 + $0xf0] sm:$0xff]
      %v254 = vld [vmem:[%s209 + $0xf8] sm:$0xff]
      %v255 = vld [vmem:[%s215] sm:$0xff]
      %v256 = vld [vmem:[%s215 + $0x8] sm:$0xff]
      %v257 = vld [vmem:[%s215 + $0x10] sm:$0xff]
      %v258 = vld [vmem:[%s215 + $0x18] sm:$0xff]
      %v259 = vld [vmem:[%s215 + $0x20] sm:$0xff]
      %v260 = vld [vmem:[%s215 + $0x28] sm:$0xff]
      %v261 = vld [vmem:[%s215 + $0x30] sm:$0xff]
      %v262 = vld [vmem:[%s215 + $0x38] sm:$0xff]
      %v263 = vld [vmem:[%s215 + $0x40] sm:$0xff]
      %v264 = vld [vmem:[%s215 + $0x48] sm:$0xff]
      %v265 = vld [vmem:[%s215 + $0x50] sm:$0xff]
      %v266 = vld [vmem:[%s215 + $0x58] sm:$0xff]
      %v267 = vld [vmem:[%s215 + $0x60] sm:$0xff]
      %v268 = vld [vmem:[%s215 + $0x68] sm:$0xff]
      %v269 = vld [vmem:[%s215 + $0x70] sm:$0xff]
      %v270 = vld [vmem:[%s215 + $0x78] sm:$0xff]
      %v271 = vld [vmem:[%s215 + $0x80] sm:$0xff]
      %v272 = vld [vmem:[%s215 + $0x88] sm:$0xff]
      %v273 = vld [vmem:[%s215 + $0x90] sm:$0xff]
      %v274 = vld [vmem:[%s215 + $0x98] sm:$0xff]
      %v275 = vld [vmem:[%s215 + $0xa0] sm:$0xff]
      %v276 = vld [vmem:[%s215 + $0xa8] sm:$0xff]
      %v277 = vld [vmem:[%s215 + $0xb0] sm:$0xff]
      %v278 = vld [vmem:[%s215 + $0xb8] sm:$0xff]
      %v279 = vld [vmem:[%s215 + $0xc0] sm:$0xff]
      %v280 = vld [vmem:[%s215 + $0xc8] sm:$0xff]
      %v281 = vld [vmem:[%s215 + $0xd0] sm:$0xff]
      %v282 = vld [vmem:[%s215 + $0xd8] sm:$0xff]
      %v283 = vld [vmem:[%s215 + $0xe0] sm:$0xff]
      %v284 = vld [vmem:[%s215 + $0xe8] sm:$0xff]
      %v285 = vld [vmem:[%s215 + $0xf0] sm:$0xff]
      %v286 = vld [vmem:[%s215 + $0xf8] sm:$0xff]
      %v287 = vlaneseq
      %v288 = vand.u32 %v287, 127
      %v289 = vadd.s32 %v288, 128
      %290 = vset.pattern.permute.xlu0 0
      %291 = vperm.xlu0 %290, %v223
      %v292 = vpop.permute.xlu0 %291
      %293 = vset.pattern.permute.xlu0 0
      %294 = vperm.xlu0 %293, %v224
      %v295 = vpop.permute.xlu0 %294
      %296 = vset.pattern.permute.xlu0 0
      %297 = vperm.xlu0 %296, %v225
      %v298 = vpop.permute.xlu0 %297
      %299 = vset.pattern.permute.xlu0 0
      %300 = vperm.xlu0 %299, %v226
      %v301 = vpop.permute.xlu0 %300
      %302 = vset.pattern.permute.xlu0 0
      %303 = vperm.xlu0 %302, %v227
      %v304 = vpop.permute.xlu0 %303
      %305 = vset.pattern.permute.xlu0 0
      %306 = vperm.xlu0 %305, %v228
      %v307 = vpop.permute.xlu0 %306
      %308 = vset.pattern.permute.xlu0 0
      %309 = vperm.xlu0 %308, %v229
      %v310 = vpop.permute.xlu0 %309
      %311 = vset.pattern.permute.xlu0 0
      %312 = vperm.xlu0 %311, %v230
      %v313 = vpop.permute.xlu0 %312
      %314 = vset.pattern.permute.xlu0 0
      %315 = vperm.xlu0 %314, %v231
      %v316 = vpop.permute.xlu0 %315
      %317 = vset.pattern.permute.xlu0 0
      %318 = vperm.xlu0 %317, %v232
      %v319 = vpop.permute.xlu0 %318
      %320 = vset.pattern.permute.xlu0 0
      %321 = vperm.xlu0 %320, %v233
      %v322 = vpop.permute.xlu0 %321
      %323 = vset.pattern.permute.xlu0 0
      %324 = vperm.xlu0 %323, %v234
      %v325 = vpop.permute.xlu0 %324
      %326 = vset.pattern.permute.xlu0 0
      %327 = vperm.xlu0 %326, %v235
      %v328 = vpop.permute.xlu0 %327
      %329 = vset.pattern.permute.xlu0 0
      %330 = vperm.xlu0 %329, %v236
      %v331 = vpop.permute.xlu0 %330
      %332 = vset.pattern.permute.xlu0 0
      %333 = vperm.xlu0 %332, %v237
      %v334 = vpop.permute.xlu0 %333
      %335 = vset.pattern.permute.xlu0 0
      %336 = vperm.xlu0 %335, %v238
      %v337 = vpop.permute.xlu0 %336
      %338 = vset.pattern.permute.xlu0 0
      %339 = vperm.xlu0 %338, %v239
      %v340 = vpop.permute.xlu0 %339
      %341 = vset.pattern.permute.xlu0 0
      %342 = vperm.xlu0 %341, %v240
      %v343 = vpop.permute.xlu0 %342
      %344 = vset.pattern.permute.xlu0 0
      %345 = vperm.xlu0 %344, %v241
      %v346 = vpop.permute.xlu0 %345
      %347 = vset.pattern.permute.xlu0 0
      %348 = vperm.xlu0 %347, %v242
      %v349 = vpop.permute.xlu0 %348
      %350 = vset.pattern.permute.xlu0 0
      %351 = vperm.xlu0 %350, %v243
      %v352 = vpop.permute.xlu0 %351
      %353 = vset.pattern.permute.xlu0 0
      %354 = vperm.xlu0 %353, %v244
      %v355 = vpop.permute.xlu0 %354
      %356 = vset.pattern.permute.xlu0 0
      %357 = vperm.xlu0 %356, %v245
      %v358 = vpop.permute.xlu0 %357
      %359 = vset.pattern.permute.xlu0 0
      %360 = vperm.xlu0 %359, %v246
      %v361 = vpop.permute.xlu0 %360
      %362 = vset.pattern.permute.xlu0 0
      %363 = vperm.xlu0 %362, %v247
      %v364 = vpop.permute.xlu0 %363
      %365 = vset.pattern.permute.xlu0 0
      %366 = vperm.xlu0 %365, %v248
      %v367 = vpop.permute.xlu0 %366
      %368 = vset.pattern.permute.xlu0 0
      %369 = vperm.xlu0 %368, %v249
      %v370 = vpop.permute.xlu0 %369
      %371 = vset.pattern.permute.xlu0 0
      %372 = vperm.xlu0 %371, %v250
      %v373 = vpop.permute.xlu0 %372
      %374 = vset.pattern.permute.xlu0 0
      %375 = vperm.xlu0 %374, %v251
      %v376 = vpop.permute.xlu0 %375
      %377 = vset.pattern.permute.xlu0 0
      %378 = vperm.xlu0 %377, %v252
      %v379 = vpop.permute.xlu0 %378
      %380 = vset.pattern.permute.xlu0 0
      %381 = vperm.xlu0 %380, %v253
      %v382 = vpop.permute.xlu0 %381
      %383 = vset.pattern.permute.xlu0 0
      %384 = vperm.xlu0 %383, %v254
      %v385 = vpop.permute.xlu0 %384
      %vm386 = vcmp.eq.s32.totalorder %v288, %v292
      %vm387 = vcmp.eq.s32.totalorder %v289, %v292
      %vm388 = vcmp.eq.s32.totalorder %v288, %v295
      %vm389 = vcmp.eq.s32.totalorder %v289, %v295
      %vm390 = vcmp.eq.s32.totalorder %v288, %v298
      %vm391 = vcmp.eq.s32.totalorder %v289, %v298
      %vm392 = vcmp.eq.s32.totalorder %v288, %v301
      %vm393 = vcmp.eq.s32.totalorder %v289, %v301
      %vm394 = vcmp.eq.s32.totalorder %v288, %v304
      %vm395 = vcmp.eq.s32.totalorder %v289, %v304
      %vm396 = vcmp.eq.s32.totalorder %v288, %v307
      %vm397 = vcmp.eq.s32.totalorder %v289, %v307
      %vm398 = vcmp.eq.s32.totalorder %v288, %v310
      %vm399 = vcmp.eq.s32.totalorder %v289, %v310
      %vm400 = vcmp.eq.s32.totalorder %v288, %v313
      %vm401 = vcmp.eq.s32.totalorder %v289, %v313
      %vm402 = vcmp.eq.s32.totalorder %v288, %v316
      %vm403 = vcmp.eq.s32.totalorder %v289, %v316
      %vm404 = vcmp.eq.s32.totalorder %v288, %v319
      %vm405 = vcmp.eq.s32.totalorder %v289, %v319
      %vm406 = vcmp.eq.s32.totalorder %v288, %v322
      %vm407 = vcmp.eq.s32.totalorder %v289, %v322
      %vm408 = vcmp.eq.s32.totalorder %v288, %v325
      %vm409 = vcmp.eq.s32.totalorder %v289, %v325
      %vm410 = vcmp.eq.s32.totalorder %v288, %v328
      %vm411 = vcmp.eq.s32.totalorder %v289, %v328
      %vm412 = vcmp.eq.s32.totalorder %v288, %v331
      %vm413 = vcmp.eq.s32.totalorder %v289, %v331
      %vm414 = vcmp.eq.s32.totalorder %v288, %v334
      %vm415 = vcmp.eq.s32.totalorder %v289, %v334
      %vm416 = vcmp.eq.s32.totalorder %v288, %v337
      %vm417 = vcmp.eq.s32.totalorder %v289, %v337
      %vm418 = vcmp.eq.s32.totalorder %v288, %v340
      %vm419 = vcmp.eq.s32.totalorder %v289, %v340
      %vm420 = vcmp.eq.s32.totalorder %v288, %v343
      %vm421 = vcmp.eq.s32.totalorder %v289, %v343
      %vm422 = vcmp.eq.s32.totalorder %v288, %v346
      %vm423 = vcmp.eq.s32.totalorder %v289, %v346
      %vm424 = vcmp.eq.s32.totalorder %v288, %v349
      %vm425 = vcmp.eq.s32.totalorder %v289, %v349
      %vm426 = vcmp.eq.s32.totalorder %v288, %v352
      %vm427 = vcmp.eq.s32.totalorder %v289, %v352
      %vm428 = vcmp.eq.s32.totalorder %v288, %v355
      %vm429 = vcmp.eq.s32.totalorder %v289, %v355
      %vm430 = vcmp.eq.s32.totalorder %v288, %v358
      %vm431 = vcmp.eq.s32.totalorder %v289, %v358
      %vm432 = vcmp.eq.s32.totalorder %v288, %v361
      %vm433 = vcmp.eq.s32.totalorder %v289, %v361
      %vm434 = vcmp.eq.s32.totalorder %v288, %v364
      %vm435 = vcmp.eq.s32.totalorder %v289, %v364
      %vm436 = vcmp.eq.s32.totalorder %v288, %v367
      %vm437 = vcmp.eq.s32.totalorder %v289, %v367
      %vm438 = vcmp.eq.s32.totalorder %v288, %v370
      %vm439 = vcmp.eq.s32.totalorder %v289, %v370
      %vm440 = vcmp.eq.s32.totalorder %v288, %v373
      %vm441 = vcmp.eq.s32.totalorder %v289, %v373
      %vm442 = vcmp.eq.s32.totalorder %v288, %v376
      %vm443 = vcmp.eq.s32.totalorder %v289, %v376
      %vm444 = vcmp.eq.s32.totalorder %v288, %v379
      %vm445 = vcmp.eq.s32.totalorder %v289, %v379
      %vm446 = vcmp.eq.s32.totalorder %v288, %v382
      %vm447 = vcmp.eq.s32.totalorder %v289, %v382
      %vm448 = vcmp.eq.s32.totalorder %v288, %v385
      %vm449 = vcmp.eq.s32.totalorder %v289, %v385
      %451 = vset.pattern.permute.xlu0 0
      %452 = vperm.xlu0 %451, %v255
      %v453 = vpop.permute.xlu0 %452
      %456 = vset.pattern.permute.xlu0 0
      %457 = vperm.xlu0 %456, %v256
      %v458 = vpop.permute.xlu0 %457
      %461 = vset.pattern.permute.xlu0 0
      %462 = vperm.xlu0 %461, %v257
      %v463 = vpop.permute.xlu0 %462
      %466 = vset.pattern.permute.xlu0 0
      %467 = vperm.xlu0 %466, %v258
      %v468 = vpop.permute.xlu0 %467
      %471 = vset.pattern.permute.xlu0 0
      %472 = vperm.xlu0 %471, %v259
      %v473 = vpop.permute.xlu0 %472
      %476 = vset.pattern.permute.xlu0 0
      %477 = vperm.xlu0 %476, %v260
      %v478 = vpop.permute.xlu0 %477
      %481 = vset.pattern.permute.xlu0 0
      %482 = vperm.xlu0 %481, %v261
      %v483 = vpop.permute.xlu0 %482
      %486 = vset.pattern.permute.xlu0 0
      %487 = vperm.xlu0 %486, %v262
      %v488 = vpop.permute.xlu0 %487
      %491 = vset.pattern.permute.xlu0 0
      %492 = vperm.xlu0 %491, %v263
      %v493 = vpop.permute.xlu0 %492
      %496 = vset.pattern.permute.xlu0 0
      %497 = vperm.xlu0 %496, %v264
      %v498 = vpop.permute.xlu0 %497
      %501 = vset.pattern.permute.xlu0 0
      %502 = vperm.xlu0 %501, %v265
      %v503 = vpop.permute.xlu0 %502
      %506 = vset.pattern.permute.xlu0 0
      %507 = vperm.xlu0 %506, %v266
      %v508 = vpop.permute.xlu0 %507
      %511 = vset.pattern.permute.xlu0 0
      %512 = vperm.xlu0 %511, %v267
      %v513 = vpop.permute.xlu0 %512
      %516 = vset.pattern.permute.xlu0 0
      %517 = vperm.xlu0 %516, %v268
      %v518 = vpop.permute.xlu0 %517
      %521 = vset.pattern.permute.xlu0 0
      %522 = vperm.xlu0 %521, %v269
      %v523 = vpop.permute.xlu0 %522
      %526 = vset.pattern.permute.xlu0 0
      %527 = vperm.xlu0 %526, %v270
      %v528 = vpop.permute.xlu0 %527
      %531 = vset.pattern.permute.xlu0 0
      %532 = vperm.xlu0 %531, %v271
      %v533 = vpop.permute.xlu0 %532
      %536 = vset.pattern.permute.xlu0 0
      %537 = vperm.xlu0 %536, %v272
      %v538 = vpop.permute.xlu0 %537
      %541 = vset.pattern.permute.xlu0 0
      %542 = vperm.xlu0 %541, %v273
      %v543 = vpop.permute.xlu0 %542
      %546 = vset.pattern.permute.xlu0 0
      %547 = vperm.xlu0 %546, %v274
      %v548 = vpop.permute.xlu0 %547
      %551 = vset.pattern.permute.xlu0 0
      %552 = vperm.xlu0 %551, %v275
      %v553 = vpop.permute.xlu0 %552
      %556 = vset.pattern.permute.xlu0 0
      %557 = vperm.xlu0 %556, %v276
      %v558 = vpop.permute.xlu0 %557
      %561 = vset.pattern.permute.xlu0 0
      %562 = vperm.xlu0 %561, %v277
      %v563 = vpop.permute.xlu0 %562
      %566 = vset.pattern.permute.xlu0 0
      %567 = vperm.xlu0 %566, %v278
      %v568 = vpop.permute.xlu0 %567
      %571 = vset.pattern.permute.xlu0 0
      %572 = vperm.xlu0 %571, %v279
      %v573 = vpop.permute.xlu0 %572
      %576 = vset.pattern.permute.xlu0 0
      %577 = vperm.xlu0 %576, %v280
      %v578 = vpop.permute.xlu0 %577
      %581 = vset.pattern.permute.xlu0 0
      %582 = vperm.xlu0 %581, %v281
      %v583 = vpop.permute.xlu0 %582
      %586 = vset.pattern.permute.xlu0 0
      %587 = vperm.xlu0 %586, %v282
      %v588 = vpop.permute.xlu0 %587
      %591 = vset.pattern.permute.xlu0 0
      %592 = vperm.xlu0 %591, %v283
      %v593 = vpop.permute.xlu0 %592
      %596 = vset.pattern.permute.xlu0 0
      %597 = vperm.xlu0 %596, %v284
      %v598 = vpop.permute.xlu0 %597
      %601 = vset.pattern.permute.xlu0 0
      %602 = vperm.xlu0 %601, %v285
      %v603 = vpop.permute.xlu0 %602
      %606 = vset.pattern.permute.xlu0 0
      %607 = vperm.xlu0 %606, %v286
      %v608 = vpop.permute.xlu0 %607
      %v610 = vsel %vm386, %v453, 0.0
      %v611 = vsel %vm387, %v453, 0.0
      %v612 = vsel %vm388, %v458, 0.0
      %v613 = vsel %vm389, %v458, 0.0
      %v614 = vsel %vm390, %v463, 0.0
      %v615 = vsel %vm391, %v463, 0.0
      %v616 = vsel %vm392, %v468, 0.0
      %v617 = vsel %vm393, %v468, 0.0
      %v618 = vsel %vm394, %v473, 0.0
      %v619 = vsel %vm395, %v473, 0.0
      %v620 = vsel %vm396, %v478, 0.0
      %v621 = vsel %vm397, %v478, 0.0
      %v622 = vsel %vm398, %v483, 0.0
      %v623 = vsel %vm399, %v483, 0.0
      %v624 = vsel %vm400, %v488, 0.0
      %v625 = vsel %vm401, %v488, 0.0
      %v626 = vsel %vm402, %v493, 0.0
      %v627 = vsel %vm403, %v493, 0.0
      %v628 = vsel %vm404, %v498, 0.0
      %v629 = vsel %vm405, %v498, 0.0
      %v630 = vsel %vm406, %v503, 0.0
      %v631 = vsel %vm407, %v503, 0.0
      %v632 = vsel %vm408, %v508, 0.0
      %v633 = vsel %vm409, %v508, 0.0
      %v634 = vsel %vm410, %v513, 0.0
      %v635 = vsel %vm411, %v513, 0.0
      %v636 = vsel %vm412, %v518, 0.0
      %v637 = vsel %vm413, %v518, 0.0
      %v638 = vsel %vm414, %v523, 0.0
      %v639 = vsel %vm415, %v523, 0.0
      %v640 = vsel %vm416, %v528, 0.0
      %v641 = vsel %vm417, %v528, 0.0
      %v642 = vsel %vm418, %v533, 0.0
      %v643 = vsel %vm419, %v533, 0.0
      %v644 = vsel %vm420, %v538, 0.0
      %v645 = vsel %vm421, %v538, 0.0
      %v646 = vsel %vm422, %v543, 0.0
      %v647 = vsel %vm423, %v543, 0.0
      %v648 = vsel %vm424, %v548, 0.0
      %v649 = vsel %vm425, %v548, 0.0
      %v650 = vsel %vm426, %v553, 0.0
      %v651 = vsel %vm427, %v553, 0.0
      %v652 = vsel %vm428, %v558, 0.0
      %v653 = vsel %vm429, %v558, 0.0
      %v654 = vsel %vm430, %v563, 0.0
      %v655 = vsel %vm431, %v563, 0.0
      %v656 = vsel %vm432, %v568, 0.0
      %v657 = vsel %vm433, %v568, 0.0
      %v658 = vsel %vm434, %v573, 0.0
      %v659 = vsel %vm435, %v573, 0.0
      %v660 = vsel %vm436, %v578, 0.0
      %v661 = vsel %vm437, %v578, 0.0
      %v662 = vsel %vm438, %v583, 0.0
      %v663 = vsel %vm439, %v583, 0.0
      %v664 = vsel %vm440, %v588, 0.0
      %v665 = vsel %vm441, %v588, 0.0
      %v666 = vsel %vm442, %v593, 0.0
      %v667 = vsel %vm443, %v593, 0.0
      %v668 = vsel %vm444, %v598, 0.0
      %v669 = vsel %vm445, %v598, 0.0
      %v670 = vsel %vm446, %v603, 0.0
      %v671 = vsel %vm447, %v603, 0.0
      %v672 = vsel %vm448, %v608, 0.0
      %v673 = vsel %vm449, %v608, 0.0
      %v674 = vadd.s32 %v223, 1
      %v675 = vadd.s32 %v224, 1
      %v676 = vadd.s32 %v225, 1
      %v677 = vadd.s32 %v226, 1
      %v678 = vadd.s32 %v227, 1
      %v679 = vadd.s32 %v228, 1
      %v680 = vadd.s32 %v229, 1
      %v681 = vadd.s32 %v230, 1
      %v682 = vadd.s32 %v231, 1
      %v683 = vadd.s32 %v232, 1
      %v684 = vadd.s32 %v233, 1
      %v685 = vadd.s32 %v234, 1
      %v686 = vadd.s32 %v235, 1
      %v687 = vadd.s32 %v236, 1
      %v688 = vadd.s32 %v237, 1
      %v689 = vadd.s32 %v238, 1
      %v690 = vadd.s32 %v239, 1
      %v691 = vadd.s32 %v240, 1
      %v692 = vadd.s32 %v241, 1
      %v693 = vadd.s32 %v242, 1
      %v694 = vadd.s32 %v243, 1
      %v695 = vadd.s32 %v244, 1
      %v696 = vadd.s32 %v245, 1
      %v697 = vadd.s32 %v246, 1
      %v698 = vadd.s32 %v247, 1
      %v699 = vadd.s32 %v248, 1
      %v700 = vadd.s32 %v249, 1
      %v701 = vadd.s32 %v250, 1
      %v702 = vadd.s32 %v251, 1
      %v703 = vadd.s32 %v252, 1
      %v704 = vadd.s32 %v253, 1
      %v705 = vadd.s32 %v254, 1
      %706 = vset.pattern.permute.xlu0 0
      %707 = vperm.xlu0 %706, %v674
      %v708 = vpop.permute.xlu0 %707
      %709 = vset.pattern.permute.xlu0 0
      %710 = vperm.xlu0 %709, %v675
      %v711 = vpop.permute.xlu0 %710
      %712 = vset.pattern.permute.xlu0 0
      %713 = vperm.xlu0 %712, %v676
      %v714 = vpop.permute.xlu0 %713
      %715 = vset.pattern.permute.xlu0 0
      %716 = vperm.xlu0 %715, %v677
      %v717 = vpop.permute.xlu0 %716
      %718 = vset.pattern.permute.xlu0 0
      %719 = vperm.xlu0 %718, %v678
      %v720 = vpop.permute.xlu0 %719
      %721 = vset.pattern.permute.xlu0 0
      %722 = vperm.xlu0 %721, %v679
      %v723 = vpop.permute.xlu0 %722
      %724 = vset.pattern.permute.xlu0 0
      %725 = vperm.xlu0 %724, %v680
      %v726 = vpop.permute.xlu0 %725
      %727 = vset.pattern.permute.xlu0 0
      %728 = vperm.xlu0 %727, %v681
      %v729 = vpop.permute.xlu0 %728
      %730 = vset.pattern.permute.xlu0 0
      %731 = vperm.xlu0 %730, %v682
      %v732 = vpop.permute.xlu0 %731
      %733 = vset.pattern.permute.xlu0 0
      %734 = vperm.xlu0 %733, %v683
      %v735 = vpop.permute.xlu0 %734
      %736 = vset.pattern.permute.xlu0 0
      %737 = vperm.xlu0 %736, %v684
      %v738 = vpop.permute.xlu0 %737
      %739 = vset.pattern.permute.xlu0 0
      %740 = vperm.xlu0 %739, %v685
      %v741 = vpop.permute.xlu0 %740
      %742 = vset.pattern.permute.xlu0 0
      %743 = vperm.xlu0 %742, %v686
      %v744 = vpop.permute.xlu0 %743
      %745 = vset.pattern.permute.xlu0 0
      %746 = vperm.xlu0 %745, %v687
      %v747 = vpop.permute.xlu0 %746
      %748 = vset.pattern.permute.xlu0 0
      %749 = vperm.xlu0 %748, %v688
      %v750 = vpop.permute.xlu0 %749
      %751 = vset.pattern.permute.xlu0 0
      %752 = vperm.xlu0 %751, %v689
      %v753 = vpop.permute.xlu0 %752
      %754 = vset.pattern.permute.xlu0 0
      %755 = vperm.xlu0 %754, %v690
      %v756 = vpop.permute.xlu0 %755
      %757 = vset.pattern.permute.xlu0 0
      %758 = vperm.xlu0 %757, %v691
      %v759 = vpop.permute.xlu0 %758
      %760 = vset.pattern.permute.xlu0 0
      %761 = vperm.xlu0 %760, %v692
      %v762 = vpop.permute.xlu0 %761
      %763 = vset.pattern.permute.xlu0 0
      %764 = vperm.xlu0 %763, %v693
      %v765 = vpop.permute.xlu0 %764
      %766 = vset.pattern.permute.xlu0 0
      %767 = vperm.xlu0 %766, %v694
      %v768 = vpop.permute.xlu0 %767
      %769 = vset.pattern.permute.xlu0 0
      %770 = vperm.xlu0 %769, %v695
      %v771 = vpop.permute.xlu0 %770
      %772 = vset.pattern.permute.xlu0 0
      %773 = vperm.xlu0 %772, %v696
      %v774 = vpop.permute.xlu0 %773
      %775 = vset.pattern.permute.xlu0 0
      %776 = vperm.xlu0 %775, %v697
      %v777 = vpop.permute.xlu0 %776
      %778 = vset.pattern.permute.xlu0 0
      %779 = vperm.xlu0 %778, %v698
      %v780 = vpop.permute.xlu0 %779
      %781 = vset.pattern.permute.xlu0 0
      %782 = vperm.xlu0 %781, %v699
      %v783 = vpop.permute.xlu0 %782
      %784 = vset.pattern.permute.xlu0 0
      %785 = vperm.xlu0 %784, %v700
      %v786 = vpop.permute.xlu0 %785
      %787 = vset.pattern.permute.xlu0 0
      %788 = vperm.xlu0 %787, %v701
      %v789 = vpop.permute.xlu0 %788
      %790 = vset.pattern.permute.xlu0 0
      %791 = vperm.xlu0 %790, %v702
      %v792 = vpop.permute.xlu0 %791
      %793 = vset.pattern.permute.xlu0 0
      %794 = vperm.xlu0 %793, %v703
      %v795 = vpop.permute.xlu0 %794
      %796 = vset.pattern.permute.xlu0 0
      %797 = vperm.xlu0 %796, %v704
      %v798 = vpop.permute.xlu0 %797
      %799 = vset.pattern.permute.xlu0 0
      %800 = vperm.xlu0 %799, %v705
      %v801 = vpop.permute.xlu0 %800
      %vm802 = vcmp.eq.s32.totalorder %v288, %v708
      %vm803 = vcmp.eq.s32.totalorder %v289, %v708
      %vm804 = vcmp.eq.s32.totalorder %v288, %v711
      %vm805 = vcmp.eq.s32.totalorder %v289, %v711
      %vm806 = vcmp.eq.s32.totalorder %v288, %v714
      %vm807 = vcmp.eq.s32.totalorder %v289, %v714
      %vm808 = vcmp.eq.s32.totalorder %v288, %v717
      %vm809 = vcmp.eq.s32.totalorder %v289, %v717
      %vm810 = vcmp.eq.s32.totalorder %v288, %v720
      %vm811 = vcmp.eq.s32.totalorder %v289, %v720
      %vm812 = vcmp.eq.s32.totalorder %v288, %v723
      %vm813 = vcmp.eq.s32.totalorder %v289, %v723
      %vm814 = vcmp.eq.s32.totalorder %v288, %v726
      %vm815 = vcmp.eq.s32.totalorder %v289, %v726
      %vm816 = vcmp.eq.s32.totalorder %v288, %v729
      %vm817 = vcmp.eq.s32.totalorder %v289, %v729
      %vm818 = vcmp.eq.s32.totalorder %v288, %v732
      %vm819 = vcmp.eq.s32.totalorder %v289, %v732
      %vm820 = vcmp.eq.s32.totalorder %v288, %v735
      %vm821 = vcmp.eq.s32.totalorder %v289, %v735
      %vm822 = vcmp.eq.s32.totalorder %v288, %v738
      %vm823 = vcmp.eq.s32.totalorder %v289, %v738
      %vm824 = vcmp.eq.s32.totalorder %v288, %v741
      %vm825 = vcmp.eq.s32.totalorder %v289, %v741
      %vm826 = vcmp.eq.s32.totalorder %v288, %v744
      %vm827 = vcmp.eq.s32.totalorder %v289, %v744
      %vm828 = vcmp.eq.s32.totalorder %v288, %v747
      %vm829 = vcmp.eq.s32.totalorder %v289, %v747
      %vm830 = vcmp.eq.s32.totalorder %v288, %v750
      %vm831 = vcmp.eq.s32.totalorder %v289, %v750
      %vm832 = vcmp.eq.s32.totalorder %v288, %v753
      %vm833 = vcmp.eq.s32.totalorder %v289, %v753
      %vm834 = vcmp.eq.s32.totalorder %v288, %v756
      %vm835 = vcmp.eq.s32.totalorder %v289, %v756
      %vm836 = vcmp.eq.s32.totalorder %v288, %v759
      %vm837 = vcmp.eq.s32.totalorder %v289, %v759
      %vm838 = vcmp.eq.s32.totalorder %v288, %v762
      %vm839 = vcmp.eq.s32.totalorder %v289, %v762
      %vm840 = vcmp.eq.s32.totalorder %v288, %v765
      %vm841 = vcmp.eq.s32.totalorder %v289, %v765
      %vm842 = vcmp.eq.s32.totalorder %v288, %v768
      %vm843 = vcmp.eq.s32.totalorder %v289, %v768
      %vm844 = vcmp.eq.s32.totalorder %v288, %v771
      %vm845 = vcmp.eq.s32.totalorder %v289, %v771
      %vm846 = vcmp.eq.s32.totalorder %v288, %v774
      %vm847 = vcmp.eq.s32.totalorder %v289, %v774
      %vm848 = vcmp.eq.s32.totalorder %v288, %v777
      %vm849 = vcmp.eq.s32.totalorder %v289, %v777
      %vm850 = vcmp.eq.s32.totalorder %v288, %v780
      %vm851 = vcmp.eq.s32.totalorder %v289, %v780
      %vm852 = vcmp.eq.s32.totalorder %v288, %v783
      %vm853 = vcmp.eq.s32.totalorder %v289, %v783
      %vm854 = vcmp.eq.s32.totalorder %v288, %v786
      %vm855 = vcmp.eq.s32.totalorder %v289, %v786
      %vm856 = vcmp.eq.s32.totalorder %v288, %v789
      %vm857 = vcmp.eq.s32.totalorder %v289, %v789
      %vm858 = vcmp.eq.s32.totalorder %v288, %v792
      %vm859 = vcmp.eq.s32.totalorder %v289, %v792
      %vm860 = vcmp.eq.s32.totalorder %v288, %v795
      %vm861 = vcmp.eq.s32.totalorder %v289, %v795
      %vm862 = vcmp.eq.s32.totalorder %v288, %v798
      %vm863 = vcmp.eq.s32.totalorder %v289, %v798
      %vm864 = vcmp.eq.s32.totalorder %v288, %v801
      %vm865 = vcmp.eq.s32.totalorder %v289, %v801
      %866 = vset.pattern.permute.xlu0 1
      %867 = vperm.xlu0 %866, %v255
      %v868 = vpop.permute.xlu0 %867
      %870 = vset.pattern.permute.xlu0 1
      %871 = vperm.xlu0 %870, %v256
      %v872 = vpop.permute.xlu0 %871
      %874 = vset.pattern.permute.xlu0 1
      %875 = vperm.xlu0 %874, %v257
      %v876 = vpop.permute.xlu0 %875
      %878 = vset.pattern.permute.xlu0 1
      %879 = vperm.xlu0 %878, %v258
      %v880 = vpop.permute.xlu0 %879
      %882 = vset.pattern.permute.xlu0 1
      %883 = vperm.xlu0 %882, %v259
      %v884 = vpop.permute.xlu0 %883
      %886 = vset.pattern.permute.xlu0 1
      %887 = vperm.xlu0 %886, %v260
      %v888 = vpop.permute.xlu0 %887
      %890 = vset.pattern.permute.xlu0 1
      %891 = vperm.xlu0 %890, %v261
      %v892 = vpop.permute.xlu0 %891
      %894 = vset.pattern.permute.xlu0 1
      %895 = vperm.xlu0 %894, %v262
      %v896 = vpop.permute.xlu0 %895
      %898 = vset.pattern.permute.xlu0 1
      %899 = vperm.xlu0 %898, %v263
      %v900 = vpop.permute.xlu0 %899
      %902 = vset.pattern.permute.xlu0 1
      %903 = vperm.xlu0 %902, %v264
      %v904 = vpop.permute.xlu0 %903
      %906 = vset.pattern.permute.xlu0 1
      %907 = vperm.xlu0 %906, %v265
      %v908 = vpop.permute.xlu0 %907
      %910 = vset.pattern.permute.xlu0 1
      %911 = vperm.xlu0 %910, %v266
      %v912 = vpop.permute.xlu0 %911
      %914 = vset.pattern.permute.xlu0 1
      %915 = vperm.xlu0 %914, %v267
      %v916 = vpop.permute.xlu0 %915
      %918 = vset.pattern.permute.xlu0 1
      %919 = vperm.xlu0 %918, %v268
      %v920 = vpop.permute.xlu0 %919
      %922 = vset.pattern.permute.xlu0 1
      %923 = vperm.xlu0 %922, %v269
      %v924 = vpop.permute.xlu0 %923
      %926 = vset.pattern.permute.xlu0 1
      %927 = vperm.xlu0 %926, %v270
      %v928 = vpop.permute.xlu0 %927
      %930 = vset.pattern.permute.xlu0 1
      %931 = vperm.xlu0 %930, %v271
      %v932 = vpop.permute.xlu0 %931
      %934 = vset.pattern.permute.xlu0 1
      %935 = vperm.xlu0 %934, %v272
      %v936 = vpop.permute.xlu0 %935
      %938 = vset.pattern.permute.xlu0 1
      %939 = vperm.xlu0 %938, %v273
      %v940 = vpop.permute.xlu0 %939
      %942 = vset.pattern.permute.xlu0 1
      %943 = vperm.xlu0 %942, %v274
      %v944 = vpop.permute.xlu0 %943
      %946 = vset.pattern.permute.xlu0 1
      %947 = vperm.xlu0 %946, %v275
      %v948 = vpop.permute.xlu0 %947
      %950 = vset.pattern.permute.xlu0 1
      %951 = vperm.xlu0 %950, %v276
      %v952 = vpop.permute.xlu0 %951
      %954 = vset.pattern.permute.xlu0 1
      %955 = vperm.xlu0 %954, %v277
      %v956 = vpop.permute.xlu0 %955
      %958 = vset.pattern.permute.xlu0 1
      %959 = vperm.xlu0 %958, %v278
      %v960 = vpop.permute.xlu0 %959
      %962 = vset.pattern.permute.xlu0 1
      %963 = vperm.xlu0 %962, %v279
      %v964 = vpop.permute.xlu0 %963
      %966 = vset.pattern.permute.xlu0 1
      %967 = vperm.xlu0 %966, %v280
      %v968 = vpop.permute.xlu0 %967
      %970 = vset.pattern.permute.xlu0 1
      %971 = vperm.xlu0 %970, %v281
      %v972 = vpop.permute.xlu0 %971
      %974 = vset.pattern.permute.xlu0 1
      %975 = vperm.xlu0 %974, %v282
      %v976 = vpop.permute.xlu0 %975
      %978 = vset.pattern.permute.xlu0 1
      %979 = vperm.xlu0 %978, %v283
      %v980 = vpop.permute.xlu0 %979
      %982 = vset.pattern.permute.xlu0 1
      %983 = vperm.xlu0 %982, %v284
      %v984 = vpop.permute.xlu0 %983
      %986 = vset.pattern.permute.xlu0 1
      %987 = vperm.xlu0 %986, %v285
      %v988 = vpop.permute.xlu0 %987
      %990 = vset.pattern.permute.xlu0 1
      %991 = vperm.xlu0 %990, %v286
      %v992 = vpop.permute.xlu0 %991
      %v994 = vsel %vm802, %v868, 0.0
      %v995 = vsel %vm803, %v868, 0.0
      %v996 = vsel %vm804, %v872, 0.0
      %v997 = vsel %vm805, %v872, 0.0
      %v998 = vsel %vm806, %v876, 0.0
      %v999 = vsel %vm807, %v876, 0.0
      %v1000 = vsel %vm808, %v880, 0.0
      %v1001 = vsel %vm809, %v880, 0.0
      %v1002 = vsel %vm810, %v884, 0.0
      %v1003 = vsel %vm811, %v884, 0.0
      %v1004 = vsel %vm812, %v888, 0.0
      %v1005 = vsel %vm813, %v888, 0.0
      %v1006 = vsel %vm814, %v892, 0.0
      %v1007 = vsel %vm815, %v892, 0.0
      %v1008 = vsel %vm816, %v896, 0.0
      %v1009 = vsel %vm817, %v896, 0.0
      %v1010 = vsel %vm818, %v900, 0.0
      %v1011 = vsel %vm819, %v900, 0.0
      %v1012 = vsel %vm820, %v904, 0.0
      %v1013 = vsel %vm821, %v904, 0.0
      %v1014 = vsel %vm822, %v908, 0.0
      %v1015 = vsel %vm823, %v908, 0.0
      %v1016 = vsel %vm824, %v912, 0.0
      %v1017 = vsel %vm825, %v912, 0.0
      %v1018 = vsel %vm826, %v916, 0.0
      %v1019 = vsel %vm827, %v916, 0.0
      %v1020 = vsel %vm828, %v920, 0.0
      %v1021 = vsel %vm829, %v920, 0.0
      %v1022 = vsel %vm830, %v924, 0.0
      %v1023 = vsel %vm831, %v924, 0.0
      %v1024 = vsel %vm832, %v928, 0.0
      %v1025 = vsel %vm833, %v928, 0.0
      %v1026 = vsel %vm834, %v932, 0.0
      %v1027 = vsel %vm835, %v932, 0.0
      %v1028 = vsel %vm836, %v936, 0.0
      %v1029 = vsel %vm837, %v936, 0.0
      %v1030 = vsel %vm838, %v940, 0.0
      %v1031 = vsel %vm839, %v940, 0.0
      %v1032 = vsel %vm840, %v944, 0.0
      %v1033 = vsel %vm841, %v944, 0.0
      %v1034 = vsel %vm842, %v948, 0.0
      %v1035 = vsel %vm843, %v948, 0.0
      %v1036 = vsel %vm844, %v952, 0.0
      %v1037 = vsel %vm845, %v952, 0.0
      %v1038 = vsel %vm846, %v956, 0.0
      %v1039 = vsel %vm847, %v956, 0.0
      %v1040 = vsel %vm848, %v960, 0.0
      %v1041 = vsel %vm849, %v960, 0.0
      %v1042 = vsel %vm850, %v964, 0.0
      %v1043 = vsel %vm851, %v964, 0.0
      %v1044 = vsel %vm852, %v968, 0.0
      %v1045 = vsel %vm853, %v968, 0.0
      %v1046 = vsel %vm854, %v972, 0.0
      %v1047 = vsel %vm855, %v972, 0.0
      %v1048 = vsel %vm856, %v976, 0.0
      %v1049 = vsel %vm857, %v976, 0.0
      %v1050 = vsel %vm858, %v980, 0.0
      %v1051 = vsel %vm859, %v980, 0.0
      %v1052 = vsel %vm860, %v984, 0.0
      %v1053 = vsel %vm861, %v984, 0.0
      %v1054 = vsel %vm862, %v988, 0.0
      %v1055 = vsel %vm863, %v988, 0.0
      %v1056 = vsel %vm864, %v992, 0.0
      %v1057 = vsel %vm865, %v992, 0.0
      %v1058 = vadd.f32 %v610, %v994
      %v1059 = vadd.f32 %v611, %v995
      %v1060 = vadd.f32 %v612, %v996
      %v1061 = vadd.f32 %v613, %v997
      %v1062 = vadd.f32 %v614, %v998
      %v1063 = vadd.f32 %v615, %v999
      %v1064 = vadd.f32 %v616, %v1000
      %v1065 = vadd.f32 %v617, %v1001
      %v1066 = vadd.f32 %v618, %v1002
      %v1067 = vadd.f32 %v619, %v1003
      %v1068 = vadd.f32 %v620, %v1004
      %v1069 = vadd.f32 %v621, %v1005
      %v1070 = vadd.f32 %v622, %v1006
      %v1071 = vadd.f32 %v623, %v1007
      %v1072 = vadd.f32 %v624, %v1008
      %v1073 = vadd.f32 %v625, %v1009
      %v1074 = vadd.f32 %v626, %v1010
      %v1075 = vadd.f32 %v627, %v1011
      %v1076 = vadd.f32 %v628, %v1012
      %v1077 = vadd.f32 %v629, %v1013
      %v1078 = vadd.f32 %v630, %v1014
      %v1079 = vadd.f32 %v631, %v1015
      %v1080 = vadd.f32 %v632, %v1016
      %v1081 = vadd.f32 %v633, %v1017
      %v1082 = vadd.f32 %v634, %v1018
      %v1083 = vadd.f32 %v635, %v1019
      %v1084 = vadd.f32 %v636, %v1020
      %v1085 = vadd.f32 %v637, %v1021
      %v1086 = vadd.f32 %v638, %v1022
      %v1087 = vadd.f32 %v639, %v1023
      %v1088 = vadd.f32 %v640, %v1024
      %v1089 = vadd.f32 %v641, %v1025
      %v1090 = vadd.f32 %v642, %v1026
      %v1091 = vadd.f32 %v643, %v1027
      %v1092 = vadd.f32 %v644, %v1028
      %v1093 = vadd.f32 %v645, %v1029
      %v1094 = vadd.f32 %v646, %v1030
      %v1095 = vadd.f32 %v647, %v1031
      %v1096 = vadd.f32 %v648, %v1032
      %v1097 = vadd.f32 %v649, %v1033
      %v1098 = vadd.f32 %v650, %v1034
      %v1099 = vadd.f32 %v651, %v1035
      %v1100 = vadd.f32 %v652, %v1036
      %v1101 = vadd.f32 %v653, %v1037
      %v1102 = vadd.f32 %v654, %v1038
      %v1103 = vadd.f32 %v655, %v1039
      %v1104 = vadd.f32 %v656, %v1040
      %v1105 = vadd.f32 %v657, %v1041
      %v1106 = vadd.f32 %v658, %v1042
      %v1107 = vadd.f32 %v659, %v1043
      %v1108 = vadd.f32 %v660, %v1044
      %v1109 = vadd.f32 %v661, %v1045
      %v1110 = vadd.f32 %v662, %v1046
      %v1111 = vadd.f32 %v663, %v1047
      %v1112 = vadd.f32 %v664, %v1048
      %v1113 = vadd.f32 %v665, %v1049
      %v1114 = vadd.f32 %v666, %v1050
      %v1115 = vadd.f32 %v667, %v1051
      %v1116 = vadd.f32 %v668, %v1052
      %v1117 = vadd.f32 %v669, %v1053
      %v1118 = vadd.f32 %v670, %v1054
      %v1119 = vadd.f32 %v671, %v1055
      %v1120 = vadd.f32 %v672, %v1056
      %v1121 = vadd.f32 %v673, %v1057
      %v1122 = vadd.s32 %v223, 16
      %v1123 = vadd.s32 %v224, 16
      %v1124 = vadd.s32 %v225, 16
      %v1125 = vadd.s32 %v226, 16
      %v1126 = vadd.s32 %v227, 16
      %v1127 = vadd.s32 %v228, 16
      %v1128 = vadd.s32 %v229, 16
      %v1129 = vadd.s32 %v230, 16
      %v1130 = vadd.s32 %v231, 16
      %v1131 = vadd.s32 %v232, 16
      %v1132 = vadd.s32 %v233, 16
      %v1133 = vadd.s32 %v234, 16
      %v1134 = vadd.s32 %v235, 16
      %v1135 = vadd.s32 %v236, 16
      %v1136 = vadd.s32 %v237, 16
      %v1137 = vadd.s32 %v238, 16
      %v1138 = vadd.s32 %v239, 16
      %v1139 = vadd.s32 %v240, 16
      %v1140 = vadd.s32 %v241, 16
      %v1141 = vadd.s32 %v242, 16
      %v1142 = vadd.s32 %v243, 16
      %v1143 = vadd.s32 %v244, 16
      %v1144 = vadd.s32 %v245, 16
      %v1145 = vadd.s32 %v246, 16
      %v1146 = vadd.s32 %v247, 16
      %v1147 = vadd.s32 %v248, 16
      %v1148 = vadd.s32 %v249, 16
      %v1149 = vadd.s32 %v250, 16
      %v1150 = vadd.s32 %v251, 16
      %v1151 = vadd.s32 %v252, 16
      %v1152 = vadd.s32 %v253, 16
      %v1153 = vadd.s32 %v254, 16
      %1154 = vset.pattern.permute.xlu0 0
      %1155 = vperm.xlu0 %1154, %v1122
      %v1156 = vpop.permute.xlu0 %1155
      %1157 = vset.pattern.permute.xlu0 0
      %1158 = vperm.xlu0 %1157, %v1123
      %v1159 = vpop.permute.xlu0 %1158
      %1160 = vset.pattern.permute.xlu0 0
      %1161 = vperm.xlu0 %1160, %v1124
      %v1162 = vpop.permute.xlu0 %1161
      %1163 = vset.pattern.permute.xlu0 0
      %1164 = vperm.xlu0 %1163, %v1125
      %v1165 = vpop.permute.xlu0 %1164
      %1166 = vset.pattern.permute.xlu0 0
      %1167 = vperm.xlu0 %1166, %v1126
      %v1168 = vpop.permute.xlu0 %1167
      %1169 = vset.pattern.permute.xlu0 0
      %1170 = vperm.xlu0 %1169, %v1127
      %v1171 = vpop.permute.xlu0 %1170
      %1172 = vset.pattern.permute.xlu0 0
      %1173 = vperm.xlu0 %1172, %v1128
      %v1174 = vpop.permute.xlu0 %1173
      %1175 = vset.pattern.permute.xlu0 0
      %1176 = vperm.xlu0 %1175, %v1129
      %v1177 = vpop.permute.xlu0 %1176
      %1178 = vset.pattern.permute.xlu0 0
      %1179 = vperm.xlu0 %1178, %v1130
      %v1180 = vpop.permute.xlu0 %1179
      %1181 = vset.pattern.permute.xlu0 0
      %1182 = vperm.xlu0 %1181, %v1131
      %v1183 = vpop.permute.xlu0 %1182
      %1184 = vset.pattern.permute.xlu0 0
      %1185 = vperm.xlu0 %1184, %v1132
      %v1186 = vpop.permute.xlu0 %1185
      %1187 = vset.pattern.permute.xlu0 0
      %1188 = vperm.xlu0 %1187, %v1133
      %v1189 = vpop.permute.xlu0 %1188
      %1190 = vset.pattern.permute.xlu0 0
      %1191 = vperm.xlu0 %1190, %v1134
      %v1192 = vpop.permute.xlu0 %1191
      %1193 = vset.pattern.permute.xlu0 0
      %1194 = vperm.xlu0 %1193, %v1135
      %v1195 = vpop.permute.xlu0 %1194
      %1196 = vset.pattern.permute.xlu0 0
      %1197 = vperm.xlu0 %1196, %v1136
      %v1198 = vpop.permute.xlu0 %1197
      %1199 = vset.pattern.permute.xlu0 0
      %1200 = vperm.xlu0 %1199, %v1137
      %v1201 = vpop.permute.xlu0 %1200
      %1202 = vset.pattern.permute.xlu0 0
      %1203 = vperm.xlu0 %1202, %v1138
      %v1204 = vpop.permute.xlu0 %1203
      %1205 = vset.pattern.permute.xlu0 0
      %1206 = vperm.xlu0 %1205, %v1139
      %v1207 = vpop.permute.xlu0 %1206
      %1208 = vset.pattern.permute.xlu0 0
      %1209 = vperm.xlu0 %1208, %v1140
      %v1210 = vpop.permute.xlu0 %1209
      %1211 = vset.pattern.permute.xlu0 0
      %1212 = vperm.xlu0 %1211, %v1141
      %v1213 = vpop.permute.xlu0 %1212
      %1214 = vset.pattern.permute.xlu0 0
      %1215 = vperm.xlu0 %1214, %v1142
      %v1216 = vpop.permute.xlu0 %1215
      %1217 = vset.pattern.permute.xlu0 0
      %1218 = vperm.xlu0 %1217, %v1143
      %v1219 = vpop.permute.xlu0 %1218
      %1220 = vset.pattern.permute.xlu0 0
      %1221 = vperm.xlu0 %1220, %v1144
      %v1222 = vpop.permute.xlu0 %1221
      %1223 = vset.pattern.permute.xlu0 0
      %1224 = vperm.xlu0 %1223, %v1145
      %v1225 = vpop.permute.xlu0 %1224
      %1226 = vset.pattern.permute.xlu0 0
      %1227 = vperm.xlu0 %1226, %v1146
      %v1228 = vpop.permute.xlu0 %1227
      %1229 = vset.pattern.permute.xlu0 0
      %1230 = vperm.xlu0 %1229, %v1147
      %v1231 = vpop.permute.xlu0 %1230
      %1232 = vset.pattern.permute.xlu0 0
      %1233 = vperm.xlu0 %1232, %v1148
      %v1234 = vpop.permute.xlu0 %1233
      %1235 = vset.pattern.permute.xlu0 0
      %1236 = vperm.xlu0 %1235, %v1149
      %v1237 = vpop.permute.xlu0 %1236
      %1238 = vset.pattern.permute.xlu0 0
      %1239 = vperm.xlu0 %1238, %v1150
      %v1240 = vpop.permute.xlu0 %1239
      %1241 = vset.pattern.permute.xlu0 0
      %1242 = vperm.xlu0 %1241, %v1151
      %v1243 = vpop.permute.xlu0 %1242
      %1244 = vset.pattern.permute.xlu0 0
      %1245 = vperm.xlu0 %1244, %v1152
      %v1246 = vpop.permute.xlu0 %1245
      %1247 = vset.pattern.permute.xlu0 0
      %1248 = vperm.xlu0 %1247, %v1153
      %v1249 = vpop.permute.xlu0 %1248
      %vm1250 = vcmp.eq.s32.totalorder %v288, %v1156
      %vm1251 = vcmp.eq.s32.totalorder %v289, %v1156
      %vm1252 = vcmp.eq.s32.totalorder %v288, %v1159
      %vm1253 = vcmp.eq.s32.totalorder %v289, %v1159
      %vm1254 = vcmp.eq.s32.totalorder %v288, %v1162
      %vm1255 = vcmp.eq.s32.totalorder %v289, %v1162
      %vm1256 = vcmp.eq.s32.totalorder %v288, %v1165
      %vm1257 = vcmp.eq.s32.totalorder %v289, %v1165
      %vm1258 = vcmp.eq.s32.totalorder %v288, %v1168
      %vm1259 = vcmp.eq.s32.totalorder %v289, %v1168
      %vm1260 = vcmp.eq.s32.totalorder %v288, %v1171
      %vm1261 = vcmp.eq.s32.totalorder %v289, %v1171
      %vm1262 = vcmp.eq.s32.totalorder %v288, %v1174
      %vm1263 = vcmp.eq.s32.totalorder %v289, %v1174
      %vm1264 = vcmp.eq.s32.totalorder %v288, %v1177
      %vm1265 = vcmp.eq.s32.totalorder %v289, %v1177
      %vm1266 = vcmp.eq.s32.totalorder %v288, %v1180
      %vm1267 = vcmp.eq.s32.totalorder %v289, %v1180
      %vm1268 = vcmp.eq.s32.totalorder %v288, %v1183
      %vm1269 = vcmp.eq.s32.totalorder %v289, %v1183
      %vm1270 = vcmp.eq.s32.totalorder %v288, %v1186
      %vm1271 = vcmp.eq.s32.totalorder %v289, %v1186
      %vm1272 = vcmp.eq.s32.totalorder %v288, %v1189
      %vm1273 = vcmp.eq.s32.totalorder %v289, %v1189
      %vm1274 = vcmp.eq.s32.totalorder %v288, %v1192
      %vm1275 = vcmp.eq.s32.totalorder %v289, %v1192
      %vm1276 = vcmp.eq.s32.totalorder %v288, %v1195
      %vm1277 = vcmp.eq.s32.totalorder %v289, %v1195
      %vm1278 = vcmp.eq.s32.totalorder %v288, %v1198
      %vm1279 = vcmp.eq.s32.totalorder %v289, %v1198
      %vm1280 = vcmp.eq.s32.totalorder %v288, %v1201
      %vm1281 = vcmp.eq.s32.totalorder %v289, %v1201
      %vm1282 = vcmp.eq.s32.totalorder %v288, %v1204
      %vm1283 = vcmp.eq.s32.totalorder %v289, %v1204
      %vm1284 = vcmp.eq.s32.totalorder %v288, %v1207
      %vm1285 = vcmp.eq.s32.totalorder %v289, %v1207
      %vm1286 = vcmp.eq.s32.totalorder %v288, %v1210
      %vm1287 = vcmp.eq.s32.totalorder %v289, %v1210
      %vm1288 = vcmp.eq.s32.totalorder %v288, %v1213
      %vm1289 = vcmp.eq.s32.totalorder %v289, %v1213
      %vm1290 = vcmp.eq.s32.totalorder %v288, %v1216
      %vm1291 = vcmp.eq.s32.totalorder %v289, %v1216
      %vm1292 = vcmp.eq.s32.totalorder %v288, %v1219
      %vm1293 = vcmp.eq.s32.totalorder %v289, %v1219
      %vm1294 = vcmp.eq.s32.totalorder %v288, %v1222
      %vm1295 = vcmp.eq.s32.totalorder %v289, %v1222
      %vm1296 = vcmp.eq.s32.totalorder %v288, %v1225
      %vm1297 = vcmp.eq.s32.totalorder %v289, %v1225
      %vm1298 = vcmp.eq.s32.totalorder %v288, %v1228
      %vm1299 = vcmp.eq.s32.totalorder %v289, %v1228
      %vm1300 = vcmp.eq.s32.totalorder %v288, %v1231
      %vm1301 = vcmp.eq.s32.totalorder %v289, %v1231
      %vm1302 = vcmp.eq.s32.totalorder %v288, %v1234
      %vm1303 = vcmp.eq.s32.totalorder %v289, %v1234
      %vm1304 = vcmp.eq.s32.totalorder %v288, %v1237
      %vm1305 = vcmp.eq.s32.totalorder %v289, %v1237
      %vm1306 = vcmp.eq.s32.totalorder %v288, %v1240
      %vm1307 = vcmp.eq.s32.totalorder %v289, %v1240
      %vm1308 = vcmp.eq.s32.totalorder %v288, %v1243
      %vm1309 = vcmp.eq.s32.totalorder %v289, %v1243
      %vm1310 = vcmp.eq.s32.totalorder %v288, %v1246
      %vm1311 = vcmp.eq.s32.totalorder %v289, %v1246
      %vm1312 = vcmp.eq.s32.totalorder %v288, %v1249
      %vm1313 = vcmp.eq.s32.totalorder %v289, %v1249
      %1314 = vset.pattern.permute.xlu0 2
      %1315 = vperm.xlu0 %1314, %v255
      %v1316 = vpop.permute.xlu0 %1315
      %1318 = vset.pattern.permute.xlu0 2
      %1319 = vperm.xlu0 %1318, %v256
      %v1320 = vpop.permute.xlu0 %1319
      %1322 = vset.pattern.permute.xlu0 2
      %1323 = vperm.xlu0 %1322, %v257
      %v1324 = vpop.permute.xlu0 %1323
      %1326 = vset.pattern.permute.xlu0 2
      %1327 = vperm.xlu0 %1326, %v258
      %v1328 = vpop.permute.xlu0 %1327
      %1330 = vset.pattern.permute.xlu0 2
      %1331 = vperm.xlu0 %1330, %v259
      %v1332 = vpop.permute.xlu0 %1331
      %1334 = vset.pattern.permute.xlu0 2
      %1335 = vperm.xlu0 %1334, %v260
      %v1336 = vpop.permute.xlu0 %1335
      %1338 = vset.pattern.permute.xlu0 2
      %1339 = vperm.xlu0 %1338, %v261
      %v1340 = vpop.permute.xlu0 %1339
      %1342 = vset.pattern.permute.xlu0 2
      %1343 = vperm.xlu0 %1342, %v262
      %v1344 = vpop.permute.xlu0 %1343
      %1346 = vset.pattern.permute.xlu0 2
      %1347 = vperm.xlu0 %1346, %v263
      %v1348 = vpop.permute.xlu0 %1347
      %1350 = vset.pattern.permute.xlu0 2
      %1351 = vperm.xlu0 %1350, %v264
      %v1352 = vpop.permute.xlu0 %1351
      %1354 = vset.pattern.permute.xlu0 2
      %1355 = vperm.xlu0 %1354, %v265
      %v1356 = vpop.permute.xlu0 %1355
      %1358 = vset.pattern.permute.xlu0 2
      %1359 = vperm.xlu0 %1358, %v266
      %v1360 = vpop.permute.xlu0 %1359
      %1362 = vset.pattern.permute.xlu0 2
      %1363 = vperm.xlu0 %1362, %v267
      %v1364 = vpop.permute.xlu0 %1363
      %1366 = vset.pattern.permute.xlu0 2
      %1367 = vperm.xlu0 %1366, %v268
      %v1368 = vpop.permute.xlu0 %1367
      %1370 = vset.pattern.permute.xlu0 2
      %1371 = vperm.xlu0 %1370, %v269
      %v1372 = vpop.permute.xlu0 %1371
      %1374 = vset.pattern.permute.xlu0 2
      %1375 = vperm.xlu0 %1374, %v270
      %v1376 = vpop.permute.xlu0 %1375
      %1378 = vset.pattern.permute.xlu0 2
      %1379 = vperm.xlu0 %1378, %v271
      %v1380 = vpop.permute.xlu0 %1379
      %1382 = vset.pattern.permute.xlu0 2
      %1383 = vperm.xlu0 %1382, %v272
      %v1384 = vpop.permute.xlu0 %1383
      %1386 = vset.pattern.permute.xlu0 2
      %1387 = vperm.xlu0 %1386, %v273
      %v1388 = vpop.permute.xlu0 %1387
      %1390 = vset.pattern.permute.xlu0 2
      %1391 = vperm.xlu0 %1390, %v274
      %v1392 = vpop.permute.xlu0 %1391
      %1394 = vset.pattern.permute.xlu0 2
      %1395 = vperm.xlu0 %1394, %v275
      %v1396 = vpop.permute.xlu0 %1395
      %1398 = vset.pattern.permute.xlu0 2
      %1399 = vperm.xlu0 %1398, %v276
      %v1400 = vpop.permute.xlu0 %1399
      %1402 = vset.pattern.permute.xlu0 2
      %1403 = vperm.xlu0 %1402, %v277
      %v1404 = vpop.permute.xlu0 %1403
      %1406 = vset.pattern.permute.xlu0 2
      %1407 = vperm.xlu0 %1406, %v278
      %v1408 = vpop.permute.xlu0 %1407
      %1410 = vset.pattern.permute.xlu0 2
      %1411 = vperm.xlu0 %1410, %v279
      %v1412 = vpop.permute.xlu0 %1411
      %1414 = vset.pattern.permute.xlu0 2
      %1415 = vperm.xlu0 %1414, %v280
      %v1416 = vpop.permute.xlu0 %1415
      %1418 = vset.pattern.permute.xlu0 2
      %1419 = vperm.xlu0 %1418, %v281
      %v1420 = vpop.permute.xlu0 %1419
      %1422 = vset.pattern.permute.xlu0 2
      %1423 = vperm.xlu0 %1422, %v282
      %v1424 = vpop.permute.xlu0 %1423
      %1426 = vset.pattern.permute.xlu0 2
      %1427 = vperm.xlu0 %1426, %v283
      %v1428 = vpop.permute.xlu0 %1427
      %1430 = vset.pattern.permute.xlu0 2
      %1431 = vperm.xlu0 %1430, %v284
      %v1432 = vpop.permute.xlu0 %1431
      %1434 = vset.pattern.permute.xlu0 2
      %1435 = vperm.xlu0 %1434, %v285
      %v1436 = vpop.permute.xlu0 %1435
      %1438 = vset.pattern.permute.xlu0 2
      %1439 = vperm.xlu0 %1438, %v286
      %v1440 = vpop.permute.xlu0 %1439
      %v1442 = vsel %vm1250, %v1316, 0.0
      %v1443 = vsel %vm1251, %v1316, 0.0
      %v1444 = vsel %vm1252, %v1320, 0.0
      %v1445 = vsel %vm1253, %v1320, 0.0
      %v1446 = vsel %vm1254, %v1324, 0.0
      %v1447 = vsel %vm1255, %v1324, 0.0
      %v1448 = vsel %vm1256, %v1328, 0.0
      %v1449 = vsel %vm1257, %v1328, 0.0
      %v1450 = vsel %vm1258, %v1332, 0.0
      %v1451 = vsel %vm1259, %v1332, 0.0
      %v1452 = vsel %vm1260, %v1336, 0.0
      %v1453 = vsel %vm1261, %v1336, 0.0
      %v1454 = vsel %vm1262, %v1340, 0.0
      %v1455 = vsel %vm1263, %v1340, 0.0
      %v1456 = vsel %vm1264, %v1344, 0.0
      %v1457 = vsel %vm1265, %v1344, 0.0
      %v1458 = vsel %vm1266, %v1348, 0.0
      %v1459 = vsel %vm1267, %v1348, 0.0
      %v1460 = vsel %vm1268, %v1352, 0.0
      %v1461 = vsel %vm1269, %v1352, 0.0
      %v1462 = vsel %vm1270, %v1356, 0.0
      %v1463 = vsel %vm1271, %v1356, 0.0
      %v1464 = vsel %vm1272, %v1360, 0.0
      %v1465 = vsel %vm1273, %v1360, 0.0
      %v1466 = vsel %vm1274, %v1364, 0.0
      %v1467 = vsel %vm1275, %v1364, 0.0
      %v1468 = vsel %vm1276, %v1368, 0.0
      %v1469 = vsel %vm1277, %v1368, 0.0
      %v1470 = vsel %vm1278, %v1372, 0.0
      %v1471 = vsel %vm1279, %v1372, 0.0
      %v1472 = vsel %vm1280, %v1376, 0.0
      %v1473 = vsel %vm1281, %v1376, 0.0
      %v1474 = vsel %vm1282, %v1380, 0.0
      %v1475 = vsel %vm1283, %v1380, 0.0
      %v1476 = vsel %vm1284, %v1384, 0.0
      %v1477 = vsel %vm1285, %v1384, 0.0
      %v1478 = vsel %vm1286, %v1388, 0.0
      %v1479 = vsel %vm1287, %v1388, 0.0
      %v1480 = vsel %vm1288, %v1392, 0.0
      %v1481 = vsel %vm1289, %v1392, 0.0
      %v1482 = vsel %vm1290, %v1396, 0.0
      %v1483 = vsel %vm1291, %v1396, 0.0
      %v1484 = vsel %vm1292, %v1400, 0.0
      %v1485 = vsel %vm1293, %v1400, 0.0
      %v1486 = vsel %vm1294, %v1404, 0.0
      %v1487 = vsel %vm1295, %v1404, 0.0
      %v1488 = vsel %vm1296, %v1408, 0.0
      %v1489 = vsel %vm1297, %v1408, 0.0
      %v1490 = vsel %vm1298, %v1412, 0.0
      %v1491 = vsel %vm1299, %v1412, 0.0
      %v1492 = vsel %vm1300, %v1416, 0.0
      %v1493 = vsel %vm1301, %v1416, 0.0
      %v1494 = vsel %vm1302, %v1420, 0.0
      %v1495 = vsel %vm1303, %v1420, 0.0
      %v1496 = vsel %vm1304, %v1424, 0.0
      %v1497 = vsel %vm1305, %v1424, 0.0
      %v1498 = vsel %vm1306, %v1428, 0.0
      %v1499 = vsel %vm1307, %v1428, 0.0
      %v1500 = vsel %vm1308, %v1432, 0.0
      %v1501 = vsel %vm1309, %v1432, 0.0
      %v1502 = vsel %vm1310, %v1436, 0.0
      %v1503 = vsel %vm1311, %v1436, 0.0
      %v1504 = vsel %vm1312, %v1440, 0.0
      %v1505 = vsel %vm1313, %v1440, 0.0
      %v1506 = vadd.f32 %v1058, %v1442
      %v1507 = vadd.f32 %v1059, %v1443
      %v1508 = vadd.f32 %v1060, %v1444
      %v1509 = vadd.f32 %v1061, %v1445
      %v1510 = vadd.f32 %v1062, %v1446
      %v1511 = vadd.f32 %v1063, %v1447
      %v1512 = vadd.f32 %v1064, %v1448
      %v1513 = vadd.f32 %v1065, %v1449
      %v1514 = vadd.f32 %v1066, %v1450
      %v1515 = vadd.f32 %v1067, %v1451
      %v1516 = vadd.f32 %v1068, %v1452
      %v1517 = vadd.f32 %v1069, %v1453
      %v1518 = vadd.f32 %v1070, %v1454
      %v1519 = vadd.f32 %v1071, %v1455
      %v1520 = vadd.f32 %v1072, %v1456
      %v1521 = vadd.f32 %v1073, %v1457
      %v1522 = vadd.f32 %v1074, %v1458
      %v1523 = vadd.f32 %v1075, %v1459
      %v1524 = vadd.f32 %v1076, %v1460
      %v1525 = vadd.f32 %v1077, %v1461
      %v1526 = vadd.f32 %v1078, %v1462
      %v1527 = vadd.f32 %v1079, %v1463
      %v1528 = vadd.f32 %v1080, %v1464
      %v1529 = vadd.f32 %v1081, %v1465
      %v1530 = vadd.f32 %v1082, %v1466
      %v1531 = vadd.f32 %v1083, %v1467
      %v1532 = vadd.f32 %v1084, %v1468
      %v1533 = vadd.f32 %v1085, %v1469
      %v1534 = vadd.f32 %v1086, %v1470
      %v1535 = vadd.f32 %v1087, %v1471
      %v1536 = vadd.f32 %v1088, %v1472
      %v1537 = vadd.f32 %v1089, %v1473
      %v1538 = vadd.f32 %v1090, %v1474
      %v1539 = vadd.f32 %v1091, %v1475
      %v1540 = vadd.f32 %v1092, %v1476
      %v1541 = vadd.f32 %v1093, %v1477
      %v1542 = vadd.f32 %v1094, %v1478
      %v1543 = vadd.f32 %v1095, %v1479
      %v1544 = vadd.f32 %v1096, %v1480
      %v1545 = vadd.f32 %v1097, %v1481
      %v1546 = vadd.f32 %v1098, %v1482
      %v1547 = vadd.f32 %v1099, %v1483
      %v1548 = vadd.f32 %v1100, %v1484
      %v1549 = vadd.f32 %v1101, %v1485
      %v1550 = vadd.f32 %v1102, %v1486
      %v1551 = vadd.f32 %v1103, %v1487
      %v1552 = vadd.f32 %v1104, %v1488
      %v1553 = vadd.f32 %v1105, %v1489
      %v1554 = vadd.f32 %v1106, %v1490
      %v1555 = vadd.f32 %v1107, %v1491
      %v1556 = vadd.f32 %v1108, %v1492
      %v1557 = vadd.f32 %v1109, %v1493
      %v1558 = vadd.f32 %v1110, %v1494
      %v1559 = vadd.f32 %v1111, %v1495
      %v1560 = vadd.f32 %v1112, %v1496
      %v1561 = vadd.f32 %v1113, %v1497
      %v1562 = vadd.f32 %v1114, %v1498
      %v1563 = vadd.f32 %v1115, %v1499
      %v1564 = vadd.f32 %v1116, %v1500
      %v1565 = vadd.f32 %v1117, %v1501
      %v1566 = vadd.f32 %v1118, %v1502
      %v1567 = vadd.f32 %v1119, %v1503
      %v1568 = vadd.f32 %v1120, %v1504
      %v1569 = vadd.f32 %v1121, %v1505
      %v1570 = vadd.s32 %v1122, 1
      %v1571 = vadd.s32 %v1123, 1
      %v1572 = vadd.s32 %v1124, 1
      %v1573 = vadd.s32 %v1125, 1
      %v1574 = vadd.s32 %v1126, 1
      %v1575 = vadd.s32 %v1127, 1
      %v1576 = vadd.s32 %v1128, 1
      %v1577 = vadd.s32 %v1129, 1
      %v1578 = vadd.s32 %v1130, 1
      %v1579 = vadd.s32 %v1131, 1
      %v1580 = vadd.s32 %v1132, 1
      %v1581 = vadd.s32 %v1133, 1
      %v1582 = vadd.s32 %v1134, 1
      %v1583 = vadd.s32 %v1135, 1
      %v1584 = vadd.s32 %v1136, 1
      %v1585 = vadd.s32 %v1137, 1
      %v1586 = vadd.s32 %v1138, 1
      %v1587 = vadd.s32 %v1139, 1
      %v1588 = vadd.s32 %v1140, 1
      %v1589 = vadd.s32 %v1141, 1
      %v1590 = vadd.s32 %v1142, 1
      %v1591 = vadd.s32 %v1143, 1
      %v1592 = vadd.s32 %v1144, 1
      %v1593 = vadd.s32 %v1145, 1
      %v1594 = vadd.s32 %v1146, 1
      %v1595 = vadd.s32 %v1147, 1
      %v1596 = vadd.s32 %v1148, 1
      %v1597 = vadd.s32 %v1149, 1
      %v1598 = vadd.s32 %v1150, 1
      %v1599 = vadd.s32 %v1151, 1
      %v1600 = vadd.s32 %v1152, 1
      %v1601 = vadd.s32 %v1153, 1
      %1602 = vset.pattern.permute.xlu0 0
      %1603 = vperm.xlu0 %1602, %v1570
      %v1604 = vpop.permute.xlu0 %1603
      %1605 = vset.pattern.permute.xlu0 0
      %1606 = vperm.xlu0 %1605, %v1571
      %v1607 = vpop.permute.xlu0 %1606
      %1608 = vset.pattern.permute.xlu0 0
      %1609 = vperm.xlu0 %1608, %v1572
      %v1610 = vpop.permute.xlu0 %1609
      %1611 = vset.pattern.permute.xlu0 0
      %1612 = vperm.xlu0 %1611, %v1573
      %v1613 = vpop.permute.xlu0 %1612
      %1614 = vset.pattern.permute.xlu0 0
      %1615 = vperm.xlu0 %1614, %v1574
      %v1616 = vpop.permute.xlu0 %1615
      %1617 = vset.pattern.permute.xlu0 0
      %1618 = vperm.xlu0 %1617, %v1575
      %v1619 = vpop.permute.xlu0 %1618
      %1620 = vset.pattern.permute.xlu0 0
      %1621 = vperm.xlu0 %1620, %v1576
      %v1622 = vpop.permute.xlu0 %1621
      %1623 = vset.pattern.permute.xlu0 0
      %1624 = vperm.xlu0 %1623, %v1577
      %v1625 = vpop.permute.xlu0 %1624
      %1626 = vset.pattern.permute.xlu0 0
      %1627 = vperm.xlu0 %1626, %v1578
      %v1628 = vpop.permute.xlu0 %1627
      %1629 = vset.pattern.permute.xlu0 0
      %1630 = vperm.xlu0 %1629, %v1579
      %v1631 = vpop.permute.xlu0 %1630
      %1632 = vset.pattern.permute.xlu0 0
      %1633 = vperm.xlu0 %1632, %v1580
      %v1634 = vpop.permute.xlu0 %1633
      %1635 = vset.pattern.permute.xlu0 0
      %1636 = vperm.xlu0 %1635, %v1581
      %v1637 = vpop.permute.xlu0 %1636
      %1638 = vset.pattern.permute.xlu0 0
      %1639 = vperm.xlu0 %1638, %v1582
      %v1640 = vpop.permute.xlu0 %1639
      %1641 = vset.pattern.permute.xlu0 0
      %1642 = vperm.xlu0 %1641, %v1583
      %v1643 = vpop.permute.xlu0 %1642
      %1644 = vset.pattern.permute.xlu0 0
      %1645 = vperm.xlu0 %1644, %v1584
      %v1646 = vpop.permute.xlu0 %1645
      %1647 = vset.pattern.permute.xlu0 0
      %1648 = vperm.xlu0 %1647, %v1585
      %v1649 = vpop.permute.xlu0 %1648
      %1650 = vset.pattern.permute.xlu0 0
      %1651 = vperm.xlu0 %1650, %v1586
      %v1652 = vpop.permute.xlu0 %1651
      %1653 = vset.pattern.permute.xlu0 0
      %1654 = vperm.xlu0 %1653, %v1587
      %v1655 = vpop.permute.xlu0 %1654
      %1656 = vset.pattern.permute.xlu0 0
      %1657 = vperm.xlu0 %1656, %v1588
      %v1658 = vpop.permute.xlu0 %1657
      %1659 = vset.pattern.permute.xlu0 0
      %1660 = vperm.xlu0 %1659, %v1589
      %v1661 = vpop.permute.xlu0 %1660
      %1662 = vset.pattern.permute.xlu0 0
      %1663 = vperm.xlu0 %1662, %v1590
      %v1664 = vpop.permute.xlu0 %1663
      %1665 = vset.pattern.permute.xlu0 0
      %1666 = vperm.xlu0 %1665, %v1591
      %v1667 = vpop.permute.xlu0 %1666
      %1668 = vset.pattern.permute.xlu0 0
      %1669 = vperm.xlu0 %1668, %v1592
      %v1670 = vpop.permute.xlu0 %1669
      %1671 = vset.pattern.permute.xlu0 0
      %1672 = vperm.xlu0 %1671, %v1593
      %v1673 = vpop.permute.xlu0 %1672
      %1674 = vset.pattern.permute.xlu0 0
      %1675 = vperm.xlu0 %1674, %v1594
      %v1676 = vpop.permute.xlu0 %1675
      %1677 = vset.pattern.permute.xlu0 0
      %1678 = vperm.xlu0 %1677, %v1595
      %v1679 = vpop.permute.xlu0 %1678
      %1680 = vset.pattern.permute.xlu0 0
      %1681 = vperm.xlu0 %1680, %v1596
      %v1682 = vpop.permute.xlu0 %1681
      %1683 = vset.pattern.permute.xlu0 0
      %1684 = vperm.xlu0 %1683, %v1597
      %v1685 = vpop.permute.xlu0 %1684
      %1686 = vset.pattern.permute.xlu0 0
      %1687 = vperm.xlu0 %1686, %v1598
      %v1688 = vpop.permute.xlu0 %1687
      %1689 = vset.pattern.permute.xlu0 0
      %1690 = vperm.xlu0 %1689, %v1599
      %v1691 = vpop.permute.xlu0 %1690
      %1692 = vset.pattern.permute.xlu0 0
      %1693 = vperm.xlu0 %1692, %v1600
      %v1694 = vpop.permute.xlu0 %1693
      %1695 = vset.pattern.permute.xlu0 0
      %1696 = vperm.xlu0 %1695, %v1601
      %v1697 = vpop.permute.xlu0 %1696
      %vm1698 = vcmp.eq.s32.totalorder %v288, %v1604
      %vm1699 = vcmp.eq.s32.totalorder %v289, %v1604
      %vm1700 = vcmp.eq.s32.totalorder %v288, %v1607
      %vm1701 = vcmp.eq.s32.totalorder %v289, %v1607
      %vm1702 = vcmp.eq.s32.totalorder %v288, %v1610
      %vm1703 = vcmp.eq.s32.totalorder %v289, %v1610
      %vm1704 = vcmp.eq.s32.totalorder %v288, %v1613
      %vm1705 = vcmp.eq.s32.totalorder %v289, %v1613
      %vm1706 = vcmp.eq.s32.totalorder %v288, %v1616
      %vm1707 = vcmp.eq.s32.totalorder %v289, %v1616
      %vm1708 = vcmp.eq.s32.totalorder %v288, %v1619
      %vm1709 = vcmp.eq.s32.totalorder %v289, %v1619
      %vm1710 = vcmp.eq.s32.totalorder %v288, %v1622
      %vm1711 = vcmp.eq.s32.totalorder %v289, %v1622
      %vm1712 = vcmp.eq.s32.totalorder %v288, %v1625
      %vm1713 = vcmp.eq.s32.totalorder %v289, %v1625
      %vm1714 = vcmp.eq.s32.totalorder %v288, %v1628
      %vm1715 = vcmp.eq.s32.totalorder %v289, %v1628
      %vm1716 = vcmp.eq.s32.totalorder %v288, %v1631
      %vm1717 = vcmp.eq.s32.totalorder %v289, %v1631
      %vm1718 = vcmp.eq.s32.totalorder %v288, %v1634
      %vm1719 = vcmp.eq.s32.totalorder %v289, %v1634
      %vm1720 = vcmp.eq.s32.totalorder %v288, %v1637
      %vm1721 = vcmp.eq.s32.totalorder %v289, %v1637
      %vm1722 = vcmp.eq.s32.totalorder %v288, %v1640
      %vm1723 = vcmp.eq.s32.totalorder %v289, %v1640
      %vm1724 = vcmp.eq.s32.totalorder %v288, %v1643
      %vm1725 = vcmp.eq.s32.totalorder %v289, %v1643
      %vm1726 = vcmp.eq.s32.totalorder %v288, %v1646
      %vm1727 = vcmp.eq.s32.totalorder %v289, %v1646
      %vm1728 = vcmp.eq.s32.totalorder %v288, %v1649
      %vm1729 = vcmp.eq.s32.totalorder %v289, %v1649
      %vm1730 = vcmp.eq.s32.totalorder %v288, %v1652
      %vm1731 = vcmp.eq.s32.totalorder %v289, %v1652
      %vm1732 = vcmp.eq.s32.totalorder %v288, %v1655
      %vm1733 = vcmp.eq.s32.totalorder %v289, %v1655
      %vm1734 = vcmp.eq.s32.totalorder %v288, %v1658
      %vm1735 = vcmp.eq.s32.totalorder %v289, %v1658
      %vm1736 = vcmp.eq.s32.totalorder %v288, %v1661
      %vm1737 = vcmp.eq.s32.totalorder %v289, %v1661
      %vm1738 = vcmp.eq.s32.totalorder %v288, %v1664
      %vm1739 = vcmp.eq.s32.totalorder %v289, %v1664
      %vm1740 = vcmp.eq.s32.totalorder %v288, %v1667
      %vm1741 = vcmp.eq.s32.totalorder %v289, %v1667
      %vm1742 = vcmp.eq.s32.totalorder %v288, %v1670
      %vm1743 = vcmp.eq.s32.totalorder %v289, %v1670
      %vm1744 = vcmp.eq.s32.totalorder %v288, %v1673
      %vm1745 = vcmp.eq.s32.totalorder %v289, %v1673
      %vm1746 = vcmp.eq.s32.totalorder %v288, %v1676
      %vm1747 = vcmp.eq.s32.totalorder %v289, %v1676
      %vm1748 = vcmp.eq.s32.totalorder %v288, %v1679
      %vm1749 = vcmp.eq.s32.totalorder %v289, %v1679
      %vm1750 = vcmp.eq.s32.totalorder %v288, %v1682
      %vm1751 = vcmp.eq.s32.totalorder %v289, %v1682
      %vm1752 = vcmp.eq.s32.totalorder %v288, %v1685
      %vm1753 = vcmp.eq.s32.totalorder %v289, %v1685
      %vm1754 = vcmp.eq.s32.totalorder %v288, %v1688
      %vm1755 = vcmp.eq.s32.totalorder %v289, %v1688
      %vm1756 = vcmp.eq.s32.totalorder %v288, %v1691
      %vm1757 = vcmp.eq.s32.totalorder %v289, %v1691
      %vm1758 = vcmp.eq.s32.totalorder %v288, %v1694
      %vm1759 = vcmp.eq.s32.totalorder %v289, %v1694
      %vm1760 = vcmp.eq.s32.totalorder %v288, %v1697
      %vm1761 = vcmp.eq.s32.totalorder %v289, %v1697
      %1762 = vset.pattern.permute.xlu0 3
      %1763 = vperm.xlu0 %1762, %v255
      %v1764 = vpop.permute.xlu0 %1763
      %1766 = vset.pattern.permute.xlu0 3
      %1767 = vperm.xlu0 %1766, %v256
      %v1768 = vpop.permute.xlu0 %1767
      %1770 = vset.pattern.permute.xlu0 3
      %1771 = vperm.xlu0 %1770, %v257
      %v1772 = vpop.permute.xlu0 %1771
      %1774 = vset.pattern.permute.xlu0 3
      %1775 = vperm.xlu0 %1774, %v258
      %v1776 = vpop.permute.xlu0 %1775
      %1778 = vset.pattern.permute.xlu0 3
      %1779 = vperm.xlu0 %1778, %v259
      %v1780 = vpop.permute.xlu0 %1779
      %1782 = vset.pattern.permute.xlu0 3
      %1783 = vperm.xlu0 %1782, %v260
      %v1784 = vpop.permute.xlu0 %1783
      %1786 = vset.pattern.permute.xlu0 3
      %1787 = vperm.xlu0 %1786, %v261
      %v1788 = vpop.permute.xlu0 %1787
      %1790 = vset.pattern.permute.xlu0 3
      %1791 = vperm.xlu0 %1790, %v262
      %v1792 = vpop.permute.xlu0 %1791
      %1794 = vset.pattern.permute.xlu0 3
      %1795 = vperm.xlu0 %1794, %v263
      %v1796 = vpop.permute.xlu0 %1795
      %1798 = vset.pattern.permute.xlu0 3
      %1799 = vperm.xlu0 %1798, %v264
      %v1800 = vpop.permute.xlu0 %1799
      %1802 = vset.pattern.permute.xlu0 3
      %1803 = vperm.xlu0 %1802, %v265
      %v1804 = vpop.permute.xlu0 %1803
      %1806 = vset.pattern.permute.xlu0 3
      %1807 = vperm.xlu0 %1806, %v266
      %v1808 = vpop.permute.xlu0 %1807
      %1810 = vset.pattern.permute.xlu0 3
      %1811 = vperm.xlu0 %1810, %v267
      %v1812 = vpop.permute.xlu0 %1811
      %1814 = vset.pattern.permute.xlu0 3
      %1815 = vperm.xlu0 %1814, %v268
      %v1816 = vpop.permute.xlu0 %1815
      %1818 = vset.pattern.permute.xlu0 3
      %1819 = vperm.xlu0 %1818, %v269
      %v1820 = vpop.permute.xlu0 %1819
      %1822 = vset.pattern.permute.xlu0 3
      %1823 = vperm.xlu0 %1822, %v270
      %v1824 = vpop.permute.xlu0 %1823
      %1826 = vset.pattern.permute.xlu0 3
      %1827 = vperm.xlu0 %1826, %v271
      %v1828 = vpop.permute.xlu0 %1827
      %1830 = vset.pattern.permute.xlu0 3
      %1831 = vperm.xlu0 %1830, %v272
      %v1832 = vpop.permute.xlu0 %1831
      %1834 = vset.pattern.permute.xlu0 3
      %1835 = vperm.xlu0 %1834, %v273
      %v1836 = vpop.permute.xlu0 %1835
      %1838 = vset.pattern.permute.xlu0 3
      %1839 = vperm.xlu0 %1838, %v274
      %v1840 = vpop.permute.xlu0 %1839
      %1842 = vset.pattern.permute.xlu0 3
      %1843 = vperm.xlu0 %1842, %v275
      %v1844 = vpop.permute.xlu0 %1843
      %1846 = vset.pattern.permute.xlu0 3
      %1847 = vperm.xlu0 %1846, %v276
      %v1848 = vpop.permute.xlu0 %1847
      %1850 = vset.pattern.permute.xlu0 3
      %1851 = vperm.xlu0 %1850, %v277
      %v1852 = vpop.permute.xlu0 %1851
      %1854 = vset.pattern.permute.xlu0 3
      %1855 = vperm.xlu0 %1854, %v278
      %v1856 = vpop.permute.xlu0 %1855
      %1858 = vset.pattern.permute.xlu0 3
      %1859 = vperm.xlu0 %1858, %v279
      %v1860 = vpop.permute.xlu0 %1859
      %1862 = vset.pattern.permute.xlu0 3
      %1863 = vperm.xlu0 %1862, %v280
      %v1864 = vpop.permute.xlu0 %1863
      %1866 = vset.pattern.permute.xlu0 3
      %1867 = vperm.xlu0 %1866, %v281
      %v1868 = vpop.permute.xlu0 %1867
      %1870 = vset.pattern.permute.xlu0 3
      %1871 = vperm.xlu0 %1870, %v282
      %v1872 = vpop.permute.xlu0 %1871
      %1874 = vset.pattern.permute.xlu0 3
      %1875 = vperm.xlu0 %1874, %v283
      %v1876 = vpop.permute.xlu0 %1875
      %1878 = vset.pattern.permute.xlu0 3
      %1879 = vperm.xlu0 %1878, %v284
      %v1880 = vpop.permute.xlu0 %1879
      %1882 = vset.pattern.permute.xlu0 3
      %1883 = vperm.xlu0 %1882, %v285
      %v1884 = vpop.permute.xlu0 %1883
      %1886 = vset.pattern.permute.xlu0 3
      %1887 = vperm.xlu0 %1886, %v286
      %v1888 = vpop.permute.xlu0 %1887
      %v1890 = vsel %vm1698, %v1764, 0.0
      %v1891 = vsel %vm1699, %v1764, 0.0
      %v1892 = vsel %vm1700, %v1768, 0.0
      %v1893 = vsel %vm1701, %v1768, 0.0
      %v1894 = vsel %vm1702, %v1772, 0.0
      %v1895 = vsel %vm1703, %v1772, 0.0
      %v1896 = vsel %vm1704, %v1776, 0.0
      %v1897 = vsel %vm1705, %v1776, 0.0
      %v1898 = vsel %vm1706, %v1780, 0.0
      %v1899 = vsel %vm1707, %v1780, 0.0
      %v1900 = vsel %vm1708, %v1784, 0.0
      %v1901 = vsel %vm1709, %v1784, 0.0
      %v1902 = vsel %vm1710, %v1788, 0.0
      %v1903 = vsel %vm1711, %v1788, 0.0
      %v1904 = vsel %vm1712, %v1792, 0.0
      %v1905 = vsel %vm1713, %v1792, 0.0
      %v1906 = vsel %vm1714, %v1796, 0.0
      %v1907 = vsel %vm1715, %v1796, 0.0
      %v1908 = vsel %vm1716, %v1800, 0.0
      %v1909 = vsel %vm1717, %v1800, 0.0
      %v1910 = vsel %vm1718, %v1804, 0.0
      %v1911 = vsel %vm1719, %v1804, 0.0
      %v1912 = vsel %vm1720, %v1808, 0.0
      %v1913 = vsel %vm1721, %v1808, 0.0
      %v1914 = vsel %vm1722, %v1812, 0.0
      %v1915 = vsel %vm1723, %v1812, 0.0
      %v1916 = vsel %vm1724, %v1816, 0.0
      %v1917 = vsel %vm1725, %v1816, 0.0
      %v1918 = vsel %vm1726, %v1820, 0.0
      %v1919 = vsel %vm1727, %v1820, 0.0
      %v1920 = vsel %vm1728, %v1824, 0.0
      %v1921 = vsel %vm1729, %v1824, 0.0
      %v1922 = vsel %vm1730, %v1828, 0.0
      %v1923 = vsel %vm1731, %v1828, 0.0
      %v1924 = vsel %vm1732, %v1832, 0.0
      %v1925 = vsel %vm1733, %v1832, 0.0
      %v1926 = vsel %vm1734, %v1836, 0.0
      %v1927 = vsel %vm1735, %v1836, 0.0
      %v1928 = vsel %vm1736, %v1840, 0.0
      %v1929 = vsel %vm1737, %v1840, 0.0
      %v1930 = vsel %vm1738, %v1844, 0.0
      %v1931 = vsel %vm1739, %v1844, 0.0
      %v1932 = vsel %vm1740, %v1848, 0.0
      %v1933 = vsel %vm1741, %v1848, 0.0
      %v1934 = vsel %vm1742, %v1852, 0.0
      %v1935 = vsel %vm1743, %v1852, 0.0
      %v1936 = vsel %vm1744, %v1856, 0.0
      %v1937 = vsel %vm1745, %v1856, 0.0
      %v1938 = vsel %vm1746, %v1860, 0.0
      %v1939 = vsel %vm1747, %v1860, 0.0
      %v1940 = vsel %vm1748, %v1864, 0.0
      %v1941 = vsel %vm1749, %v1864, 0.0
      %v1942 = vsel %vm1750, %v1868, 0.0
      %v1943 = vsel %vm1751, %v1868, 0.0
      %v1944 = vsel %vm1752, %v1872, 0.0
      %v1945 = vsel %vm1753, %v1872, 0.0
      %v1946 = vsel %vm1754, %v1876, 0.0
      %v1947 = vsel %vm1755, %v1876, 0.0
      %v1948 = vsel %vm1756, %v1880, 0.0
      %v1949 = vsel %vm1757, %v1880, 0.0
      %v1950 = vsel %vm1758, %v1884, 0.0
      %v1951 = vsel %vm1759, %v1884, 0.0
      %v1952 = vsel %vm1760, %v1888, 0.0
      %v1953 = vsel %vm1761, %v1888, 0.0
      %v1954 = vadd.f32 %v1506, %v1890
      %v1955 = vadd.f32 %v1507, %v1891
      %v1956 = vadd.f32 %v1508, %v1892
      %v1957 = vadd.f32 %v1509, %v1893
      %v1958 = vadd.f32 %v1510, %v1894
      %v1959 = vadd.f32 %v1511, %v1895
      %v1960 = vadd.f32 %v1512, %v1896
      %v1961 = vadd.f32 %v1513, %v1897
      %v1962 = vadd.f32 %v1514, %v1898
      %v1963 = vadd.f32 %v1515, %v1899
      %v1964 = vadd.f32 %v1516, %v1900
      %v1965 = vadd.f32 %v1517, %v1901
      %v1966 = vadd.f32 %v1518, %v1902
      %v1967 = vadd.f32 %v1519, %v1903
      %v1968 = vadd.f32 %v1520, %v1904
      %v1969 = vadd.f32 %v1521, %v1905
      %v1970 = vadd.f32 %v1522, %v1906
      %v1971 = vadd.f32 %v1523, %v1907
      %v1972 = vadd.f32 %v1524, %v1908
      %v1973 = vadd.f32 %v1525, %v1909
      %v1974 = vadd.f32 %v1526, %v1910
      %v1975 = vadd.f32 %v1527, %v1911
      %v1976 = vadd.f32 %v1528, %v1912
      %v1977 = vadd.f32 %v1529, %v1913
      %v1978 = vadd.f32 %v1530, %v1914
      %v1979 = vadd.f32 %v1531, %v1915
      %v1980 = vadd.f32 %v1532, %v1916
      %v1981 = vadd.f32 %v1533, %v1917
      %v1982 = vadd.f32 %v1534, %v1918
      %v1983 = vadd.f32 %v1535, %v1919
      %v1984 = vadd.f32 %v1536, %v1920
      %v1985 = vadd.f32 %v1537, %v1921
      %v1986 = vadd.f32 %v1538, %v1922
      %v1987 = vadd.f32 %v1539, %v1923
      %v1988 = vadd.f32 %v1540, %v1924
      %v1989 = vadd.f32 %v1541, %v1925
      %v1990 = vadd.f32 %v1542, %v1926
      %v1991 = vadd.f32 %v1543, %v1927
      %v1992 = vadd.f32 %v1544, %v1928
      %v1993 = vadd.f32 %v1545, %v1929
      %v1994 = vadd.f32 %v1546, %v1930
      %v1995 = vadd.f32 %v1547, %v1931
      %v1996 = vadd.f32 %v1548, %v1932
      %v1997 = vadd.f32 %v1549, %v1933
      %v1998 = vadd.f32 %v1550, %v1934
      %v1999 = vadd.f32 %v1551, %v1935
      %v2000 = vadd.f32 %v1552, %v1936
      %v2001 = vadd.f32 %v1553, %v1937
      %v2002 = vadd.f32 %v1554, %v1938
      %v2003 = vadd.f32 %v1555, %v1939
      %v2004 = vadd.f32 %v1556, %v1940
      %v2005 = vadd.f32 %v1557, %v1941
      %v2006 = vadd.f32 %v1558, %v1942
      %v2007 = vadd.f32 %v1559, %v1943
      %v2008 = vadd.f32 %v1560, %v1944
      %v2009 = vadd.f32 %v1561, %v1945
      %v2010 = vadd.f32 %v1562, %v1946
      %v2011 = vadd.f32 %v1563, %v1947
      %v2012 = vadd.f32 %v1564, %v1948
      %v2013 = vadd.f32 %v1565, %v1949
      %v2014 = vadd.f32 %v1566, %v1950
      %v2015 = vadd.f32 %v1567, %v1951
      %v2016 = vadd.f32 %v1568, %v1952
      %v2017 = vadd.f32 %v1569, %v1953
      %v2018 = vld [vmem:[%s2] sm:$0xff]
      %v2019 = vld [vmem:[%s2 + $0x8] sm:$0xff]
      %v2020 = vld [vmem:[%s2 + $0x10] sm:$0xff]
      %v2021 = vld [vmem:[%s2 + $0x18] sm:$0xff]
      %v2022 = vld [vmem:[%s2 + $0x20] sm:$0xff]
      %v2023 = vld [vmem:[%s2 + $0x28] sm:$0xff]
      %v2024 = vld [vmem:[%s2 + $0x30] sm:$0xff]
      %v2025 = vld [vmem:[%s2 + $0x38] sm:$0xff]
      %v2026 = vld [vmem:[%s2 + $0x40] sm:$0xff]
      %v2027 = vld [vmem:[%s2 + $0x48] sm:$0xff]
      %v2028 = vld [vmem:[%s2 + $0x50] sm:$0xff]
      %v2029 = vld [vmem:[%s2 + $0x58] sm:$0xff]
      %v2030 = vld [vmem:[%s2 + $0x60] sm:$0xff]
      %v2031 = vld [vmem:[%s2 + $0x68] sm:$0xff]
      %v2032 = vld [vmem:[%s2 + $0x70] sm:$0xff]
      %v2033 = vld [vmem:[%s2 + $0x78] sm:$0xff]
      %v2034 = vld [vmem:[%s2 + $0x80] sm:$0xff]
      %v2035 = vld [vmem:[%s2 + $0x88] sm:$0xff]
      %v2036 = vld [vmem:[%s2 + $0x90] sm:$0xff]
      %v2037 = vld [vmem:[%s2 + $0x98] sm:$0xff]
      %v2038 = vld [vmem:[%s2 + $0xa0] sm:$0xff]
      %v2039 = vld [vmem:[%s2 + $0xa8] sm:$0xff]
      %v2040 = vld [vmem:[%s2 + $0xb0] sm:$0xff]
      %v2041 = vld [vmem:[%s2 + $0xb8] sm:$0xff]
      %v2042 = vld [vmem:[%s2 + $0xc0] sm:$0xff]
      %v2043 = vld [vmem:[%s2 + $0xc8] sm:$0xff]
      %v2044 = vld [vmem:[%s2 + $0xd0] sm:$0xff]
      %v2045 = vld [vmem:[%s2 + $0xd8] sm:$0xff]
      %v2046 = vld [vmem:[%s2 + $0xe0] sm:$0xff]
      %v2047 = vld [vmem:[%s2 + $0xe8] sm:$0xff]
      %v2048 = vld [vmem:[%s2 + $0xf0] sm:$0xff]
      %v2049 = vld [vmem:[%s2 + $0xf8] sm:$0xff]
      %2050 = vmatprep.subr.mxu0 0.0
      %v2051 = vand.u32 %v2018, 4294901760
      %2052 = vmatpush1.msra.mxu0 %v2051
      %2053 = vmatprep.subr.mxu0 0.0
      %v2054 = vand.u32 %v2019, 4294901760
      %2055 = vmatpush1.msra.mxu0 %v2054
      %2056 = vmatprep.subr.mxu0 0.0
      %v2057 = vand.u32 %v2020, 4294901760
      %2058 = vmatpush1.msra.mxu0 %v2057
      %2059 = vmatprep.subr.mxu0 0.0
      %v2060 = vand.u32 %v2021, 4294901760
      %2061 = vmatpush1.msra.mxu0 %v2060
      %2062 = vmatprep.subr.mxu0 0.0
      %v2063 = vand.u32 %v2022, 4294901760
      %2064 = vmatpush1.msra.mxu0 %v2063
      %2065 = vmatprep.subr.mxu0 0.0
      %v2066 = vand.u32 %v2023, 4294901760
      %2067 = vmatpush1.msra.mxu0 %v2066
      %2068 = vmatprep.subr.mxu0 0.0
      %v2069 = vand.u32 %v2024, 4294901760
      %2070 = vmatpush1.msra.mxu0 %v2069
      %2071 = vmatprep.subr.mxu0 0.0
      %v2072 = vand.u32 %v2025, 4294901760
      %2073 = vmatpush1.msra.mxu0 %v2072
      %2074 = vmatprep.subr.mxu0 0.0
      %v2075 = vand.u32 %v2026, 4294901760
      %2076 = vmatpush1.msra.mxu0 %v2075
      %2077 = vmatprep.subr.mxu0 0.0
      %v2078 = vand.u32 %v2027, 4294901760
      %2079 = vmatpush1.msra.mxu0 %v2078
      %2080 = vmatprep.subr.mxu0 0.0
      %v2081 = vand.u32 %v2028, 4294901760
      %2082 = vmatpush1.msra.mxu0 %v2081
      %2083 = vmatprep.subr.mxu0 0.0
      %v2084 = vand.u32 %v2029, 4294901760
      %2085 = vmatpush1.msra.mxu0 %v2084
      %2086 = vmatprep.subr.mxu0 0.0
      %v2087 = vand.u32 %v2030, 4294901760
      %2088 = vmatpush1.msra.mxu0 %v2087
      %2089 = vmatprep.subr.mxu0 0.0
      %v2090 = vand.u32 %v2031, 4294901760
      %2091 = vmatpush1.msra.mxu0 %v2090
      %2092 = vmatprep.subr.mxu0 0.0
      %v2093 = vand.u32 %v2032, 4294901760
      %2094 = vmatpush1.msra.mxu0 %v2093
      %2095 = vmatprep.subr.mxu0 0.0
      %v2096 = vand.u32 %v2033, 4294901760
      %2097 = vmatpush1.msra.mxu0 %v2096
      %2098 = vmatprep.subr.mxu0 0.0
      %v2099 = vand.u32 %v2034, 4294901760
      %2100 = vmatpush1.msra.mxu0 %v2099
      %2101 = vmatprep.subr.mxu0 0.0
      %v2102 = vand.u32 %v2035, 4294901760
      %2103 = vmatpush1.msra.mxu0 %v2102
      %2104 = vmatprep.subr.mxu0 0.0
      %v2105 = vand.u32 %v2036, 4294901760
      %2106 = vmatpush1.msra.mxu0 %v2105
      %2107 = vmatprep.subr.mxu0 0.0
      %v2108 = vand.u32 %v2037, 4294901760
      %2109 = vmatpush1.msra.mxu0 %v2108
      %2110 = vmatprep.subr.mxu0 0.0
      %v2111 = vand.u32 %v2038, 4294901760
      %2112 = vmatpush1.msra.mxu0 %v2111
      %2113 = vmatprep.subr.mxu0 0.0
      %v2114 = vand.u32 %v2039, 4294901760
      %2115 = vmatpush1.msra.mxu0 %v2114
      %2116 = vmatprep.subr.mxu0 0.0
      %v2117 = vand.u32 %v2040, 4294901760
      %2118 = vmatpush1.msra.mxu0 %v2117
      %2119 = vmatprep.subr.mxu0 0.0
      %v2120 = vand.u32 %v2041, 4294901760
      %2121 = vmatpush1.msra.mxu0 %v2120
      %2122 = vmatprep.subr.mxu0 0.0
      %v2123 = vand.u32 %v2042, 4294901760
      %2124 = vmatpush1.msra.mxu0 %v2123
      %2125 = vmatprep.subr.mxu0 0.0
      %v2126 = vand.u32 %v2043, 4294901760
      %2127 = vmatpush1.msra.mxu0 %v2126
      %2128 = vmatprep.subr.mxu0 0.0
      %v2129 = vand.u32 %v2044, 4294901760
      %2130 = vmatpush1.msra.mxu0 %v2129
      %2131 = vmatprep.subr.mxu0 0.0
      %v2132 = vand.u32 %v2045, 4294901760
      %2133 = vmatpush1.msra.mxu0 %v2132
      %2134 = vmatprep.subr.mxu0 0.0
      %v2135 = vand.u32 %v2046, 4294901760
      %2136 = vmatpush1.msra.mxu0 %v2135
      %2137 = vmatprep.subr.mxu0 0.0
      %v2138 = vand.u32 %v2047, 4294901760
      %2139 = vmatpush1.msra.mxu0 %v2138
      %2140 = vmatprep.subr.mxu0 0.0
      %v2141 = vand.u32 %v2048, 4294901760
      %2142 = vmatpush1.msra.mxu0 %v2141
      %2143 = vmatprep.subr.mxu0 0.0
      %v2144 = vand.u32 %v2049, 4294901760
      %2145 = vmatpush1.msra.mxu0 %v2144
      %v2146 = vand.u32 %v1955, 4294901760
      %v2147 = vsub.f32 %v1955, %v2146
      %v2148 = vand.u32 %v2147, 4294901760
      %v2149 = vsub.f32 %v2147, %v2148
      %v2150 = vand.u32 %v2149, 4294901760
      %2151 = vmatprep.mubr.f32.mxu0 %v2150
      %v2152 = vand.u32 %v1954, 4294901760
      %v2153 = vsub.f32 %v1954, %v2152
      %v2154 = vand.u32 %v2153, 4294901760
      %v2155 = vsub.f32 %v2153, %v2154
      %v2156 = vand.u32 %v2155, 4294901760
      %2157 = vmatmul.mubr.f32.gmra.mrb[0].mxu0 %v2156
      %v2158 = vpop.f32.mrb[0].mxu0
      %v2159 = vadd.f32 0.0, %v2158
      %v2160 = vpop.f32.mrb[0].mxu0
      %v2161 = vand.u32 %v1957, 4294901760
      %v2162 = vsub.f32 %v1957, %v2161
      %v2163 = vand.u32 %v2162, 4294901760
      %v2164 = vsub.f32 %v2162, %v2163
      %v2165 = vand.u32 %v2164, 4294901760
      %2166 = vmatprep.mubr.f32.mxu0 %v2165
      %v2167 = vand.u32 %v1956, 4294901760
      %v2168 = vsub.f32 %v1956, %v2167
      %v2169 = vand.u32 %v2168, 4294901760
      %v2170 = vsub.f32 %v2168, %v2169
      %v2171 = vand.u32 %v2170, 4294901760
      %2172 = vmatmul.mubr.f32.gmra.mrb[0].mxu0 %v2171
      %v2173 = vpop.f32.mrb[0].mxu0
      %v2174 = vadd.f32 0.0, %v2173
      %v2175 = vpop.f32.mrb[0].mxu0
      %v2176 = vand.u32 %v1959, 4294901760
      %v2177 = vsub.f32 %v1959, %v2176
      %v2178 = vand.u32 %v2177, 4294901760
      %v2179 = vsub.f32 %v2177, %v2178
      %v2180 = vand.u32 %v2179, 4294901760
      %2181 = vmatprep.mubr.f32.mxu0 %v2180
      %v2182 = vand.u32 %v1958, 4294901760
      %v2183 = vsub.f32 %v1958, %v2182
      %v2184 = vand.u32 %v2183, 4294901760
      %v2185 = vsub.f32 %v2183, %v2184
      %v2186 = vand.u32 %v2185, 4294901760
      %2187 = vmatmul.mubr.f32.gmra.mrb[0].mxu0 %v2186
      %v2188 = vpop.f32.mrb[0].mxu0
      %v2189 = vadd.f32 0.0, %v2188
      %v2190 = vpop.f32.mrb[0].mxu0
      %v2191 = vand.u32 %v1961, 4294901760
      %v2192 = vsub.f32 %v1961, %v2191
      %v2193 = vand.u32 %v2192, 4294901760
      %v2194 = vsub.f32 %v2192, %v2193
      %v2195 = vand.u32 %v2194, 4294901760
      %2196 = vmatprep.mubr.f32.mxu0 %v2195
      %v2197 = vand.u32 %v1960, 4294901760
      %v2198 = vsub.f32 %v1960, %v2197
      %v2199 = vand.u32 %v2198, 4294901760
      %v2200 = vsub.f32 %v2198, %v2199
      %v2201 = vand.u32 %v2200, 4294901760
      %2202 = vmatmul.mubr.f32.gmra.mrb[0].mxu0 %v2201
      %v2203 = vpop.f32.mrb[0].mxu0
      %v2204 = vadd.f32 0.0, %v2203
      %v2205 = vpop.f32.mrb[0].mxu0
      %v2206 = vand.u32 %v1963, 4294901760
      %v2207 = vsub.f32 %v1963, %v2206
      %v2208 = vand.u32 %v2207, 4294901760
      %v2209 = vsub.f32 %v2207, %v2208
      %v2210 = vand.u32 %v2209, 4294901760
      %2211 = vmatprep.mubr.f32.mxu0 %v2210
      %v2212 = vand.u32 %v1962, 4294901760
      %v2213 = vsub.f32 %v1962, %v2212
      %v2214 = vand.u32 %v2213, 4294901760
      %v2215 = vsub.f32 %v2213, %v2214
      %v2216 = vand.u32 %v2215, 4294901760
      %2217 = vmatmul.mubr.f32.gmra.mrb[0].mxu0 %v2216
      %v2218 = vpop.f32.mrb[0].mxu0
      %v2219 = vadd.f32 0.0, %v2218
      %v2220 = vpop.f32.mrb[0].mxu0
      %v2221 = vand.u32 %v1965, 4294901760
      %v2222 = vsub.f32 %v1965, %v2221
      %v2223 = vand.u32 %v2222, 4294901760
      %v2224 = vsub.f32 %v2222, %v2223
      %v2225 = vand.u32 %v2224, 4294901760
      %2226 = vmatprep.mubr.f32.mxu0 %v2225
      %v2227 = vand.u32 %v1964, 4294901760
      %v2228 = vsub.f32 %v1964, %v2227
      %v2229 = vand.u32 %v2228, 4294901760
      %v2230 = vsub.f32 %v2228, %v2229
      %v2231 = vand.u32 %v2230, 4294901760
      %2232 = vmatmul.mubr.f32.gmra.mrb[0].mxu0 %v2231
      %v2233 = vpop.f32.mrb[0].mxu0
      %v2234 = vadd.f32 0.0, %v2233
      %v2235 = vpop.f32.mrb[0].mxu0
      %v2236 = vand.u32 %v1967, 4294901760
      %v2237 = vsub.f32 %v1967, %v2236
      %v2238 = vand.u32 %v2237, 4294901760
      %v2239 = vsub.f32 %v2237, %v2238
      %v2240 = vand.u32 %v2239, 4294901760
      %2241 = vmatprep.mubr.f32.mxu0 %v2240
      %v2242 = vand.u32 %v1966, 4294901760
      %v2243 = vsub.f32 %v1966, %v2242
      %v2244 = vand.u32 %v2243, 4294901760
      %v2245 = vsub.f32 %v2243, %v2244
      %v2246 = vand.u32 %v2245, 4294901760
      %2247 = vmatmul.mubr.f32.gmra.mrb[0].mxu0 %v2246
      %v2248 = vpop.f32.mrb[0].mxu0
      %v2249 = vadd.f32 0.0, %v2248
      %v2250 = vpop.f32.mrb[0].mxu0
      %v2251 = vand.u32 %v1969, 4294901760
      %v2252 = vsub.f32 %v1969, %v2251
      %v2253 = vand.u32 %v2252, 4294901760
      %v2254 = vsub.f32 %v2252, %v2253
      %v2255 = vand.u32 %v2254, 4294901760
      %2256 = vmatprep.mubr.f32.mxu0 %v2255
      %v2257 = vand.u32 %v1968, 4294901760
      %v2258 = vsub.f32 %v1968, %v2257
      %v2259 = vand.u32 %v2258, 4294901760
      %v2260 = vsub.f32 %v2258, %v2259
      %v2261 = vand.u32 %v2260, 4294901760
      %2262 = vmatmul.mubr.f32.gmra.mrb[0].mxu0 %v2261
      %v2263 = vpop.f32.mrb[0].mxu0
      %v2264 = vadd.f32 0.0, %v2263
      %v2265 = vpop.f32.mrb[0].mxu0
      %v2266 = vand.u32 %v1971, 4294901760
      %v2267 = vsub.f32 %v1971, %v2266
      %v2268 = vand.u32 %v2267, 4294901760
      %v2269 = vsub.f32 %v2267, %v2268
      %v2270 = vand.u32 %v2269, 4294901760
      %2271 = vmatprep.mubr.f32.mxu0 %v2270
      %v2272 = vand.u32 %v1970, 4294901760
      %v2273 = vsub.f32 %v1970, %v2272
      %v2274 = vand.u32 %v2273, 4294901760
      %v2275 = vsub.f32 %v2273, %v2274
      %v2276 = vand.u32 %v2275, 4294901760
      %2277 = vmatmul.mubr.f32.gmra.mrb[0].mxu0 %v2276
      %v2278 = vpop.f32.mrb[0].mxu0
      %v2279 = vadd.f32 0.0, %v2278
      %v2280 = vpop.f32.mrb[0].mxu0
      %v2281 = vand.u32 %v1973, 4294901760
      %v2282 = vsub.f32 %v1973, %v2281
      %v2283 = vand.u32 %v2282, 4294901760
      %v2284 = vsub.f32 %v2282, %v2283
      %v2285 = vand.u32 %v2284, 4294901760
      %2286 = vmatprep.mubr.f32.mxu0 %v2285
      %v2287 = vand.u32 %v1972, 4294901760
      %v2288 = vsub.f32 %v1972, %v2287
      %v2289 = vand.u32 %v2288, 4294901760
      %v2290 = vsub.f32 %v2288, %v2289
      %v2291 = vand.u32 %v2290, 4294901760
      %2292 = vmatmul.mubr.f32.gmra.mrb[0].mxu0 %v2291
      %v2293 = vpop.f32.mrb[0].mxu0
      %v2294 = vadd.f32 0.0, %v2293
      %v2295 = vpop.f32.mrb[0].mxu0
      %v2296 = vand.u32 %v1975, 4294901760
      %v2297 = vsub.f32 %v1975, %v2296
      %v2298 = vand.u32 %v2297, 4294901760
      %v2299 = vsub.f32 %v2297, %v2298
      %v2300 = vand.u32 %v2299, 4294901760
      %2301 = vmatprep.mubr.f32.mxu0 %v2300
      %v2302 = vand.u32 %v1974, 4294901760
      %v2303 = vsub.f32 %v1974, %v2302
      %v2304 = vand.u32 %v2303, 4294901760
      %v2305 = vsub.f32 %v2303, %v2304
      %v2306 = vand.u32 %v2305, 4294901760
      %2307 = vmatmul.mubr.f32.gmra.mrb[0].mxu0 %v2306
      %v2308 = vpop.f32.mrb[0].mxu0
      %v2309 = vadd.f32 0.0, %v2308
      %v2310 = vpop.f32.mrb[0].mxu0
      %v2311 = vand.u32 %v1977, 4294901760
      %v2312 = vsub.f32 %v1977, %v2311
      %v2313 = vand.u32 %v2312, 4294901760
      %v2314 = vsub.f32 %v2312, %v2313
      %v2315 = vand.u32 %v2314, 4294901760
      %2316 = vmatprep.mubr.f32.mxu0 %v2315
      %v2317 = vand.u32 %v1976, 4294901760
      %v2318 = vsub.f32 %v1976, %v2317
      %v2319 = vand.u32 %v2318, 4294901760
      %v2320 = vsub.f32 %v2318, %v2319
      %v2321 = vand.u32 %v2320, 4294901760
      %2322 = vmatmul.mubr.f32.gmra.mrb[0].mxu0 %v2321
      %v2323 = vpop.f32.mrb[0].mxu0
      %v2324 = vadd.f32 0.0, %v2323
      %v2325 = vpop.f32.mrb[0].mxu0
      %v2326 = vand.u32 %v1979, 4294901760
      %v2327 = vsub.f32 %v1979, %v2326
      %v2328 = vand.u32 %v2327, 4294901760
      %v2329 = vsub.f32 %v2327, %v2328
      %v2330 = vand.u32 %v2329, 4294901760
      %2331 = vmatprep.mubr.f32.mxu0 %v2330
      %v2332 = vand.u32 %v1978, 4294901760
      %v2333 = vsub.f32 %v1978, %v2332
      %v2334 = vand.u32 %v2333, 4294901760
      %v2335 = vsub.f32 %v2333, %v2334
      %v2336 = vand.u32 %v2335, 4294901760
      %2337 = vmatmul.mubr.f32.gmra.mrb[0].mxu0 %v2336
      %v2338 = vpop.f32.mrb[0].mxu0
      %v2339 = vadd.f32 0.0, %v2338
      %v2340 = vpop.f32.mrb[0].mxu0
      %v2341 = vand.u32 %v1981, 4294901760
      %v2342 = vsub.f32 %v1981, %v2341
      %v2343 = vand.u32 %v2342, 4294901760
      %v2344 = vsub.f32 %v2342, %v2343
      %v2345 = vand.u32 %v2344, 4294901760
      %2346 = vmatprep.mubr.f32.mxu0 %v2345
      %v2347 = vand.u32 %v1980, 4294901760
      %v2348 = vsub.f32 %v1980, %v2347
      %v2349 = vand.u32 %v2348, 4294901760
      %v2350 = vsub.f32 %v2348, %v2349
      %v2351 = vand.u32 %v2350, 4294901760
      %2352 = vmatmul.mubr.f32.gmra.mrb[0].mxu0 %v2351
      %v2353 = vpop.f32.mrb[0].mxu0
      %v2354 = vadd.f32 0.0, %v2353
      %v2355 = vpop.f32.mrb[0].mxu0
      %v2356 = vand.u32 %v1983, 4294901760
      %v2357 = vsub.f32 %v1983, %v2356
      %v2358 = vand.u32 %v2357, 4294901760
      %v2359 = vsub.f32 %v2357, %v2358
      %v2360 = vand.u32 %v2359, 4294901760
      %2361 = vmatprep.mubr.f32.mxu0 %v2360
      %v2362 = vand.u32 %v1982, 4294901760
      %v2363 = vsub.f32 %v1982, %v2362
      %v2364 = vand.u32 %v2363, 4294901760
      %v2365 = vsub.f32 %v2363, %v2364
      %v2366 = vand.u32 %v2365, 4294901760
      %2367 = vmatmul.mubr.f32.gmra.mrb[0].mxu0 %v2366
      %v2368 = vpop.f32.mrb[0].mxu0
      %v2369 = vadd.f32 0.0, %v2368
      %v2370 = vpop.f32.mrb[0].mxu0
      %v2371 = vand.u32 %v1985, 4294901760
      %v2372 = vsub.f32 %v1985, %v2371
      %v2373 = vand.u32 %v2372, 4294901760
      %v2374 = vsub.f32 %v2372, %v2373
      %v2375 = vand.u32 %v2374, 4294901760
      %2376 = vmatprep.mubr.f32.mxu0 %v2375
      %v2377 = vand.u32 %v1984, 4294901760
      %v2378 = vsub.f32 %v1984, %v2377
      %v2379 = vand.u32 %v2378, 4294901760
      %v2380 = vsub.f32 %v2378, %v2379
      %v2381 = vand.u32 %v2380, 4294901760
      %2382 = vmatmul.mubr.f32.gmra.mrb[0].mxu0 %v2381
      %v2383 = vpop.f32.mrb[0].mxu0
      %v2384 = vadd.f32 0.0, %v2383
      %v2385 = vpop.f32.mrb[0].mxu0
      %v2386 = vand.u32 %v1987, 4294901760
      %v2387 = vsub.f32 %v1987, %v2386
      %v2388 = vand.u32 %v2387, 4294901760
      %v2389 = vsub.f32 %v2387, %v2388
      %v2390 = vand.u32 %v2389, 4294901760
      %2391 = vmatprep.mubr.f32.mxu0 %v2390
      %v2392 = vand.u32 %v1986, 4294901760
      %v2393 = vsub.f32 %v1986, %v2392
      %v2394 = vand.u32 %v2393, 4294901760
      %v2395 = vsub.f32 %v2393, %v2394
      %v2396 = vand.u32 %v2395, 4294901760
      %2397 = vmatmul.mubr.f32.gmra.mrb[0].mxu0 %v2396
      %v2398 = vpop.f32.mrb[0].mxu0
      %v2399 = vadd.f32 0.0, %v2398
      %v2400 = vpop.f32.mrb[0].mxu0
      %v2401 = vand.u32 %v1989, 4294901760
      %v2402 = vsub.f32 %v1989, %v2401
      %v2403 = vand.u32 %v2402, 4294901760
      %v2404 = vsub.f32 %v2402, %v2403
      %v2405 = vand.u32 %v2404, 4294901760
      %2406 = vmatprep.mubr.f32.mxu0 %v2405
      %v2407 = vand.u32 %v1988, 4294901760
      %v2408 = vsub.f32 %v1988, %v2407
      %v2409 = vand.u32 %v2408, 4294901760
      %v2410 = vsub.f32 %v2408, %v2409
      %v2411 = vand.u32 %v2410, 4294901760
      %2412 = vmatmul.mubr.f32.gmra.mrb[0].mxu0 %v2411
      %v2413 = vpop.f32.mrb[0].mxu0
      %v2414 = vadd.f32 0.0, %v2413
      %v2415 = vpop.f32.mrb[0].mxu0
      %v2416 = vand.u32 %v1991, 4294901760
      %v2417 = vsub.f32 %v1991, %v2416
      %v2418 = vand.u32 %v2417, 4294901760
      %v2419 = vsub.f32 %v2417, %v2418
      %v2420 = vand.u32 %v2419, 4294901760
      %2421 = vmatprep.mubr.f32.mxu0 %v2420
      %v2422 = vand.u32 %v1990, 4294901760
      %v2423 = vsub.f32 %v1990, %v2422
      %v2424 = vand.u32 %v2423, 4294901760
      %v2425 = vsub.f32 %v2423, %v2424
      %v2426 = vand.u32 %v2425, 4294901760
      %2427 = vmatmul.mubr.f32.gmra.mrb[0].mxu0 %v2426
      %v2428 = vpop.f32.mrb[0].mxu0
      %v2429 = vadd.f32 0.0, %v2428
      %v2430 = vpop.f32.mrb[0].mxu0
      %v2431 = vand.u32 %v1993, 4294901760
      %v2432 = vsub.f32 %v1993, %v2431
      %v2433 = vand.u32 %v2432, 4294901760
      %v2434 = vsub.f32 %v2432, %v2433
      %v2435 = vand.u32 %v2434, 4294901760
      %2436 = vmatprep.mubr.f32.mxu0 %v2435
      %v2437 = vand.u32 %v1992, 4294901760
      %v2438 = vsub.f32 %v1992, %v2437
      %v2439 = vand.u32 %v2438, 4294901760
      %v2440 = vsub.f32 %v2438, %v2439
      %v2441 = vand.u32 %v2440, 4294901760
      %2442 = vmatmul.mubr.f32.gmra.mrb[0].mxu0 %v2441
      %v2443 = vpop.f32.mrb[0].mxu0
      %v2444 = vadd.f32 0.0, %v2443
      %v2445 = vpop.f32.mrb[0].mxu0
      %v2446 = vand.u32 %v1995, 4294901760
      %v2447 = vsub.f32 %v1995, %v2446
      %v2448 = vand.u32 %v2447, 4294901760
      %v2449 = vsub.f32 %v2447, %v2448
      %v2450 = vand.u32 %v2449, 4294901760
      %2451 = vmatprep.mubr.f32.mxu0 %v2450
      %v2452 = vand.u32 %v1994, 4294901760
      %v2453 = vsub.f32 %v1994, %v2452
      %v2454 = vand.u32 %v2453, 4294901760
      %v2455 = vsub.f32 %v2453, %v2454
      %v2456 = vand.u32 %v2455, 4294901760
      %2457 = vmatmul.mubr.f32.gmra.mrb[0].mxu0 %v2456
      %v2458 = vpop.f32.mrb[0].mxu0
      %v2459 = vadd.f32 0.0, %v2458
      %v2460 = vpop.f32.mrb[0].mxu0
      %v2461 = vand.u32 %v1997, 4294901760
      %v2462 = vsub.f32 %v1997, %v2461
      %v2463 = vand.u32 %v2462, 4294901760
      %v2464 = vsub.f32 %v2462, %v2463
      %v2465 = vand.u32 %v2464, 4294901760
      %2466 = vmatprep.mubr.f32.mxu0 %v2465
      %v2467 = vand.u32 %v1996, 4294901760
      %v2468 = vsub.f32 %v1996, %v2467
      %v2469 = vand.u32 %v2468, 4294901760
      %v2470 = vsub.f32 %v2468, %v2469
      %v2471 = vand.u32 %v2470, 4294901760
      %2472 = vmatmul.mubr.f32.gmra.mrb[0].mxu0 %v2471
      %v2473 = vpop.f32.mrb[0].mxu0
      %v2474 = vadd.f32 0.0, %v2473
      %v2475 = vpop.f32.mrb[0].mxu0
      %v2476 = vand.u32 %v1999, 4294901760
      %v2477 = vsub.f32 %v1999, %v2476
      %v2478 = vand.u32 %v2477, 4294901760
      %v2479 = vsub.f32 %v2477, %v2478
      %v2480 = vand.u32 %v2479, 4294901760
      %2481 = vmatprep.mubr.f32.mxu0 %v2480
      %v2482 = vand.u32 %v1998, 4294901760
      %v2483 = vsub.f32 %v1998, %v2482
      %v2484 = vand.u32 %v2483, 4294901760
      %v2485 = vsub.f32 %v2483, %v2484
      %v2486 = vand.u32 %v2485, 4294901760
      %2487 = vmatmul.mubr.f32.gmra.mrb[0].mxu0 %v2486
      %v2488 = vpop.f32.mrb[0].mxu0
      %v2489 = vadd.f32 0.0, %v2488
      %v2490 = vpop.f32.mrb[0].mxu0
      %v2491 = vand.u32 %v2001, 4294901760
      %v2492 = vsub.f32 %v2001, %v2491
      %v2493 = vand.u32 %v2492, 4294901760
      %v2494 = vsub.f32 %v2492, %v2493
      %v2495 = vand.u32 %v2494, 4294901760
      %2496 = vmatprep.mubr.f32.mxu0 %v2495
      %v2497 = vand.u32 %v2000, 4294901760
      %v2498 = vsub.f32 %v2000, %v2497
      %v2499 = vand.u32 %v2498, 4294901760
      %v2500 = vsub.f32 %v2498, %v2499
      %v2501 = vand.u32 %v2500, 4294901760
      %2502 = vmatmul.mubr.f32.gmra.mrb[0].mxu0 %v2501
      %v2503 = vpop.f32.mrb[0].mxu0
      %v2504 = vadd.f32 0.0, %v2503
      %v2505 = vpop.f32.mrb[0].mxu0
      %v2506 = vand.u32 %v2003, 4294901760
      %v2507 = vsub.f32 %v2003, %v2506
      %v2508 = vand.u32 %v2507, 4294901760
      %v2509 = vsub.f32 %v2507, %v2508
      %v2510 = vand.u32 %v2509, 4294901760
      %2511 = vmatprep.mubr.f32.mxu0 %v2510
      %v2512 = vand.u32 %v2002, 4294901760
      %v2513 = vsub.f32 %v2002, %v2512
      %v2514 = vand.u32 %v2513, 4294901760
      %v2515 = vsub.f32 %v2513, %v2514
      %v2516 = vand.u32 %v2515, 4294901760
      %2517 = vmatmul.mubr.f32.gmra.mrb[0].mxu0 %v2516
      %v2518 = vpop.f32.mrb[0].mxu0
      %v2519 = vadd.f32 0.0, %v2518
      %v2520 = vpop.f32.mrb[0].mxu0
      %v2521 = vand.u32 %v2005, 4294901760
      %v2522 = vsub.f32 %v2005, %v2521
      %v2523 = vand.u32 %v2522, 4294901760
      %v2524 = vsub.f32 %v2522, %v2523
      %v2525 = vand.u32 %v2524, 4294901760
      %2526 = vmatprep.mubr.f32.mxu0 %v2525
      %v2527 = vand.u32 %v2004, 4294901760
      %v2528 = vsub.f32 %v2004, %v2527
      %v2529 = vand.u32 %v2528, 4294901760
      %v2530 = vsub.f32 %v2528, %v2529
      %v2531 = vand.u32 %v2530, 4294901760
      %2532 = vmatmul.mubr.f32.gmra.mrb[0].mxu0 %v2531
      %v2533 = vpop.f32.mrb[0].mxu0
      %v2534 = vadd.f32 0.0, %v2533
      %v2535 = vpop.f32.mrb[0].mxu0
      %v2536 = vand.u32 %v2007, 4294901760
      %v2537 = vsub.f32 %v2007, %v2536
      %v2538 = vand.u32 %v2537, 4294901760
      %v2539 = vsub.f32 %v2537, %v2538
      %v2540 = vand.u32 %v2539, 4294901760
      %2541 = vmatprep.mubr.f32.mxu0 %v2540
      %v2542 = vand.u32 %v2006, 4294901760
      %v2543 = vsub.f32 %v2006, %v2542
      %v2544 = vand.u32 %v2543, 4294901760
      %v2545 = vsub.f32 %v2543, %v2544
      %v2546 = vand.u32 %v2545, 4294901760
      %2547 = vmatmul.mubr.f32.gmra.mrb[0].mxu0 %v2546
      %v2548 = vpop.f32.mrb[0].mxu0
      %v2549 = vadd.f32 0.0, %v2548
      %v2550 = vpop.f32.mrb[0].mxu0
      %v2551 = vand.u32 %v2009, 4294901760
      %v2552 = vsub.f32 %v2009, %v2551
      %v2553 = vand.u32 %v2552, 4294901760
      %v2554 = vsub.f32 %v2552, %v2553
      %v2555 = vand.u32 %v2554, 4294901760
      %2556 = vmatprep.mubr.f32.mxu0 %v2555
      %v2557 = vand.u32 %v2008, 4294901760
      %v2558 = vsub.f32 %v2008, %v2557
      %v2559 = vand.u32 %v2558, 4294901760
      %v2560 = vsub.f32 %v2558, %v2559
      %v2561 = vand.u32 %v2560, 4294901760
      %2562 = vmatmul.mubr.f32.gmra.mrb[0].mxu0 %v2561
      %v2563 = vpop.f32.mrb[0].mxu0
      %v2564 = vadd.f32 0.0, %v2563
      %v2565 = vpop.f32.mrb[0].mxu0
      %v2566 = vand.u32 %v2011, 4294901760
      %v2567 = vsub.f32 %v2011, %v2566
      %v2568 = vand.u32 %v2567, 4294901760
      %v2569 = vsub.f32 %v2567, %v2568
      %v2570 = vand.u32 %v2569, 4294901760
      %2571 = vmatprep.mubr.f32.mxu0 %v2570
      %v2572 = vand.u32 %v2010, 4294901760
      %v2573 = vsub.f32 %v2010, %v2572
      %v2574 = vand.u32 %v2573, 4294901760
      %v2575 = vsub.f32 %v2573, %v2574
      %v2576 = vand.u32 %v2575, 4294901760
      %2577 = vmatmul.mubr.f32.gmra.mrb[0].mxu0 %v2576
      %v2578 = vpop.f32.mrb[0].mxu0
      %v2579 = vadd.f32 0.0, %v2578
      %v2580 = vpop.f32.mrb[0].mxu0
      %v2581 = vand.u32 %v2013, 4294901760
      %v2582 = vsub.f32 %v2013, %v2581
      %v2583 = vand.u32 %v2582, 4294901760
      %v2584 = vsub.f32 %v2582, %v2583
      %v2585 = vand.u32 %v2584, 4294901760
      %2586 = vmatprep.mubr.f32.mxu0 %v2585
      %v2587 = vand.u32 %v2012, 4294901760
      %v2588 = vsub.f32 %v2012, %v2587
      %v2589 = vand.u32 %v2588, 4294901760
      %v2590 = vsub.f32 %v2588, %v2589
      %v2591 = vand.u32 %v2590, 4294901760
      %2592 = vmatmul.mubr.f32.gmra.mrb[0].mxu0 %v2591
      %v2593 = vpop.f32.mrb[0].mxu0
      %v2594 = vadd.f32 0.0, %v2593
      %v2595 = vpop.f32.mrb[0].mxu0
      %v2596 = vand.u32 %v2015, 4294901760
      %v2597 = vsub.f32 %v2015, %v2596
      %v2598 = vand.u32 %v2597, 4294901760
      %v2599 = vsub.f32 %v2597, %v2598
      %v2600 = vand.u32 %v2599, 4294901760
      %2601 = vmatprep.mubr.f32.mxu0 %v2600
      %v2602 = vand.u32 %v2014, 4294901760
      %v2603 = vsub.f32 %v2014, %v2602
      %v2604 = vand.u32 %v2603, 4294901760
      %v2605 = vsub.f32 %v2603, %v2604
      %v2606 = vand.u32 %v2605, 4294901760
      %2607 = vmatmul.mubr.f32.gmra.mrb[0].mxu0 %v2606
      %v2608 = vpop.f32.mrb[0].mxu0
      %v2609 = vadd.f32 0.0, %v2608
      %v2610 = vpop.f32.mrb[0].mxu0
      %v2611 = vand.u32 %v2017, 4294901760
      %v2612 = vsub.f32 %v2017, %v2611
      %v2613 = vand.u32 %v2612, 4294901760
      %v2614 = vsub.f32 %v2612, %v2613
      %v2615 = vand.u32 %v2614, 4294901760
      %2616 = vmatprep.mubr.f32.mxu0 %v2615
      %v2617 = vand.u32 %v2016, 4294901760
      %v2618 = vsub.f32 %v2016, %v2617
      %v2619 = vand.u32 %v2618, 4294901760
      %v2620 = vsub.f32 %v2618, %v2619
      %v2621 = vand.u32 %v2620, 4294901760
      %2622 = vmatmul.mubr.f32.gmra.mrb[0].mxu0 %v2621
      %v2623 = vpop.f32.mrb[0].mxu0
      %v2624 = vadd.f32 0.0, %v2623
      %v2625 = vpop.f32.mrb[0].mxu0
      %2626 = vdwg.mxu0
      %2627 = vmatprep.subr.mxu0 0.0
      %v2628 = vand.u32 %v2018, 4294901760
      %v2629 = vsub.f32 %v2018, %v2628
      %v2630 = vand.u32 %v2629, 4294901760
      %v2631 = vsub.f32 %v2629, %v2630
      %v2632 = vand.u32 %v2631, 4294901760
      %2633 = vmatpush1.msra.mxu0 %v2632
      %2634 = vmatprep.subr.mxu0 0.0
      %v2635 = vand.u32 %v2019, 4294901760
      %v2636 = vsub.f32 %v2019, %v2635
      %v2637 = vand.u32 %v2636, 4294901760
      %v2638 = vsub.f32 %v2636, %v2637
      %v2639 = vand.u32 %v2638, 4294901760
      %2640 = vmatpush1.msra.mxu0 %v2639
      %2641 = vmatprep.subr.mxu0 0.0
      %v2642 = vand.u32 %v2020, 4294901760
      %v2643 = vsub.f32 %v2020, %v2642
      %v2644 = vand.u32 %v2643, 4294901760
      %v2645 = vsub.f32 %v2643, %v2644
      %v2646 = vand.u32 %v2645, 4294901760
      %2647 = vmatpush1.msra.mxu0 %v2646
      %2648 = vmatprep.subr.mxu0 0.0
      %v2649 = vand.u32 %v2021, 4294901760
      %v2650 = vsub.f32 %v2021, %v2649
      %v2651 = vand.u32 %v2650, 4294901760
      %v2652 = vsub.f32 %v2650, %v2651
      %v2653 = vand.u32 %v2652, 4294901760
      %2654 = vmatpush1.msra.mxu0 %v2653
      %2655 = vmatprep.subr.mxu0 0.0
      %v2656 = vand.u32 %v2022, 4294901760
      %v2657 = vsub.f32 %v2022, %v2656
      %v2658 = vand.u32 %v2657, 4294901760
      %v2659 = vsub.f32 %v2657, %v2658
      %v2660 = vand.u32 %v2659, 4294901760
      %2661 = vmatpush1.msra.mxu0 %v2660
      %2662 = vmatprep.subr.mxu0 0.0
      %v2663 = vand.u32 %v2023, 4294901760
      %v2664 = vsub.f32 %v2023, %v2663
      %v2665 = vand.u32 %v2664, 4294901760
      %v2666 = vsub.f32 %v2664, %v2665
      %v2667 = vand.u32 %v2666, 4294901760
      %2668 = vmatpush1.msra.mxu0 %v2667
      %2669 = vmatprep.subr.mxu0 0.0
      %v2670 = vand.u32 %v2024, 4294901760
      %v2671 = vsub.f32 %v2024, %v2670
      %v2672 = vand.u32 %v2671, 4294901760
      %v2673 = vsub.f32 %v2671, %v2672
      %v2674 = vand.u32 %v2673, 4294901760
      %2675 = vmatpush1.msra.mxu0 %v2674
      %2676 = vmatprep.subr.mxu0 0.0
      %v2677 = vand.u32 %v2025, 4294901760
      %v2678 = vsub.f32 %v2025, %v2677
      %v2679 = vand.u32 %v2678, 4294901760
      %v2680 = vsub.f32 %v2678, %v2679
      %v2681 = vand.u32 %v2680, 4294901760
      %2682 = vmatpush1.msra.mxu0 %v2681
      %2683 = vmatprep.subr.mxu0 0.0
      %v2684 = vand.u32 %v2026, 4294901760
      %v2685 = vsub.f32 %v2026, %v2684
      %v2686 = vand.u32 %v2685, 4294901760
      %v2687 = vsub.f32 %v2685, %v2686
      %v2688 = vand.u32 %v2687, 4294901760
      %2689 = vmatpush1.msra.mxu0 %v2688
      %2690 = vmatprep.subr.mxu0 0.0
      %v2691 = vand.u32 %v2027, 4294901760
      %v2692 = vsub.f32 %v2027, %v2691
      %v2693 = vand.u32 %v2692, 4294901760
      %v2694 = vsub.f32 %v2692, %v2693
      %v2695 = vand.u32 %v2694, 4294901760
      %2696 = vmatpush1.msra.mxu0 %v2695
      %2697 = vmatprep.subr.mxu0 0.0
      %v2698 = vand.u32 %v2028, 4294901760
      %v2699 = vsub.f32 %v2028, %v2698
      %v2700 = vand.u32 %v2699, 4294901760
      %v2701 = vsub.f32 %v2699, %v2700
      %v2702 = vand.u32 %v2701, 4294901760
      %2703 = vmatpush1.msra.mxu0 %v2702
      %2704 = vmatprep.subr.mxu0 0.0
      %v2705 = vand.u32 %v2029, 4294901760
      %v2706 = vsub.f32 %v2029, %v2705
      %v2707 = vand.u32 %v2706, 4294901760
      %v2708 = vsub.f32 %v2706, %v2707
      %v2709 = vand.u32 %v2708, 4294901760
      %2710 = vmatpush1.msra.mxu0 %v2709
      %2711 = vmatprep.subr.mxu0 0.0
      %v2712 = vand.u32 %v2030, 4294901760
      %v2713 = vsub.f32 %v2030, %v2712
      %v2714 = vand.u32 %v2713, 4294901760
      %v2715 = vsub.f32 %v2713, %v2714
      %v2716 = vand.u32 %v2715, 4294901760
      %2717 = vmatpush1.msra.mxu0 %v2716
      %2718 = vmatprep.subr.mxu0 0.0
      %v2719 = vand.u32 %v2031, 4294901760
      %v2720 = vsub.f32 %v2031, %v2719
      %v2721 = vand.u32 %v2720, 4294901760
      %v2722 = vsub.f32 %v2720, %v2721
      %v2723 = vand.u32 %v2722, 4294901760
      %2724 = vmatpush1.msra.mxu0 %v2723
      %2725 = vmatprep.subr.mxu0 0.0
      %v2726 = vand.u32 %v2032, 4294901760
      %v2727 = vsub.f32 %v2032, %v2726
      %v2728 = vand.u32 %v2727, 4294901760
      %v2729 = vsub.f32 %v2727, %v2728
      %v2730 = vand.u32 %v2729, 4294901760
      %2731 = vmatpush1.msra.mxu0 %v2730
      %2732 = vmatprep.subr.mxu0 0.0
      %v2733 = vand.u32 %v2033, 4294901760
      %v2734 = vsub.f32 %v2033, %v2733
      %v2735 = vand.u32 %v2734, 4294901760
      %v2736 = vsub.f32 %v2734, %v2735
      %v2737 = vand.u32 %v2736, 4294901760
      %2738 = vmatpush1.msra.mxu0 %v2737
      %2739 = vmatprep.subr.mxu0 0.0
      %v2740 = vand.u32 %v2034, 4294901760
      %v2741 = vsub.f32 %v2034, %v2740
      %v2742 = vand.u32 %v2741, 4294901760
      %v2743 = vsub.f32 %v2741, %v2742
      %v2744 = vand.u32 %v2743, 4294901760
      %2745 = vmatpush1.msra.mxu0 %v2744
      %2746 = vmatprep.subr.mxu0 0.0
      %v2747 = vand.u32 %v2035, 4294901760
      %v2748 = vsub.f32 %v2035, %v2747
      %v2749 = vand.u32 %v2748, 4294901760
      %v2750 = vsub.f32 %v2748, %v2749
      %v2751 = vand.u32 %v2750, 4294901760
      %2752 = vmatpush1.msra.mxu0 %v2751
      %2753 = vmatprep.subr.mxu0 0.0
      %v2754 = vand.u32 %v2036, 4294901760
      %v2755 = vsub.f32 %v2036, %v2754
      %v2756 = vand.u32 %v2755, 4294901760
      %v2757 = vsub.f32 %v2755, %v2756
      %v2758 = vand.u32 %v2757, 4294901760
      %2759 = vmatpush1.msra.mxu0 %v2758
      %2760 = vmatprep.subr.mxu0 0.0
      %v2761 = vand.u32 %v2037, 4294901760
      %v2762 = vsub.f32 %v2037, %v2761
      %v2763 = vand.u32 %v2762, 4294901760
      %v2764 = vsub.f32 %v2762, %v2763
      %v2765 = vand.u32 %v2764, 4294901760
      %2766 = vmatpush1.msra.mxu0 %v2765
      %2767 = vmatprep.subr.mxu0 0.0
      %v2768 = vand.u32 %v2038, 4294901760
      %v2769 = vsub.f32 %v2038, %v2768
      %v2770 = vand.u32 %v2769, 4294901760
      %v2771 = vsub.f32 %v2769, %v2770
      %v2772 = vand.u32 %v2771, 4294901760
      %2773 = vmatpush1.msra.mxu0 %v2772
      %2774 = vmatprep.subr.mxu0 0.0
      %v2775 = vand.u32 %v2039, 4294901760
      %v2776 = vsub.f32 %v2039, %v2775
      %v2777 = vand.u32 %v2776, 4294901760
      %v2778 = vsub.f32 %v2776, %v2777
      %v2779 = vand.u32 %v2778, 4294901760
      %2780 = vmatpush1.msra.mxu0 %v2779
      %2781 = vmatprep.subr.mxu0 0.0
      %v2782 = vand.u32 %v2040, 4294901760
      %v2783 = vsub.f32 %v2040, %v2782
      %v2784 = vand.u32 %v2783, 4294901760
      %v2785 = vsub.f32 %v2783, %v2784
      %v2786 = vand.u32 %v2785, 4294901760
      %2787 = vmatpush1.msra.mxu0 %v2786
      %2788 = vmatprep.subr.mxu0 0.0
      %v2789 = vand.u32 %v2041, 4294901760
      %v2790 = vsub.f32 %v2041, %v2789
      %v2791 = vand.u32 %v2790, 4294901760
      %v2792 = vsub.f32 %v2790, %v2791
      %v2793 = vand.u32 %v2792, 4294901760
      %2794 = vmatpush1.msra.mxu0 %v2793
      %2795 = vmatprep.subr.mxu0 0.0
      %v2796 = vand.u32 %v2042, 4294901760
      %v2797 = vsub.f32 %v2042, %v2796
      %v2798 = vand.u32 %v2797, 4294901760
      %v2799 = vsub.f32 %v2797, %v2798
      %v2800 = vand.u32 %v2799, 4294901760
      %2801 = vmatpush1.msra.mxu0 %v2800
      %2802 = vmatprep.subr.mxu0 0.0
      %v2803 = vand.u32 %v2043, 4294901760
      %v2804 = vsub.f32 %v2043, %v2803
      %v2805 = vand.u32 %v2804, 4294901760
      %v2806 = vsub.f32 %v2804, %v2805
      %v2807 = vand.u32 %v2806, 4294901760
      %2808 = vmatpush1.msra.mxu0 %v2807
      %2809 = vmatprep.subr.mxu0 0.0
      %v2810 = vand.u32 %v2044, 4294901760
      %v2811 = vsub.f32 %v2044, %v2810
      %v2812 = vand.u32 %v2811, 4294901760
      %v2813 = vsub.f32 %v2811, %v2812
      %v2814 = vand.u32 %v2813, 4294901760
      %2815 = vmatpush1.msra.mxu0 %v2814
      %2816 = vmatprep.subr.mxu0 0.0
      %v2817 = vand.u32 %v2045, 4294901760
      %v2818 = vsub.f32 %v2045, %v2817
      %v2819 = vand.u32 %v2818, 4294901760
      %v2820 = vsub.f32 %v2818, %v2819
      %v2821 = vand.u32 %v2820, 4294901760
      %2822 = vmatpush1.msra.mxu0 %v2821
      %2823 = vmatprep.subr.mxu0 0.0
      %v2824 = vand.u32 %v2046, 4294901760
      %v2825 = vsub.f32 %v2046, %v2824
      %v2826 = vand.u32 %v2825, 4294901760
      %v2827 = vsub.f32 %v2825, %v2826
      %v2828 = vand.u32 %v2827, 4294901760
      %2829 = vmatpush1.msra.mxu0 %v2828
      %2830 = vmatprep.subr.mxu0 0.0
      %v2831 = vand.u32 %v2047, 4294901760
      %v2832 = vsub.f32 %v2047, %v2831
      %v2833 = vand.u32 %v2832, 4294901760
      %v2834 = vsub.f32 %v2832, %v2833
      %v2835 = vand.u32 %v2834, 4294901760
      %2836 = vmatpush1.msra.mxu0 %v2835
      %2837 = vmatprep.subr.mxu0 0.0
      %v2838 = vand.u32 %v2048, 4294901760
      %v2839 = vsub.f32 %v2048, %v2838
      %v2840 = vand.u32 %v2839, 4294901760
      %v2841 = vsub.f32 %v2839, %v2840
      %v2842 = vand.u32 %v2841, 4294901760
      %2843 = vmatpush1.msra.mxu0 %v2842
      %2844 = vmatprep.subr.mxu0 0.0
      %v2845 = vand.u32 %v2049, 4294901760
      %v2846 = vsub.f32 %v2049, %v2845
      %v2847 = vand.u32 %v2846, 4294901760
      %v2848 = vsub.f32 %v2846, %v2847
      %v2849 = vand.u32 %v2848, 4294901760
      %2850 = vmatpush1.msra.mxu0 %v2849
      %v2851 = vand.u32 %v1955, 4294901760
      %2852 = vmatprep.mubr.f32.mxu0 %v2851
      %v2853 = vand.u32 %v1954, 4294901760
      %2854 = vmatmul.mubr.f32.gmra.mrb[0].mxu0 %v2853
      %v2855 = vpop.f32.mrb[0].mxu0
      %v2856 = vadd.f32 %v2159, %v2855
      %v2857 = vpop.f32.mrb[0].mxu0
      %v2858 = vand.u32 %v1957, 4294901760
      %2859 = vmatprep.mubr.f32.mxu0 %v2858
      %v2860 = vand.u32 %v1956, 4294901760
      %2861 = vmatmul.mubr.f32.gmra.mrb[0].mxu0 %v2860
      %v2862 = vpop.f32.mrb[0].mxu0
      %v2863 = vadd.f32 %v2174, %v2862
      %v2864 = vpop.f32.mrb[0].mxu0
      %v2865 = vand.u32 %v1959, 4294901760
      %2866 = vmatprep.mubr.f32.mxu0 %v2865
      %v2867 = vand.u32 %v1958, 4294901760
      %2868 = vmatmul.mubr.f32.gmra.mrb[0].mxu0 %v2867
      %v2869 = vpop.f32.mrb[0].mxu0
      %v2870 = vadd.f32 %v2189, %v2869
      %v2871 = vpop.f32.mrb[0].mxu0
      %v2872 = vand.u32 %v1961, 4294901760
      %2873 = vmatprep.mubr.f32.mxu0 %v2872
      %v2874 = vand.u32 %v1960, 4294901760
      %2875 = vmatmul.mubr.f32.gmra.mrb[0].mxu0 %v2874
      %v2876 = vpop.f32.mrb[0].mxu0
      %v2877 = vadd.f32 %v2204, %v2876
      %v2878 = vpop.f32.mrb[0].mxu0
      %v2879 = vand.u32 %v1963, 4294901760
      %2880 = vmatprep.mubr.f32.mxu0 %v2879
      %v2881 = vand.u32 %v1962, 4294901760
      %2882 = vmatmul.mubr.f32.gmra.mrb[0].mxu0 %v2881
      %v2883 = vpop.f32.mrb[0].mxu0
      %v2884 = vadd.f32 %v2219, %v2883
      %v2885 = vpop.f32.mrb[0].mxu0
      %v2886 = vand.u32 %v1965, 4294901760
      %2887 = vmatprep.mubr.f32.mxu0 %v2886
      %v2888 = vand.u32 %v1964, 4294901760
      %2889 = vmatmul.mubr.f32.gmra.mrb[0].mxu0 %v2888
      %v2890 = vpop.f32.mrb[0].mxu0
      %v2891 = vadd.f32 %v2234, %v2890
      %v2892 = vpop.f32.mrb[0].mxu0
      %v2893 = vand.u32 %v1967, 4294901760
      %2894 = vmatprep.mubr.f32.mxu0 %v2893
      %v2895 = vand.u32 %v1966, 4294901760
      %2896 = vmatmul.mubr.f32.gmra.mrb[0].mxu0 %v2895
      %v2897 = vpop.f32.mrb[0].mxu0
      %v2898 = vadd.f32 %v2249, %v2897
      %v2899 = vpop.f32.mrb[0].mxu0
      %v2900 = vand.u32 %v1969, 4294901760
      %2901 = vmatprep.mubr.f32.mxu0 %v2900
      %v2902 = vand.u32 %v1968, 4294901760
      %2903 = vmatmul.mubr.f32.gmra.mrb[0].mxu0 %v2902
      %v2904 = vpop.f32.mrb[0].mxu0
      %v2905 = vadd.f32 %v2264, %v2904
      %v2906 = vpop.f32.mrb[0].mxu0
      %v2907 = vand.u32 %v1971, 4294901760
      %2908 = vmatprep.mubr.f32.mxu0 %v2907
      %v2909 = vand.u32 %v1970, 4294901760
      %2910 = vmatmul.mubr.f32.gmra.mrb[0].mxu0 %v2909
      %v2911 = vpop.f32.mrb[0].mxu0
      %v2912 = vadd.f32 %v2279, %v2911
      %v2913 = vpop.f32.mrb[0].mxu0
      %v2914 = vand.u32 %v1973, 4294901760
      %2915 = vmatprep.mubr.f32.mxu0 %v2914
      %v2916 = vand.u32 %v1972, 4294901760
      %2917 = vmatmul.mubr.f32.gmra.mrb[0].mxu0 %v2916
      %v2918 = vpop.f32.mrb[0].mxu0
      %v2919 = vadd.f32 %v2294, %v2918
      %v2920 = vpop.f32.mrb[0].mxu0
      %v2921 = vand.u32 %v1975, 4294901760
      %2922 = vmatprep.mubr.f32.mxu0 %v2921
      %v2923 = vand.u32 %v1974, 4294901760
      %2924 = vmatmul.mubr.f32.gmra.mrb[0].mxu0 %v2923
      %v2925 = vpop.f32.mrb[0].mxu0
      %v2926 = vadd.f32 %v2309, %v2925
      %v2927 = vpop.f32.mrb[0].mxu0
      %v2928 = vand.u32 %v1977, 4294901760
      %2929 = vmatprep.mubr.f32.mxu0 %v2928
      %v2930 = vand.u32 %v1976, 4294901760
      %2931 = vmatmul.mubr.f32.gmra.mrb[0].mxu0 %v2930
      %v2932 = vpop.f32.mrb[0].mxu0
      %v2933 = vadd.f32 %v2324, %v2932
      %v2934 = vpop.f32.mrb[0].mxu0
      %v2935 = vand.u32 %v1979, 4294901760
      %2936 = vmatprep.mubr.f32.mxu0 %v2935
      %v2937 = vand.u32 %v1978, 4294901760
      %2938 = vmatmul.mubr.f32.gmra.mrb[0].mxu0 %v2937
      %v2939 = vpop.f32.mrb[0].mxu0
      %v2940 = vadd.f32 %v2339, %v2939
      %v2941 = vpop.f32.mrb[0].mxu0
      %v2942 = vand.u32 %v1981, 4294901760
      %2943 = vmatprep.mubr.f32.mxu0 %v2942
      %v2944 = vand.u32 %v1980, 4294901760
      %2945 = vmatmul.mubr.f32.gmra.mrb[0].mxu0 %v2944
      %v2946 = vpop.f32.mrb[0].mxu0
      %v2947 = vadd.f32 %v2354, %v2946
      %v2948 = vpop.f32.mrb[0].mxu0
      %v2949 = vand.u32 %v1983, 4294901760
      %2950 = vmatprep.mubr.f32.mxu0 %v2949
      %v2951 = vand.u32 %v1982, 4294901760
      %2952 = vmatmul.mubr.f32.gmra.mrb[0].mxu0 %v2951
      %v2953 = vpop.f32.mrb[0].mxu0
      %v2954 = vadd.f32 %v2369, %v2953
      %v2955 = vpop.f32.mrb[0].mxu0
      %v2956 = vand.u32 %v1985, 4294901760
      %2957 = vmatprep.mubr.f32.mxu0 %v2956
      %v2958 = vand.u32 %v1984, 4294901760
      %2959 = vmatmul.mubr.f32.gmra.mrb[0].mxu0 %v2958
      %v2960 = vpop.f32.mrb[0].mxu0
      %v2961 = vadd.f32 %v2384, %v2960
      %v2962 = vpop.f32.mrb[0].mxu0
      %v2963 = vand.u32 %v1987, 4294901760
      %2964 = vmatprep.mubr.f32.mxu0 %v2963
      %v2965 = vand.u32 %v1986, 4294901760
      %2966 = vmatmul.mubr.f32.gmra.mrb[0].mxu0 %v2965
      %v2967 = vpop.f32.mrb[0].mxu0
      %v2968 = vadd.f32 %v2399, %v2967
      %v2969 = vpop.f32.mrb[0].mxu0
      %v2970 = vand.u32 %v1989, 4294901760
      %2971 = vmatprep.mubr.f32.mxu0 %v2970
      %v2972 = vand.u32 %v1988, 4294901760
      %2973 = vmatmul.mubr.f32.gmra.mrb[0].mxu0 %v2972
      %v2974 = vpop.f32.mrb[0].mxu0
      %v2975 = vadd.f32 %v2414, %v2974
      %v2976 = vpop.f32.mrb[0].mxu0
      %v2977 = vand.u32 %v1991, 4294901760
      %2978 = vmatprep.mubr.f32.mxu0 %v2977
      %v2979 = vand.u32 %v1990, 4294901760
      %2980 = vmatmul.mubr.f32.gmra.mrb[0].mxu0 %v2979
      %v2981 = vpop.f32.mrb[0].mxu0
      %v2982 = vadd.f32 %v2429, %v2981
      %v2983 = vpop.f32.mrb[0].mxu0
      %v2984 = vand.u32 %v1993, 4294901760
      %2985 = vmatprep.mubr.f32.mxu0 %v2984
      %v2986 = vand.u32 %v1992, 4294901760
      %2987 = vmatmul.mubr.f32.gmra.mrb[0].mxu0 %v2986
      %v2988 = vpop.f32.mrb[0].mxu0
      %v2989 = vadd.f32 %v2444, %v2988
      %v2990 = vpop.f32.mrb[0].mxu0
      %v2991 = vand.u32 %v1995, 4294901760
      %2992 = vmatprep.mubr.f32.mxu0 %v2991
      %v2993 = vand.u32 %v1994, 4294901760
      %2994 = vmatmul.mubr.f32.gmra.mrb[0].mxu0 %v2993
      %v2995 = vpop.f32.mrb[0].mxu0
      %v2996 = vadd.f32 %v2459, %v2995
      %v2997 = vpop.f32.mrb[0].mxu0
      %v2998 = vand.u32 %v1997, 4294901760
      %2999 = vmatprep.mubr.f32.mxu0 %v2998
      %v3000 = vand.u32 %v1996, 4294901760
      %3001 = vmatmul.mubr.f32.gmra.mrb[0].mxu0 %v3000
      %v3002 = vpop.f32.mrb[0].mxu0
      %v3003 = vadd.f32 %v2474, %v3002
      %v3004 = vpop.f32.mrb[0].mxu0
      %v3005 = vand.u32 %v1999, 4294901760
      %3006 = vmatprep.mubr.f32.mxu0 %v3005
      %v3007 = vand.u32 %v1998, 4294901760
      %3008 = vmatmul.mubr.f32.gmra.mrb[0].mxu0 %v3007
      %v3009 = vpop.f32.mrb[0].mxu0
      %v3010 = vadd.f32 %v2489, %v3009
      %v3011 = vpop.f32.mrb[0].mxu0
      %v3012 = vand.u32 %v2001, 4294901760
      %3013 = vmatprep.mubr.f32.mxu0 %v3012
      %v3014 = vand.u32 %v2000, 4294901760
      %3015 = vmatmul.mubr.f32.gmra.mrb[0].mxu0 %v3014
      %v3016 = vpop.f32.mrb[0].mxu0
      %v3017 = vadd.f32 %v2504, %v3016
      %v3018 = vpop.f32.mrb[0].mxu0
      %v3019 = vand.u32 %v2003, 4294901760
      %3020 = vmatprep.mubr.f32.mxu0 %v3019
      %v3021 = vand.u32 %v2002, 4294901760
      %3022 = vmatmul.mubr.f32.gmra.mrb[0].mxu0 %v3021
      %v3023 = vpop.f32.mrb[0].mxu0
      %v3024 = vadd.f32 %v2519, %v3023
      %v3025 = vpop.f32.mrb[0].mxu0
      %v3026 = vand.u32 %v2005, 4294901760
      %3027 = vmatprep.mubr.f32.mxu0 %v3026
      %v3028 = vand.u32 %v2004, 4294901760
      %3029 = vmatmul.mubr.f32.gmra.mrb[0].mxu0 %v3028
      %v3030 = vpop.f32.mrb[0].mxu0
      %v3031 = vadd.f32 %v2534, %v3030
      %v3032 = vpop.f32.mrb[0].mxu0
      %v3033 = vand.u32 %v2007, 4294901760
      %3034 = vmatprep.mubr.f32.mxu0 %v3033
      %v3035 = vand.u32 %v2006, 4294901760
      %3036 = vmatmul.mubr.f32.gmra.mrb[0].mxu0 %v3035
      %v3037 = vpop.f32.mrb[0].mxu0
      %v3038 = vadd.f32 %v2549, %v3037
      %v3039 = vpop.f32.mrb[0].mxu0
      %v3040 = vand.u32 %v2009, 4294901760
      %3041 = vmatprep.mubr.f32.mxu0 %v3040
      %v3042 = vand.u32 %v2008, 4294901760
      %3043 = vmatmul.mubr.f32.gmra.mrb[0].mxu0 %v3042
      %v3044 = vpop.f32.mrb[0].mxu0
      %v3045 = vadd.f32 %v2564, %v3044
      %v3046 = vpop.f32.mrb[0].mxu0
      %v3047 = vand.u32 %v2011, 4294901760
      %3048 = vmatprep.mubr.f32.mxu0 %v3047
      %v3049 = vand.u32 %v2010, 4294901760
      %3050 = vmatmul.mubr.f32.gmra.mrb[0].mxu0 %v3049
      %v3051 = vpop.f32.mrb[0].mxu0
      %v3052 = vadd.f32 %v2579, %v3051
      %v3053 = vpop.f32.mrb[0].mxu0
      %v3054 = vand.u32 %v2013, 4294901760
      %3055 = vmatprep.mubr.f32.mxu0 %v3054
      %v3056 = vand.u32 %v2012, 4294901760
      %3057 = vmatmul.mubr.f32.gmra.mrb[0].mxu0 %v3056
      %v3058 = vpop.f32.mrb[0].mxu0
      %v3059 = vadd.f32 %v2594, %v3058
      %v3060 = vpop.f32.mrb[0].mxu0
      %v3061 = vand.u32 %v2015, 4294901760
      %3062 = vmatprep.mubr.f32.mxu0 %v3061
      %v3063 = vand.u32 %v2014, 4294901760
      %3064 = vmatmul.mubr.f32.gmra.mrb[0].mxu0 %v3063
      %v3065 = vpop.f32.mrb[0].mxu0
      %v3066 = vadd.f32 %v2609, %v3065
      %v3067 = vpop.f32.mrb[0].mxu0
      %v3068 = vand.u32 %v2017, 4294901760
      %3069 = vmatprep.mubr.f32.mxu0 %v3068
      %v3070 = vand.u32 %v2016, 4294901760
      %3071 = vmatmul.mubr.f32.gmra.mrb[0].mxu0 %v3070
      %v3072 = vpop.f32.mrb[0].mxu0
      %v3073 = vadd.f32 %v2624, %v3072
      %v3074 = vpop.f32.mrb[0].mxu0
      %3075 = vdwg.mxu0
      %3076 = vmatprep.subr.mxu0 0.0
      %v3077 = vand.u32 %v2018, 4294901760
      %v3078 = vsub.f32 %v2018, %v3077
      %3079 = vmatpush1.msra.mxu0 %v3078
      %3080 = vmatprep.subr.mxu0 0.0
      %v3081 = vand.u32 %v2019, 4294901760
      %v3082 = vsub.f32 %v2019, %v3081
      %3083 = vmatpush1.msra.mxu0 %v3082
      %3084 = vmatprep.subr.mxu0 0.0
      %v3085 = vand.u32 %v2020, 4294901760
      %v3086 = vsub.f32 %v2020, %v3085
      %3087 = vmatpush1.msra.mxu0 %v3086
      %3088 = vmatprep.subr.mxu0 0.0
      %v3089 = vand.u32 %v2021, 4294901760
      %v3090 = vsub.f32 %v2021, %v3089
      %3091 = vmatpush1.msra.mxu0 %v3090
      %3092 = vmatprep.subr.mxu0 0.0
      %v3093 = vand.u32 %v2022, 4294901760
      %v3094 = vsub.f32 %v2022, %v3093
      %3095 = vmatpush1.msra.mxu0 %v3094
      %3096 = vmatprep.subr.mxu0 0.0
      %v3097 = vand.u32 %v2023, 4294901760
      %v3098 = vsub.f32 %v2023, %v3097
      %3099 = vmatpush1.msra.mxu0 %v3098
      %3100 = vmatprep.subr.mxu0 0.0
      %v3101 = vand.u32 %v2024, 4294901760
      %v3102 = vsub.f32 %v2024, %v3101
      %3103 = vmatpush1.msra.mxu0 %v3102
      %3104 = vmatprep.subr.mxu0 0.0
      %v3105 = vand.u32 %v2025, 4294901760
      %v3106 = vsub.f32 %v2025, %v3105
      %3107 = vmatpush1.msra.mxu0 %v3106
      %3108 = vmatprep.subr.mxu0 0.0
      %v3109 = vand.u32 %v2026, 4294901760
      %v3110 = vsub.f32 %v2026, %v3109
      %3111 = vmatpush1.msra.mxu0 %v3110
      %3112 = vmatprep.subr.mxu0 0.0
      %v3113 = vand.u32 %v2027, 4294901760
      %v3114 = vsub.f32 %v2027, %v3113
      %3115 = vmatpush1.msra.mxu0 %v3114
      %3116 = vmatprep.subr.mxu0 0.0
      %v3117 = vand.u32 %v2028, 4294901760
      %v3118 = vsub.f32 %v2028, %v3117
      %3119 = vmatpush1.msra.mxu0 %v3118
      %3120 = vmatprep.subr.mxu0 0.0
      %v3121 = vand.u32 %v2029, 4294901760
      %v3122 = vsub.f32 %v2029, %v3121
      %3123 = vmatpush1.msra.mxu0 %v3122
      %3124 = vmatprep.subr.mxu0 0.0
      %v3125 = vand.u32 %v2030, 4294901760
      %v3126 = vsub.f32 %v2030, %v3125
      %3127 = vmatpush1.msra.mxu0 %v3126
      %3128 = vmatprep.subr.mxu0 0.0
      %v3129 = vand.u32 %v2031, 4294901760
      %v3130 = vsub.f32 %v2031, %v3129
      %3131 = vmatpush1.msra.mxu0 %v3130
      %3132 = vmatprep.subr.mxu0 0.0
      %v3133 = vand.u32 %v2032, 4294901760
      %v3134 = vsub.f32 %v2032, %v3133
      %3135 = vmatpush1.msra.mxu0 %v3134
      %3136 = vmatprep.subr.mxu0 0.0
      %v3137 = vand.u32 %v2033, 4294901760
      %v3138 = vsub.f32 %v2033, %v3137
      %3139 = vmatpush1.msra.mxu0 %v3138
      %3140 = vmatprep.subr.mxu0 0.0
      %v3141 = vand.u32 %v2034, 4294901760
      %v3142 = vsub.f32 %v2034, %v3141
      %3143 = vmatpush1.msra.mxu0 %v3142
      %3144 = vmatprep.subr.mxu0 0.0
      %v3145 = vand.u32 %v2035, 4294901760
      %v3146 = vsub.f32 %v2035, %v3145
      %3147 = vmatpush1.msra.mxu0 %v3146
      %3148 = vmatprep.subr.mxu0 0.0
      %v3149 = vand.u32 %v2036, 4294901760
      %v3150 = vsub.f32 %v2036, %v3149
      %3151 = vmatpush1.msra.mxu0 %v3150
      %3152 = vmatprep.subr.mxu0 0.0
      %v3153 = vand.u32 %v2037, 4294901760
      %v3154 = vsub.f32 %v2037, %v3153
      %3155 = vmatpush1.msra.mxu0 %v3154
      %3156 = vmatprep.subr.mxu0 0.0
      %v3157 = vand.u32 %v2038, 4294901760
      %v3158 = vsub.f32 %v2038, %v3157
      %3159 = vmatpush1.msra.mxu0 %v3158
      %3160 = vmatprep.subr.mxu0 0.0
      %v3161 = vand.u32 %v2039, 4294901760
      %v3162 = vsub.f32 %v2039, %v3161
      %3163 = vmatpush1.msra.mxu0 %v3162
      %3164 = vmatprep.subr.mxu0 0.0
      %v3165 = vand.u32 %v2040, 4294901760
      %v3166 = vsub.f32 %v2040, %v3165
      %3167 = vmatpush1.msra.mxu0 %v3166
      %3168 = vmatprep.subr.mxu0 0.0
      %v3169 = vand.u32 %v2041, 4294901760
      %v3170 = vsub.f32 %v2041, %v3169
      %3171 = vmatpush1.msra.mxu0 %v3170
      %3172 = vmatprep.subr.mxu0 0.0
      %v3173 = vand.u32 %v2042, 4294901760
      %v3174 = vsub.f32 %v2042, %v3173
      %3175 = vmatpush1.msra.mxu0 %v3174
      %3176 = vmatprep.subr.mxu0 0.0
      %v3177 = vand.u32 %v2043, 4294901760
      %v3178 = vsub.f32 %v2043, %v3177
      %3179 = vmatpush1.msra.mxu0 %v3178
      %3180 = vmatprep.subr.mxu0 0.0
      %v3181 = vand.u32 %v2044, 4294901760
      %v3182 = vsub.f32 %v2044, %v3181
      %3183 = vmatpush1.msra.mxu0 %v3182
      %3184 = vmatprep.subr.mxu0 0.0
      %v3185 = vand.u32 %v2045, 4294901760
      %v3186 = vsub.f32 %v2045, %v3185
      %3187 = vmatpush1.msra.mxu0 %v3186
      %3188 = vmatprep.subr.mxu0 0.0
      %v3189 = vand.u32 %v2046, 4294901760
      %v3190 = vsub.f32 %v2046, %v3189
      %3191 = vmatpush1.msra.mxu0 %v3190
      %3192 = vmatprep.subr.mxu0 0.0
      %v3193 = vand.u32 %v2047, 4294901760
      %v3194 = vsub.f32 %v2047, %v3193
      %3195 = vmatpush1.msra.mxu0 %v3194
      %3196 = vmatprep.subr.mxu0 0.0
      %v3197 = vand.u32 %v2048, 4294901760
      %v3198 = vsub.f32 %v2048, %v3197
      %3199 = vmatpush1.msra.mxu0 %v3198
      %3200 = vmatprep.subr.mxu0 0.0
      %v3201 = vand.u32 %v2049, 4294901760
      %v3202 = vsub.f32 %v2049, %v3201
      %3203 = vmatpush1.msra.mxu0 %v3202
      %v3204 = vand.u32 %v1955, 4294901760
      %v3205 = vsub.f32 %v1955, %v3204
      %3206 = vmatprep.mubr.f32.mxu0 %v3205
      %v3207 = vand.u32 %v1954, 4294901760
      %v3208 = vsub.f32 %v1954, %v3207
      %3209 = vmatmul.mubr.f32.gmra.mrb[0].mxu0 %v3208
      %v3210 = vpop.f32.mrb[0].mxu0
      %v3211 = vadd.f32 %v2856, %v3210
      %v3212 = vpop.f32.mrb[0].mxu0
      %v3213 = vand.u32 %v1957, 4294901760
      %v3214 = vsub.f32 %v1957, %v3213
      %3215 = vmatprep.mubr.f32.mxu0 %v3214
      %v3216 = vand.u32 %v1956, 4294901760
      %v3217 = vsub.f32 %v1956, %v3216
      %3218 = vmatmul.mubr.f32.gmra.mrb[0].mxu0 %v3217
      %v3219 = vpop.f32.mrb[0].mxu0
      %v3220 = vadd.f32 %v2863, %v3219
      %v3221 = vpop.f32.mrb[0].mxu0
      %v3222 = vand.u32 %v1959, 4294901760
      %v3223 = vsub.f32 %v1959, %v3222
      %3224 = vmatprep.mubr.f32.mxu0 %v3223
      %v3225 = vand.u32 %v1958, 4294901760
      %v3226 = vsub.f32 %v1958, %v3225
      %3227 = vmatmul.mubr.f32.gmra.mrb[0].mxu0 %v3226
      %v3228 = vpop.f32.mrb[0].mxu0
      %v3229 = vadd.f32 %v2870, %v3228
      %v3230 = vpop.f32.mrb[0].mxu0
      %v3231 = vand.u32 %v1961, 4294901760
      %v3232 = vsub.f32 %v1961, %v3231
      %3233 = vmatprep.mubr.f32.mxu0 %v3232
      %v3234 = vand.u32 %v1960, 4294901760
      %v3235 = vsub.f32 %v1960, %v3234
      %3236 = vmatmul.mubr.f32.gmra.mrb[0].mxu0 %v3235
      %v3237 = vpop.f32.mrb[0].mxu0
      %v3238 = vadd.f32 %v2877, %v3237
      %v3239 = vpop.f32.mrb[0].mxu0
      %v3240 = vand.u32 %v1963, 4294901760
      %v3241 = vsub.f32 %v1963, %v3240
      %3242 = vmatprep.mubr.f32.mxu0 %v3241
      %v3243 = vand.u32 %v1962, 4294901760
      %v3244 = vsub.f32 %v1962, %v3243
      %3245 = vmatmul.mubr.f32.gmra.mrb[0].mxu0 %v3244
      %v3246 = vpop.f32.mrb[0].mxu0
      %v3247 = vadd.f32 %v2884, %v3246
      %v3248 = vpop.f32.mrb[0].mxu0
      %v3249 = vand.u32 %v1965, 4294901760
      %v3250 = vsub.f32 %v1965, %v3249
      %3251 = vmatprep.mubr.f32.mxu0 %v3250
      %v3252 = vand.u32 %v1964, 4294901760
      %v3253 = vsub.f32 %v1964, %v3252
      %3254 = vmatmul.mubr.f32.gmra.mrb[0].mxu0 %v3253
      %v3255 = vpop.f32.mrb[0].mxu0
      %v3256 = vadd.f32 %v2891, %v3255
      %v3257 = vpop.f32.mrb[0].mxu0
      %v3258 = vand.u32 %v1967, 4294901760
      %v3259 = vsub.f32 %v1967, %v3258
      %3260 = vmatprep.mubr.f32.mxu0 %v3259
      %v3261 = vand.u32 %v1966, 4294901760
      %v3262 = vsub.f32 %v1966, %v3261
      %3263 = vmatmul.mubr.f32.gmra.mrb[0].mxu0 %v3262
      %v3264 = vpop.f32.mrb[0].mxu0
      %v3265 = vadd.f32 %v2898, %v3264
      %v3266 = vpop.f32.mrb[0].mxu0
      %v3267 = vand.u32 %v1969, 4294901760
      %v3268 = vsub.f32 %v1969, %v3267
      %3269 = vmatprep.mubr.f32.mxu0 %v3268
      %v3270 = vand.u32 %v1968, 4294901760
      %v3271 = vsub.f32 %v1968, %v3270
      %3272 = vmatmul.mubr.f32.gmra.mrb[0].mxu0 %v3271
      %v3273 = vpop.f32.mrb[0].mxu0
      %v3274 = vadd.f32 %v2905, %v3273
      %v3275 = vpop.f32.mrb[0].mxu0
      %v3276 = vand.u32 %v1971, 4294901760
      %v3277 = vsub.f32 %v1971, %v3276
      %3278 = vmatprep.mubr.f32.mxu0 %v3277
      %v3279 = vand.u32 %v1970, 4294901760
      %v3280 = vsub.f32 %v1970, %v3279
      %3281 = vmatmul.mubr.f32.gmra.mrb[0].mxu0 %v3280
      %v3282 = vpop.f32.mrb[0].mxu0
      %v3283 = vadd.f32 %v2912, %v3282
      %v3284 = vpop.f32.mrb[0].mxu0
      %v3285 = vand.u32 %v1973, 4294901760
      %v3286 = vsub.f32 %v1973, %v3285
      %3287 = vmatprep.mubr.f32.mxu0 %v3286
      %v3288 = vand.u32 %v1972, 4294901760
      %v3289 = vsub.f32 %v1972, %v3288
      %3290 = vmatmul.mubr.f32.gmra.mrb[0].mxu0 %v3289
      %v3291 = vpop.f32.mrb[0].mxu0
      %v3292 = vadd.f32 %v2919, %v3291
      %v3293 = vpop.f32.mrb[0].mxu0
      %v3294 = vand.u32 %v1975, 4294901760
      %v3295 = vsub.f32 %v1975, %v3294
      %3296 = vmatprep.mubr.f32.mxu0 %v3295
      %v3297 = vand.u32 %v1974, 4294901760
      %v3298 = vsub.f32 %v1974, %v3297
      %3299 = vmatmul.mubr.f32.gmra.mrb[0].mxu0 %v3298
      %v3300 = vpop.f32.mrb[0].mxu0
      %v3301 = vadd.f32 %v2926, %v3300
      %v3302 = vpop.f32.mrb[0].mxu0
      %v3303 = vand.u32 %v1977, 4294901760
      %v3304 = vsub.f32 %v1977, %v3303
      %3305 = vmatprep.mubr.f32.mxu0 %v3304
      %v3306 = vand.u32 %v1976, 4294901760
      %v3307 = vsub.f32 %v1976, %v3306
      %3308 = vmatmul.mubr.f32.gmra.mrb[0].mxu0 %v3307
      %v3309 = vpop.f32.mrb[0].mxu0
      %v3310 = vadd.f32 %v2933, %v3309
      %v3311 = vpop.f32.mrb[0].mxu0
      %v3312 = vand.u32 %v1979, 4294901760
      %v3313 = vsub.f32 %v1979, %v3312
      %3314 = vmatprep.mubr.f32.mxu0 %v3313
      %v3315 = vand.u32 %v1978, 4294901760
      %v3316 = vsub.f32 %v1978, %v3315
      %3317 = vmatmul.mubr.f32.gmra.mrb[0].mxu0 %v3316
      %v3318 = vpop.f32.mrb[0].mxu0
      %v3319 = vadd.f32 %v2940, %v3318
      %v3320 = vpop.f32.mrb[0].mxu0
      %v3321 = vand.u32 %v1981, 4294901760
      %v3322 = vsub.f32 %v1981, %v3321
      %3323 = vmatprep.mubr.f32.mxu0 %v3322
      %v3324 = vand.u32 %v1980, 4294901760
      %v3325 = vsub.f32 %v1980, %v3324
      %3326 = vmatmul.mubr.f32.gmra.mrb[0].mxu0 %v3325
      %v3327 = vpop.f32.mrb[0].mxu0
      %v3328 = vadd.f32 %v2947, %v3327
      %v3329 = vpop.f32.mrb[0].mxu0
      %v3330 = vand.u32 %v1983, 4294901760
      %v3331 = vsub.f32 %v1983, %v3330
      %3332 = vmatprep.mubr.f32.mxu0 %v3331
      %v3333 = vand.u32 %v1982, 4294901760
      %v3334 = vsub.f32 %v1982, %v3333
      %3335 = vmatmul.mubr.f32.gmra.mrb[0].mxu0 %v3334
      %v3336 = vpop.f32.mrb[0].mxu0
      %v3337 = vadd.f32 %v2954, %v3336
      %v3338 = vpop.f32.mrb[0].mxu0
      %v3339 = vand.u32 %v1985, 4294901760
      %v3340 = vsub.f32 %v1985, %v3339
      %3341 = vmatprep.mubr.f32.mxu0 %v3340
      %v3342 = vand.u32 %v1984, 4294901760
      %v3343 = vsub.f32 %v1984, %v3342
      %3344 = vmatmul.mubr.f32.gmra.mrb[0].mxu0 %v3343
      %v3345 = vpop.f32.mrb[0].mxu0
      %v3346 = vadd.f32 %v2961, %v3345
      %v3347 = vpop.f32.mrb[0].mxu0
      %v3348 = vand.u32 %v1987, 4294901760
      %v3349 = vsub.f32 %v1987, %v3348
      %3350 = vmatprep.mubr.f32.mxu0 %v3349
      %v3351 = vand.u32 %v1986, 4294901760
      %v3352 = vsub.f32 %v1986, %v3351
      %3353 = vmatmul.mubr.f32.gmra.mrb[0].mxu0 %v3352
      %v3354 = vpop.f32.mrb[0].mxu0
      %v3355 = vadd.f32 %v2968, %v3354
      %v3356 = vpop.f32.mrb[0].mxu0
      %v3357 = vand.u32 %v1989, 4294901760
      %v3358 = vsub.f32 %v1989, %v3357
      %3359 = vmatprep.mubr.f32.mxu0 %v3358
      %v3360 = vand.u32 %v1988, 4294901760
      %v3361 = vsub.f32 %v1988, %v3360
      %3362 = vmatmul.mubr.f32.gmra.mrb[0].mxu0 %v3361
      %v3363 = vpop.f32.mrb[0].mxu0
      %v3364 = vadd.f32 %v2975, %v3363
      %v3365 = vpop.f32.mrb[0].mxu0
      %v3366 = vand.u32 %v1991, 4294901760
      %v3367 = vsub.f32 %v1991, %v3366
      %3368 = vmatprep.mubr.f32.mxu0 %v3367
      %v3369 = vand.u32 %v1990, 4294901760
      %v3370 = vsub.f32 %v1990, %v3369
      %3371 = vmatmul.mubr.f32.gmra.mrb[0].mxu0 %v3370
      %v3372 = vpop.f32.mrb[0].mxu0
      %v3373 = vadd.f32 %v2982, %v3372
      %v3374 = vpop.f32.mrb[0].mxu0
      %v3375 = vand.u32 %v1993, 4294901760
      %v3376 = vsub.f32 %v1993, %v3375
      %3377 = vmatprep.mubr.f32.mxu0 %v3376
      %v3378 = vand.u32 %v1992, 4294901760
      %v3379 = vsub.f32 %v1992, %v3378
      %3380 = vmatmul.mubr.f32.gmra.mrb[0].mxu0 %v3379
      %v3381 = vpop.f32.mrb[0].mxu0
      %v3382 = vadd.f32 %v2989, %v3381
      %v3383 = vpop.f32.mrb[0].mxu0
      %v3384 = vand.u32 %v1995, 4294901760
      %v3385 = vsub.f32 %v1995, %v3384
      %3386 = vmatprep.mubr.f32.mxu0 %v3385
      %v3387 = vand.u32 %v1994, 4294901760
      %v3388 = vsub.f32 %v1994, %v3387
      %3389 = vmatmul.mubr.f32.gmra.mrb[0].mxu0 %v3388
      %v3390 = vpop.f32.mrb[0].mxu0
      %v3391 = vadd.f32 %v2996, %v3390
      %v3392 = vpop.f32.mrb[0].mxu0
      %v3393 = vand.u32 %v1997, 4294901760
      %v3394 = vsub.f32 %v1997, %v3393
      %3395 = vmatprep.mubr.f32.mxu0 %v3394
      %v3396 = vand.u32 %v1996, 4294901760
      %v3397 = vsub.f32 %v1996, %v3396
      %3398 = vmatmul.mubr.f32.gmra.mrb[0].mxu0 %v3397
      %v3399 = vpop.f32.mrb[0].mxu0
      %v3400 = vadd.f32 %v3003, %v3399
      %v3401 = vpop.f32.mrb[0].mxu0
      %v3402 = vand.u32 %v1999, 4294901760
      %v3403 = vsub.f32 %v1999, %v3402
      %3404 = vmatprep.mubr.f32.mxu0 %v3403
      %v3405 = vand.u32 %v1998, 4294901760
      %v3406 = vsub.f32 %v1998, %v3405
      %3407 = vmatmul.mubr.f32.gmra.mrb[0].mxu0 %v3406
      %v3408 = vpop.f32.mrb[0].mxu0
      %v3409 = vadd.f32 %v3010, %v3408
      %v3410 = vpop.f32.mrb[0].mxu0
      %v3411 = vand.u32 %v2001, 4294901760
      %v3412 = vsub.f32 %v2001, %v3411
      %3413 = vmatprep.mubr.f32.mxu0 %v3412
      %v3414 = vand.u32 %v2000, 4294901760
      %v3415 = vsub.f32 %v2000, %v3414
      %3416 = vmatmul.mubr.f32.gmra.mrb[0].mxu0 %v3415
      %v3417 = vpop.f32.mrb[0].mxu0
      %v3418 = vadd.f32 %v3017, %v3417
      %v3419 = vpop.f32.mrb[0].mxu0
      %v3420 = vand.u32 %v2003, 4294901760
      %v3421 = vsub.f32 %v2003, %v3420
      %3422 = vmatprep.mubr.f32.mxu0 %v3421
      %v3423 = vand.u32 %v2002, 4294901760
      %v3424 = vsub.f32 %v2002, %v3423
      %3425 = vmatmul.mubr.f32.gmra.mrb[0].mxu0 %v3424
      %v3426 = vpop.f32.mrb[0].mxu0
      %v3427 = vadd.f32 %v3024, %v3426
      %v3428 = vpop.f32.mrb[0].mxu0
      %v3429 = vand.u32 %v2005, 4294901760
      %v3430 = vsub.f32 %v2005, %v3429
      %3431 = vmatprep.mubr.f32.mxu0 %v3430
      %v3432 = vand.u32 %v2004, 4294901760
      %v3433 = vsub.f32 %v2004, %v3432
      %3434 = vmatmul.mubr.f32.gmra.mrb[0].mxu0 %v3433
      %v3435 = vpop.f32.mrb[0].mxu0
      %v3436 = vadd.f32 %v3031, %v3435
      %v3437 = vpop.f32.mrb[0].mxu0
      %v3438 = vand.u32 %v2007, 4294901760
      %v3439 = vsub.f32 %v2007, %v3438
      %3440 = vmatprep.mubr.f32.mxu0 %v3439
      %v3441 = vand.u32 %v2006, 4294901760
      %v3442 = vsub.f32 %v2006, %v3441
      %3443 = vmatmul.mubr.f32.gmra.mrb[0].mxu0 %v3442
      %v3444 = vpop.f32.mrb[0].mxu0
      %v3445 = vadd.f32 %v3038, %v3444
      %v3446 = vpop.f32.mrb[0].mxu0
      %v3447 = vand.u32 %v2009, 4294901760
      %v3448 = vsub.f32 %v2009, %v3447
      %3449 = vmatprep.mubr.f32.mxu0 %v3448
      %v3450 = vand.u32 %v2008, 4294901760
      %v3451 = vsub.f32 %v2008, %v3450
      %3452 = vmatmul.mubr.f32.gmra.mrb[0].mxu0 %v3451
      %v3453 = vpop.f32.mrb[0].mxu0
      %v3454 = vadd.f32 %v3045, %v3453
      %v3455 = vpop.f32.mrb[0].mxu0
      %v3456 = vand.u32 %v2011, 4294901760
      %v3457 = vsub.f32 %v2011, %v3456
      %3458 = vmatprep.mubr.f32.mxu0 %v3457
      %v3459 = vand.u32 %v2010, 4294901760
      %v3460 = vsub.f32 %v2010, %v3459
      %3461 = vmatmul.mubr.f32.gmra.mrb[0].mxu0 %v3460
      %v3462 = vpop.f32.mrb[0].mxu0
      %v3463 = vadd.f32 %v3052, %v3462
      %v3464 = vpop.f32.mrb[0].mxu0
      %v3465 = vand.u32 %v2013, 4294901760
      %v3466 = vsub.f32 %v2013, %v3465
      %3467 = vmatprep.mubr.f32.mxu0 %v3466
      %v3468 = vand.u32 %v2012, 4294901760
      %v3469 = vsub.f32 %v2012, %v3468
      %3470 = vmatmul.mubr.f32.gmra.mrb[0].mxu0 %v3469
      %v3471 = vpop.f32.mrb[0].mxu0
      %v3472 = vadd.f32 %v3059, %v3471
      %v3473 = vpop.f32.mrb[0].mxu0
      %v3474 = vand.u32 %v2015, 4294901760
      %v3475 = vsub.f32 %v2015, %v3474
      %3476 = vmatprep.mubr.f32.mxu0 %v3475
      %v3477 = vand.u32 %v2014, 4294901760
      %v3478 = vsub.f32 %v2014, %v3477
      %3479 = vmatmul.mubr.f32.gmra.mrb[0].mxu0 %v3478
      %v3480 = vpop.f32.mrb[0].mxu0
      %v3481 = vadd.f32 %v3066, %v3480
      %v3482 = vpop.f32.mrb[0].mxu0
      %v3483 = vand.u32 %v2017, 4294901760
      %v3484 = vsub.f32 %v2017, %v3483
      %3485 = vmatprep.mubr.f32.mxu0 %v3484
      %v3486 = vand.u32 %v2016, 4294901760
      %v3487 = vsub.f32 %v2016, %v3486
      %3488 = vmatmul.mubr.f32.gmra.mrb[0].mxu0 %v3487
      %v3489 = vpop.f32.mrb[0].mxu0
      %v3490 = vadd.f32 %v3073, %v3489
      %v3491 = vpop.f32.mrb[0].mxu0
      %3492 = vdwg.mxu0
      %3493 = vmatprep.subr.mxu0 0.0
      %v3494 = vand.u32 %v2018, 4294901760
      %3495 = vmatpush1.msra.mxu0 %v3494
      %3496 = vmatprep.subr.mxu0 0.0
      %v3497 = vand.u32 %v2019, 4294901760
      %3498 = vmatpush1.msra.mxu0 %v3497
      %3499 = vmatprep.subr.mxu0 0.0
      %v3500 = vand.u32 %v2020, 4294901760
      %3501 = vmatpush1.msra.mxu0 %v3500
      %3502 = vmatprep.subr.mxu0 0.0
      %v3503 = vand.u32 %v2021, 4294901760
      %3504 = vmatpush1.msra.mxu0 %v3503
      %3505 = vmatprep.subr.mxu0 0.0
      %v3506 = vand.u32 %v2022, 4294901760
      %3507 = vmatpush1.msra.mxu0 %v3506
      %3508 = vmatprep.subr.mxu0 0.0
      %v3509 = vand.u32 %v2023, 4294901760
      %3510 = vmatpush1.msra.mxu0 %v3509
      %3511 = vmatprep.subr.mxu0 0.0
      %v3512 = vand.u32 %v2024, 4294901760
      %3513 = vmatpush1.msra.mxu0 %v3512
      %3514 = vmatprep.subr.mxu0 0.0
      %v3515 = vand.u32 %v2025, 4294901760
      %3516 = vmatpush1.msra.mxu0 %v3515
      %3517 = vmatprep.subr.mxu0 0.0
      %v3518 = vand.u32 %v2026, 4294901760
      %3519 = vmatpush1.msra.mxu0 %v3518
      %3520 = vmatprep.subr.mxu0 0.0
      %v3521 = vand.u32 %v2027, 4294901760
      %3522 = vmatpush1.msra.mxu0 %v3521
      %3523 = vmatprep.subr.mxu0 0.0
      %v3524 = vand.u32 %v2028, 4294901760
      %3525 = vmatpush1.msra.mxu0 %v3524
      %3526 = vmatprep.subr.mxu0 0.0
      %v3527 = vand.u32 %v2029, 4294901760
      %3528 = vmatpush1.msra.mxu0 %v3527
      %3529 = vmatprep.subr.mxu0 0.0
      %v3530 = vand.u32 %v2030, 4294901760
      %3531 = vmatpush1.msra.mxu0 %v3530
      %3532 = vmatprep.subr.mxu0 0.0
      %v3533 = vand.u32 %v2031, 4294901760
      %3534 = vmatpush1.msra.mxu0 %v3533
      %3535 = vmatprep.subr.mxu0 0.0
      %v3536 = vand.u32 %v2032, 4294901760
      %3537 = vmatpush1.msra.mxu0 %v3536
      %3538 = vmatprep.subr.mxu0 0.0
      %v3539 = vand.u32 %v2033, 4294901760
      %3540 = vmatpush1.msra.mxu0 %v3539
      %3541 = vmatprep.subr.mxu0 0.0
      %v3542 = vand.u32 %v2034, 4294901760
      %3543 = vmatpush1.msra.mxu0 %v3542
      %3544 = vmatprep.subr.mxu0 0.0
      %v3545 = vand.u32 %v2035, 4294901760
      %3546 = vmatpush1.msra.mxu0 %v3545
      %3547 = vmatprep.subr.mxu0 0.0
      %v3548 = vand.u32 %v2036, 4294901760
      %3549 = vmatpush1.msra.mxu0 %v3548
      %3550 = vmatprep.subr.mxu0 0.0
      %v3551 = vand.u32 %v2037, 4294901760
      %3552 = vmatpush1.msra.mxu0 %v3551
      %3553 = vmatprep.subr.mxu0 0.0
      %v3554 = vand.u32 %v2038, 4294901760
      %3555 = vmatpush1.msra.mxu0 %v3554
      %3556 = vmatprep.subr.mxu0 0.0
      %v3557 = vand.u32 %v2039, 4294901760
      %3558 = vmatpush1.msra.mxu0 %v3557
      %3559 = vmatprep.subr.mxu0 0.0
      %v3560 = vand.u32 %v2040, 4294901760
      %3561 = vmatpush1.msra.mxu0 %v3560
      %3562 = vmatprep.subr.mxu0 0.0
      %v3563 = vand.u32 %v2041, 4294901760
      %3564 = vmatpush1.msra.mxu0 %v3563
      %3565 = vmatprep.subr.mxu0 0.0
      %v3566 = vand.u32 %v2042, 4294901760
      %3567 = vmatpush1.msra.mxu0 %v3566
      %3568 = vmatprep.subr.mxu0 0.0
      %v3569 = vand.u32 %v2043, 4294901760
      %3570 = vmatpush1.msra.mxu0 %v3569
      %3571 = vmatprep.subr.mxu0 0.0
      %v3572 = vand.u32 %v2044, 4294901760
      %3573 = vmatpush1.msra.mxu0 %v3572
      %3574 = vmatprep.subr.mxu0 0.0
      %v3575 = vand.u32 %v2045, 4294901760
      %3576 = vmatpush1.msra.mxu0 %v3575
      %3577 = vmatprep.subr.mxu0 0.0
      %v3578 = vand.u32 %v2046, 4294901760
      %3579 = vmatpush1.msra.mxu0 %v3578
      %3580 = vmatprep.subr.mxu0 0.0
      %v3581 = vand.u32 %v2047, 4294901760
      %3582 = vmatpush1.msra.mxu0 %v3581
      %3583 = vmatprep.subr.mxu0 0.0
      %v3584 = vand.u32 %v2048, 4294901760
      %3585 = vmatpush1.msra.mxu0 %v3584
      %3586 = vmatprep.subr.mxu0 0.0
      %v3587 = vand.u32 %v2049, 4294901760
      %3588 = vmatpush1.msra.mxu0 %v3587
      %v3589 = vand.u32 %v1955, 4294901760
      %v3590 = vsub.f32 %v1955, %v3589
      %v3591 = vand.u32 %v3590, 4294901760
      %3592 = vmatprep.mubr.f32.mxu0 %v3591
      %v3593 = vand.u32 %v1954, 4294901760
      %v3594 = vsub.f32 %v1954, %v3593
      %v3595 = vand.u32 %v3594, 4294901760
      %3596 = vmatmul.mubr.f32.gmra.mrb[0].mxu0 %v3595
      %v3597 = vpop.f32.mrb[0].mxu0
      %v3598 = vadd.f32 %v3211, %v3597
      %v3599 = vpop.f32.mrb[0].mxu0
      %v3600 = vand.u32 %v1957, 4294901760
      %v3601 = vsub.f32 %v1957, %v3600
      %v3602 = vand.u32 %v3601, 4294901760
      %3603 = vmatprep.mubr.f32.mxu0 %v3602
      %v3604 = vand.u32 %v1956, 4294901760
      %v3605 = vsub.f32 %v1956, %v3604
      %v3606 = vand.u32 %v3605, 4294901760
      %3607 = vmatmul.mubr.f32.gmra.mrb[0].mxu0 %v3606
      %v3608 = vpop.f32.mrb[0].mxu0
      %v3609 = vadd.f32 %v3220, %v3608
      %v3610 = vpop.f32.mrb[0].mxu0
      %v3611 = vand.u32 %v1959, 4294901760
      %v3612 = vsub.f32 %v1959, %v3611
      %v3613 = vand.u32 %v3612, 4294901760
      %3614 = vmatprep.mubr.f32.mxu0 %v3613
      %v3615 = vand.u32 %v1958, 4294901760
      %v3616 = vsub.f32 %v1958, %v3615
      %v3617 = vand.u32 %v3616, 4294901760
      %3618 = vmatmul.mubr.f32.gmra.mrb[0].mxu0 %v3617
      %v3619 = vpop.f32.mrb[0].mxu0
      %v3620 = vadd.f32 %v3229, %v3619
      %v3621 = vpop.f32.mrb[0].mxu0
      %v3622 = vand.u32 %v1961, 4294901760
      %v3623 = vsub.f32 %v1961, %v3622
      %v3624 = vand.u32 %v3623, 4294901760
      %3625 = vmatprep.mubr.f32.mxu0 %v3624
      %v3626 = vand.u32 %v1960, 4294901760
      %v3627 = vsub.f32 %v1960, %v3626
      %v3628 = vand.u32 %v3627, 4294901760
      %3629 = vmatmul.mubr.f32.gmra.mrb[0].mxu0 %v3628
      %v3630 = vpop.f32.mrb[0].mxu0
      %v3631 = vadd.f32 %v3238, %v3630
      %v3632 = vpop.f32.mrb[0].mxu0
      %v3633 = vand.u32 %v1963, 4294901760
      %v3634 = vsub.f32 %v1963, %v3633
      %v3635 = vand.u32 %v3634, 4294901760
      %3636 = vmatprep.mubr.f32.mxu0 %v3635
      %v3637 = vand.u32 %v1962, 4294901760
      %v3638 = vsub.f32 %v1962, %v3637
      %v3639 = vand.u32 %v3638, 4294901760
      %3640 = vmatmul.mubr.f32.gmra.mrb[0].mxu0 %v3639
      %v3641 = vpop.f32.mrb[0].mxu0
      %v3642 = vadd.f32 %v3247, %v3641
      %v3643 = vpop.f32.mrb[0].mxu0
      %v3644 = vand.u32 %v1965, 4294901760
      %v3645 = vsub.f32 %v1965, %v3644
      %v3646 = vand.u32 %v3645, 4294901760
      %3647 = vmatprep.mubr.f32.mxu0 %v3646
      %v3648 = vand.u32 %v1964, 4294901760
      %v3649 = vsub.f32 %v1964, %v3648
      %v3650 = vand.u32 %v3649, 4294901760
      %3651 = vmatmul.mubr.f32.gmra.mrb[0].mxu0 %v3650
      %v3652 = vpop.f32.mrb[0].mxu0
      %v3653 = vadd.f32 %v3256, %v3652
      %v3654 = vpop.f32.mrb[0].mxu0
      %v3655 = vand.u32 %v1967, 4294901760
      %v3656 = vsub.f32 %v1967, %v3655
      %v3657 = vand.u32 %v3656, 4294901760
      %3658 = vmatprep.mubr.f32.mxu0 %v3657
      %v3659 = vand.u32 %v1966, 4294901760
      %v3660 = vsub.f32 %v1966, %v3659
      %v3661 = vand.u32 %v3660, 4294901760
      %3662 = vmatmul.mubr.f32.gmra.mrb[0].mxu0 %v3661
      %v3663 = vpop.f32.mrb[0].mxu0
      %v3664 = vadd.f32 %v3265, %v3663
      %v3665 = vpop.f32.mrb[0].mxu0
      %v3666 = vand.u32 %v1969, 4294901760
      %v3667 = vsub.f32 %v1969, %v3666
      %v3668 = vand.u32 %v3667, 4294901760
      %3669 = vmatprep.mubr.f32.mxu0 %v3668
      %v3670 = vand.u32 %v1968, 4294901760
      %v3671 = vsub.f32 %v1968, %v3670
      %v3672 = vand.u32 %v3671, 4294901760
      %3673 = vmatmul.mubr.f32.gmra.mrb[0].mxu0 %v3672
      %v3674 = vpop.f32.mrb[0].mxu0
      %v3675 = vadd.f32 %v3274, %v3674
      %v3676 = vpop.f32.mrb[0].mxu0
      %v3677 = vand.u32 %v1971, 4294901760
      %v3678 = vsub.f32 %v1971, %v3677
      %v3679 = vand.u32 %v3678, 4294901760
      %3680 = vmatprep.mubr.f32.mxu0 %v3679
      %v3681 = vand.u32 %v1970, 4294901760
      %v3682 = vsub.f32 %v1970, %v3681
      %v3683 = vand.u32 %v3682, 4294901760
      %3684 = vmatmul.mubr.f32.gmra.mrb[0].mxu0 %v3683
      %v3685 = vpop.f32.mrb[0].mxu0
      %v3686 = vadd.f32 %v3283, %v3685
      %v3687 = vpop.f32.mrb[0].mxu0
      %v3688 = vand.u32 %v1973, 4294901760
      %v3689 = vsub.f32 %v1973, %v3688
      %v3690 = vand.u32 %v3689, 4294901760
      %3691 = vmatprep.mubr.f32.mxu0 %v3690
      %v3692 = vand.u32 %v1972, 4294901760
      %v3693 = vsub.f32 %v1972, %v3692
      %v3694 = vand.u32 %v3693, 4294901760
      %3695 = vmatmul.mubr.f32.gmra.mrb[0].mxu0 %v3694
      %v3696 = vpop.f32.mrb[0].mxu0
      %v3697 = vadd.f32 %v3292, %v3696
      %v3698 = vpop.f32.mrb[0].mxu0
      %v3699 = vand.u32 %v1975, 4294901760
      %v3700 = vsub.f32 %v1975, %v3699
      %v3701 = vand.u32 %v3700, 4294901760
      %3702 = vmatprep.mubr.f32.mxu0 %v3701
      %v3703 = vand.u32 %v1974, 4294901760
      %v3704 = vsub.f32 %v1974, %v3703
      %v3705 = vand.u32 %v3704, 4294901760
      %3706 = vmatmul.mubr.f32.gmra.mrb[0].mxu0 %v3705
      %v3707 = vpop.f32.mrb[0].mxu0
      %v3708 = vadd.f32 %v3301, %v3707
      %v3709 = vpop.f32.mrb[0].mxu0
      %v3710 = vand.u32 %v1977, 4294901760
      %v3711 = vsub.f32 %v1977, %v3710
      %v3712 = vand.u32 %v3711, 4294901760
      %3713 = vmatprep.mubr.f32.mxu0 %v3712
      %v3714 = vand.u32 %v1976, 4294901760
      %v3715 = vsub.f32 %v1976, %v3714
      %v3716 = vand.u32 %v3715, 4294901760
      %3717 = vmatmul.mubr.f32.gmra.mrb[0].mxu0 %v3716
      %v3718 = vpop.f32.mrb[0].mxu0
      %v3719 = vadd.f32 %v3310, %v3718
      %v3720 = vpop.f32.mrb[0].mxu0
      %v3721 = vand.u32 %v1979, 4294901760
      %v3722 = vsub.f32 %v1979, %v3721
      %v3723 = vand.u32 %v3722, 4294901760
      %3724 = vmatprep.mubr.f32.mxu0 %v3723
      %v3725 = vand.u32 %v1978, 4294901760
      %v3726 = vsub.f32 %v1978, %v3725
      %v3727 = vand.u32 %v3726, 4294901760
      %3728 = vmatmul.mubr.f32.gmra.mrb[0].mxu0 %v3727
      %v3729 = vpop.f32.mrb[0].mxu0
      %v3730 = vadd.f32 %v3319, %v3729
      %v3731 = vpop.f32.mrb[0].mxu0
      %v3732 = vand.u32 %v1981, 4294901760
      %v3733 = vsub.f32 %v1981, %v3732
      %v3734 = vand.u32 %v3733, 4294901760
      %3735 = vmatprep.mubr.f32.mxu0 %v3734
      %v3736 = vand.u32 %v1980, 4294901760
      %v3737 = vsub.f32 %v1980, %v3736
      %v3738 = vand.u32 %v3737, 4294901760
      %3739 = vmatmul.mubr.f32.gmra.mrb[0].mxu0 %v3738
      %v3740 = vpop.f32.mrb[0].mxu0
      %v3741 = vadd.f32 %v3328, %v3740
      %v3742 = vpop.f32.mrb[0].mxu0
      %v3743 = vand.u32 %v1983, 4294901760
      %v3744 = vsub.f32 %v1983, %v3743
      %v3745 = vand.u32 %v3744, 4294901760
      %3746 = vmatprep.mubr.f32.mxu0 %v3745
      %v3747 = vand.u32 %v1982, 4294901760
      %v3748 = vsub.f32 %v1982, %v3747
      %v3749 = vand.u32 %v3748, 4294901760
      %3750 = vmatmul.mubr.f32.gmra.mrb[0].mxu0 %v3749
      %v3751 = vpop.f32.mrb[0].mxu0
      %v3752 = vadd.f32 %v3337, %v3751
      %v3753 = vpop.f32.mrb[0].mxu0
      %v3754 = vand.u32 %v1985, 4294901760
      %v3755 = vsub.f32 %v1985, %v3754
      %v3756 = vand.u32 %v3755, 4294901760
      %3757 = vmatprep.mubr.f32.mxu0 %v3756
      %v3758 = vand.u32 %v1984, 4294901760
      %v3759 = vsub.f32 %v1984, %v3758
      %v3760 = vand.u32 %v3759, 4294901760
      %3761 = vmatmul.mubr.f32.gmra.mrb[0].mxu0 %v3760
      %v3762 = vpop.f32.mrb[0].mxu0
      %v3763 = vadd.f32 %v3346, %v3762
      %v3764 = vpop.f32.mrb[0].mxu0
      %v3765 = vand.u32 %v1987, 4294901760
      %v3766 = vsub.f32 %v1987, %v3765
      %v3767 = vand.u32 %v3766, 4294901760
      %3768 = vmatprep.mubr.f32.mxu0 %v3767
      %v3769 = vand.u32 %v1986, 4294901760
      %v3770 = vsub.f32 %v1986, %v3769
      %v3771 = vand.u32 %v3770, 4294901760
      %3772 = vmatmul.mubr.f32.gmra.mrb[0].mxu0 %v3771
      %v3773 = vpop.f32.mrb[0].mxu0
      %v3774 = vadd.f32 %v3355, %v3773
      %v3775 = vpop.f32.mrb[0].mxu0
      %v3776 = vand.u32 %v1989, 4294901760
      %v3777 = vsub.f32 %v1989, %v3776
      %v3778 = vand.u32 %v3777, 4294901760
      %3779 = vmatprep.mubr.f32.mxu0 %v3778
      %v3780 = vand.u32 %v1988, 4294901760
      %v3781 = vsub.f32 %v1988, %v3780
      %v3782 = vand.u32 %v3781, 4294901760
      %3783 = vmatmul.mubr.f32.gmra.mrb[0].mxu0 %v3782
      %v3784 = vpop.f32.mrb[0].mxu0
      %v3785 = vadd.f32 %v3364, %v3784
      %v3786 = vpop.f32.mrb[0].mxu0
      %v3787 = vand.u32 %v1991, 4294901760
      %v3788 = vsub.f32 %v1991, %v3787
      %v3789 = vand.u32 %v3788, 4294901760
      %3790 = vmatprep.mubr.f32.mxu0 %v3789
      %v3791 = vand.u32 %v1990, 4294901760
      %v3792 = vsub.f32 %v1990, %v3791
      %v3793 = vand.u32 %v3792, 4294901760
      %3794 = vmatmul.mubr.f32.gmra.mrb[0].mxu0 %v3793
      %v3795 = vpop.f32.mrb[0].mxu0
      %v3796 = vadd.f32 %v3373, %v3795
      %v3797 = vpop.f32.mrb[0].mxu0
      %v3798 = vand.u32 %v1993, 4294901760
      %v3799 = vsub.f32 %v1993, %v3798
      %v3800 = vand.u32 %v3799, 4294901760
      %3801 = vmatprep.mubr.f32.mxu0 %v3800
      %v3802 = vand.u32 %v1992, 4294901760
      %v3803 = vsub.f32 %v1992, %v3802
      %v3804 = vand.u32 %v3803, 4294901760
      %3805 = vmatmul.mubr.f32.gmra.mrb[0].mxu0 %v3804
      %v3806 = vpop.f32.mrb[0].mxu0
      %v3807 = vadd.f32 %v3382, %v3806
      %v3808 = vpop.f32.mrb[0].mxu0
      %v3809 = vand.u32 %v1995, 4294901760
      %v3810 = vsub.f32 %v1995, %v3809
      %v3811 = vand.u32 %v3810, 4294901760
      %3812 = vmatprep.mubr.f32.mxu0 %v3811
      %v3813 = vand.u32 %v1994, 4294901760
      %v3814 = vsub.f32 %v1994, %v3813
      %v3815 = vand.u32 %v3814, 4294901760
      %3816 = vmatmul.mubr.f32.gmra.mrb[0].mxu0 %v3815
      %v3817 = vpop.f32.mrb[0].mxu0
      %v3818 = vadd.f32 %v3391, %v3817
      %v3819 = vpop.f32.mrb[0].mxu0
      %v3820 = vand.u32 %v1997, 4294901760
      %v3821 = vsub.f32 %v1997, %v3820
      %v3822 = vand.u32 %v3821, 4294901760
      %3823 = vmatprep.mubr.f32.mxu0 %v3822
      %v3824 = vand.u32 %v1996, 4294901760
      %v3825 = vsub.f32 %v1996, %v3824
      %v3826 = vand.u32 %v3825, 4294901760
      %3827 = vmatmul.mubr.f32.gmra.mrb[0].mxu0 %v3826
      %v3828 = vpop.f32.mrb[0].mxu0
      %v3829 = vadd.f32 %v3400, %v3828
      %v3830 = vpop.f32.mrb[0].mxu0
      %v3831 = vand.u32 %v1999, 4294901760
      %v3832 = vsub.f32 %v1999, %v3831
      %v3833 = vand.u32 %v3832, 4294901760
      %3834 = vmatprep.mubr.f32.mxu0 %v3833
      %v3835 = vand.u32 %v1998, 4294901760
      %v3836 = vsub.f32 %v1998, %v3835
      %v3837 = vand.u32 %v3836, 4294901760
      %3838 = vmatmul.mubr.f32.gmra.mrb[0].mxu0 %v3837
      %v3839 = vpop.f32.mrb[0].mxu0
      %v3840 = vadd.f32 %v3409, %v3839
      %v3841 = vpop.f32.mrb[0].mxu0
      %v3842 = vand.u32 %v2001, 4294901760
      %v3843 = vsub.f32 %v2001, %v3842
      %v3844 = vand.u32 %v3843, 4294901760
      %3845 = vmatprep.mubr.f32.mxu0 %v3844
      %v3846 = vand.u32 %v2000, 4294901760
      %v3847 = vsub.f32 %v2000, %v3846
      %v3848 = vand.u32 %v3847, 4294901760
      %3849 = vmatmul.mubr.f32.gmra.mrb[0].mxu0 %v3848
      %v3850 = vpop.f32.mrb[0].mxu0
      %v3851 = vadd.f32 %v3418, %v3850
      %v3852 = vpop.f32.mrb[0].mxu0
      %v3853 = vand.u32 %v2003, 4294901760
      %v3854 = vsub.f32 %v2003, %v3853
      %v3855 = vand.u32 %v3854, 4294901760
      %3856 = vmatprep.mubr.f32.mxu0 %v3855
      %v3857 = vand.u32 %v2002, 4294901760
      %v3858 = vsub.f32 %v2002, %v3857
      %v3859 = vand.u32 %v3858, 4294901760
      %3860 = vmatmul.mubr.f32.gmra.mrb[0].mxu0 %v3859
      %v3861 = vpop.f32.mrb[0].mxu0
      %v3862 = vadd.f32 %v3427, %v3861
      %v3863 = vpop.f32.mrb[0].mxu0
      %v3864 = vand.u32 %v2005, 4294901760
      %v3865 = vsub.f32 %v2005, %v3864
      %v3866 = vand.u32 %v3865, 4294901760
      %3867 = vmatprep.mubr.f32.mxu0 %v3866
      %v3868 = vand.u32 %v2004, 4294901760
      %v3869 = vsub.f32 %v2004, %v3868
      %v3870 = vand.u32 %v3869, 4294901760
      %3871 = vmatmul.mubr.f32.gmra.mrb[0].mxu0 %v3870
      %v3872 = vpop.f32.mrb[0].mxu0
      %v3873 = vadd.f32 %v3436, %v3872
      %v3874 = vpop.f32.mrb[0].mxu0
      %v3875 = vand.u32 %v2007, 4294901760
      %v3876 = vsub.f32 %v2007, %v3875
      %v3877 = vand.u32 %v3876, 4294901760
      %3878 = vmatprep.mubr.f32.mxu0 %v3877
      %v3879 = vand.u32 %v2006, 4294901760
      %v3880 = vsub.f32 %v2006, %v3879
      %v3881 = vand.u32 %v3880, 4294901760
      %3882 = vmatmul.mubr.f32.gmra.mrb[0].mxu0 %v3881
      %v3883 = vpop.f32.mrb[0].mxu0
      %v3884 = vadd.f32 %v3445, %v3883
      %v3885 = vpop.f32.mrb[0].mxu0
      %v3886 = vand.u32 %v2009, 4294901760
      %v3887 = vsub.f32 %v2009, %v3886
      %v3888 = vand.u32 %v3887, 4294901760
      %3889 = vmatprep.mubr.f32.mxu0 %v3888
      %v3890 = vand.u32 %v2008, 4294901760
      %v3891 = vsub.f32 %v2008, %v3890
      %v3892 = vand.u32 %v3891, 4294901760
      %3893 = vmatmul.mubr.f32.gmra.mrb[0].mxu0 %v3892
      %v3894 = vpop.f32.mrb[0].mxu0
      %v3895 = vadd.f32 %v3454, %v3894
      %v3896 = vpop.f32.mrb[0].mxu0
      %v3897 = vand.u32 %v2011, 4294901760
      %v3898 = vsub.f32 %v2011, %v3897
      %v3899 = vand.u32 %v3898, 4294901760
      %3900 = vmatprep.mubr.f32.mxu0 %v3899
      %v3901 = vand.u32 %v2010, 4294901760
      %v3902 = vsub.f32 %v2010, %v3901
      %v3903 = vand.u32 %v3902, 4294901760
      %3904 = vmatmul.mubr.f32.gmra.mrb[0].mxu0 %v3903
      %v3905 = vpop.f32.mrb[0].mxu0
      %v3906 = vadd.f32 %v3463, %v3905
      %v3907 = vpop.f32.mrb[0].mxu0
      %v3908 = vand.u32 %v2013, 4294901760
      %v3909 = vsub.f32 %v2013, %v3908
      %v3910 = vand.u32 %v3909, 4294901760
      %3911 = vmatprep.mubr.f32.mxu0 %v3910
      %v3912 = vand.u32 %v2012, 4294901760
      %v3913 = vsub.f32 %v2012, %v3912
      %v3914 = vand.u32 %v3913, 4294901760
      %3915 = vmatmul.mubr.f32.gmra.mrb[0].mxu0 %v3914
      %v3916 = vpop.f32.mrb[0].mxu0
      %v3917 = vadd.f32 %v3472, %v3916
      %v3918 = vpop.f32.mrb[0].mxu0
      %v3919 = vand.u32 %v2015, 4294901760
      %v3920 = vsub.f32 %v2015, %v3919
      %v3921 = vand.u32 %v3920, 4294901760
      %3922 = vmatprep.mubr.f32.mxu0 %v3921
      %v3923 = vand.u32 %v2014, 4294901760
      %v3924 = vsub.f32 %v2014, %v3923
      %v3925 = vand.u32 %v3924, 4294901760
      %3926 = vmatmul.mubr.f32.gmra.mrb[0].mxu0 %v3925
      %v3927 = vpop.f32.mrb[0].mxu0
      %v3928 = vadd.f32 %v3481, %v3927
      %v3929 = vpop.f32.mrb[0].mxu0
      %v3930 = vand.u32 %v2017, 4294901760
      %v3931 = vsub.f32 %v2017, %v3930
      %v3932 = vand.u32 %v3931, 4294901760
      %3933 = vmatprep.mubr.f32.mxu0 %v3932
      %v3934 = vand.u32 %v2016, 4294901760
      %v3935 = vsub.f32 %v2016, %v3934
      %v3936 = vand.u32 %v3935, 4294901760
      %3937 = vmatmul.mubr.f32.gmra.mrb[0].mxu0 %v3936
      %v3938 = vpop.f32.mrb[0].mxu0
      %v3939 = vadd.f32 %v3490, %v3938
      %v3940 = vpop.f32.mrb[0].mxu0
      %3941 = vdwg.mxu0
      %3942 = vmatprep.subr.mxu0 0.0
      %v3943 = vand.u32 %v2018, 4294901760
      %v3944 = vsub.f32 %v2018, %v3943
      %v3945 = vand.u32 %v3944, 4294901760
      %3946 = vmatpush1.msra.mxu0 %v3945
      %3947 = vmatprep.subr.mxu0 0.0
      %v3948 = vand.u32 %v2019, 4294901760
      %v3949 = vsub.f32 %v2019, %v3948
      %v3950 = vand.u32 %v3949, 4294901760
      %3951 = vmatpush1.msra.mxu0 %v3950
      %3952 = vmatprep.subr.mxu0 0.0
      %v3953 = vand.u32 %v2020, 4294901760
      %v3954 = vsub.f32 %v2020, %v3953
      %v3955 = vand.u32 %v3954, 4294901760
      %3956 = vmatpush1.msra.mxu0 %v3955
      %3957 = vmatprep.subr.mxu0 0.0
      %v3958 = vand.u32 %v2021, 4294901760
      %v3959 = vsub.f32 %v2021, %v3958
      %v3960 = vand.u32 %v3959, 4294901760
      %3961 = vmatpush1.msra.mxu0 %v3960
      %3962 = vmatprep.subr.mxu0 0.0
      %v3963 = vand.u32 %v2022, 4294901760
      %v3964 = vsub.f32 %v2022, %v3963
      %v3965 = vand.u32 %v3964, 4294901760
      %3966 = vmatpush1.msra.mxu0 %v3965
      %3967 = vmatprep.subr.mxu0 0.0
      %v3968 = vand.u32 %v2023, 4294901760
      %v3969 = vsub.f32 %v2023, %v3968
      %v3970 = vand.u32 %v3969, 4294901760
      %3971 = vmatpush1.msra.mxu0 %v3970
      %3972 = vmatprep.subr.mxu0 0.0
      %v3973 = vand.u32 %v2024, 4294901760
      %v3974 = vsub.f32 %v2024, %v3973
      %v3975 = vand.u32 %v3974, 4294901760
      %3976 = vmatpush1.msra.mxu0 %v3975
      %3977 = vmatprep.subr.mxu0 0.0
      %v3978 = vand.u32 %v2025, 4294901760
      %v3979 = vsub.f32 %v2025, %v3978
      %v3980 = vand.u32 %v3979, 4294901760
      %3981 = vmatpush1.msra.mxu0 %v3980
      %3982 = vmatprep.subr.mxu0 0.0
      %v3983 = vand.u32 %v2026, 4294901760
      %v3984 = vsub.f32 %v2026, %v3983
      %v3985 = vand.u32 %v3984, 4294901760
      %3986 = vmatpush1.msra.mxu0 %v3985
      %3987 = vmatprep.subr.mxu0 0.0
      %v3988 = vand.u32 %v2027, 4294901760
      %v3989 = vsub.f32 %v2027, %v3988
      %v3990 = vand.u32 %v3989, 4294901760
      %3991 = vmatpush1.msra.mxu0 %v3990
      %3992 = vmatprep.subr.mxu0 0.0
      %v3993 = vand.u32 %v2028, 4294901760
      %v3994 = vsub.f32 %v2028, %v3993
      %v3995 = vand.u32 %v3994, 4294901760
      %3996 = vmatpush1.msra.mxu0 %v3995
      %3997 = vmatprep.subr.mxu0 0.0
      %v3998 = vand.u32 %v2029, 4294901760
      %v3999 = vsub.f32 %v2029, %v3998
      %v4000 = vand.u32 %v3999, 4294901760
      %4001 = vmatpush1.msra.mxu0 %v4000
      %4002 = vmatprep.subr.mxu0 0.0
      %v4003 = vand.u32 %v2030, 4294901760
      %v4004 = vsub.f32 %v2030, %v4003
      %v4005 = vand.u32 %v4004, 4294901760
      %4006 = vmatpush1.msra.mxu0 %v4005
      %4007 = vmatprep.subr.mxu0 0.0
      %v4008 = vand.u32 %v2031, 4294901760
      %v4009 = vsub.f32 %v2031, %v4008
      %v4010 = vand.u32 %v4009, 4294901760
      %4011 = vmatpush1.msra.mxu0 %v4010
      %4012 = vmatprep.subr.mxu0 0.0
      %v4013 = vand.u32 %v2032, 4294901760
      %v4014 = vsub.f32 %v2032, %v4013
      %v4015 = vand.u32 %v4014, 4294901760
      %4016 = vmatpush1.msra.mxu0 %v4015
      %4017 = vmatprep.subr.mxu0 0.0
      %v4018 = vand.u32 %v2033, 4294901760
      %v4019 = vsub.f32 %v2033, %v4018
      %v4020 = vand.u32 %v4019, 4294901760
      %4021 = vmatpush1.msra.mxu0 %v4020
      %4022 = vmatprep.subr.mxu0 0.0
      %v4023 = vand.u32 %v2034, 4294901760
      %v4024 = vsub.f32 %v2034, %v4023
      %v4025 = vand.u32 %v4024, 4294901760
      %4026 = vmatpush1.msra.mxu0 %v4025
      %4027 = vmatprep.subr.mxu0 0.0
      %v4028 = vand.u32 %v2035, 4294901760
      %v4029 = vsub.f32 %v2035, %v4028
      %v4030 = vand.u32 %v4029, 4294901760
      %4031 = vmatpush1.msra.mxu0 %v4030
      %4032 = vmatprep.subr.mxu0 0.0
      %v4033 = vand.u32 %v2036, 4294901760
      %v4034 = vsub.f32 %v2036, %v4033
      %v4035 = vand.u32 %v4034, 4294901760
      %4036 = vmatpush1.msra.mxu0 %v4035
      %4037 = vmatprep.subr.mxu0 0.0
      %v4038 = vand.u32 %v2037, 4294901760
      %v4039 = vsub.f32 %v2037, %v4038
      %v4040 = vand.u32 %v4039, 4294901760
      %4041 = vmatpush1.msra.mxu0 %v4040
      %4042 = vmatprep.subr.mxu0 0.0
      %v4043 = vand.u32 %v2038, 4294901760
      %v4044 = vsub.f32 %v2038, %v4043
      %v4045 = vand.u32 %v4044, 4294901760
      %4046 = vmatpush1.msra.mxu0 %v4045
      %4047 = vmatprep.subr.mxu0 0.0
      %v4048 = vand.u32 %v2039, 4294901760
      %v4049 = vsub.f32 %v2039, %v4048
      %v4050 = vand.u32 %v4049, 4294901760
      %4051 = vmatpush1.msra.mxu0 %v4050
      %4052 = vmatprep.subr.mxu0 0.0
      %v4053 = vand.u32 %v2040, 4294901760
      %v4054 = vsub.f32 %v2040, %v4053
      %v4055 = vand.u32 %v4054, 4294901760
      %4056 = vmatpush1.msra.mxu0 %v4055
      %4057 = vmatprep.subr.mxu0 0.0
      %v4058 = vand.u32 %v2041, 4294901760
      %v4059 = vsub.f32 %v2041, %v4058
      %v4060 = vand.u32 %v4059, 4294901760
      %4061 = vmatpush1.msra.mxu0 %v4060
      %4062 = vmatprep.subr.mxu0 0.0
      %v4063 = vand.u32 %v2042, 4294901760
      %v4064 = vsub.f32 %v2042, %v4063
      %v4065 = vand.u32 %v4064, 4294901760
      %4066 = vmatpush1.msra.mxu0 %v4065
      %4067 = vmatprep.subr.mxu0 0.0
      %v4068 = vand.u32 %v2043, 4294901760
      %v4069 = vsub.f32 %v2043, %v4068
      %v4070 = vand.u32 %v4069, 4294901760
      %4071 = vmatpush1.msra.mxu0 %v4070
      %4072 = vmatprep.subr.mxu0 0.0
      %v4073 = vand.u32 %v2044, 4294901760
      %v4074 = vsub.f32 %v2044, %v4073
      %v4075 = vand.u32 %v4074, 4294901760
      %4076 = vmatpush1.msra.mxu0 %v4075
      %4077 = vmatprep.subr.mxu0 0.0
      %v4078 = vand.u32 %v2045, 4294901760
      %v4079 = vsub.f32 %v2045, %v4078
      %v4080 = vand.u32 %v4079, 4294901760
      %4081 = vmatpush1.msra.mxu0 %v4080
      %4082 = vmatprep.subr.mxu0 0.0
      %v4083 = vand.u32 %v2046, 4294901760
      %v4084 = vsub.f32 %v2046, %v4083
      %v4085 = vand.u32 %v4084, 4294901760
      %4086 = vmatpush1.msra.mxu0 %v4085
      %4087 = vmatprep.subr.mxu0 0.0
      %v4088 = vand.u32 %v2047, 4294901760
      %v4089 = vsub.f32 %v2047, %v4088
      %v4090 = vand.u32 %v4089, 4294901760
      %4091 = vmatpush1.msra.mxu0 %v4090
      %4092 = vmatprep.subr.mxu0 0.0
      %v4093 = vand.u32 %v2048, 4294901760
      %v4094 = vsub.f32 %v2048, %v4093
      %v4095 = vand.u32 %v4094, 4294901760
      %4096 = vmatpush1.msra.mxu0 %v4095
      %4097 = vmatprep.subr.mxu0 0.0
      %v4098 = vand.u32 %v2049, 4294901760
      %v4099 = vsub.f32 %v2049, %v4098
      %v4100 = vand.u32 %v4099, 4294901760
      %4101 = vmatpush1.msra.mxu0 %v4100
      %v4102 = vand.u32 %v1955, 4294901760
      %4103 = vmatprep.mubr.f32.mxu0 %v4102
      %v4104 = vand.u32 %v1954, 4294901760
      %4105 = vmatmul.mubr.f32.gmra.mrb[0].mxu0 %v4104
      %v4106 = vpop.f32.mrb[0].mxu0
      %v4107 = vadd.f32 %v3598, %v4106
      %v4108 = vpop.f32.mrb[0].mxu0
      %v4109 = vand.u32 %v1957, 4294901760
      %4110 = vmatprep.mubr.f32.mxu0 %v4109
      %v4111 = vand.u32 %v1956, 4294901760
      %4112 = vmatmul.mubr.f32.gmra.mrb[0].mxu0 %v4111
      %v4113 = vpop.f32.mrb[0].mxu0
      %v4114 = vadd.f32 %v3609, %v4113
      %v4115 = vpop.f32.mrb[0].mxu0
      %v4116 = vand.u32 %v1959, 4294901760
      %4117 = vmatprep.mubr.f32.mxu0 %v4116
      %v4118 = vand.u32 %v1958, 4294901760
      %4119 = vmatmul.mubr.f32.gmra.mrb[0].mxu0 %v4118
      %v4120 = vpop.f32.mrb[0].mxu0
      %v4121 = vadd.f32 %v3620, %v4120
      %v4122 = vpop.f32.mrb[0].mxu0
      %v4123 = vand.u32 %v1961, 4294901760
      %4124 = vmatprep.mubr.f32.mxu0 %v4123
      %v4125 = vand.u32 %v1960, 4294901760
      %4126 = vmatmul.mubr.f32.gmra.mrb[0].mxu0 %v4125
      %v4127 = vpop.f32.mrb[0].mxu0
      %v4128 = vadd.f32 %v3631, %v4127
      %v4129 = vpop.f32.mrb[0].mxu0
      %v4130 = vand.u32 %v1963, 4294901760
      %4131 = vmatprep.mubr.f32.mxu0 %v4130
      %v4132 = vand.u32 %v1962, 4294901760
      %4133 = vmatmul.mubr.f32.gmra.mrb[0].mxu0 %v4132
      %v4134 = vpop.f32.mrb[0].mxu0
      %v4135 = vadd.f32 %v3642, %v4134
      %v4136 = vpop.f32.mrb[0].mxu0
      %v4137 = vand.u32 %v1965, 4294901760
      %4138 = vmatprep.mubr.f32.mxu0 %v4137
      %v4139 = vand.u32 %v1964, 4294901760
      %4140 = vmatmul.mubr.f32.gmra.mrb[0].mxu0 %v4139
      %v4141 = vpop.f32.mrb[0].mxu0
      %v4142 = vadd.f32 %v3653, %v4141
      %v4143 = vpop.f32.mrb[0].mxu0
      %v4144 = vand.u32 %v1967, 4294901760
      %4145 = vmatprep.mubr.f32.mxu0 %v4144
      %v4146 = vand.u32 %v1966, 4294901760
      %4147 = vmatmul.mubr.f32.gmra.mrb[0].mxu0 %v4146
      %v4148 = vpop.f32.mrb[0].mxu0
      %v4149 = vadd.f32 %v3664, %v4148
      %v4150 = vpop.f32.mrb[0].mxu0
      %v4151 = vand.u32 %v1969, 4294901760
      %4152 = vmatprep.mubr.f32.mxu0 %v4151
      %v4153 = vand.u32 %v1968, 4294901760
      %4154 = vmatmul.mubr.f32.gmra.mrb[0].mxu0 %v4153
      %v4155 = vpop.f32.mrb[0].mxu0
      %v4156 = vadd.f32 %v3675, %v4155
      %v4157 = vpop.f32.mrb[0].mxu0
      %v4158 = vand.u32 %v1971, 4294901760
      %4159 = vmatprep.mubr.f32.mxu0 %v4158
      %v4160 = vand.u32 %v1970, 4294901760
      %4161 = vmatmul.mubr.f32.gmra.mrb[0].mxu0 %v4160
      %v4162 = vpop.f32.mrb[0].mxu0
      %v4163 = vadd.f32 %v3686, %v4162
      %v4164 = vpop.f32.mrb[0].mxu0
      %v4165 = vand.u32 %v1973, 4294901760
      %4166 = vmatprep.mubr.f32.mxu0 %v4165
      %v4167 = vand.u32 %v1972, 4294901760
      %4168 = vmatmul.mubr.f32.gmra.mrb[0].mxu0 %v4167
      %v4169 = vpop.f32.mrb[0].mxu0
      %v4170 = vadd.f32 %v3697, %v4169
      %v4171 = vpop.f32.mrb[0].mxu0
      %v4172 = vand.u32 %v1975, 4294901760
      %4173 = vmatprep.mubr.f32.mxu0 %v4172
      %v4174 = vand.u32 %v1974, 4294901760
      %4175 = vmatmul.mubr.f32.gmra.mrb[0].mxu0 %v4174
      %v4176 = vpop.f32.mrb[0].mxu0
      %v4177 = vadd.f32 %v3708, %v4176
      %v4178 = vpop.f32.mrb[0].mxu0
      %v4179 = vand.u32 %v1977, 4294901760
      %4180 = vmatprep.mubr.f32.mxu0 %v4179
      %v4181 = vand.u32 %v1976, 4294901760
      %4182 = vmatmul.mubr.f32.gmra.mrb[0].mxu0 %v4181
      %v4183 = vpop.f32.mrb[0].mxu0
      %v4184 = vadd.f32 %v3719, %v4183
      %v4185 = vpop.f32.mrb[0].mxu0
      %v4186 = vand.u32 %v1979, 4294901760
      %4187 = vmatprep.mubr.f32.mxu0 %v4186
      %v4188 = vand.u32 %v1978, 4294901760
      %4189 = vmatmul.mubr.f32.gmra.mrb[0].mxu0 %v4188
      %v4190 = vpop.f32.mrb[0].mxu0
      %v4191 = vadd.f32 %v3730, %v4190
      %v4192 = vpop.f32.mrb[0].mxu0
      %v4193 = vand.u32 %v1981, 4294901760
      %4194 = vmatprep.mubr.f32.mxu0 %v4193
      %v4195 = vand.u32 %v1980, 4294901760
      %4196 = vmatmul.mubr.f32.gmra.mrb[0].mxu0 %v4195
      %v4197 = vpop.f32.mrb[0].mxu0
      %v4198 = vadd.f32 %v3741, %v4197
      %v4199 = vpop.f32.mrb[0].mxu0
      %v4200 = vand.u32 %v1983, 4294901760
      %4201 = vmatprep.mubr.f32.mxu0 %v4200
      %v4202 = vand.u32 %v1982, 4294901760
      %4203 = vmatmul.mubr.f32.gmra.mrb[0].mxu0 %v4202
      %v4204 = vpop.f32.mrb[0].mxu0
      %v4205 = vadd.f32 %v3752, %v4204
      %v4206 = vpop.f32.mrb[0].mxu0
      %v4207 = vand.u32 %v1985, 4294901760
      %4208 = vmatprep.mubr.f32.mxu0 %v4207
      %v4209 = vand.u32 %v1984, 4294901760
      %4210 = vmatmul.mubr.f32.gmra.mrb[0].mxu0 %v4209
      %v4211 = vpop.f32.mrb[0].mxu0
      %v4212 = vadd.f32 %v3763, %v4211
      %v4213 = vpop.f32.mrb[0].mxu0
      %v4214 = vand.u32 %v1987, 4294901760
      %4215 = vmatprep.mubr.f32.mxu0 %v4214
      %v4216 = vand.u32 %v1986, 4294901760
      %4217 = vmatmul.mubr.f32.gmra.mrb[0].mxu0 %v4216
      %v4218 = vpop.f32.mrb[0].mxu0
      %v4219 = vadd.f32 %v3774, %v4218
      %v4220 = vpop.f32.mrb[0].mxu0
      %v4221 = vand.u32 %v1989, 4294901760
      %4222 = vmatprep.mubr.f32.mxu0 %v4221
      %v4223 = vand.u32 %v1988, 4294901760
      %4224 = vmatmul.mubr.f32.gmra.mrb[0].mxu0 %v4223
      %v4225 = vpop.f32.mrb[0].mxu0
      %v4226 = vadd.f32 %v3785, %v4225
      %v4227 = vpop.f32.mrb[0].mxu0
      %v4228 = vand.u32 %v1991, 4294901760
      %4229 = vmatprep.mubr.f32.mxu0 %v4228
      %v4230 = vand.u32 %v1990, 4294901760
      %4231 = vmatmul.mubr.f32.gmra.mrb[0].mxu0 %v4230
      %v4232 = vpop.f32.mrb[0].mxu0
      %v4233 = vadd.f32 %v3796, %v4232
      %v4234 = vpop.f32.mrb[0].mxu0
      %v4235 = vand.u32 %v1993, 4294901760
      %4236 = vmatprep.mubr.f32.mxu0 %v4235
      %v4237 = vand.u32 %v1992, 4294901760
      %4238 = vmatmul.mubr.f32.gmra.mrb[0].mxu0 %v4237
      %v4239 = vpop.f32.mrb[0].mxu0
      %v4240 = vadd.f32 %v3807, %v4239
      %v4241 = vpop.f32.mrb[0].mxu0
      %v4242 = vand.u32 %v1995, 4294901760
      %4243 = vmatprep.mubr.f32.mxu0 %v4242
      %v4244 = vand.u32 %v1994, 4294901760
      %4245 = vmatmul.mubr.f32.gmra.mrb[0].mxu0 %v4244
      %v4246 = vpop.f32.mrb[0].mxu0
      %v4247 = vadd.f32 %v3818, %v4246
      %v4248 = vpop.f32.mrb[0].mxu0
      %v4249 = vand.u32 %v1997, 4294901760
      %4250 = vmatprep.mubr.f32.mxu0 %v4249
      %v4251 = vand.u32 %v1996, 4294901760
      %4252 = vmatmul.mubr.f32.gmra.mrb[0].mxu0 %v4251
      %v4253 = vpop.f32.mrb[0].mxu0
      %v4254 = vadd.f32 %v3829, %v4253
      %v4255 = vpop.f32.mrb[0].mxu0
      %v4256 = vand.u32 %v1999, 4294901760
      %4257 = vmatprep.mubr.f32.mxu0 %v4256
      %v4258 = vand.u32 %v1998, 4294901760
      %4259 = vmatmul.mubr.f32.gmra.mrb[0].mxu0 %v4258
      %v4260 = vpop.f32.mrb[0].mxu0
      %v4261 = vadd.f32 %v3840, %v4260
      %v4262 = vpop.f32.mrb[0].mxu0
      %v4263 = vand.u32 %v2001, 4294901760
      %4264 = vmatprep.mubr.f32.mxu0 %v4263
      %v4265 = vand.u32 %v2000, 4294901760
      %4266 = vmatmul.mubr.f32.gmra.mrb[0].mxu0 %v4265
      %v4267 = vpop.f32.mrb[0].mxu0
      %v4268 = vadd.f32 %v3851, %v4267
      %v4269 = vpop.f32.mrb[0].mxu0
      %v4270 = vand.u32 %v2003, 4294901760
      %4271 = vmatprep.mubr.f32.mxu0 %v4270
      %v4272 = vand.u32 %v2002, 4294901760
      %4273 = vmatmul.mubr.f32.gmra.mrb[0].mxu0 %v4272
      %v4274 = vpop.f32.mrb[0].mxu0
      %v4275 = vadd.f32 %v3862, %v4274
      %v4276 = vpop.f32.mrb[0].mxu0
      %v4277 = vand.u32 %v2005, 4294901760
      %4278 = vmatprep.mubr.f32.mxu0 %v4277
      %v4279 = vand.u32 %v2004, 4294901760
      %4280 = vmatmul.mubr.f32.gmra.mrb[0].mxu0 %v4279
      %v4281 = vpop.f32.mrb[0].mxu0
      %v4282 = vadd.f32 %v3873, %v4281
      %v4283 = vpop.f32.mrb[0].mxu0
      %v4284 = vand.u32 %v2007, 4294901760
      %4285 = vmatprep.mubr.f32.mxu0 %v4284
      %v4286 = vand.u32 %v2006, 4294901760
      %4287 = vmatmul.mubr.f32.gmra.mrb[0].mxu0 %v4286
      %v4288 = vpop.f32.mrb[0].mxu0
      %v4289 = vadd.f32 %v3884, %v4288
      %v4290 = vpop.f32.mrb[0].mxu0
      %v4291 = vand.u32 %v2009, 4294901760
      %4292 = vmatprep.mubr.f32.mxu0 %v4291
      %v4293 = vand.u32 %v2008, 4294901760
      %4294 = vmatmul.mubr.f32.gmra.mrb[0].mxu0 %v4293
      %v4295 = vpop.f32.mrb[0].mxu0
      %v4296 = vadd.f32 %v3895, %v4295
      %v4297 = vpop.f32.mrb[0].mxu0
      %v4298 = vand.u32 %v2011, 4294901760
      %4299 = vmatprep.mubr.f32.mxu0 %v4298
      %v4300 = vand.u32 %v2010, 4294901760
      %4301 = vmatmul.mubr.f32.gmra.mrb[0].mxu0 %v4300
      %v4302 = vpop.f32.mrb[0].mxu0
      %v4303 = vadd.f32 %v3906, %v4302
      %v4304 = vpop.f32.mrb[0].mxu0
      %v4305 = vand.u32 %v2013, 4294901760
      %4306 = vmatprep.mubr.f32.mxu0 %v4305
      %v4307 = vand.u32 %v2012, 4294901760
      %4308 = vmatmul.mubr.f32.gmra.mrb[0].mxu0 %v4307
      %v4309 = vpop.f32.mrb[0].mxu0
      %v4310 = vadd.f32 %v3917, %v4309
      %v4311 = vpop.f32.mrb[0].mxu0
      %v4312 = vand.u32 %v2015, 4294901760
      %4313 = vmatprep.mubr.f32.mxu0 %v4312
      %v4314 = vand.u32 %v2014, 4294901760
      %4315 = vmatmul.mubr.f32.gmra.mrb[0].mxu0 %v4314
      %v4316 = vpop.f32.mrb[0].mxu0
      %v4317 = vadd.f32 %v3928, %v4316
      %v4318 = vpop.f32.mrb[0].mxu0
      %v4319 = vand.u32 %v2017, 4294901760
      %4320 = vmatprep.mubr.f32.mxu0 %v4319
      %v4321 = vand.u32 %v2016, 4294901760
      %4322 = vmatmul.mubr.f32.gmra.mrb[0].mxu0 %v4321
      %v4323 = vpop.f32.mrb[0].mxu0
      %v4324 = vadd.f32 %v3939, %v4323
      %v4325 = vpop.f32.mrb[0].mxu0
      %4326 = vdwg.mxu0
      %4327 = vmatprep.subr.mxu0 0.0
      %v4328 = vand.u32 %v2018, 4294901760
      %4329 = vmatpush1.msra.mxu0 %v4328
      %4330 = vmatprep.subr.mxu0 0.0
      %v4331 = vand.u32 %v2019, 4294901760
      %4332 = vmatpush1.msra.mxu0 %v4331
      %4333 = vmatprep.subr.mxu0 0.0
      %v4334 = vand.u32 %v2020, 4294901760
      %4335 = vmatpush1.msra.mxu0 %v4334
      %4336 = vmatprep.subr.mxu0 0.0
      %v4337 = vand.u32 %v2021, 4294901760
      %4338 = vmatpush1.msra.mxu0 %v4337
      %4339 = vmatprep.subr.mxu0 0.0
      %v4340 = vand.u32 %v2022, 4294901760
      %4341 = vmatpush1.msra.mxu0 %v4340
      %4342 = vmatprep.subr.mxu0 0.0
      %v4343 = vand.u32 %v2023, 4294901760
      %4344 = vmatpush1.msra.mxu0 %v4343
      %4345 = vmatprep.subr.mxu0 0.0
      %v4346 = vand.u32 %v2024, 4294901760
      %4347 = vmatpush1.msra.mxu0 %v4346
      %4348 = vmatprep.subr.mxu0 0.0
      %v4349 = vand.u32 %v2025, 4294901760
      %4350 = vmatpush1.msra.mxu0 %v4349
      %4351 = vmatprep.subr.mxu0 0.0
      %v4352 = vand.u32 %v2026, 4294901760
      %4353 = vmatpush1.msra.mxu0 %v4352
      %4354 = vmatprep.subr.mxu0 0.0
      %v4355 = vand.u32 %v2027, 4294901760
      %4356 = vmatpush1.msra.mxu0 %v4355
      %4357 = vmatprep.subr.mxu0 0.0
      %v4358 = vand.u32 %v2028, 4294901760
      %4359 = vmatpush1.msra.mxu0 %v4358
      %4360 = vmatprep.subr.mxu0 0.0
      %v4361 = vand.u32 %v2029, 4294901760
      %4362 = vmatpush1.msra.mxu0 %v4361
      %4363 = vmatprep.subr.mxu0 0.0
      %v4364 = vand.u32 %v2030, 4294901760
      %4365 = vmatpush1.msra.mxu0 %v4364
      %4366 = vmatprep.subr.mxu0 0.0
      %v4367 = vand.u32 %v2031, 4294901760
      %4368 = vmatpush1.msra.mxu0 %v4367
      %4369 = vmatprep.subr.mxu0 0.0
      %v4370 = vand.u32 %v2032, 4294901760
      %4371 = vmatpush1.msra.mxu0 %v4370
      %4372 = vmatprep.subr.mxu0 0.0
      %v4373 = vand.u32 %v2033, 4294901760
      %4374 = vmatpush1.msra.mxu0 %v4373
      %4375 = vmatprep.subr.mxu0 0.0
      %v4376 = vand.u32 %v2034, 4294901760
      %4377 = vmatpush1.msra.mxu0 %v4376
      %4378 = vmatprep.subr.mxu0 0.0
      %v4379 = vand.u32 %v2035, 4294901760
      %4380 = vmatpush1.msra.mxu0 %v4379
      %4381 = vmatprep.subr.mxu0 0.0
      %v4382 = vand.u32 %v2036, 4294901760
      %4383 = vmatpush1.msra.mxu0 %v4382
      %4384 = vmatprep.subr.mxu0 0.0
      %v4385 = vand.u32 %v2037, 4294901760
      %4386 = vmatpush1.msra.mxu0 %v4385
      %4387 = vmatprep.subr.mxu0 0.0
      %v4388 = vand.u32 %v2038, 4294901760
      %4389 = vmatpush1.msra.mxu0 %v4388
      %4390 = vmatprep.subr.mxu0 0.0
      %v4391 = vand.u32 %v2039, 4294901760
      %4392 = vmatpush1.msra.mxu0 %v4391
      %4393 = vmatprep.subr.mxu0 0.0
      %v4394 = vand.u32 %v2040, 4294901760
      %4395 = vmatpush1.msra.mxu0 %v4394
      %4396 = vmatprep.subr.mxu0 0.0
      %v4397 = vand.u32 %v2041, 4294901760
      %4398 = vmatpush1.msra.mxu0 %v4397
      %4399 = vmatprep.subr.mxu0 0.0
      %v4400 = vand.u32 %v2042, 4294901760
      %4401 = vmatpush1.msra.mxu0 %v4400
      %4402 = vmatprep.subr.mxu0 0.0
      %v4403 = vand.u32 %v2043, 4294901760
      %4404 = vmatpush1.msra.mxu0 %v4403
      %4405 = vmatprep.subr.mxu0 0.0
      %v4406 = vand.u32 %v2044, 4294901760
      %4407 = vmatpush1.msra.mxu0 %v4406
      %4408 = vmatprep.subr.mxu0 0.0
      %v4409 = vand.u32 %v2045, 4294901760
      %4410 = vmatpush1.msra.mxu0 %v4409
      %4411 = vmatprep.subr.mxu0 0.0
      %v4412 = vand.u32 %v2046, 4294901760
      %4413 = vmatpush1.msra.mxu0 %v4412
      %4414 = vmatprep.subr.mxu0 0.0
      %v4415 = vand.u32 %v2047, 4294901760
      %4416 = vmatpush1.msra.mxu0 %v4415
      %4417 = vmatprep.subr.mxu0 0.0
      %v4418 = vand.u32 %v2048, 4294901760
      %4419 = vmatpush1.msra.mxu0 %v4418
      %4420 = vmatprep.subr.mxu0 0.0
      %v4421 = vand.u32 %v2049, 4294901760
      %4422 = vmatpush1.msra.mxu0 %v4421
      %v4423 = vand.u32 %v1955, 4294901760
      %4424 = vmatprep.mubr.f32.mxu0 %v4423
      %v4425 = vand.u32 %v1954, 4294901760
      %4426 = vmatmul.mubr.f32.gmra.mrb[0].mxu0 %v4425
      %v4427 = vpop.f32.mrb[0].mxu0
      %v4428 = vadd.f32 %v4107, %v4427
      %v4429 = vpop.f32.mrb[0].mxu0
      %v4430 = vand.u32 %v1957, 4294901760
      %4431 = vmatprep.mubr.f32.mxu0 %v4430
      %v4432 = vand.u32 %v1956, 4294901760
      %4433 = vmatmul.mubr.f32.gmra.mrb[0].mxu0 %v4432
      %v4434 = vpop.f32.mrb[0].mxu0
      %v4435 = vadd.f32 %v4114, %v4434
      %v4436 = vpop.f32.mrb[0].mxu0
      %v4437 = vand.u32 %v1959, 4294901760
      %4438 = vmatprep.mubr.f32.mxu0 %v4437
      %v4439 = vand.u32 %v1958, 4294901760
      %4440 = vmatmul.mubr.f32.gmra.mrb[0].mxu0 %v4439
      %v4441 = vpop.f32.mrb[0].mxu0
      %v4442 = vadd.f32 %v4121, %v4441
      %v4443 = vpop.f32.mrb[0].mxu0
      %v4444 = vand.u32 %v1961, 4294901760
      %4445 = vmatprep.mubr.f32.mxu0 %v4444
      %v4446 = vand.u32 %v1960, 4294901760
      %4447 = vmatmul.mubr.f32.gmra.mrb[0].mxu0 %v4446
      %v4448 = vpop.f32.mrb[0].mxu0
      %v4449 = vadd.f32 %v4128, %v4448
      %v4450 = vpop.f32.mrb[0].mxu0
      %v4451 = vand.u32 %v1963, 4294901760
      %4452 = vmatprep.mubr.f32.mxu0 %v4451
      %v4453 = vand.u32 %v1962, 4294901760
      %4454 = vmatmul.mubr.f32.gmra.mrb[0].mxu0 %v4453
      %v4455 = vpop.f32.mrb[0].mxu0
      %v4456 = vadd.f32 %v4135, %v4455
      %v4457 = vpop.f32.mrb[0].mxu0
      %v4458 = vand.u32 %v1965, 4294901760
      %4459 = vmatprep.mubr.f32.mxu0 %v4458
      %v4460 = vand.u32 %v1964, 4294901760
      %4461 = vmatmul.mubr.f32.gmra.mrb[0].mxu0 %v4460
      %v4462 = vpop.f32.mrb[0].mxu0
      %v4463 = vadd.f32 %v4142, %v4462
      %v4464 = vpop.f32.mrb[0].mxu0
      %v4465 = vand.u32 %v1967, 4294901760
      %4466 = vmatprep.mubr.f32.mxu0 %v4465
      %v4467 = vand.u32 %v1966, 4294901760
      %4468 = vmatmul.mubr.f32.gmra.mrb[0].mxu0 %v4467
      %v4469 = vpop.f32.mrb[0].mxu0
      %v4470 = vadd.f32 %v4149, %v4469
      %v4471 = vpop.f32.mrb[0].mxu0
      %v4472 = vand.u32 %v1969, 4294901760
      %4473 = vmatprep.mubr.f32.mxu0 %v4472
      %v4474 = vand.u32 %v1968, 4294901760
      %4475 = vmatmul.mubr.f32.gmra.mrb[0].mxu0 %v4474
      %v4476 = vpop.f32.mrb[0].mxu0
      %v4477 = vadd.f32 %v4156, %v4476
      %v4478 = vpop.f32.mrb[0].mxu0
      %v4479 = vand.u32 %v1971, 4294901760
      %4480 = vmatprep.mubr.f32.mxu0 %v4479
      %v4481 = vand.u32 %v1970, 4294901760
      %4482 = vmatmul.mubr.f32.gmra.mrb[0].mxu0 %v4481
      %v4483 = vpop.f32.mrb[0].mxu0
      %v4484 = vadd.f32 %v4163, %v4483
      %v4485 = vpop.f32.mrb[0].mxu0
      %v4486 = vand.u32 %v1973, 4294901760
      %4487 = vmatprep.mubr.f32.mxu0 %v4486
      %v4488 = vand.u32 %v1972, 4294901760
      %4489 = vmatmul.mubr.f32.gmra.mrb[0].mxu0 %v4488
      %v4490 = vpop.f32.mrb[0].mxu0
      %v4491 = vadd.f32 %v4170, %v4490
      %v4492 = vpop.f32.mrb[0].mxu0
      %v4493 = vand.u32 %v1975, 4294901760
      %4494 = vmatprep.mubr.f32.mxu0 %v4493
      %v4495 = vand.u32 %v1974, 4294901760
      %4496 = vmatmul.mubr.f32.gmra.mrb[0].mxu0 %v4495
      %v4497 = vpop.f32.mrb[0].mxu0
      %v4498 = vadd.f32 %v4177, %v4497
      %v4499 = vpop.f32.mrb[0].mxu0
      %v4500 = vand.u32 %v1977, 4294901760
      %4501 = vmatprep.mubr.f32.mxu0 %v4500
      %v4502 = vand.u32 %v1976, 4294901760
      %4503 = vmatmul.mubr.f32.gmra.mrb[0].mxu0 %v4502
      %v4504 = vpop.f32.mrb[0].mxu0
      %v4505 = vadd.f32 %v4184, %v4504
      %v4506 = vpop.f32.mrb[0].mxu0
      %v4507 = vand.u32 %v1979, 4294901760
      %4508 = vmatprep.mubr.f32.mxu0 %v4507
      %v4509 = vand.u32 %v1978, 4294901760
      %4510 = vmatmul.mubr.f32.gmra.mrb[0].mxu0 %v4509
      %v4511 = vpop.f32.mrb[0].mxu0
      %v4512 = vadd.f32 %v4191, %v4511
      %v4513 = vpop.f32.mrb[0].mxu0
      %v4514 = vand.u32 %v1981, 4294901760
      %4515 = vmatprep.mubr.f32.mxu0 %v4514
      %v4516 = vand.u32 %v1980, 4294901760
      %4517 = vmatmul.mubr.f32.gmra.mrb[0].mxu0 %v4516
      %v4518 = vpop.f32.mrb[0].mxu0
      %v4519 = vadd.f32 %v4198, %v4518
      %v4520 = vpop.f32.mrb[0].mxu0
      %v4521 = vand.u32 %v1983, 4294901760
      %4522 = vmatprep.mubr.f32.mxu0 %v4521
      %v4523 = vand.u32 %v1982, 4294901760
      %4524 = vmatmul.mubr.f32.gmra.mrb[0].mxu0 %v4523
      %v4525 = vpop.f32.mrb[0].mxu0
      %v4526 = vadd.f32 %v4205, %v4525
      %v4527 = vpop.f32.mrb[0].mxu0
      %v4528 = vand.u32 %v1985, 4294901760
      %4529 = vmatprep.mubr.f32.mxu0 %v4528
      %v4530 = vand.u32 %v1984, 4294901760
      %4531 = vmatmul.mubr.f32.gmra.mrb[0].mxu0 %v4530
      %v4532 = vpop.f32.mrb[0].mxu0
      %v4533 = vadd.f32 %v4212, %v4532
      %v4534 = vpop.f32.mrb[0].mxu0
      %v4535 = vand.u32 %v1987, 4294901760
      %4536 = vmatprep.mubr.f32.mxu0 %v4535
      %v4537 = vand.u32 %v1986, 4294901760
      %4538 = vmatmul.mubr.f32.gmra.mrb[0].mxu0 %v4537
      %v4539 = vpop.f32.mrb[0].mxu0
      %v4540 = vadd.f32 %v4219, %v4539
      %v4541 = vpop.f32.mrb[0].mxu0
      %v4542 = vand.u32 %v1989, 4294901760
      %4543 = vmatprep.mubr.f32.mxu0 %v4542
      %v4544 = vand.u32 %v1988, 4294901760
      %4545 = vmatmul.mubr.f32.gmra.mrb[0].mxu0 %v4544
      %v4546 = vpop.f32.mrb[0].mxu0
      %v4547 = vadd.f32 %v4226, %v4546
      %v4548 = vpop.f32.mrb[0].mxu0
      %v4549 = vand.u32 %v1991, 4294901760
      %4550 = vmatprep.mubr.f32.mxu0 %v4549
      %v4551 = vand.u32 %v1990, 4294901760
      %4552 = vmatmul.mubr.f32.gmra.mrb[0].mxu0 %v4551
      %v4553 = vpop.f32.mrb[0].mxu0
      %v4554 = vadd.f32 %v4233, %v4553
      %v4555 = vpop.f32.mrb[0].mxu0
      %v4556 = vand.u32 %v1993, 4294901760
      %4557 = vmatprep.mubr.f32.mxu0 %v4556
      %v4558 = vand.u32 %v1992, 4294901760
      %4559 = vmatmul.mubr.f32.gmra.mrb[0].mxu0 %v4558
      %v4560 = vpop.f32.mrb[0].mxu0
      %v4561 = vadd.f32 %v4240, %v4560
      %v4562 = vpop.f32.mrb[0].mxu0
      %v4563 = vand.u32 %v1995, 4294901760
      %4564 = vmatprep.mubr.f32.mxu0 %v4563
      %v4565 = vand.u32 %v1994, 4294901760
      %4566 = vmatmul.mubr.f32.gmra.mrb[0].mxu0 %v4565
      %v4567 = vpop.f32.mrb[0].mxu0
      %v4568 = vadd.f32 %v4247, %v4567
      %v4569 = vpop.f32.mrb[0].mxu0
      %v4570 = vand.u32 %v1997, 4294901760
      %4571 = vmatprep.mubr.f32.mxu0 %v4570
      %v4572 = vand.u32 %v1996, 4294901760
      %4573 = vmatmul.mubr.f32.gmra.mrb[0].mxu0 %v4572
      %v4574 = vpop.f32.mrb[0].mxu0
      %v4575 = vadd.f32 %v4254, %v4574
      %v4576 = vpop.f32.mrb[0].mxu0
      %v4577 = vand.u32 %v1999, 4294901760
      %4578 = vmatprep.mubr.f32.mxu0 %v4577
      %v4579 = vand.u32 %v1998, 4294901760
      %4580 = vmatmul.mubr.f32.gmra.mrb[0].mxu0 %v4579
      %v4581 = vpop.f32.mrb[0].mxu0
      %v4582 = vadd.f32 %v4261, %v4581
      %v4583 = vpop.f32.mrb[0].mxu0
      %v4584 = vand.u32 %v2001, 4294901760
      %4585 = vmatprep.mubr.f32.mxu0 %v4584
      %v4586 = vand.u32 %v2000, 4294901760
      %4587 = vmatmul.mubr.f32.gmra.mrb[0].mxu0 %v4586
      %v4588 = vpop.f32.mrb[0].mxu0
      %v4589 = vadd.f32 %v4268, %v4588
      %v4590 = vpop.f32.mrb[0].mxu0
      %v4591 = vand.u32 %v2003, 4294901760
      %4592 = vmatprep.mubr.f32.mxu0 %v4591
      %v4593 = vand.u32 %v2002, 4294901760
      %4594 = vmatmul.mubr.f32.gmra.mrb[0].mxu0 %v4593
      %v4595 = vpop.f32.mrb[0].mxu0
      %v4596 = vadd.f32 %v4275, %v4595
      %v4597 = vpop.f32.mrb[0].mxu0
      %v4598 = vand.u32 %v2005, 4294901760
      %4599 = vmatprep.mubr.f32.mxu0 %v4598
      %v4600 = vand.u32 %v2004, 4294901760
      %4601 = vmatmul.mubr.f32.gmra.mrb[0].mxu0 %v4600
      %v4602 = vpop.f32.mrb[0].mxu0
      %v4603 = vadd.f32 %v4282, %v4602
      %v4604 = vpop.f32.mrb[0].mxu0
      %v4605 = vand.u32 %v2007, 4294901760
      %4606 = vmatprep.mubr.f32.mxu0 %v4605
      %v4607 = vand.u32 %v2006, 4294901760
      %4608 = vmatmul.mubr.f32.gmra.mrb[0].mxu0 %v4607
      %v4609 = vpop.f32.mrb[0].mxu0
      %v4610 = vadd.f32 %v4289, %v4609
      %v4611 = vpop.f32.mrb[0].mxu0
      %v4612 = vand.u32 %v2009, 4294901760
      %4613 = vmatprep.mubr.f32.mxu0 %v4612
      %v4614 = vand.u32 %v2008, 4294901760
      %4615 = vmatmul.mubr.f32.gmra.mrb[0].mxu0 %v4614
      %v4616 = vpop.f32.mrb[0].mxu0
      %v4617 = vadd.f32 %v4296, %v4616
      %v4618 = vpop.f32.mrb[0].mxu0
      %v4619 = vand.u32 %v2011, 4294901760
      %4620 = vmatprep.mubr.f32.mxu0 %v4619
      %v4621 = vand.u32 %v2010, 4294901760
      %4622 = vmatmul.mubr.f32.gmra.mrb[0].mxu0 %v4621
      %v4623 = vpop.f32.mrb[0].mxu0
      %v4624 = vadd.f32 %v4303, %v4623
      %v4625 = vpop.f32.mrb[0].mxu0
      %v4626 = vand.u32 %v2013, 4294901760
      %4627 = vmatprep.mubr.f32.mxu0 %v4626
      %v4628 = vand.u32 %v2012, 4294901760
      %4629 = vmatmul.mubr.f32.gmra.mrb[0].mxu0 %v4628
      %v4630 = vpop.f32.mrb[0].mxu0
      %v4631 = vadd.f32 %v4310, %v4630
      %v4632 = vpop.f32.mrb[0].mxu0
      %v4633 = vand.u32 %v2015, 4294901760
      %4634 = vmatprep.mubr.f32.mxu0 %v4633
      %v4635 = vand.u32 %v2014, 4294901760
      %4636 = vmatmul.mubr.f32.gmra.mrb[0].mxu0 %v4635
      %v4637 = vpop.f32.mrb[0].mxu0
      %v4638 = vadd.f32 %v4317, %v4637
      %v4639 = vpop.f32.mrb[0].mxu0
      %v4640 = vand.u32 %v2017, 4294901760
      %4641 = vmatprep.mubr.f32.mxu0 %v4640
      %v4642 = vand.u32 %v2016, 4294901760
      %4643 = vmatmul.mubr.f32.gmra.mrb[0].mxu0 %v4642
      %v4644 = vpop.f32.mrb[0].mxu0
      %v4645 = vadd.f32 %v4324, %v4644
      %v4646 = vpop.f32.mrb[0].mxu0
      %4647 = vdwg.mxu0
      %v4648 = vmul.u32 %v223, 4
      %v4649 = vmul.u32 %v224, 4
      %v4650 = vmul.u32 %v225, 4
      %v4651 = vmul.u32 %v226, 4
      %v4652 = vmul.u32 %v227, 4
      %v4653 = vmul.u32 %v228, 4
      %v4654 = vmul.u32 %v229, 4
      %v4655 = vmul.u32 %v230, 4
      %v4656 = vmul.u32 %v231, 4
      %v4657 = vmul.u32 %v232, 4
      %v4658 = vmul.u32 %v233, 4
      %v4659 = vmul.u32 %v234, 4
      %v4660 = vmul.u32 %v235, 4
      %v4661 = vmul.u32 %v236, 4
      %v4662 = vmul.u32 %v237, 4
      %v4663 = vmul.u32 %v238, 4
      %v4664 = vmul.u32 %v239, 4
      %v4665 = vmul.u32 %v240, 4
      %v4666 = vmul.u32 %v241, 4
      %v4667 = vmul.u32 %v242, 4
      %v4668 = vmul.u32 %v243, 4
      %v4669 = vmul.u32 %v244, 4
      %v4670 = vmul.u32 %v245, 4
      %v4671 = vmul.u32 %v246, 4
      %v4672 = vmul.u32 %v247, 4
      %v4673 = vmul.u32 %v248, 4
      %v4674 = vmul.u32 %v249, 4
      %v4675 = vmul.u32 %v250, 4
      %v4676 = vmul.u32 %v251, 4
      %v4677 = vmul.u32 %v252, 4
      %v4678 = vmul.u32 %v253, 4
      %v4679 = vmul.u32 %v254, 4
      %4680 = vset.pattern.permute.xlu0 1
      %4681 = vperm.xlu0 %4680, %v4648
      %v4682 = vpop.permute.xlu0 %4681
      %4683 = vset.pattern.permute.xlu0 1
      %4684 = vperm.xlu0 %4683, %v4649
      %v4685 = vpop.permute.xlu0 %4684
      %4686 = vset.pattern.permute.xlu0 1
      %4687 = vperm.xlu0 %4686, %v4650
      %v4688 = vpop.permute.xlu0 %4687
      %4689 = vset.pattern.permute.xlu0 1
      %4690 = vperm.xlu0 %4689, %v4651
      %v4691 = vpop.permute.xlu0 %4690
      %4692 = vset.pattern.permute.xlu0 1
      %4693 = vperm.xlu0 %4692, %v4652
      %v4694 = vpop.permute.xlu0 %4693
      %4695 = vset.pattern.permute.xlu0 1
      %4696 = vperm.xlu0 %4695, %v4653
      %v4697 = vpop.permute.xlu0 %4696
      %4698 = vset.pattern.permute.xlu0 1
      %4699 = vperm.xlu0 %4698, %v4654
      %v4700 = vpop.permute.xlu0 %4699
      %4701 = vset.pattern.permute.xlu0 1
      %4702 = vperm.xlu0 %4701, %v4655
      %v4703 = vpop.permute.xlu0 %4702
      %4704 = vset.pattern.permute.xlu0 1
      %4705 = vperm.xlu0 %4704, %v4656
      %v4706 = vpop.permute.xlu0 %4705
      %4707 = vset.pattern.permute.xlu0 1
      %4708 = vperm.xlu0 %4707, %v4657
      %v4709 = vpop.permute.xlu0 %4708
      %4710 = vset.pattern.permute.xlu0 1
      %4711 = vperm.xlu0 %4710, %v4658
      %v4712 = vpop.permute.xlu0 %4711
      %4713 = vset.pattern.permute.xlu0 1
      %4714 = vperm.xlu0 %4713, %v4659
      %v4715 = vpop.permute.xlu0 %4714
      %4716 = vset.pattern.permute.xlu0 1
      %4717 = vperm.xlu0 %4716, %v4660
      %v4718 = vpop.permute.xlu0 %4717
      %4719 = vset.pattern.permute.xlu0 1
      %4720 = vperm.xlu0 %4719, %v4661
      %v4721 = vpop.permute.xlu0 %4720
      %4722 = vset.pattern.permute.xlu0 1
      %4723 = vperm.xlu0 %4722, %v4662
      %v4724 = vpop.permute.xlu0 %4723
      %4725 = vset.pattern.permute.xlu0 1
      %4726 = vperm.xlu0 %4725, %v4663
      %v4727 = vpop.permute.xlu0 %4726
      %4728 = vset.pattern.permute.xlu0 1
      %4729 = vperm.xlu0 %4728, %v4664
      %v4730 = vpop.permute.xlu0 %4729
      %4731 = vset.pattern.permute.xlu0 1
      %4732 = vperm.xlu0 %4731, %v4665
      %v4733 = vpop.permute.xlu0 %4732
      %4734 = vset.pattern.permute.xlu0 1
      %4735 = vperm.xlu0 %4734, %v4666
      %v4736 = vpop.permute.xlu0 %4735
      %4737 = vset.pattern.permute.xlu0 1
      %4738 = vperm.xlu0 %4737, %v4667
      %v4739 = vpop.permute.xlu0 %4738
      %4740 = vset.pattern.permute.xlu0 1
      %4741 = vperm.xlu0 %4740, %v4668
      %v4742 = vpop.permute.xlu0 %4741
      %4743 = vset.pattern.permute.xlu0 1
      %4744 = vperm.xlu0 %4743, %v4669
      %v4745 = vpop.permute.xlu0 %4744
      %4746 = vset.pattern.permute.xlu0 1
      %4747 = vperm.xlu0 %4746, %v4670
      %v4748 = vpop.permute.xlu0 %4747
      %4749 = vset.pattern.permute.xlu0 1
      %4750 = vperm.xlu0 %4749, %v4671
      %v4751 = vpop.permute.xlu0 %4750
      %4752 = vset.pattern.permute.xlu0 1
      %4753 = vperm.xlu0 %4752, %v4672
      %v4754 = vpop.permute.xlu0 %4753
      %4755 = vset.pattern.permute.xlu0 1
      %4756 = vperm.xlu0 %4755, %v4673
      %v4757 = vpop.permute.xlu0 %4756
      %4758 = vset.pattern.permute.xlu0 1
      %4759 = vperm.xlu0 %4758, %v4674
      %v4760 = vpop.permute.xlu0 %4759
      %4761 = vset.pattern.permute.xlu0 1
      %4762 = vperm.xlu0 %4761, %v4675
      %v4763 = vpop.permute.xlu0 %4762
      %4764 = vset.pattern.permute.xlu0 1
      %4765 = vperm.xlu0 %4764, %v4676
      %v4766 = vpop.permute.xlu0 %4765
      %4767 = vset.pattern.permute.xlu0 1
      %4768 = vperm.xlu0 %4767, %v4677
      %v4769 = vpop.permute.xlu0 %4768
      %4770 = vset.pattern.permute.xlu0 1
      %4771 = vperm.xlu0 %4770, %v4678
      %v4772 = vpop.permute.xlu0 %4771
      %4773 = vset.pattern.permute.xlu0 1
      %4774 = vperm.xlu0 %4773, %v4679
      %v4775 = vpop.permute.xlu0 %4774
      %vm4776 = vcmp.ge.s32.totalorder %v288, %v4682
      %vm4777 = vcmp.ge.s32.totalorder %v288, %v4685
      %vm4778 = vcmp.ge.s32.totalorder %v288, %v4688
      %vm4779 = vcmp.ge.s32.totalorder %v288, %v4691
      %vm4780 = vcmp.ge.s32.totalorder %v288, %v4694
      %vm4781 = vcmp.ge.s32.totalorder %v288, %v4697
      %vm4782 = vcmp.ge.s32.totalorder %v288, %v4700
      %vm4783 = vcmp.ge.s32.totalorder %v288, %v4703
      %vm4784 = vcmp.ge.s32.totalorder %v288, %v4706
      %vm4785 = vcmp.ge.s32.totalorder %v288, %v4709
      %vm4786 = vcmp.ge.s32.totalorder %v288, %v4712
      %vm4787 = vcmp.ge.s32.totalorder %v288, %v4715
      %vm4788 = vcmp.ge.s32.totalorder %v288, %v4718
      %vm4789 = vcmp.ge.s32.totalorder %v288, %v4721
      %vm4790 = vcmp.ge.s32.totalorder %v288, %v4724
      %vm4791 = vcmp.ge.s32.totalorder %v288, %v4727
      %vm4792 = vcmp.ge.s32.totalorder %v288, %v4730
      %vm4793 = vcmp.ge.s32.totalorder %v288, %v4733
      %vm4794 = vcmp.ge.s32.totalorder %v288, %v4736
      %vm4795 = vcmp.ge.s32.totalorder %v288, %v4739
      %vm4796 = vcmp.ge.s32.totalorder %v288, %v4742
      %vm4797 = vcmp.ge.s32.totalorder %v288, %v4745
      %vm4798 = vcmp.ge.s32.totalorder %v288, %v4748
      %vm4799 = vcmp.ge.s32.totalorder %v288, %v4751
      %vm4800 = vcmp.ge.s32.totalorder %v288, %v4754
      %vm4801 = vcmp.ge.s32.totalorder %v288, %v4757
      %vm4802 = vcmp.ge.s32.totalorder %v288, %v4760
      %vm4803 = vcmp.ge.s32.totalorder %v288, %v4763
      %vm4804 = vcmp.ge.s32.totalorder %v288, %v4766
      %vm4805 = vcmp.ge.s32.totalorder %v288, %v4769
      %vm4806 = vcmp.ge.s32.totalorder %v288, %v4772
      %vm4807 = vcmp.ge.s32.totalorder %v288, %v4775
      %v4808 = vadd.s32 %v4648, 4
      %v4809 = vadd.s32 %v4649, 4
      %v4810 = vadd.s32 %v4650, 4
      %v4811 = vadd.s32 %v4651, 4
      %v4812 = vadd.s32 %v4652, 4
      %v4813 = vadd.s32 %v4653, 4
      %v4814 = vadd.s32 %v4654, 4
      %v4815 = vadd.s32 %v4655, 4
      %v4816 = vadd.s32 %v4656, 4
      %v4817 = vadd.s32 %v4657, 4
      %v4818 = vadd.s32 %v4658, 4
      %v4819 = vadd.s32 %v4659, 4
      %v4820 = vadd.s32 %v4660, 4
      %v4821 = vadd.s32 %v4661, 4
      %v4822 = vadd.s32 %v4662, 4
      %v4823 = vadd.s32 %v4663, 4
      %v4824 = vadd.s32 %v4664, 4
      %v4825 = vadd.s32 %v4665, 4
      %v4826 = vadd.s32 %v4666, 4
      %v4827 = vadd.s32 %v4667, 4
      %v4828 = vadd.s32 %v4668, 4
      %v4829 = vadd.s32 %v4669, 4
      %v4830 = vadd.s32 %v4670, 4
      %v4831 = vadd.s32 %v4671, 4
      %v4832 = vadd.s32 %v4672, 4
      %v4833 = vadd.s32 %v4673, 4
      %v4834 = vadd.s32 %v4674, 4
      %v4835 = vadd.s32 %v4675, 4
      %v4836 = vadd.s32 %v4676, 4
      %v4837 = vadd.s32 %v4677, 4
      %v4838 = vadd.s32 %v4678, 4
      %v4839 = vadd.s32 %v4679, 4
      %4840 = vset.pattern.permute.xlu0 1
      %4841 = vperm.xlu0 %4840, %v4808
      %v4842 = vpop.permute.xlu0 %4841
      %4843 = vset.pattern.permute.xlu0 1
      %4844 = vperm.xlu0 %4843, %v4809
      %v4845 = vpop.permute.xlu0 %4844
      %4846 = vset.pattern.permute.xlu0 1
      %4847 = vperm.xlu0 %4846, %v4810
      %v4848 = vpop.permute.xlu0 %4847
      %4849 = vset.pattern.permute.xlu0 1
      %4850 = vperm.xlu0 %4849, %v4811
      %v4851 = vpop.permute.xlu0 %4850
      %4852 = vset.pattern.permute.xlu0 1
      %4853 = vperm.xlu0 %4852, %v4812
      %v4854 = vpop.permute.xlu0 %4853
      %4855 = vset.pattern.permute.xlu0 1
      %4856 = vperm.xlu0 %4855, %v4813
      %v4857 = vpop.permute.xlu0 %4856
      %4858 = vset.pattern.permute.xlu0 1
      %4859 = vperm.xlu0 %4858, %v4814
      %v4860 = vpop.permute.xlu0 %4859
      %4861 = vset.pattern.permute.xlu0 1
      %4862 = vperm.xlu0 %4861, %v4815
      %v4863 = vpop.permute.xlu0 %4862
      %4864 = vset.pattern.permute.xlu0 1
      %4865 = vperm.xlu0 %4864, %v4816
      %v4866 = vpop.permute.xlu0 %4865
      %4867 = vset.pattern.permute.xlu0 1
      %4868 = vperm.xlu0 %4867, %v4817
      %v4869 = vpop.permute.xlu0 %4868
      %4870 = vset.pattern.permute.xlu0 1
      %4871 = vperm.xlu0 %4870, %v4818
      %v4872 = vpop.permute.xlu0 %4871
      %4873 = vset.pattern.permute.xlu0 1
      %4874 = vperm.xlu0 %4873, %v4819
      %v4875 = vpop.permute.xlu0 %4874
      %4876 = vset.pattern.permute.xlu0 1
      %4877 = vperm.xlu0 %4876, %v4820
      %v4878 = vpop.permute.xlu0 %4877
      %4879 = vset.pattern.permute.xlu0 1
      %4880 = vperm.xlu0 %4879, %v4821
      %v4881 = vpop.permute.xlu0 %4880
      %4882 = vset.pattern.permute.xlu0 1
      %4883 = vperm.xlu0 %4882, %v4822
      %v4884 = vpop.permute.xlu0 %4883
      %4885 = vset.pattern.permute.xlu0 1
      %4886 = vperm.xlu0 %4885, %v4823
      %v4887 = vpop.permute.xlu0 %4886
      %4888 = vset.pattern.permute.xlu0 1
      %4889 = vperm.xlu0 %4888, %v4824
      %v4890 = vpop.permute.xlu0 %4889
      %4891 = vset.pattern.permute.xlu0 1
      %4892 = vperm.xlu0 %4891, %v4825
      %v4893 = vpop.permute.xlu0 %4892
      %4894 = vset.pattern.permute.xlu0 1
      %4895 = vperm.xlu0 %4894, %v4826
      %v4896 = vpop.permute.xlu0 %4895
      %4897 = vset.pattern.permute.xlu0 1
      %4898 = vperm.xlu0 %4897, %v4827
      %v4899 = vpop.permute.xlu0 %4898
      %4900 = vset.pattern.permute.xlu0 1
      %4901 = vperm.xlu0 %4900, %v4828
      %v4902 = vpop.permute.xlu0 %4901
      %4903 = vset.pattern.permute.xlu0 1
      %4904 = vperm.xlu0 %4903, %v4829
      %v4905 = vpop.permute.xlu0 %4904
      %4906 = vset.pattern.permute.xlu0 1
      %4907 = vperm.xlu0 %4906, %v4830
      %v4908 = vpop.permute.xlu0 %4907
      %4909 = vset.pattern.permute.xlu0 1
      %4910 = vperm.xlu0 %4909, %v4831
      %v4911 = vpop.permute.xlu0 %4910
      %4912 = vset.pattern.permute.xlu0 1
      %4913 = vperm.xlu0 %4912, %v4832
      %v4914 = vpop.permute.xlu0 %4913
      %4915 = vset.pattern.permute.xlu0 1
      %4916 = vperm.xlu0 %4915, %v4833
      %v4917 = vpop.permute.xlu0 %4916
      %4918 = vset.pattern.permute.xlu0 1
      %4919 = vperm.xlu0 %4918, %v4834
      %v4920 = vpop.permute.xlu0 %4919
      %4921 = vset.pattern.permute.xlu0 1
      %4922 = vperm.xlu0 %4921, %v4835
      %v4923 = vpop.permute.xlu0 %4922
      %4924 = vset.pattern.permute.xlu0 1
      %4925 = vperm.xlu0 %4924, %v4836
      %v4926 = vpop.permute.xlu0 %4925
      %4927 = vset.pattern.permute.xlu0 1
      %4928 = vperm.xlu0 %4927, %v4837
      %v4929 = vpop.permute.xlu0 %4928
      %4930 = vset.pattern.permute.xlu0 1
      %4931 = vperm.xlu0 %4930, %v4838
      %v4932 = vpop.permute.xlu0 %4931
      %4933 = vset.pattern.permute.xlu0 1
      %4934 = vperm.xlu0 %4933, %v4839
      %v4935 = vpop.permute.xlu0 %4934
      %vm4936 = vcmp.lt.s32.totalorder %v288, %v4842
      %vm4937 = vcmp.lt.s32.totalorder %v288, %v4845
      %vm4938 = vcmp.lt.s32.totalorder %v288, %v4848
      %vm4939 = vcmp.lt.s32.totalorder %v288, %v4851
      %vm4940 = vcmp.lt.s32.totalorder %v288, %v4854
      %vm4941 = vcmp.lt.s32.totalorder %v288, %v4857
      %vm4942 = vcmp.lt.s32.totalorder %v288, %v4860
      %vm4943 = vcmp.lt.s32.totalorder %v288, %v4863
      %vm4944 = vcmp.lt.s32.totalorder %v288, %v4866
      %vm4945 = vcmp.lt.s32.totalorder %v288, %v4869
      %vm4946 = vcmp.lt.s32.totalorder %v288, %v4872
      %vm4947 = vcmp.lt.s32.totalorder %v288, %v4875
      %vm4948 = vcmp.lt.s32.totalorder %v288, %v4878
      %vm4949 = vcmp.lt.s32.totalorder %v288, %v4881
      %vm4950 = vcmp.lt.s32.totalorder %v288, %v4884
      %vm4951 = vcmp.lt.s32.totalorder %v288, %v4887
      %vm4952 = vcmp.lt.s32.totalorder %v288, %v4890
      %vm4953 = vcmp.lt.s32.totalorder %v288, %v4893
      %vm4954 = vcmp.lt.s32.totalorder %v288, %v4896
      %vm4955 = vcmp.lt.s32.totalorder %v288, %v4899
      %vm4956 = vcmp.lt.s32.totalorder %v288, %v4902
      %vm4957 = vcmp.lt.s32.totalorder %v288, %v4905
      %vm4958 = vcmp.lt.s32.totalorder %v288, %v4908
      %vm4959 = vcmp.lt.s32.totalorder %v288, %v4911
      %vm4960 = vcmp.lt.s32.totalorder %v288, %v4914
      %vm4961 = vcmp.lt.s32.totalorder %v288, %v4917
      %vm4962 = vcmp.lt.s32.totalorder %v288, %v4920
      %vm4963 = vcmp.lt.s32.totalorder %v288, %v4923
      %vm4964 = vcmp.lt.s32.totalorder %v288, %v4926
      %vm4965 = vcmp.lt.s32.totalorder %v288, %v4929
      %vm4966 = vcmp.lt.s32.totalorder %v288, %v4932
      %vm4967 = vcmp.lt.s32.totalorder %v288, %v4935
      %vm4968 = vmand %vm4776, %vm4936
      %vm4969 = vmand %vm4777, %vm4937
      %vm4970 = vmand %vm4778, %vm4938
      %vm4971 = vmand %vm4779, %vm4939
      %vm4972 = vmand %vm4780, %vm4940
      %vm4973 = vmand %vm4781, %vm4941
      %vm4974 = vmand %vm4782, %vm4942
      %vm4975 = vmand %vm4783, %vm4943
      %vm4976 = vmand %vm4784, %vm4944
      %vm4977 = vmand %vm4785, %vm4945
      %vm4978 = vmand %vm4786, %vm4946
      %vm4979 = vmand %vm4787, %vm4947
      %vm4980 = vmand %vm4788, %vm4948
      %vm4981 = vmand %vm4789, %vm4949
      %vm4982 = vmand %vm4790, %vm4950
      %vm4983 = vmand %vm4791, %vm4951
      %vm4984 = vmand %vm4792, %vm4952
      %vm4985 = vmand %vm4793, %vm4953
      %vm4986 = vmand %vm4794, %vm4954
      %vm4987 = vmand %vm4795, %vm4955
      %vm4988 = vmand %vm4796, %vm4956
      %vm4989 = vmand %vm4797, %vm4957
      %vm4990 = vmand %vm4798, %vm4958
      %vm4991 = vmand %vm4799, %vm4959
      %vm4992 = vmand %vm4800, %vm4960
      %vm4993 = vmand %vm4801, %vm4961
      %vm4994 = vmand %vm4802, %vm4962
      %vm4995 = vmand %vm4803, %vm4963
      %vm4996 = vmand %vm4804, %vm4964
      %vm4997 = vmand %vm4805, %vm4965
      %vm4998 = vmand %vm4806, %vm4966
      %vm4999 = vmand %vm4807, %vm4967
      %5000 = vset.pattern.permute.xlu0 4
      %5001 = vperm.xlu0 %5000, %v255
      %v5002 = vpop.permute.xlu0 %5001
      %5004 = vset.pattern.permute.xlu0 4
      %5005 = vperm.xlu0 %5004, %v256
      %v5006 = vpop.permute.xlu0 %5005
      %5008 = vset.pattern.permute.xlu0 4
      %5009 = vperm.xlu0 %5008, %v257
      %v5010 = vpop.permute.xlu0 %5009
      %5012 = vset.pattern.permute.xlu0 4
      %5013 = vperm.xlu0 %5012, %v258
      %v5014 = vpop.permute.xlu0 %5013
      %5016 = vset.pattern.permute.xlu0 4
      %5017 = vperm.xlu0 %5016, %v259
      %v5018 = vpop.permute.xlu0 %5017
      %5020 = vset.pattern.permute.xlu0 4
      %5021 = vperm.xlu0 %5020, %v260
      %v5022 = vpop.permute.xlu0 %5021
      %5024 = vset.pattern.permute.xlu0 4
      %5025 = vperm.xlu0 %5024, %v261
      %v5026 = vpop.permute.xlu0 %5025
      %5028 = vset.pattern.permute.xlu0 4
      %5029 = vperm.xlu0 %5028, %v262
      %v5030 = vpop.permute.xlu0 %5029
      %5032 = vset.pattern.permute.xlu0 4
      %5033 = vperm.xlu0 %5032, %v263
      %v5034 = vpop.permute.xlu0 %5033
      %5036 = vset.pattern.permute.xlu0 4
      %5037 = vperm.xlu0 %5036, %v264
      %v5038 = vpop.permute.xlu0 %5037
      %5040 = vset.pattern.permute.xlu0 4
      %5041 = vperm.xlu0 %5040, %v265
      %v5042 = vpop.permute.xlu0 %5041
      %5044 = vset.pattern.permute.xlu0 4
      %5045 = vperm.xlu0 %5044, %v266
      %v5046 = vpop.permute.xlu0 %5045
      %5048 = vset.pattern.permute.xlu0 4
      %5049 = vperm.xlu0 %5048, %v267
      %v5050 = vpop.permute.xlu0 %5049
      %5052 = vset.pattern.permute.xlu0 4
      %5053 = vperm.xlu0 %5052, %v268
      %v5054 = vpop.permute.xlu0 %5053
      %5056 = vset.pattern.permute.xlu0 4
      %5057 = vperm.xlu0 %5056, %v269
      %v5058 = vpop.permute.xlu0 %5057
      %5060 = vset.pattern.permute.xlu0 4
      %5061 = vperm.xlu0 %5060, %v270
      %v5062 = vpop.permute.xlu0 %5061
      %5064 = vset.pattern.permute.xlu0 4
      %5065 = vperm.xlu0 %5064, %v271
      %v5066 = vpop.permute.xlu0 %5065
      %5068 = vset.pattern.permute.xlu0 4
      %5069 = vperm.xlu0 %5068, %v272
      %v5070 = vpop.permute.xlu0 %5069
      %5072 = vset.pattern.permute.xlu0 4
      %5073 = vperm.xlu0 %5072, %v273
      %v5074 = vpop.permute.xlu0 %5073
      %5076 = vset.pattern.permute.xlu0 4
      %5077 = vperm.xlu0 %5076, %v274
      %v5078 = vpop.permute.xlu0 %5077
      %5080 = vset.pattern.permute.xlu0 4
      %5081 = vperm.xlu0 %5080, %v275
      %v5082 = vpop.permute.xlu0 %5081
      %5084 = vset.pattern.permute.xlu0 4
      %5085 = vperm.xlu0 %5084, %v276
      %v5086 = vpop.permute.xlu0 %5085
      %5088 = vset.pattern.permute.xlu0 4
      %5089 = vperm.xlu0 %5088, %v277
      %v5090 = vpop.permute.xlu0 %5089
      %5092 = vset.pattern.permute.xlu0 4
      %5093 = vperm.xlu0 %5092, %v278
      %v5094 = vpop.permute.xlu0 %5093
      %5096 = vset.pattern.permute.xlu0 4
      %5097 = vperm.xlu0 %5096, %v279
      %v5098 = vpop.permute.xlu0 %5097
      %5100 = vset.pattern.permute.xlu0 4
      %5101 = vperm.xlu0 %5100, %v280
      %v5102 = vpop.permute.xlu0 %5101
      %5104 = vset.pattern.permute.xlu0 4
      %5105 = vperm.xlu0 %5104, %v281
      %v5106 = vpop.permute.xlu0 %5105
      %5108 = vset.pattern.permute.xlu0 4
      %5109 = vperm.xlu0 %5108, %v282
      %v5110 = vpop.permute.xlu0 %5109
      %5112 = vset.pattern.permute.xlu0 4
      %5113 = vperm.xlu0 %5112, %v283
      %v5114 = vpop.permute.xlu0 %5113
      %5116 = vset.pattern.permute.xlu0 4
      %5117 = vperm.xlu0 %5116, %v284
      %v5118 = vpop.permute.xlu0 %5117
      %5120 = vset.pattern.permute.xlu0 4
      %5121 = vperm.xlu0 %5120, %v285
      %v5122 = vpop.permute.xlu0 %5121
      %5124 = vset.pattern.permute.xlu0 4
      %5125 = vperm.xlu0 %5124, %v286
      %v5126 = vpop.permute.xlu0 %5125
      %v5128 = vsel %vm4968, %v5002, 0.0
      %v5129 = vsel %vm4969, %v5006, 0.0
      %v5130 = vsel %vm4970, %v5010, 0.0
      %v5131 = vsel %vm4971, %v5014, 0.0
      %v5132 = vsel %vm4972, %v5018, 0.0
      %v5133 = vsel %vm4973, %v5022, 0.0
      %v5134 = vsel %vm4974, %v5026, 0.0
      %v5135 = vsel %vm4975, %v5030, 0.0
      %v5136 = vsel %vm4976, %v5034, 0.0
      %v5137 = vsel %vm4977, %v5038, 0.0
      %v5138 = vsel %vm4978, %v5042, 0.0
      %v5139 = vsel %vm4979, %v5046, 0.0
      %v5140 = vsel %vm4980, %v5050, 0.0
      %v5141 = vsel %vm4981, %v5054, 0.0
      %v5142 = vsel %vm4982, %v5058, 0.0
      %v5143 = vsel %vm4983, %v5062, 0.0
      %v5144 = vsel %vm4984, %v5066, 0.0
      %v5145 = vsel %vm4985, %v5070, 0.0
      %v5146 = vsel %vm4986, %v5074, 0.0
      %v5147 = vsel %vm4987, %v5078, 0.0
      %v5148 = vsel %vm4988, %v5082, 0.0
      %v5149 = vsel %vm4989, %v5086, 0.0
      %v5150 = vsel %vm4990, %v5090, 0.0
      %v5151 = vsel %vm4991, %v5094, 0.0
      %v5152 = vsel %vm4992, %v5098, 0.0
      %v5153 = vsel %vm4993, %v5102, 0.0
      %v5154 = vsel %vm4994, %v5106, 0.0
      %v5155 = vsel %vm4995, %v5110, 0.0
      %v5156 = vsel %vm4996, %v5114, 0.0
      %v5157 = vsel %vm4997, %v5118, 0.0
      %v5158 = vsel %vm4998, %v5122, 0.0
      %v5159 = vsel %vm4999, %v5126, 0.0
      %vm5160 = vcmp.ge.s32.totalorder %v288, %v4842
      %vm5161 = vcmp.ge.s32.totalorder %v288, %v4845
      %vm5162 = vcmp.ge.s32.totalorder %v288, %v4848
      %vm5163 = vcmp.ge.s32.totalorder %v288, %v4851
      %vm5164 = vcmp.ge.s32.totalorder %v288, %v4854
      %vm5165 = vcmp.ge.s32.totalorder %v288, %v4857
      %vm5166 = vcmp.ge.s32.totalorder %v288, %v4860
      %vm5167 = vcmp.ge.s32.totalorder %v288, %v4863
      %vm5168 = vcmp.ge.s32.totalorder %v288, %v4866
      %vm5169 = vcmp.ge.s32.totalorder %v288, %v4869
      %vm5170 = vcmp.ge.s32.totalorder %v288, %v4872
      %vm5171 = vcmp.ge.s32.totalorder %v288, %v4875
      %vm5172 = vcmp.ge.s32.totalorder %v288, %v4878
      %vm5173 = vcmp.ge.s32.totalorder %v288, %v4881
      %vm5174 = vcmp.ge.s32.totalorder %v288, %v4884
      %vm5175 = vcmp.ge.s32.totalorder %v288, %v4887
      %vm5176 = vcmp.ge.s32.totalorder %v288, %v4890
      %vm5177 = vcmp.ge.s32.totalorder %v288, %v4893
      %vm5178 = vcmp.ge.s32.totalorder %v288, %v4896
      %vm5179 = vcmp.ge.s32.totalorder %v288, %v4899
      %vm5180 = vcmp.ge.s32.totalorder %v288, %v4902
      %vm5181 = vcmp.ge.s32.totalorder %v288, %v4905
      %vm5182 = vcmp.ge.s32.totalorder %v288, %v4908
      %vm5183 = vcmp.ge.s32.totalorder %v288, %v4911
      %vm5184 = vcmp.ge.s32.totalorder %v288, %v4914
      %vm5185 = vcmp.ge.s32.totalorder %v288, %v4917
      %vm5186 = vcmp.ge.s32.totalorder %v288, %v4920
      %vm5187 = vcmp.ge.s32.totalorder %v288, %v4923
      %vm5188 = vcmp.ge.s32.totalorder %v288, %v4926
      %vm5189 = vcmp.ge.s32.totalorder %v288, %v4929
      %vm5190 = vcmp.ge.s32.totalorder %v288, %v4932
      %vm5191 = vcmp.ge.s32.totalorder %v288, %v4935
      %v5192 = vadd.s32 %v4648, 8
      %v5193 = vadd.s32 %v4649, 8
      %v5194 = vadd.s32 %v4650, 8
      %v5195 = vadd.s32 %v4651, 8
      %v5196 = vadd.s32 %v4652, 8
      %v5197 = vadd.s32 %v4653, 8
      %v5198 = vadd.s32 %v4654, 8
      %v5199 = vadd.s32 %v4655, 8
      %v5200 = vadd.s32 %v4656, 8
      %v5201 = vadd.s32 %v4657, 8
      %v5202 = vadd.s32 %v4658, 8
      %v5203 = vadd.s32 %v4659, 8
      %v5204 = vadd.s32 %v4660, 8
      %v5205 = vadd.s32 %v4661, 8
      %v5206 = vadd.s32 %v4662, 8
      %v5207 = vadd.s32 %v4663, 8
      %v5208 = vadd.s32 %v4664, 8
      %v5209 = vadd.s32 %v4665, 8
      %v5210 = vadd.s32 %v4666, 8
      %v5211 = vadd.s32 %v4667, 8
      %v5212 = vadd.s32 %v4668, 8
      %v5213 = vadd.s32 %v4669, 8
      %v5214 = vadd.s32 %v4670, 8
      %v5215 = vadd.s32 %v4671, 8
      %v5216 = vadd.s32 %v4672, 8
      %v5217 = vadd.s32 %v4673, 8
      %v5218 = vadd.s32 %v4674, 8
      %v5219 = vadd.s32 %v4675, 8
      %v5220 = vadd.s32 %v4676, 8
      %v5221 = vadd.s32 %v4677, 8
      %v5222 = vadd.s32 %v4678, 8
      %v5223 = vadd.s32 %v4679, 8
      %5224 = vset.pattern.permute.xlu0 1
      %5225 = vperm.xlu0 %5224, %v5192
      %v5226 = vpop.permute.xlu0 %5225
      %5227 = vset.pattern.permute.xlu0 1
      %5228 = vperm.xlu0 %5227, %v5193
      %v5229 = vpop.permute.xlu0 %5228
      %5230 = vset.pattern.permute.xlu0 1
      %5231 = vperm.xlu0 %5230, %v5194
      %v5232 = vpop.permute.xlu0 %5231
      %5233 = vset.pattern.permute.xlu0 1
      %5234 = vperm.xlu0 %5233, %v5195
      %v5235 = vpop.permute.xlu0 %5234
      %5236 = vset.pattern.permute.xlu0 1
      %5237 = vperm.xlu0 %5236, %v5196
      %v5238 = vpop.permute.xlu0 %5237
      %5239 = vset.pattern.permute.xlu0 1
      %5240 = vperm.xlu0 %5239, %v5197
      %v5241 = vpop.permute.xlu0 %5240
      %5242 = vset.pattern.permute.xlu0 1
      %5243 = vperm.xlu0 %5242, %v5198
      %v5244 = vpop.permute.xlu0 %5243
      %5245 = vset.pattern.permute.xlu0 1
      %5246 = vperm.xlu0 %5245, %v5199
      %v5247 = vpop.permute.xlu0 %5246
      %5248 = vset.pattern.permute.xlu0 1
      %5249 = vperm.xlu0 %5248, %v5200
      %v5250 = vpop.permute.xlu0 %5249
      %5251 = vset.pattern.permute.xlu0 1
      %5252 = vperm.xlu0 %5251, %v5201
      %v5253 = vpop.permute.xlu0 %5252
      %5254 = vset.pattern.permute.xlu0 1
      %5255 = vperm.xlu0 %5254, %v5202
      %v5256 = vpop.permute.xlu0 %5255
      %5257 = vset.pattern.permute.xlu0 1
      %5258 = vperm.xlu0 %5257, %v5203
      %v5259 = vpop.permute.xlu0 %5258
      %5260 = vset.pattern.permute.xlu0 1
      %5261 = vperm.xlu0 %5260, %v5204
      %v5262 = vpop.permute.xlu0 %5261
      %5263 = vset.pattern.permute.xlu0 1
      %5264 = vperm.xlu0 %5263, %v5205
      %v5265 = vpop.permute.xlu0 %5264
      %5266 = vset.pattern.permute.xlu0 1
      %5267 = vperm.xlu0 %5266, %v5206
      %v5268 = vpop.permute.xlu0 %5267
      %5269 = vset.pattern.permute.xlu0 1
      %5270 = vperm.xlu0 %5269, %v5207
      %v5271 = vpop.permute.xlu0 %5270
      %5272 = vset.pattern.permute.xlu0 1
      %5273 = vperm.xlu0 %5272, %v5208
      %v5274 = vpop.permute.xlu0 %5273
      %5275 = vset.pattern.permute.xlu0 1
      %5276 = vperm.xlu0 %5275, %v5209
      %v5277 = vpop.permute.xlu0 %5276
      %5278 = vset.pattern.permute.xlu0 1
      %5279 = vperm.xlu0 %5278, %v5210
      %v5280 = vpop.permute.xlu0 %5279
      %5281 = vset.pattern.permute.xlu0 1
      %5282 = vperm.xlu0 %5281, %v5211
      %v5283 = vpop.permute.xlu0 %5282
      %5284 = vset.pattern.permute.xlu0 1
      %5285 = vperm.xlu0 %5284, %v5212
      %v5286 = vpop.permute.xlu0 %5285
      %5287 = vset.pattern.permute.xlu0 1
      %5288 = vperm.xlu0 %5287, %v5213
      %v5289 = vpop.permute.xlu0 %5288
      %5290 = vset.pattern.permute.xlu0 1
      %5291 = vperm.xlu0 %5290, %v5214
      %v5292 = vpop.permute.xlu0 %5291
      %5293 = vset.pattern.permute.xlu0 1
      %5294 = vperm.xlu0 %5293, %v5215
      %v5295 = vpop.permute.xlu0 %5294
      %5296 = vset.pattern.permute.xlu0 1
      %5297 = vperm.xlu0 %5296, %v5216
      %v5298 = vpop.permute.xlu0 %5297
      %5299 = vset.pattern.permute.xlu0 1
      %5300 = vperm.xlu0 %5299, %v5217
      %v5301 = vpop.permute.xlu0 %5300
      %5302 = vset.pattern.permute.xlu0 1
      %5303 = vperm.xlu0 %5302, %v5218
      %v5304 = vpop.permute.xlu0 %5303
      %5305 = vset.pattern.permute.xlu0 1
      %5306 = vperm.xlu0 %5305, %v5219
      %v5307 = vpop.permute.xlu0 %5306
      %5308 = vset.pattern.permute.xlu0 1
      %5309 = vperm.xlu0 %5308, %v5220
      %v5310 = vpop.permute.xlu0 %5309
      %5311 = vset.pattern.permute.xlu0 1
      %5312 = vperm.xlu0 %5311, %v5221
      %v5313 = vpop.permute.xlu0 %5312
      %5314 = vset.pattern.permute.xlu0 1
      %5315 = vperm.xlu0 %5314, %v5222
      %v5316 = vpop.permute.xlu0 %5315
      %5317 = vset.pattern.permute.xlu0 1
      %5318 = vperm.xlu0 %5317, %v5223
      %v5319 = vpop.permute.xlu0 %5318
      %vm5320 = vcmp.lt.s32.totalorder %v288, %v5226
      %vm5321 = vcmp.lt.s32.totalorder %v288, %v5229
      %vm5322 = vcmp.lt.s32.totalorder %v288, %v5232
      %vm5323 = vcmp.lt.s32.totalorder %v288, %v5235
      %vm5324 = vcmp.lt.s32.totalorder %v288, %v5238
      %vm5325 = vcmp.lt.s32.totalorder %v288, %v5241
      %vm5326 = vcmp.lt.s32.totalorder %v288, %v5244
      %vm5327 = vcmp.lt.s32.totalorder %v288, %v5247
      %vm5328 = vcmp.lt.s32.totalorder %v288, %v5250
      %vm5329 = vcmp.lt.s32.totalorder %v288, %v5253
      %vm5330 = vcmp.lt.s32.totalorder %v288, %v5256
      %vm5331 = vcmp.lt.s32.totalorder %v288, %v5259
      %vm5332 = vcmp.lt.s32.totalorder %v288, %v5262
      %vm5333 = vcmp.lt.s32.totalorder %v288, %v5265
      %vm5334 = vcmp.lt.s32.totalorder %v288, %v5268
      %vm5335 = vcmp.lt.s32.totalorder %v288, %v5271
      %vm5336 = vcmp.lt.s32.totalorder %v288, %v5274
      %vm5337 = vcmp.lt.s32.totalorder %v288, %v5277
      %vm5338 = vcmp.lt.s32.totalorder %v288, %v5280
      %vm5339 = vcmp.lt.s32.totalorder %v288, %v5283
      %vm5340 = vcmp.lt.s32.totalorder %v288, %v5286
      %vm5341 = vcmp.lt.s32.totalorder %v288, %v5289
      %vm5342 = vcmp.lt.s32.totalorder %v288, %v5292
      %vm5343 = vcmp.lt.s32.totalorder %v288, %v5295
      %vm5344 = vcmp.lt.s32.totalorder %v288, %v5298
      %vm5345 = vcmp.lt.s32.totalorder %v288, %v5301
      %vm5346 = vcmp.lt.s32.totalorder %v288, %v5304
      %vm5347 = vcmp.lt.s32.totalorder %v288, %v5307
      %vm5348 = vcmp.lt.s32.totalorder %v288, %v5310
      %vm5349 = vcmp.lt.s32.totalorder %v288, %v5313
      %vm5350 = vcmp.lt.s32.totalorder %v288, %v5316
      %vm5351 = vcmp.lt.s32.totalorder %v288, %v5319
      %vm5352 = vmand %vm5160, %vm5320
      %vm5353 = vmand %vm5161, %vm5321
      %vm5354 = vmand %vm5162, %vm5322
      %vm5355 = vmand %vm5163, %vm5323
      %vm5356 = vmand %vm5164, %vm5324
      %vm5357 = vmand %vm5165, %vm5325
      %vm5358 = vmand %vm5166, %vm5326
      %vm5359 = vmand %vm5167, %vm5327
      %vm5360 = vmand %vm5168, %vm5328
      %vm5361 = vmand %vm5169, %vm5329
      %vm5362 = vmand %vm5170, %vm5330
      %vm5363 = vmand %vm5171, %vm5331
      %vm5364 = vmand %vm5172, %vm5332
      %vm5365 = vmand %vm5173, %vm5333
      %vm5366 = vmand %vm5174, %vm5334
      %vm5367 = vmand %vm5175, %vm5335
      %vm5368 = vmand %vm5176, %vm5336
      %vm5369 = vmand %vm5177, %vm5337
      %vm5370 = vmand %vm5178, %vm5338
      %vm5371 = vmand %vm5179, %vm5339
      %vm5372 = vmand %vm5180, %vm5340
      %vm5373 = vmand %vm5181, %vm5341
      %vm5374 = vmand %vm5182, %vm5342
      %vm5375 = vmand %vm5183, %vm5343
      %vm5376 = vmand %vm5184, %vm5344
      %vm5377 = vmand %vm5185, %vm5345
      %vm5378 = vmand %vm5186, %vm5346
      %vm5379 = vmand %vm5187, %vm5347
      %vm5380 = vmand %vm5188, %vm5348
      %vm5381 = vmand %vm5189, %vm5349
      %vm5382 = vmand %vm5190, %vm5350
      %vm5383 = vmand %vm5191, %vm5351
      %5384 = vset.pattern.permute.xlu0 5
      %5385 = vperm.xlu0 %5384, %v255
      %v5386 = vpop.permute.xlu0 %5385
      %5388 = vset.pattern.permute.xlu0 5
      %5389 = vperm.xlu0 %5388, %v256
      %v5390 = vpop.permute.xlu0 %5389
      %5392 = vset.pattern.permute.xlu0 5
      %5393 = vperm.xlu0 %5392, %v257
      %v5394 = vpop.permute.xlu0 %5393
      %5396 = vset.pattern.permute.xlu0 5
      %5397 = vperm.xlu0 %5396, %v258
      %v5398 = vpop.permute.xlu0 %5397
      %5400 = vset.pattern.permute.xlu0 5
      %5401 = vperm.xlu0 %5400, %v259
      %v5402 = vpop.permute.xlu0 %5401
      %5404 = vset.pattern.permute.xlu0 5
      %5405 = vperm.xlu0 %5404, %v260
      %v5406 = vpop.permute.xlu0 %5405
      %5408 = vset.pattern.permute.xlu0 5
      %5409 = vperm.xlu0 %5408, %v261
      %v5410 = vpop.permute.xlu0 %5409
      %5412 = vset.pattern.permute.xlu0 5
      %5413 = vperm.xlu0 %5412, %v262
      %v5414 = vpop.permute.xlu0 %5413
      %5416 = vset.pattern.permute.xlu0 5
      %5417 = vperm.xlu0 %5416, %v263
      %v5418 = vpop.permute.xlu0 %5417
      %5420 = vset.pattern.permute.xlu0 5
      %5421 = vperm.xlu0 %5420, %v264
      %v5422 = vpop.permute.xlu0 %5421
      %5424 = vset.pattern.permute.xlu0 5
      %5425 = vperm.xlu0 %5424, %v265
      %v5426 = vpop.permute.xlu0 %5425
      %5428 = vset.pattern.permute.xlu0 5
      %5429 = vperm.xlu0 %5428, %v266
      %v5430 = vpop.permute.xlu0 %5429
      %5432 = vset.pattern.permute.xlu0 5
      %5433 = vperm.xlu0 %5432, %v267
      %v5434 = vpop.permute.xlu0 %5433
      %5436 = vset.pattern.permute.xlu0 5
      %5437 = vperm.xlu0 %5436, %v268
      %v5438 = vpop.permute.xlu0 %5437
      %5440 = vset.pattern.permute.xlu0 5
      %5441 = vperm.xlu0 %5440, %v269
      %v5442 = vpop.permute.xlu0 %5441
      %5444 = vset.pattern.permute.xlu0 5
      %5445 = vperm.xlu0 %5444, %v270
      %v5446 = vpop.permute.xlu0 %5445
      %5448 = vset.pattern.permute.xlu0 5
      %5449 = vperm.xlu0 %5448, %v271
      %v5450 = vpop.permute.xlu0 %5449
      %5452 = vset.pattern.permute.xlu0 5
      %5453 = vperm.xlu0 %5452, %v272
      %v5454 = vpop.permute.xlu0 %5453
      %5456 = vset.pattern.permute.xlu0 5
      %5457 = vperm.xlu0 %5456, %v273
      %v5458 = vpop.permute.xlu0 %5457
      %5460 = vset.pattern.permute.xlu0 5
      %5461 = vperm.xlu0 %5460, %v274
      %v5462 = vpop.permute.xlu0 %5461
      %5464 = vset.pattern.permute.xlu0 5
      %5465 = vperm.xlu0 %5464, %v275
      %v5466 = vpop.permute.xlu0 %5465
      %5468 = vset.pattern.permute.xlu0 5
      %5469 = vperm.xlu0 %5468, %v276
      %v5470 = vpop.permute.xlu0 %5469
      %5472 = vset.pattern.permute.xlu0 5
      %5473 = vperm.xlu0 %5472, %v277
      %v5474 = vpop.permute.xlu0 %5473
      %5476 = vset.pattern.permute.xlu0 5
      %5477 = vperm.xlu0 %5476, %v278
      %v5478 = vpop.permute.xlu0 %5477
      %5480 = vset.pattern.permute.xlu0 5
      %5481 = vperm.xlu0 %5480, %v279
      %v5482 = vpop.permute.xlu0 %5481
      %5484 = vset.pattern.permute.xlu0 5
      %5485 = vperm.xlu0 %5484, %v280
      %v5486 = vpop.permute.xlu0 %5485
      %5488 = vset.pattern.permute.xlu0 5
      %5489 = vperm.xlu0 %5488, %v281
      %v5490 = vpop.permute.xlu0 %5489
      %5492 = vset.pattern.permute.xlu0 5
      %5493 = vperm.xlu0 %5492, %v282
      %v5494 = vpop.permute.xlu0 %5493
      %5496 = vset.pattern.permute.xlu0 5
      %5497 = vperm.xlu0 %5496, %v283
      %v5498 = vpop.permute.xlu0 %5497
      %5500 = vset.pattern.permute.xlu0 5
      %5501 = vperm.xlu0 %5500, %v284
      %v5502 = vpop.permute.xlu0 %5501
      %5504 = vset.pattern.permute.xlu0 5
      %5505 = vperm.xlu0 %5504, %v285
      %v5506 = vpop.permute.xlu0 %5505
      %5508 = vset.pattern.permute.xlu0 5
      %5509 = vperm.xlu0 %5508, %v286
      %v5510 = vpop.permute.xlu0 %5509
      %v5512 = vsel %vm5352, %v5386, 0.0
      %v5513 = vsel %vm5353, %v5390, 0.0
      %v5514 = vsel %vm5354, %v5394, 0.0
      %v5515 = vsel %vm5355, %v5398, 0.0
      %v5516 = vsel %vm5356, %v5402, 0.0
      %v5517 = vsel %vm5357, %v5406, 0.0
      %v5518 = vsel %vm5358, %v5410, 0.0
      %v5519 = vsel %vm5359, %v5414, 0.0
      %v5520 = vsel %vm5360, %v5418, 0.0
      %v5521 = vsel %vm5361, %v5422, 0.0
      %v5522 = vsel %vm5362, %v5426, 0.0
      %v5523 = vsel %vm5363, %v5430, 0.0
      %v5524 = vsel %vm5364, %v5434, 0.0
      %v5525 = vsel %vm5365, %v5438, 0.0
      %v5526 = vsel %vm5366, %v5442, 0.0
      %v5527 = vsel %vm5367, %v5446, 0.0
      %v5528 = vsel %vm5368, %v5450, 0.0
      %v5529 = vsel %vm5369, %v5454, 0.0
      %v5530 = vsel %vm5370, %v5458, 0.0
      %v5531 = vsel %vm5371, %v5462, 0.0
      %v5532 = vsel %vm5372, %v5466, 0.0
      %v5533 = vsel %vm5373, %v5470, 0.0
      %v5534 = vsel %vm5374, %v5474, 0.0
      %v5535 = vsel %vm5375, %v5478, 0.0
      %v5536 = vsel %vm5376, %v5482, 0.0
      %v5537 = vsel %vm5377, %v5486, 0.0
      %v5538 = vsel %vm5378, %v5490, 0.0
      %v5539 = vsel %vm5379, %v5494, 0.0
      %v5540 = vsel %vm5380, %v5498, 0.0
      %v5541 = vsel %vm5381, %v5502, 0.0
      %v5542 = vsel %vm5382, %v5506, 0.0
      %v5543 = vsel %vm5383, %v5510, 0.0
      %v5544 = vadd.f32 %v5128, %v5512
      %v5545 = vadd.f32 %v5129, %v5513
      %v5546 = vadd.f32 %v5130, %v5514
      %v5547 = vadd.f32 %v5131, %v5515
      %v5548 = vadd.f32 %v5132, %v5516
      %v5549 = vadd.f32 %v5133, %v5517
      %v5550 = vadd.f32 %v5134, %v5518
      %v5551 = vadd.f32 %v5135, %v5519
      %v5552 = vadd.f32 %v5136, %v5520
      %v5553 = vadd.f32 %v5137, %v5521
      %v5554 = vadd.f32 %v5138, %v5522
      %v5555 = vadd.f32 %v5139, %v5523
      %v5556 = vadd.f32 %v5140, %v5524
      %v5557 = vadd.f32 %v5141, %v5525
      %v5558 = vadd.f32 %v5142, %v5526
      %v5559 = vadd.f32 %v5143, %v5527
      %v5560 = vadd.f32 %v5144, %v5528
      %v5561 = vadd.f32 %v5145, %v5529
      %v5562 = vadd.f32 %v5146, %v5530
      %v5563 = vadd.f32 %v5147, %v5531
      %v5564 = vadd.f32 %v5148, %v5532
      %v5565 = vadd.f32 %v5149, %v5533
      %v5566 = vadd.f32 %v5150, %v5534
      %v5567 = vadd.f32 %v5151, %v5535
      %v5568 = vadd.f32 %v5152, %v5536
      %v5569 = vadd.f32 %v5153, %v5537
      %v5570 = vadd.f32 %v5154, %v5538
      %v5571 = vadd.f32 %v5155, %v5539
      %v5572 = vadd.f32 %v5156, %v5540
      %v5573 = vadd.f32 %v5157, %v5541
      %v5574 = vadd.f32 %v5158, %v5542
      %v5575 = vadd.f32 %v5159, %v5543
      %v5576 = vmul.f32 %v4428, %v5544
      %v5577 = vmul.f32 %v4435, %v5545
      %v5578 = vmul.f32 %v4442, %v5546
      %v5579 = vmul.f32 %v4449, %v5547
      %v5580 = vmul.f32 %v4456, %v5548
      %v5581 = vmul.f32 %v4463, %v5549
      %v5582 = vmul.f32 %v4470, %v5550
      %v5583 = vmul.f32 %v4477, %v5551
      %v5584 = vmul.f32 %v4484, %v5552
      %v5585 = vmul.f32 %v4491, %v5553
      %v5586 = vmul.f32 %v4498, %v5554
      %v5587 = vmul.f32 %v4505, %v5555
      %v5588 = vmul.f32 %v4512, %v5556
      %v5589 = vmul.f32 %v4519, %v5557
      %v5590 = vmul.f32 %v4526, %v5558
      %v5591 = vmul.f32 %v4533, %v5559
      %v5592 = vmul.f32 %v4540, %v5560
      %v5593 = vmul.f32 %v4547, %v5561
      %v5594 = vmul.f32 %v4554, %v5562
      %v5595 = vmul.f32 %v4561, %v5563
      %v5596 = vmul.f32 %v4568, %v5564
      %v5597 = vmul.f32 %v4575, %v5565
      %v5598 = vmul.f32 %v4582, %v5566
      %v5599 = vmul.f32 %v4589, %v5567
      %v5600 = vmul.f32 %v4596, %v5568
      %v5601 = vmul.f32 %v4603, %v5569
      %v5602 = vmul.f32 %v4610, %v5570
      %v5603 = vmul.f32 %v4617, %v5571
      %v5604 = vmul.f32 %v4624, %v5572
      %v5605 = vmul.f32 %v4631, %v5573
      %v5606 = vmul.f32 %v4638, %v5574
      %v5607 = vmul.f32 %v4645, %v5575
      %v5608 = vld [vmem:[%s3] sm:$0xff]
      %v5609 = vld [vmem:[%s3 + $0x8] sm:$0xff]
      %v5610 = vld [vmem:[%s3 + $0x10] sm:$0xff]
      %v5611 = vld [vmem:[%s3 + $0x18] sm:$0xff]
      %v5612 = vld [vmem:[%s3 + $0x20] sm:$0xff]
      %v5613 = vld [vmem:[%s3 + $0x28] sm:$0xff]
      %v5614 = vld [vmem:[%s3 + $0x30] sm:$0xff]
      %v5615 = vld [vmem:[%s3 + $0x38] sm:$0xff]
      %vm5616 = vcmask 523264
      %v5618 = vsel %vm5616, %v5576, 0
      %v5621 = vsel %vm5616, %v5577, 0
      %v5624 = vsel %vm5616, %v5578, 0
      %v5627 = vsel %vm5616, %v5579, 0
      %v5630 = vsel %vm5616, %v5580, 0
      %v5633 = vsel %vm5616, %v5581, 0
      %v5636 = vsel %vm5616, %v5582, 0
      %v5639 = vsel %vm5616, %v5583, 0
      %v5642 = vsel %vm5616, %v5584, 0
      %v5645 = vsel %vm5616, %v5585, 0
      %v5648 = vsel %vm5616, %v5586, 0
      %v5651 = vsel %vm5616, %v5587, 0
      %v5654 = vsel %vm5616, %v5588, 0
      %v5657 = vsel %vm5616, %v5589, 0
      %v5660 = vsel %vm5616, %v5590, 0
      %v5663 = vsel %vm5616, %v5591, 0
      %v5666 = vsel %vm5616, %v5592, 0
      %v5669 = vsel %vm5616, %v5593, 0
      %v5672 = vsel %vm5616, %v5594, 0
      %v5675 = vsel %vm5616, %v5595, 0
      %v5678 = vsel %vm5616, %v5596, 0
      %v5681 = vsel %vm5616, %v5597, 0
      %v5684 = vsel %vm5616, %v5598, 0
      %v5687 = vsel %vm5616, %v5599, 0
      %v5690 = vsel %vm5616, %v5600, 0
      %v5693 = vsel %vm5616, %v5601, 0
      %v5696 = vsel %vm5616, %v5602, 0
      %v5699 = vsel %vm5616, %v5603, 0
      %v5702 = vsel %vm5616, %v5604, 0
      %v5705 = vsel %vm5616, %v5605, 0
      %v5708 = vsel %vm5616, %v5606, 0
      %v5711 = vsel %vm5616, %v5607, 0
      %5713 = vmatprep.subr.mxu0 0.0
      %v5714 = vand.u32 %v5608, 4294901760
      %5715 = vmatpush1.msra.mxu0 %v5714
      %5716 = vmatprep.subr.mxu0 0.0
      %v5717 = vand.u32 %v5609, 4294901760
      %5718 = vmatpush1.msra.mxu0 %v5717
      %5719 = vmatprep.subr.mxu0 0.0
      %v5720 = vand.u32 %v5610, 4294901760
      %5721 = vmatpush1.msra.mxu0 %v5720
      %5722 = vmatprep.subr.mxu0 0.0
      %v5723 = vand.u32 %v5611, 4294901760
      %5724 = vmatpush1.msra.mxu0 %v5723
      %5725 = vmatprep.subr.mxu0 0.0
      %v5726 = vand.u32 %v5612, 4294901760
      %5727 = vmatpush1.msra.mxu0 %v5726
      %5728 = vmatprep.subr.mxu0 0.0
      %v5729 = vand.u32 %v5613, 4294901760
      %5730 = vmatpush1.msra.mxu0 %v5729
      %5731 = vmatprep.subr.mxu0 0.0
      %v5732 = vand.u32 %v5614, 4294901760
      %5733 = vmatpush1.msra.mxu0 %v5732
      %5734 = vmatprep.subr.mxu0 0.0
      %v5735 = vand.u32 %v5615, 4294901760
      %5736 = vmatpush1.msra.mxu0 %v5735
      %5737 = vmatprep.subr.mxu0 0.0
      %5738 = vmatpush1.msra.mxu0 0.0
      %5739 = vmatprep.subr.mxu0 0.0
      %5740 = vmatpush1.msra.mxu0 0.0
      %5741 = vmatprep.subr.mxu0 0.0
      %5742 = vmatpush1.msra.mxu0 0.0
      %5743 = vmatprep.subr.mxu0 0.0
      %5744 = vmatpush1.msra.mxu0 0.0
      %5745 = vmatprep.subr.mxu0 0.0
      %5746 = vmatpush1.msra.mxu0 0.0
      %5747 = vmatprep.subr.mxu0 0.0
      %5748 = vmatpush1.msra.mxu0 0.0
      %5749 = vmatprep.subr.mxu0 0.0
      %5750 = vmatpush1.msra.mxu0 0.0
      %5751 = vmatprep.subr.mxu0 0.0
      %5752 = vmatpush1.msra.mxu0 0.0
      %5753 = vmatprep.subr.mxu0 0.0
      %5754 = vmatpush1.msra.mxu0 0.0
      %5755 = vmatprep.subr.mxu0 0.0
      %5756 = vmatpush1.msra.mxu0 0.0
      %5757 = vmatprep.subr.mxu0 0.0
      %5758 = vmatpush1.msra.mxu0 0.0
      %5759 = vmatprep.subr.mxu0 0.0
      %5760 = vmatpush1.msra.mxu0 0.0
      %5761 = vmatprep.subr.mxu0 0.0
      %5762 = vmatpush1.msra.mxu0 0.0
      %5763 = vmatprep.subr.mxu0 0.0
      %5764 = vmatpush1.msra.mxu0 0.0
      %5765 = vmatprep.subr.mxu0 0.0
      %5766 = vmatpush1.msra.mxu0 0.0
      %5767 = vmatprep.subr.mxu0 0.0
      %5768 = vmatpush1.msra.mxu0 0.0
      %5769 = vmatprep.subr.mxu0 0.0
      %5770 = vmatpush1.msra.mxu0 0.0
      %5771 = vmatprep.subr.mxu0 0.0
      %5772 = vmatpush1.msra.mxu0 0.0
      %5773 = vmatprep.subr.mxu0 0.0
      %5774 = vmatpush1.msra.mxu0 0.0
      %5775 = vmatprep.subr.mxu0 0.0
      %5776 = vmatpush1.msra.mxu0 0.0
      %5777 = vmatprep.subr.mxu0 0.0
      %5778 = vmatpush1.msra.mxu0 0.0
      %5779 = vmatprep.subr.mxu0 0.0
      %5780 = vmatpush1.msra.mxu0 0.0
      %5781 = vmatprep.subr.mxu0 0.0
      %5782 = vmatpush1.msra.mxu0 0.0
      %5783 = vmatprep.subr.mxu0 0.0
      %5784 = vmatpush1.msra.mxu0 0.0
      %5785 = vmatprep.mubr.f32.mxu0 0.0
      %v5786 = vand.u32 %v5618, 4294901760
      %v5787 = vsub.f32 %v5618, %v5786
      %v5788 = vand.u32 %v5787, 4294901760
      %v5789 = vsub.f32 %v5787, %v5788
      %v5790 = vand.u32 %v5789, 4294901760
      %5791 = vmatmul.mubr.f32.gmra.mrb[0].mxu0 %v5790
      %v5792 = vpop.f32.mrb[0].mxu0
      %v5793 = vadd.f32 0.0, %v5792
      %v5794 = vpop.f32.mrb[0].mxu0
      %5795 = vmatprep.mubr.f32.mxu0 0.0
      %v5796 = vand.u32 %v5621, 4294901760
      %v5797 = vsub.f32 %v5621, %v5796
      %v5798 = vand.u32 %v5797, 4294901760
      %v5799 = vsub.f32 %v5797, %v5798
      %v5800 = vand.u32 %v5799, 4294901760
      %5801 = vmatmul.mubr.f32.gmra.mrb[0].mxu0 %v5800
      %v5802 = vpop.f32.mrb[0].mxu0
      %v5803 = vadd.f32 0.0, %v5802
      %v5804 = vpop.f32.mrb[0].mxu0
      %5805 = vmatprep.mubr.f32.mxu0 0.0
      %v5806 = vand.u32 %v5624, 4294901760
      %v5807 = vsub.f32 %v5624, %v5806
      %v5808 = vand.u32 %v5807, 4294901760
      %v5809 = vsub.f32 %v5807, %v5808
      %v5810 = vand.u32 %v5809, 4294901760
      %5811 = vmatmul.mubr.f32.gmra.mrb[0].mxu0 %v5810
      %v5812 = vpop.f32.mrb[0].mxu0
      %v5813 = vadd.f32 0.0, %v5812
      %v5814 = vpop.f32.mrb[0].mxu0
      %5815 = vmatprep.mubr.f32.mxu0 0.0
      %v5816 = vand.u32 %v5627, 4294901760
      %v5817 = vsub.f32 %v5627, %v5816
      %v5818 = vand.u32 %v5817, 4294901760
      %v5819 = vsub.f32 %v5817, %v5818
      %v5820 = vand.u32 %v5819, 4294901760
      %5821 = vmatmul.mubr.f32.gmra.mrb[0].mxu0 %v5820
      %v5822 = vpop.f32.mrb[0].mxu0
      %v5823 = vadd.f32 0.0, %v5822
      %v5824 = vpop.f32.mrb[0].mxu0
      %5825 = vmatprep.mubr.f32.mxu0 0.0
      %v5826 = vand.u32 %v5630, 4294901760
      %v5827 = vsub.f32 %v5630, %v5826
      %v5828 = vand.u32 %v5827, 4294901760
      %v5829 = vsub.f32 %v5827, %v5828
      %v5830 = vand.u32 %v5829, 4294901760
      %5831 = vmatmul.mubr.f32.gmra.mrb[0].mxu0 %v5830
      %v5832 = vpop.f32.mrb[0].mxu0
      %v5833 = vadd.f32 0.0, %v5832
      %v5834 = vpop.f32.mrb[0].mxu0
      %5835 = vmatprep.mubr.f32.mxu0 0.0
      %v5836 = vand.u32 %v5633, 4294901760
      %v5837 = vsub.f32 %v5633, %v5836
      %v5838 = vand.u32 %v5837, 4294901760
      %v5839 = vsub.f32 %v5837, %v5838
      %v5840 = vand.u32 %v5839, 4294901760
      %5841 = vmatmul.mubr.f32.gmra.mrb[0].mxu0 %v5840
      %v5842 = vpop.f32.mrb[0].mxu0
      %v5843 = vadd.f32 0.0, %v5842
      %v5844 = vpop.f32.mrb[0].mxu0
      %5845 = vmatprep.mubr.f32.mxu0 0.0
      %v5846 = vand.u32 %v5636, 4294901760
      %v5847 = vsub.f32 %v5636, %v5846
      %v5848 = vand.u32 %v5847, 4294901760
      %v5849 = vsub.f32 %v5847, %v5848
      %v5850 = vand.u32 %v5849, 4294901760
      %5851 = vmatmul.mubr.f32.gmra.mrb[0].mxu0 %v5850
      %v5852 = vpop.f32.mrb[0].mxu0
      %v5853 = vadd.f32 0.0, %v5852
      %v5854 = vpop.f32.mrb[0].mxu0
      %5855 = vmatprep.mubr.f32.mxu0 0.0
      %v5856 = vand.u32 %v5639, 4294901760
      %v5857 = vsub.f32 %v5639, %v5856
      %v5858 = vand.u32 %v5857, 4294901760
      %v5859 = vsub.f32 %v5857, %v5858
      %v5860 = vand.u32 %v5859, 4294901760
      %5861 = vmatmul.mubr.f32.gmra.mrb[0].mxu0 %v5860
      %v5862 = vpop.f32.mrb[0].mxu0
      %v5863 = vadd.f32 0.0, %v5862
      %v5864 = vpop.f32.mrb[0].mxu0
      %5865 = vmatprep.mubr.f32.mxu0 0.0
      %v5866 = vand.u32 %v5642, 4294901760
      %v5867 = vsub.f32 %v5642, %v5866
      %v5868 = vand.u32 %v5867, 4294901760
      %v5869 = vsub.f32 %v5867, %v5868
      %v5870 = vand.u32 %v5869, 4294901760
      %5871 = vmatmul.mubr.f32.gmra.mrb[0].mxu0 %v5870
      %v5872 = vpop.f32.mrb[0].mxu0
      %v5873 = vadd.f32 0.0, %v5872
      %v5874 = vpop.f32.mrb[0].mxu0
      %5875 = vmatprep.mubr.f32.mxu0 0.0
      %v5876 = vand.u32 %v5645, 4294901760
      %v5877 = vsub.f32 %v5645, %v5876
      %v5878 = vand.u32 %v5877, 4294901760
      %v5879 = vsub.f32 %v5877, %v5878
      %v5880 = vand.u32 %v5879, 4294901760
      %5881 = vmatmul.mubr.f32.gmra.mrb[0].mxu0 %v5880
      %v5882 = vpop.f32.mrb[0].mxu0
      %v5883 = vadd.f32 0.0, %v5882
      %v5884 = vpop.f32.mrb[0].mxu0
      %5885 = vmatprep.mubr.f32.mxu0 0.0
      %v5886 = vand.u32 %v5648, 4294901760
      %v5887 = vsub.f32 %v5648, %v5886
      %v5888 = vand.u32 %v5887, 4294901760
      %v5889 = vsub.f32 %v5887, %v5888
      %v5890 = vand.u32 %v5889, 4294901760
      %5891 = vmatmul.mubr.f32.gmra.mrb[0].mxu0 %v5890
      %v5892 = vpop.f32.mrb[0].mxu0
      %v5893 = vadd.f32 0.0, %v5892
      %v5894 = vpop.f32.mrb[0].mxu0
      %5895 = vmatprep.mubr.f32.mxu0 0.0
      %v5896 = vand.u32 %v5651, 4294901760
      %v5897 = vsub.f32 %v5651, %v5896
      %v5898 = vand.u32 %v5897, 4294901760
      %v5899 = vsub.f32 %v5897, %v5898
      %v5900 = vand.u32 %v5899, 4294901760
      %5901 = vmatmul.mubr.f32.gmra.mrb[0].mxu0 %v5900
      %v5902 = vpop.f32.mrb[0].mxu0
      %v5903 = vadd.f32 0.0, %v5902
      %v5904 = vpop.f32.mrb[0].mxu0
      %5905 = vmatprep.mubr.f32.mxu0 0.0
      %v5906 = vand.u32 %v5654, 4294901760
      %v5907 = vsub.f32 %v5654, %v5906
      %v5908 = vand.u32 %v5907, 4294901760
      %v5909 = vsub.f32 %v5907, %v5908
      %v5910 = vand.u32 %v5909, 4294901760
      %5911 = vmatmul.mubr.f32.gmra.mrb[0].mxu0 %v5910
      %v5912 = vpop.f32.mrb[0].mxu0
      %v5913 = vadd.f32 0.0, %v5912
      %v5914 = vpop.f32.mrb[0].mxu0
      %5915 = vmatprep.mubr.f32.mxu0 0.0
      %v5916 = vand.u32 %v5657, 4294901760
      %v5917 = vsub.f32 %v5657, %v5916
      %v5918 = vand.u32 %v5917, 4294901760
      %v5919 = vsub.f32 %v5917, %v5918
      %v5920 = vand.u32 %v5919, 4294901760
      %5921 = vmatmul.mubr.f32.gmra.mrb[0].mxu0 %v5920
      %v5922 = vpop.f32.mrb[0].mxu0
      %v5923 = vadd.f32 0.0, %v5922
      %v5924 = vpop.f32.mrb[0].mxu0
      %5925 = vmatprep.mubr.f32.mxu0 0.0
      %v5926 = vand.u32 %v5660, 4294901760
      %v5927 = vsub.f32 %v5660, %v5926
      %v5928 = vand.u32 %v5927, 4294901760
      %v5929 = vsub.f32 %v5927, %v5928
      %v5930 = vand.u32 %v5929, 4294901760
      %5931 = vmatmul.mubr.f32.gmra.mrb[0].mxu0 %v5930
      %v5932 = vpop.f32.mrb[0].mxu0
      %v5933 = vadd.f32 0.0, %v5932
      %v5934 = vpop.f32.mrb[0].mxu0
      %5935 = vmatprep.mubr.f32.mxu0 0.0
      %v5936 = vand.u32 %v5663, 4294901760
      %v5937 = vsub.f32 %v5663, %v5936
      %v5938 = vand.u32 %v5937, 4294901760
      %v5939 = vsub.f32 %v5937, %v5938
      %v5940 = vand.u32 %v5939, 4294901760
      %5941 = vmatmul.mubr.f32.gmra.mrb[0].mxu0 %v5940
      %v5942 = vpop.f32.mrb[0].mxu0
      %v5943 = vadd.f32 0.0, %v5942
      %v5944 = vpop.f32.mrb[0].mxu0
      %5945 = vmatprep.mubr.f32.mxu0 0.0
      %v5946 = vand.u32 %v5666, 4294901760
      %v5947 = vsub.f32 %v5666, %v5946
      %v5948 = vand.u32 %v5947, 4294901760
      %v5949 = vsub.f32 %v5947, %v5948
      %v5950 = vand.u32 %v5949, 4294901760
      %5951 = vmatmul.mubr.f32.gmra.mrb[0].mxu0 %v5950
      %v5952 = vpop.f32.mrb[0].mxu0
      %v5953 = vadd.f32 0.0, %v5952
      %v5954 = vpop.f32.mrb[0].mxu0
      %5955 = vmatprep.mubr.f32.mxu0 0.0
      %v5956 = vand.u32 %v5669, 4294901760
      %v5957 = vsub.f32 %v5669, %v5956
      %v5958 = vand.u32 %v5957, 4294901760
      %v5959 = vsub.f32 %v5957, %v5958
      %v5960 = vand.u32 %v5959, 4294901760
      %5961 = vmatmul.mubr.f32.gmra.mrb[0].mxu0 %v5960
      %v5962 = vpop.f32.mrb[0].mxu0
      %v5963 = vadd.f32 0.0, %v5962
      %v5964 = vpop.f32.mrb[0].mxu0
      %5965 = vmatprep.mubr.f32.mxu0 0.0
      %v5966 = vand.u32 %v5672, 4294901760
      %v5967 = vsub.f32 %v5672, %v5966
      %v5968 = vand.u32 %v5967, 4294901760
      %v5969 = vsub.f32 %v5967, %v5968
      %v5970 = vand.u32 %v5969, 4294901760
      %5971 = vmatmul.mubr.f32.gmra.mrb[0].mxu0 %v5970
      %v5972 = vpop.f32.mrb[0].mxu0
      %v5973 = vadd.f32 0.0, %v5972
      %v5974 = vpop.f32.mrb[0].mxu0
      %5975 = vmatprep.mubr.f32.mxu0 0.0
      %v5976 = vand.u32 %v5675, 4294901760
      %v5977 = vsub.f32 %v5675, %v5976
      %v5978 = vand.u32 %v5977, 4294901760
      %v5979 = vsub.f32 %v5977, %v5978
      %v5980 = vand.u32 %v5979, 4294901760
      %5981 = vmatmul.mubr.f32.gmra.mrb[0].mxu0 %v5980
      %v5982 = vpop.f32.mrb[0].mxu0
      %v5983 = vadd.f32 0.0, %v5982
      %v5984 = vpop.f32.mrb[0].mxu0
      %5985 = vmatprep.mubr.f32.mxu0 0.0
      %v5986 = vand.u32 %v5678, 4294901760
      %v5987 = vsub.f32 %v5678, %v5986
      %v5988 = vand.u32 %v5987, 4294901760
      %v5989 = vsub.f32 %v5987, %v5988
      %v5990 = vand.u32 %v5989, 4294901760
      %5991 = vmatmul.mubr.f32.gmra.mrb[0].mxu0 %v5990
      %v5992 = vpop.f32.mrb[0].mxu0
      %v5993 = vadd.f32 0.0, %v5992
      %v5994 = vpop.f32.mrb[0].mxu0
      %5995 = vmatprep.mubr.f32.mxu0 0.0
      %v5996 = vand.u32 %v5681, 4294901760
      %v5997 = vsub.f32 %v5681, %v5996
      %v5998 = vand.u32 %v5997, 4294901760
      %v5999 = vsub.f32 %v5997, %v5998
      %v6000 = vand.u32 %v5999, 4294901760
      %6001 = vmatmul.mubr.f32.gmra.mrb[0].mxu0 %v6000
      %v6002 = vpop.f32.mrb[0].mxu0
      %v6003 = vadd.f32 0.0, %v6002
      %v6004 = vpop.f32.mrb[0].mxu0
      %6005 = vmatprep.mubr.f32.mxu0 0.0
      %v6006 = vand.u32 %v5684, 4294901760
      %v6007 = vsub.f32 %v5684, %v6006
      %v6008 = vand.u32 %v6007, 4294901760
      %v6009 = vsub.f32 %v6007, %v6008
      %v6010 = vand.u32 %v6009, 4294901760
      %6011 = vmatmul.mubr.f32.gmra.mrb[0].mxu0 %v6010
      %v6012 = vpop.f32.mrb[0].mxu0
      %v6013 = vadd.f32 0.0, %v6012
      %v6014 = vpop.f32.mrb[0].mxu0
      %6015 = vmatprep.mubr.f32.mxu0 0.0
      %v6016 = vand.u32 %v5687, 4294901760
      %v6017 = vsub.f32 %v5687, %v6016
      %v6018 = vand.u32 %v6017, 4294901760
      %v6019 = vsub.f32 %v6017, %v6018
      %v6020 = vand.u32 %v6019, 4294901760
      %6021 = vmatmul.mubr.f32.gmra.mrb[0].mxu0 %v6020
      %v6022 = vpop.f32.mrb[0].mxu0
      %v6023 = vadd.f32 0.0, %v6022
      %v6024 = vpop.f32.mrb[0].mxu0
      %6025 = vmatprep.mubr.f32.mxu0 0.0
      %v6026 = vand.u32 %v5690, 4294901760
      %v6027 = vsub.f32 %v5690, %v6026
      %v6028 = vand.u32 %v6027, 4294901760
      %v6029 = vsub.f32 %v6027, %v6028
      %v6030 = vand.u32 %v6029, 4294901760
      %6031 = vmatmul.mubr.f32.gmra.mrb[0].mxu0 %v6030
      %v6032 = vpop.f32.mrb[0].mxu0
      %v6033 = vadd.f32 0.0, %v6032
      %v6034 = vpop.f32.mrb[0].mxu0
      %6035 = vmatprep.mubr.f32.mxu0 0.0
      %v6036 = vand.u32 %v5693, 4294901760
      %v6037 = vsub.f32 %v5693, %v6036
      %v6038 = vand.u32 %v6037, 4294901760
      %v6039 = vsub.f32 %v6037, %v6038
      %v6040 = vand.u32 %v6039, 4294901760
      %6041 = vmatmul.mubr.f32.gmra.mrb[0].mxu0 %v6040
      %v6042 = vpop.f32.mrb[0].mxu0
      %v6043 = vadd.f32 0.0, %v6042
      %v6044 = vpop.f32.mrb[0].mxu0
      %6045 = vmatprep.mubr.f32.mxu0 0.0
      %v6046 = vand.u32 %v5696, 4294901760
      %v6047 = vsub.f32 %v5696, %v6046
      %v6048 = vand.u32 %v6047, 4294901760
      %v6049 = vsub.f32 %v6047, %v6048
      %v6050 = vand.u32 %v6049, 4294901760
      %6051 = vmatmul.mubr.f32.gmra.mrb[0].mxu0 %v6050
      %v6052 = vpop.f32.mrb[0].mxu0
      %v6053 = vadd.f32 0.0, %v6052
      %v6054 = vpop.f32.mrb[0].mxu0
      %6055 = vmatprep.mubr.f32.mxu0 0.0
      %v6056 = vand.u32 %v5699, 4294901760
      %v6057 = vsub.f32 %v5699, %v6056
      %v6058 = vand.u32 %v6057, 4294901760
      %v6059 = vsub.f32 %v6057, %v6058
      %v6060 = vand.u32 %v6059, 4294901760
      %6061 = vmatmul.mubr.f32.gmra.mrb[0].mxu0 %v6060
      %v6062 = vpop.f32.mrb[0].mxu0
      %v6063 = vadd.f32 0.0, %v6062
      %v6064 = vpop.f32.mrb[0].mxu0
      %6065 = vmatprep.mubr.f32.mxu0 0.0
      %v6066 = vand.u32 %v5702, 4294901760
      %v6067 = vsub.f32 %v5702, %v6066
      %v6068 = vand.u32 %v6067, 4294901760
      %v6069 = vsub.f32 %v6067, %v6068
      %v6070 = vand.u32 %v6069, 4294901760
      %6071 = vmatmul.mubr.f32.gmra.mrb[0].mxu0 %v6070
      %v6072 = vpop.f32.mrb[0].mxu0
      %v6073 = vadd.f32 0.0, %v6072
      %v6074 = vpop.f32.mrb[0].mxu0
      %6075 = vmatprep.mubr.f32.mxu0 0.0
      %v6076 = vand.u32 %v5705, 4294901760
      %v6077 = vsub.f32 %v5705, %v6076
      %v6078 = vand.u32 %v6077, 4294901760
      %v6079 = vsub.f32 %v6077, %v6078
      %v6080 = vand.u32 %v6079, 4294901760
      %6081 = vmatmul.mubr.f32.gmra.mrb[0].mxu0 %v6080
      %v6082 = vpop.f32.mrb[0].mxu0
      %v6083 = vadd.f32 0.0, %v6082
      %v6084 = vpop.f32.mrb[0].mxu0
      %6085 = vmatprep.mubr.f32.mxu0 0.0
      %v6086 = vand.u32 %v5708, 4294901760
      %v6087 = vsub.f32 %v5708, %v6086
      %v6088 = vand.u32 %v6087, 4294901760
      %v6089 = vsub.f32 %v6087, %v6088
      %v6090 = vand.u32 %v6089, 4294901760
      %6091 = vmatmul.mubr.f32.gmra.mrb[0].mxu0 %v6090
      %v6092 = vpop.f32.mrb[0].mxu0
      %v6093 = vadd.f32 0.0, %v6092
      %v6094 = vpop.f32.mrb[0].mxu0
      %6095 = vmatprep.mubr.f32.mxu0 0.0
      %v6096 = vand.u32 %v5711, 4294901760
      %v6097 = vsub.f32 %v5711, %v6096
      %v6098 = vand.u32 %v6097, 4294901760
      %v6099 = vsub.f32 %v6097, %v6098
      %v6100 = vand.u32 %v6099, 4294901760
      %6101 = vmatmul.mubr.f32.gmra.mrb[0].mxu0 %v6100
      %v6102 = vpop.f32.mrb[0].mxu0
      %v6103 = vadd.f32 0.0, %v6102
      %v6104 = vpop.f32.mrb[0].mxu0
      %6105 = vdwg.mxu0
      %6106 = vmatprep.subr.mxu0 0.0
      %v6107 = vand.u32 %v5608, 4294901760
      %v6108 = vsub.f32 %v5608, %v6107
      %v6109 = vand.u32 %v6108, 4294901760
      %v6110 = vsub.f32 %v6108, %v6109
      %v6111 = vand.u32 %v6110, 4294901760
      %6112 = vmatpush1.msra.mxu0 %v6111
      %6113 = vmatprep.subr.mxu0 0.0
      %v6114 = vand.u32 %v5609, 4294901760
      %v6115 = vsub.f32 %v5609, %v6114
      %v6116 = vand.u32 %v6115, 4294901760
      %v6117 = vsub.f32 %v6115, %v6116
      %v6118 = vand.u32 %v6117, 4294901760
      %6119 = vmatpush1.msra.mxu0 %v6118
      %6120 = vmatprep.subr.mxu0 0.0
      %v6121 = vand.u32 %v5610, 4294901760
      %v6122 = vsub.f32 %v5610, %v6121
      %v6123 = vand.u32 %v6122, 4294901760
      %v6124 = vsub.f32 %v6122, %v6123
      %v6125 = vand.u32 %v6124, 4294901760
      %6126 = vmatpush1.msra.mxu0 %v6125
      %6127 = vmatprep.subr.mxu0 0.0
      %v6128 = vand.u32 %v5611, 4294901760
      %v6129 = vsub.f32 %v5611, %v6128
      %v6130 = vand.u32 %v6129, 4294901760
      %v6131 = vsub.f32 %v6129, %v6130
      %v6132 = vand.u32 %v6131, 4294901760
      %6133 = vmatpush1.msra.mxu0 %v6132
      %6134 = vmatprep.subr.mxu0 0.0
      %v6135 = vand.u32 %v5612, 4294901760
      %v6136 = vsub.f32 %v5612, %v6135
      %v6137 = vand.u32 %v6136, 4294901760
      %v6138 = vsub.f32 %v6136, %v6137
      %v6139 = vand.u32 %v6138, 4294901760
      %6140 = vmatpush1.msra.mxu0 %v6139
      %6141 = vmatprep.subr.mxu0 0.0
      %v6142 = vand.u32 %v5613, 4294901760
      %v6143 = vsub.f32 %v5613, %v6142
      %v6144 = vand.u32 %v6143, 4294901760
      %v6145 = vsub.f32 %v6143, %v6144
      %v6146 = vand.u32 %v6145, 4294901760
      %6147 = vmatpush1.msra.mxu0 %v6146
      %6148 = vmatprep.subr.mxu0 0.0
      %v6149 = vand.u32 %v5614, 4294901760
      %v6150 = vsub.f32 %v5614, %v6149
      %v6151 = vand.u32 %v6150, 4294901760
      %v6152 = vsub.f32 %v6150, %v6151
      %v6153 = vand.u32 %v6152, 4294901760
      %6154 = vmatpush1.msra.mxu0 %v6153
      %6155 = vmatprep.subr.mxu0 0.0
      %v6156 = vand.u32 %v5615, 4294901760
      %v6157 = vsub.f32 %v5615, %v6156
      %v6158 = vand.u32 %v6157, 4294901760
      %v6159 = vsub.f32 %v6157, %v6158
      %v6160 = vand.u32 %v6159, 4294901760
      %6161 = vmatpush1.msra.mxu0 %v6160
      %6162 = vmatprep.subr.mxu0 0.0
      %6163 = vmatpush1.msra.mxu0 0.0
      %6164 = vmatprep.subr.mxu0 0.0
      %6165 = vmatpush1.msra.mxu0 0.0
      %6166 = vmatprep.subr.mxu0 0.0
      %6167 = vmatpush1.msra.mxu0 0.0
      %6168 = vmatprep.subr.mxu0 0.0
      %6169 = vmatpush1.msra.mxu0 0.0
      %6170 = vmatprep.subr.mxu0 0.0
      %6171 = vmatpush1.msra.mxu0 0.0
      %6172 = vmatprep.subr.mxu0 0.0
      %6173 = vmatpush1.msra.mxu0 0.0
      %6174 = vmatprep.subr.mxu0 0.0
      %6175 = vmatpush1.msra.mxu0 0.0
      %6176 = vmatprep.subr.mxu0 0.0
      %6177 = vmatpush1.msra.mxu0 0.0
      %6178 = vmatprep.subr.mxu0 0.0
      %6179 = vmatpush1.msra.mxu0 0.0
      %6180 = vmatprep.subr.mxu0 0.0
      %6181 = vmatpush1.msra.mxu0 0.0
      %6182 = vmatprep.subr.mxu0 0.0
      %6183 = vmatpush1.msra.mxu0 0.0
      %6184 = vmatprep.subr.mxu0 0.0
      %6185 = vmatpush1.msra.mxu0 0.0
      %6186 = vmatprep.subr.mxu0 0.0
      %6187 = vmatpush1.msra.mxu0 0.0
      %6188 = vmatprep.subr.mxu0 0.0
      %6189 = vmatpush1.msra.mxu0 0.0
      %6190 = vmatprep.subr.mxu0 0.0
      %6191 = vmatpush1.msra.mxu0 0.0
      %6192 = vmatprep.subr.mxu0 0.0
      %6193 = vmatpush1.msra.mxu0 0.0
      %6194 = vmatprep.subr.mxu0 0.0
      %6195 = vmatpush1.msra.mxu0 0.0
      %6196 = vmatprep.subr.mxu0 0.0
      %6197 = vmatpush1.msra.mxu0 0.0
      %6198 = vmatprep.subr.mxu0 0.0
      %6199 = vmatpush1.msra.mxu0 0.0
      %6200 = vmatprep.subr.mxu0 0.0
      %6201 = vmatpush1.msra.mxu0 0.0
      %6202 = vmatprep.subr.mxu0 0.0
      %6203 = vmatpush1.msra.mxu0 0.0
      %6204 = vmatprep.subr.mxu0 0.0
      %6205 = vmatpush1.msra.mxu0 0.0
      %6206 = vmatprep.subr.mxu0 0.0
      %6207 = vmatpush1.msra.mxu0 0.0
      %6208 = vmatprep.subr.mxu0 0.0
      %6209 = vmatpush1.msra.mxu0 0.0
      %6210 = vmatprep.mubr.f32.mxu0 0.0
      %v6211 = vand.u32 %v5618, 4294901760
      %6212 = vmatmul.mubr.f32.gmra.mrb[0].mxu0 %v6211
      %v6213 = vpop.f32.mrb[0].mxu0
      %v6214 = vadd.f32 %v5793, %v6213
      %v6215 = vpop.f32.mrb[0].mxu0
      %6216 = vmatprep.mubr.f32.mxu0 0.0
      %v6217 = vand.u32 %v5621, 4294901760
      %6218 = vmatmul.mubr.f32.gmra.mrb[0].mxu0 %v6217
      %v6219 = vpop.f32.mrb[0].mxu0
      %v6220 = vadd.f32 %v5803, %v6219
      %v6221 = vpop.f32.mrb[0].mxu0
      %6222 = vmatprep.mubr.f32.mxu0 0.0
      %v6223 = vand.u32 %v5624, 4294901760
      %6224 = vmatmul.mubr.f32.gmra.mrb[0].mxu0 %v6223
      %v6225 = vpop.f32.mrb[0].mxu0
      %v6226 = vadd.f32 %v5813, %v6225
      %v6227 = vpop.f32.mrb[0].mxu0
      %6228 = vmatprep.mubr.f32.mxu0 0.0
      %v6229 = vand.u32 %v5627, 4294901760
      %6230 = vmatmul.mubr.f32.gmra.mrb[0].mxu0 %v6229
      %v6231 = vpop.f32.mrb[0].mxu0
      %v6232 = vadd.f32 %v5823, %v6231
      %v6233 = vpop.f32.mrb[0].mxu0
      %6234 = vmatprep.mubr.f32.mxu0 0.0
      %v6235 = vand.u32 %v5630, 4294901760
      %6236 = vmatmul.mubr.f32.gmra.mrb[0].mxu0 %v6235
      %v6237 = vpop.f32.mrb[0].mxu0
      %v6238 = vadd.f32 %v5833, %v6237
      %v6239 = vpop.f32.mrb[0].mxu0
      %6240 = vmatprep.mubr.f32.mxu0 0.0
      %v6241 = vand.u32 %v5633, 4294901760
      %6242 = vmatmul.mubr.f32.gmra.mrb[0].mxu0 %v6241
      %v6243 = vpop.f32.mrb[0].mxu0
      %v6244 = vadd.f32 %v5843, %v6243
      %v6245 = vpop.f32.mrb[0].mxu0
      %6246 = vmatprep.mubr.f32.mxu0 0.0
      %v6247 = vand.u32 %v5636, 4294901760
      %6248 = vmatmul.mubr.f32.gmra.mrb[0].mxu0 %v6247
      %v6249 = vpop.f32.mrb[0].mxu0
      %v6250 = vadd.f32 %v5853, %v6249
      %v6251 = vpop.f32.mrb[0].mxu0
      %6252 = vmatprep.mubr.f32.mxu0 0.0
      %v6253 = vand.u32 %v5639, 4294901760
      %6254 = vmatmul.mubr.f32.gmra.mrb[0].mxu0 %v6253
      %v6255 = vpop.f32.mrb[0].mxu0
      %v6256 = vadd.f32 %v5863, %v6255
      %v6257 = vpop.f32.mrb[0].mxu0
      %6258 = vmatprep.mubr.f32.mxu0 0.0
      %v6259 = vand.u32 %v5642, 4294901760
      %6260 = vmatmul.mubr.f32.gmra.mrb[0].mxu0 %v6259
      %v6261 = vpop.f32.mrb[0].mxu0
      %v6262 = vadd.f32 %v5873, %v6261
      %v6263 = vpop.f32.mrb[0].mxu0
      %6264 = vmatprep.mubr.f32.mxu0 0.0
      %v6265 = vand.u32 %v5645, 4294901760
      %6266 = vmatmul.mubr.f32.gmra.mrb[0].mxu0 %v6265
      %v6267 = vpop.f32.mrb[0].mxu0
      %v6268 = vadd.f32 %v5883, %v6267
      %v6269 = vpop.f32.mrb[0].mxu0
      %6270 = vmatprep.mubr.f32.mxu0 0.0
      %v6271 = vand.u32 %v5648, 4294901760
      %6272 = vmatmul.mubr.f32.gmra.mrb[0].mxu0 %v6271
      %v6273 = vpop.f32.mrb[0].mxu0
      %v6274 = vadd.f32 %v5893, %v6273
      %v6275 = vpop.f32.mrb[0].mxu0
      %6276 = vmatprep.mubr.f32.mxu0 0.0
      %v6277 = vand.u32 %v5651, 4294901760
      %6278 = vmatmul.mubr.f32.gmra.mrb[0].mxu0 %v6277
      %v6279 = vpop.f32.mrb[0].mxu0
      %v6280 = vadd.f32 %v5903, %v6279
      %v6281 = vpop.f32.mrb[0].mxu0
      %6282 = vmatprep.mubr.f32.mxu0 0.0
      %v6283 = vand.u32 %v5654, 4294901760
      %6284 = vmatmul.mubr.f32.gmra.mrb[0].mxu0 %v6283
      %v6285 = vpop.f32.mrb[0].mxu0
      %v6286 = vadd.f32 %v5913, %v6285
      %v6287 = vpop.f32.mrb[0].mxu0
      %6288 = vmatprep.mubr.f32.mxu0 0.0
      %v6289 = vand.u32 %v5657, 4294901760
      %6290 = vmatmul.mubr.f32.gmra.mrb[0].mxu0 %v6289
      %v6291 = vpop.f32.mrb[0].mxu0
      %v6292 = vadd.f32 %v5923, %v6291
      %v6293 = vpop.f32.mrb[0].mxu0
      %6294 = vmatprep.mubr.f32.mxu0 0.0
      %v6295 = vand.u32 %v5660, 4294901760
      %6296 = vmatmul.mubr.f32.gmra.mrb[0].mxu0 %v6295
      %v6297 = vpop.f32.mrb[0].mxu0
      %v6298 = vadd.f32 %v5933, %v6297
      %v6299 = vpop.f32.mrb[0].mxu0
      %6300 = vmatprep.mubr.f32.mxu0 0.0
      %v6301 = vand.u32 %v5663, 4294901760
      %6302 = vmatmul.mubr.f32.gmra.mrb[0].mxu0 %v6301
      %v6303 = vpop.f32.mrb[0].mxu0
      %v6304 = vadd.f32 %v5943, %v6303
      %v6305 = vpop.f32.mrb[0].mxu0
      %6306 = vmatprep.mubr.f32.mxu0 0.0
      %v6307 = vand.u32 %v5666, 4294901760
      %6308 = vmatmul.mubr.f32.gmra.mrb[0].mxu0 %v6307
      %v6309 = vpop.f32.mrb[0].mxu0
      %v6310 = vadd.f32 %v5953, %v6309
      %v6311 = vpop.f32.mrb[0].mxu0
      %6312 = vmatprep.mubr.f32.mxu0 0.0
      %v6313 = vand.u32 %v5669, 4294901760
      %6314 = vmatmul.mubr.f32.gmra.mrb[0].mxu0 %v6313
      %v6315 = vpop.f32.mrb[0].mxu0
      %v6316 = vadd.f32 %v5963, %v6315
      %v6317 = vpop.f32.mrb[0].mxu0
      %6318 = vmatprep.mubr.f32.mxu0 0.0
      %v6319 = vand.u32 %v5672, 4294901760
      %6320 = vmatmul.mubr.f32.gmra.mrb[0].mxu0 %v6319
      %v6321 = vpop.f32.mrb[0].mxu0
      %v6322 = vadd.f32 %v5973, %v6321
      %v6323 = vpop.f32.mrb[0].mxu0
      %6324 = vmatprep.mubr.f32.mxu0 0.0
      %v6325 = vand.u32 %v5675, 4294901760
      %6326 = vmatmul.mubr.f32.gmra.mrb[0].mxu0 %v6325
      %v6327 = vpop.f32.mrb[0].mxu0
      %v6328 = vadd.f32 %v5983, %v6327
      %v6329 = vpop.f32.mrb[0].mxu0
      %6330 = vmatprep.mubr.f32.mxu0 0.0
      %v6331 = vand.u32 %v5678, 4294901760
      %6332 = vmatmul.mubr.f32.gmra.mrb[0].mxu0 %v6331
      %v6333 = vpop.f32.mrb[0].mxu0
      %v6334 = vadd.f32 %v5993, %v6333
      %v6335 = vpop.f32.mrb[0].mxu0
      %6336 = vmatprep.mubr.f32.mxu0 0.0
      %v6337 = vand.u32 %v5681, 4294901760
      %6338 = vmatmul.mubr.f32.gmra.mrb[0].mxu0 %v6337
      %v6339 = vpop.f32.mrb[0].mxu0
      %v6340 = vadd.f32 %v6003, %v6339
      %v6341 = vpop.f32.mrb[0].mxu0
      %6342 = vmatprep.mubr.f32.mxu0 0.0
      %v6343 = vand.u32 %v5684, 4294901760
      %6344 = vmatmul.mubr.f32.gmra.mrb[0].mxu0 %v6343
      %v6345 = vpop.f32.mrb[0].mxu0
      %v6346 = vadd.f32 %v6013, %v6345
      %v6347 = vpop.f32.mrb[0].mxu0
      %6348 = vmatprep.mubr.f32.mxu0 0.0
      %v6349 = vand.u32 %v5687, 4294901760
      %6350 = vmatmul.mubr.f32.gmra.mrb[0].mxu0 %v6349
      %v6351 = vpop.f32.mrb[0].mxu0
      %v6352 = vadd.f32 %v6023, %v6351
      %v6353 = vpop.f32.mrb[0].mxu0
      %6354 = vmatprep.mubr.f32.mxu0 0.0
      %v6355 = vand.u32 %v5690, 4294901760
      %6356 = vmatmul.mubr.f32.gmra.mrb[0].mxu0 %v6355
      %v6357 = vpop.f32.mrb[0].mxu0
      %v6358 = vadd.f32 %v6033, %v6357
      %v6359 = vpop.f32.mrb[0].mxu0
      %6360 = vmatprep.mubr.f32.mxu0 0.0
      %v6361 = vand.u32 %v5693, 4294901760
      %6362 = vmatmul.mubr.f32.gmra.mrb[0].mxu0 %v6361
      %v6363 = vpop.f32.mrb[0].mxu0
      %v6364 = vadd.f32 %v6043, %v6363
      %v6365 = vpop.f32.mrb[0].mxu0
      %6366 = vmatprep.mubr.f32.mxu0 0.0
      %v6367 = vand.u32 %v5696, 4294901760
      %6368 = vmatmul.mubr.f32.gmra.mrb[0].mxu0 %v6367
      %v6369 = vpop.f32.mrb[0].mxu0
      %v6370 = vadd.f32 %v6053, %v6369
      %v6371 = vpop.f32.mrb[0].mxu0
      %6372 = vmatprep.mubr.f32.mxu0 0.0
      %v6373 = vand.u32 %v5699, 4294901760
      %6374 = vmatmul.mubr.f32.gmra.mrb[0].mxu0 %v6373
      %v6375 = vpop.f32.mrb[0].mxu0
      %v6376 = vadd.f32 %v6063, %v6375
      %v6377 = vpop.f32.mrb[0].mxu0
      %6378 = vmatprep.mubr.f32.mxu0 0.0
      %v6379 = vand.u32 %v5702, 4294901760
      %6380 = vmatmul.mubr.f32.gmra.mrb[0].mxu0 %v6379
      %v6381 = vpop.f32.mrb[0].mxu0
      %v6382 = vadd.f32 %v6073, %v6381
      %v6383 = vpop.f32.mrb[0].mxu0
      %6384 = vmatprep.mubr.f32.mxu0 0.0
      %v6385 = vand.u32 %v5705, 4294901760
      %6386 = vmatmul.mubr.f32.gmra.mrb[0].mxu0 %v6385
      %v6387 = vpop.f32.mrb[0].mxu0
      %v6388 = vadd.f32 %v6083, %v6387
      %v6389 = vpop.f32.mrb[0].mxu0
      %6390 = vmatprep.mubr.f32.mxu0 0.0
      %v6391 = vand.u32 %v5708, 4294901760
      %6392 = vmatmul.mubr.f32.gmra.mrb[0].mxu0 %v6391
      %v6393 = vpop.f32.mrb[0].mxu0
      %v6394 = vadd.f32 %v6093, %v6393
      %v6395 = vpop.f32.mrb[0].mxu0
      %6396 = vmatprep.mubr.f32.mxu0 0.0
      %v6397 = vand.u32 %v5711, 4294901760
      %6398 = vmatmul.mubr.f32.gmra.mrb[0].mxu0 %v6397
      %v6399 = vpop.f32.mrb[0].mxu0
      %v6400 = vadd.f32 %v6103, %v6399
      %v6401 = vpop.f32.mrb[0].mxu0
      %6402 = vdwg.mxu0
      %6403 = vmatprep.subr.mxu0 0.0
      %v6404 = vand.u32 %v5608, 4294901760
      %v6405 = vsub.f32 %v5608, %v6404
      %6406 = vmatpush1.msra.mxu0 %v6405
      %6407 = vmatprep.subr.mxu0 0.0
      %v6408 = vand.u32 %v5609, 4294901760
      %v6409 = vsub.f32 %v5609, %v6408
      %6410 = vmatpush1.msra.mxu0 %v6409
      %6411 = vmatprep.subr.mxu0 0.0
      %v6412 = vand.u32 %v5610, 4294901760
      %v6413 = vsub.f32 %v5610, %v6412
      %6414 = vmatpush1.msra.mxu0 %v6413
      %6415 = vmatprep.subr.mxu0 0.0
      %v6416 = vand.u32 %v5611, 4294901760
      %v6417 = vsub.f32 %v5611, %v6416
      %6418 = vmatpush1.msra.mxu0 %v6417
      %6419 = vmatprep.subr.mxu0 0.0
      %v6420 = vand.u32 %v5612, 4294901760
      %v6421 = vsub.f32 %v5612, %v6420
      %6422 = vmatpush1.msra.mxu0 %v6421
      %6423 = vmatprep.subr.mxu0 0.0
      %v6424 = vand.u32 %v5613, 4294901760
      %v6425 = vsub.f32 %v5613, %v6424
      %6426 = vmatpush1.msra.mxu0 %v6425
      %6427 = vmatprep.subr.mxu0 0.0
      %v6428 = vand.u32 %v5614, 4294901760
      %v6429 = vsub.f32 %v5614, %v6428
      %6430 = vmatpush1.msra.mxu0 %v6429
      %6431 = vmatprep.subr.mxu0 0.0
      %v6432 = vand.u32 %v5615, 4294901760
      %v6433 = vsub.f32 %v5615, %v6432
      %6434 = vmatpush1.msra.mxu0 %v6433
      %6435 = vmatprep.subr.mxu0 0.0
      %6436 = vmatpush1.msra.mxu0 0.0
      %6437 = vmatprep.subr.mxu0 0.0
      %6438 = vmatpush1.msra.mxu0 0.0
      %6439 = vmatprep.subr.mxu0 0.0
      %6440 = vmatpush1.msra.mxu0 0.0
      %6441 = vmatprep.subr.mxu0 0.0
      %6442 = vmatpush1.msra.mxu0 0.0
      %6443 = vmatprep.subr.mxu0 0.0
      %6444 = vmatpush1.msra.mxu0 0.0
      %6445 = vmatprep.subr.mxu0 0.0
      %6446 = vmatpush1.msra.mxu0 0.0
      %6447 = vmatprep.subr.mxu0 0.0
      %6448 = vmatpush1.msra.mxu0 0.0
      %6449 = vmatprep.subr.mxu0 0.0
      %6450 = vmatpush1.msra.mxu0 0.0
      %6451 = vmatprep.subr.mxu0 0.0
      %6452 = vmatpush1.msra.mxu0 0.0
      %6453 = vmatprep.subr.mxu0 0.0
      %6454 = vmatpush1.msra.mxu0 0.0
      %6455 = vmatprep.subr.mxu0 0.0
      %6456 = vmatpush1.msra.mxu0 0.0
      %6457 = vmatprep.subr.mxu0 0.0
      %6458 = vmatpush1.msra.mxu0 0.0
      %6459 = vmatprep.subr.mxu0 0.0
      %6460 = vmatpush1.msra.mxu0 0.0
      %6461 = vmatprep.subr.mxu0 0.0
      %6462 = vmatpush1.msra.mxu0 0.0
      %6463 = vmatprep.subr.mxu0 0.0
      %6464 = vmatpush1.msra.mxu0 0.0
      %6465 = vmatprep.subr.mxu0 0.0
      %6466 = vmatpush1.msra.mxu0 0.0
      %6467 = vmatprep.subr.mxu0 0.0
      %6468 = vmatpush1.msra.mxu0 0.0
      %6469 = vmatprep.subr.mxu0 0.0
      %6470 = vmatpush1.msra.mxu0 0.0
      %6471 = vmatprep.subr.mxu0 0.0
      %6472 = vmatpush1.msra.mxu0 0.0
      %6473 = vmatprep.subr.mxu0 0.0
      %6474 = vmatpush1.msra.mxu0 0.0
      %6475 = vmatprep.subr.mxu0 0.0
      %6476 = vmatpush1.msra.mxu0 0.0
      %6477 = vmatprep.subr.mxu0 0.0
      %6478 = vmatpush1.msra.mxu0 0.0
      %6479 = vmatprep.subr.mxu0 0.0
      %6480 = vmatpush1.msra.mxu0 0.0
      %6481 = vmatprep.subr.mxu0 0.0
      %6482 = vmatpush1.msra.mxu0 0.0
      %6483 = vmatprep.mubr.f32.mxu0 0.0
      %v6484 = vand.u32 %v5618, 4294901760
      %v6485 = vsub.f32 %v5618, %v6484
      %6486 = vmatmul.mubr.f32.gmra.mrb[0].mxu0 %v6485
      %v6487 = vpop.f32.mrb[0].mxu0
      %v6488 = vadd.f32 %v6214, %v6487
      %v6489 = vpop.f32.mrb[0].mxu0
      %6490 = vmatprep.mubr.f32.mxu0 0.0
      %v6491 = vand.u32 %v5621, 4294901760
      %v6492 = vsub.f32 %v5621, %v6491
      %6493 = vmatmul.mubr.f32.gmra.mrb[0].mxu0 %v6492
      %v6494 = vpop.f32.mrb[0].mxu0
      %v6495 = vadd.f32 %v6220, %v6494
      %v6496 = vpop.f32.mrb[0].mxu0
      %6497 = vmatprep.mubr.f32.mxu0 0.0
      %v6498 = vand.u32 %v5624, 4294901760
      %v6499 = vsub.f32 %v5624, %v6498
      %6500 = vmatmul.mubr.f32.gmra.mrb[0].mxu0 %v6499
      %v6501 = vpop.f32.mrb[0].mxu0
      %v6502 = vadd.f32 %v6226, %v6501
      %v6503 = vpop.f32.mrb[0].mxu0
      %6504 = vmatprep.mubr.f32.mxu0 0.0
      %v6505 = vand.u32 %v5627, 4294901760
      %v6506 = vsub.f32 %v5627, %v6505
      %6507 = vmatmul.mubr.f32.gmra.mrb[0].mxu0 %v6506
      %v6508 = vpop.f32.mrb[0].mxu0
      %v6509 = vadd.f32 %v6232, %v6508
      %v6510 = vpop.f32.mrb[0].mxu0
      %6511 = vmatprep.mubr.f32.mxu0 0.0
      %v6512 = vand.u32 %v5630, 4294901760
      %v6513 = vsub.f32 %v5630, %v6512
      %6514 = vmatmul.mubr.f32.gmra.mrb[0].mxu0 %v6513
      %v6515 = vpop.f32.mrb[0].mxu0
      %v6516 = vadd.f32 %v6238, %v6515
      %v6517 = vpop.f32.mrb[0].mxu0
      %6518 = vmatprep.mubr.f32.mxu0 0.0
      %v6519 = vand.u32 %v5633, 4294901760
      %v6520 = vsub.f32 %v5633, %v6519
      %6521 = vmatmul.mubr.f32.gmra.mrb[0].mxu0 %v6520
      %v6522 = vpop.f32.mrb[0].mxu0
      %v6523 = vadd.f32 %v6244, %v6522
      %v6524 = vpop.f32.mrb[0].mxu0
      %6525 = vmatprep.mubr.f32.mxu0 0.0
      %v6526 = vand.u32 %v5636, 4294901760
      %v6527 = vsub.f32 %v5636, %v6526
      %6528 = vmatmul.mubr.f32.gmra.mrb[0].mxu0 %v6527
      %v6529 = vpop.f32.mrb[0].mxu0
      %v6530 = vadd.f32 %v6250, %v6529
      %v6531 = vpop.f32.mrb[0].mxu0
      %6532 = vmatprep.mubr.f32.mxu0 0.0
      %v6533 = vand.u32 %v5639, 4294901760
      %v6534 = vsub.f32 %v5639, %v6533
      %6535 = vmatmul.mubr.f32.gmra.mrb[0].mxu0 %v6534
      %v6536 = vpop.f32.mrb[0].mxu0
      %v6537 = vadd.f32 %v6256, %v6536
      %v6538 = vpop.f32.mrb[0].mxu0
      %6539 = vmatprep.mubr.f32.mxu0 0.0
      %v6540 = vand.u32 %v5642, 4294901760
      %v6541 = vsub.f32 %v5642, %v6540
      %6542 = vmatmul.mubr.f32.gmra.mrb[0].mxu0 %v6541
      %v6543 = vpop.f32.mrb[0].mxu0
      %v6544 = vadd.f32 %v6262, %v6543
      %v6545 = vpop.f32.mrb[0].mxu0
      %6546 = vmatprep.mubr.f32.mxu0 0.0
      %v6547 = vand.u32 %v5645, 4294901760
      %v6548 = vsub.f32 %v5645, %v6547
      %6549 = vmatmul.mubr.f32.gmra.mrb[0].mxu0 %v6548
      %v6550 = vpop.f32.mrb[0].mxu0
      %v6551 = vadd.f32 %v6268, %v6550
      %v6552 = vpop.f32.mrb[0].mxu0
      %6553 = vmatprep.mubr.f32.mxu0 0.0
      %v6554 = vand.u32 %v5648, 4294901760
      %v6555 = vsub.f32 %v5648, %v6554
      %6556 = vmatmul.mubr.f32.gmra.mrb[0].mxu0 %v6555
      %v6557 = vpop.f32.mrb[0].mxu0
      %v6558 = vadd.f32 %v6274, %v6557
      %v6559 = vpop.f32.mrb[0].mxu0
      %6560 = vmatprep.mubr.f32.mxu0 0.0
      %v6561 = vand.u32 %v5651, 4294901760
      %v6562 = vsub.f32 %v5651, %v6561
      %6563 = vmatmul.mubr.f32.gmra.mrb[0].mxu0 %v6562
      %v6564 = vpop.f32.mrb[0].mxu0
      %v6565 = vadd.f32 %v6280, %v6564
      %v6566 = vpop.f32.mrb[0].mxu0
      %6567 = vmatprep.mubr.f32.mxu0 0.0
      %v6568 = vand.u32 %v5654, 4294901760
      %v6569 = vsub.f32 %v5654, %v6568
      %6570 = vmatmul.mubr.f32.gmra.mrb[0].mxu0 %v6569
      %v6571 = vpop.f32.mrb[0].mxu0
      %v6572 = vadd.f32 %v6286, %v6571
      %v6573 = vpop.f32.mrb[0].mxu0
      %6574 = vmatprep.mubr.f32.mxu0 0.0
      %v6575 = vand.u32 %v5657, 4294901760
      %v6576 = vsub.f32 %v5657, %v6575
      %6577 = vmatmul.mubr.f32.gmra.mrb[0].mxu0 %v6576
      %v6578 = vpop.f32.mrb[0].mxu0
      %v6579 = vadd.f32 %v6292, %v6578
      %v6580 = vpop.f32.mrb[0].mxu0
      %6581 = vmatprep.mubr.f32.mxu0 0.0
      %v6582 = vand.u32 %v5660, 4294901760
      %v6583 = vsub.f32 %v5660, %v6582
      %6584 = vmatmul.mubr.f32.gmra.mrb[0].mxu0 %v6583
      %v6585 = vpop.f32.mrb[0].mxu0
      %v6586 = vadd.f32 %v6298, %v6585
      %v6587 = vpop.f32.mrb[0].mxu0
      %6588 = vmatprep.mubr.f32.mxu0 0.0
      %v6589 = vand.u32 %v5663, 4294901760
      %v6590 = vsub.f32 %v5663, %v6589
      %6591 = vmatmul.mubr.f32.gmra.mrb[0].mxu0 %v6590
      %v6592 = vpop.f32.mrb[0].mxu0
      %v6593 = vadd.f32 %v6304, %v6592
      %v6594 = vpop.f32.mrb[0].mxu0
      %6595 = vmatprep.mubr.f32.mxu0 0.0
      %v6596 = vand.u32 %v5666, 4294901760
      %v6597 = vsub.f32 %v5666, %v6596
      %6598 = vmatmul.mubr.f32.gmra.mrb[0].mxu0 %v6597
      %v6599 = vpop.f32.mrb[0].mxu0
      %v6600 = vadd.f32 %v6310, %v6599
      %v6601 = vpop.f32.mrb[0].mxu0
      %6602 = vmatprep.mubr.f32.mxu0 0.0
      %v6603 = vand.u32 %v5669, 4294901760
      %v6604 = vsub.f32 %v5669, %v6603
      %6605 = vmatmul.mubr.f32.gmra.mrb[0].mxu0 %v6604
      %v6606 = vpop.f32.mrb[0].mxu0
      %v6607 = vadd.f32 %v6316, %v6606
      %v6608 = vpop.f32.mrb[0].mxu0
      %6609 = vmatprep.mubr.f32.mxu0 0.0
      %v6610 = vand.u32 %v5672, 4294901760
      %v6611 = vsub.f32 %v5672, %v6610
      %6612 = vmatmul.mubr.f32.gmra.mrb[0].mxu0 %v6611
      %v6613 = vpop.f32.mrb[0].mxu0
      %v6614 = vadd.f32 %v6322, %v6613
      %v6615 = vpop.f32.mrb[0].mxu0
      %6616 = vmatprep.mubr.f32.mxu0 0.0
      %v6617 = vand.u32 %v5675, 4294901760
      %v6618 = vsub.f32 %v5675, %v6617
      %6619 = vmatmul.mubr.f32.gmra.mrb[0].mxu0 %v6618
      %v6620 = vpop.f32.mrb[0].mxu0
      %v6621 = vadd.f32 %v6328, %v6620
      %v6622 = vpop.f32.mrb[0].mxu0
      %6623 = vmatprep.mubr.f32.mxu0 0.0
      %v6624 = vand.u32 %v5678, 4294901760
      %v6625 = vsub.f32 %v5678, %v6624
      %6626 = vmatmul.mubr.f32.gmra.mrb[0].mxu0 %v6625
      %v6627 = vpop.f32.mrb[0].mxu0
      %v6628 = vadd.f32 %v6334, %v6627
      %v6629 = vpop.f32.mrb[0].mxu0
      %6630 = vmatprep.mubr.f32.mxu0 0.0
      %v6631 = vand.u32 %v5681, 4294901760
      %v6632 = vsub.f32 %v5681, %v6631
      %6633 = vmatmul.mubr.f32.gmra.mrb[0].mxu0 %v6632
      %v6634 = vpop.f32.mrb[0].mxu0
      %v6635 = vadd.f32 %v6340, %v6634
      %v6636 = vpop.f32.mrb[0].mxu0
      %6637 = vmatprep.mubr.f32.mxu0 0.0
      %v6638 = vand.u32 %v5684, 4294901760
      %v6639 = vsub.f32 %v5684, %v6638
      %6640 = vmatmul.mubr.f32.gmra.mrb[0].mxu0 %v6639
      %v6641 = vpop.f32.mrb[0].mxu0
      %v6642 = vadd.f32 %v6346, %v6641
      %v6643 = vpop.f32.mrb[0].mxu0
      %6644 = vmatprep.mubr.f32.mxu0 0.0
      %v6645 = vand.u32 %v5687, 4294901760
      %v6646 = vsub.f32 %v5687, %v6645
      %6647 = vmatmul.mubr.f32.gmra.mrb[0].mxu0 %v6646
      %v6648 = vpop.f32.mrb[0].mxu0
      %v6649 = vadd.f32 %v6352, %v6648
      %v6650 = vpop.f32.mrb[0].mxu0
      %6651 = vmatprep.mubr.f32.mxu0 0.0
      %v6652 = vand.u32 %v5690, 4294901760
      %v6653 = vsub.f32 %v5690, %v6652
      %6654 = vmatmul.mubr.f32.gmra.mrb[0].mxu0 %v6653
      %v6655 = vpop.f32.mrb[0].mxu0
      %v6656 = vadd.f32 %v6358, %v6655
      %v6657 = vpop.f32.mrb[0].mxu0
      %6658 = vmatprep.mubr.f32.mxu0 0.0
      %v6659 = vand.u32 %v5693, 4294901760
      %v6660 = vsub.f32 %v5693, %v6659
      %6661 = vmatmul.mubr.f32.gmra.mrb[0].mxu0 %v6660
      %v6662 = vpop.f32.mrb[0].mxu0
      %v6663 = vadd.f32 %v6364, %v6662
      %v6664 = vpop.f32.mrb[0].mxu0
      %6665 = vmatprep.mubr.f32.mxu0 0.0
      %v6666 = vand.u32 %v5696, 4294901760
      %v6667 = vsub.f32 %v5696, %v6666
      %6668 = vmatmul.mubr.f32.gmra.mrb[0].mxu0 %v6667
      %v6669 = vpop.f32.mrb[0].mxu0
      %v6670 = vadd.f32 %v6370, %v6669
      %v6671 = vpop.f32.mrb[0].mxu0
      %6672 = vmatprep.mubr.f32.mxu0 0.0
      %v6673 = vand.u32 %v5699, 4294901760
      %v6674 = vsub.f32 %v5699, %v6673
      %6675 = vmatmul.mubr.f32.gmra.mrb[0].mxu0 %v6674
      %v6676 = vpop.f32.mrb[0].mxu0
      %v6677 = vadd.f32 %v6376, %v6676
      %v6678 = vpop.f32.mrb[0].mxu0
      %6679 = vmatprep.mubr.f32.mxu0 0.0
      %v6680 = vand.u32 %v5702, 4294901760
      %v6681 = vsub.f32 %v5702, %v6680
      %6682 = vmatmul.mubr.f32.gmra.mrb[0].mxu0 %v6681
      %v6683 = vpop.f32.mrb[0].mxu0
      %v6684 = vadd.f32 %v6382, %v6683
      %v6685 = vpop.f32.mrb[0].mxu0
      %6686 = vmatprep.mubr.f32.mxu0 0.0
      %v6687 = vand.u32 %v5705, 4294901760
      %v6688 = vsub.f32 %v5705, %v6687
      %6689 = vmatmul.mubr.f32.gmra.mrb[0].mxu0 %v6688
      %v6690 = vpop.f32.mrb[0].mxu0
      %v6691 = vadd.f32 %v6388, %v6690
      %v6692 = vpop.f32.mrb[0].mxu0
      %6693 = vmatprep.mubr.f32.mxu0 0.0
      %v6694 = vand.u32 %v5708, 4294901760
      %v6695 = vsub.f32 %v5708, %v6694
      %6696 = vmatmul.mubr.f32.gmra.mrb[0].mxu0 %v6695
      %v6697 = vpop.f32.mrb[0].mxu0
      %v6698 = vadd.f32 %v6394, %v6697
      %v6699 = vpop.f32.mrb[0].mxu0
      %6700 = vmatprep.mubr.f32.mxu0 0.0
      %v6701 = vand.u32 %v5711, 4294901760
      %v6702 = vsub.f32 %v5711, %v6701
      %6703 = vmatmul.mubr.f32.gmra.mrb[0].mxu0 %v6702
      %v6704 = vpop.f32.mrb[0].mxu0
      %v6705 = vadd.f32 %v6400, %v6704
      %v6706 = vpop.f32.mrb[0].mxu0
      %6707 = vdwg.mxu0
      %6708 = vmatprep.subr.mxu0 0.0
      %v6709 = vand.u32 %v5608, 4294901760
      %6710 = vmatpush1.msra.mxu0 %v6709
      %6711 = vmatprep.subr.mxu0 0.0
      %v6712 = vand.u32 %v5609, 4294901760
      %6713 = vmatpush1.msra.mxu0 %v6712
      %6714 = vmatprep.subr.mxu0 0.0
      %v6715 = vand.u32 %v5610, 4294901760
      %6716 = vmatpush1.msra.mxu0 %v6715
      %6717 = vmatprep.subr.mxu0 0.0
      %v6718 = vand.u32 %v5611, 4294901760
      %6719 = vmatpush1.msra.mxu0 %v6718
      %6720 = vmatprep.subr.mxu0 0.0
      %v6721 = vand.u32 %v5612, 4294901760
      %6722 = vmatpush1.msra.mxu0 %v6721
      %6723 = vmatprep.subr.mxu0 0.0
      %v6724 = vand.u32 %v5613, 4294901760
      %6725 = vmatpush1.msra.mxu0 %v6724
      %6726 = vmatprep.subr.mxu0 0.0
      %v6727 = vand.u32 %v5614, 4294901760
      %6728 = vmatpush1.msra.mxu0 %v6727
      %6729 = vmatprep.subr.mxu0 0.0
      %v6730 = vand.u32 %v5615, 4294901760
      %6731 = vmatpush1.msra.mxu0 %v6730
      %6732 = vmatprep.subr.mxu0 0.0
      %6733 = vmatpush1.msra.mxu0 0.0
      %6734 = vmatprep.subr.mxu0 0.0
      %6735 = vmatpush1.msra.mxu0 0.0
      %6736 = vmatprep.subr.mxu0 0.0
      %6737 = vmatpush1.msra.mxu0 0.0
      %6738 = vmatprep.subr.mxu0 0.0
      %6739 = vmatpush1.msra.mxu0 0.0
      %6740 = vmatprep.subr.mxu0 0.0
      %6741 = vmatpush1.msra.mxu0 0.0
      %6742 = vmatprep.subr.mxu0 0.0
      %6743 = vmatpush1.msra.mxu0 0.0
      %6744 = vmatprep.subr.mxu0 0.0
      %6745 = vmatpush1.msra.mxu0 0.0
      %6746 = vmatprep.subr.mxu0 0.0
      %6747 = vmatpush1.msra.mxu0 0.0
      %6748 = vmatprep.subr.mxu0 0.0
      %6749 = vmatpush1.msra.mxu0 0.0
      %6750 = vmatprep.subr.mxu0 0.0
      %6751 = vmatpush1.msra.mxu0 0.0
      %6752 = vmatprep.subr.mxu0 0.0
      %6753 = vmatpush1.msra.mxu0 0.0
      %6754 = vmatprep.subr.mxu0 0.0
      %6755 = vmatpush1.msra.mxu0 0.0
      %6756 = vmatprep.subr.mxu0 0.0
      %6757 = vmatpush1.msra.mxu0 0.0
      %6758 = vmatprep.subr.mxu0 0.0
      %6759 = vmatpush1.msra.mxu0 0.0
      %6760 = vmatprep.subr.mxu0 0.0
      %6761 = vmatpush1.msra.mxu0 0.0
      %6762 = vmatprep.subr.mxu0 0.0
      %6763 = vmatpush1.msra.mxu0 0.0
      %6764 = vmatprep.subr.mxu0 0.0
      %6765 = vmatpush1.msra.mxu0 0.0
      %6766 = vmatprep.subr.mxu0 0.0
      %6767 = vmatpush1.msra.mxu0 0.0
      %6768 = vmatprep.subr.mxu0 0.0
      %6769 = vmatpush1.msra.mxu0 0.0
      %6770 = vmatprep.subr.mxu0 0.0
      %6771 = vmatpush1.msra.mxu0 0.0
      %6772 = vmatprep.subr.mxu0 0.0
      %6773 = vmatpush1.msra.mxu0 0.0
      %6774 = vmatprep.subr.mxu0 0.0
      %6775 = vmatpush1.msra.mxu0 0.0
      %6776 = vmatprep.subr.mxu0 0.0
      %6777 = vmatpush1.msra.mxu0 0.0
      %6778 = vmatprep.subr.mxu0 0.0
      %6779 = vmatpush1.msra.mxu0 0.0
      %6780 = vmatprep.mubr.f32.mxu0 0.0
      %v6781 = vand.u32 %v5618, 4294901760
      %v6782 = vsub.f32 %v5618, %v6781
      %v6783 = vand.u32 %v6782, 4294901760
      %6784 = vmatmul.mubr.f32.gmra.mrb[0].mxu0 %v6783
      %v6785 = vpop.f32.mrb[0].mxu0
      %v6786 = vadd.f32 %v6488, %v6785
      %v6787 = vpop.f32.mrb[0].mxu0
      %6788 = vmatprep.mubr.f32.mxu0 0.0
      %v6789 = vand.u32 %v5621, 4294901760
      %v6790 = vsub.f32 %v5621, %v6789
      %v6791 = vand.u32 %v6790, 4294901760
      %6792 = vmatmul.mubr.f32.gmra.mrb[0].mxu0 %v6791
      %v6793 = vpop.f32.mrb[0].mxu0
      %v6794 = vadd.f32 %v6495, %v6793
      %v6795 = vpop.f32.mrb[0].mxu0
      %6796 = vmatprep.mubr.f32.mxu0 0.0
      %v6797 = vand.u32 %v5624, 4294901760
      %v6798 = vsub.f32 %v5624, %v6797
      %v6799 = vand.u32 %v6798, 4294901760
      %6800 = vmatmul.mubr.f32.gmra.mrb[0].mxu0 %v6799
      %v6801 = vpop.f32.mrb[0].mxu0
      %v6802 = vadd.f32 %v6502, %v6801
      %v6803 = vpop.f32.mrb[0].mxu0
      %6804 = vmatprep.mubr.f32.mxu0 0.0
      %v6805 = vand.u32 %v5627, 4294901760
      %v6806 = vsub.f32 %v5627, %v6805
      %v6807 = vand.u32 %v6806, 4294901760
      %6808 = vmatmul.mubr.f32.gmra.mrb[0].mxu0 %v6807
      %v6809 = vpop.f32.mrb[0].mxu0
      %v6810 = vadd.f32 %v6509, %v6809
      %v6811 = vpop.f32.mrb[0].mxu0
      %6812 = vmatprep.mubr.f32.mxu0 0.0
      %v6813 = vand.u32 %v5630, 4294901760
      %v6814 = vsub.f32 %v5630, %v6813
      %v6815 = vand.u32 %v6814, 4294901760
      %6816 = vmatmul.mubr.f32.gmra.mrb[0].mxu0 %v6815
      %v6817 = vpop.f32.mrb[0].mxu0
      %v6818 = vadd.f32 %v6516, %v6817
      %v6819 = vpop.f32.mrb[0].mxu0
      %6820 = vmatprep.mubr.f32.mxu0 0.0
      %v6821 = vand.u32 %v5633, 4294901760
      %v6822 = vsub.f32 %v5633, %v6821
      %v6823 = vand.u32 %v6822, 4294901760
      %6824 = vmatmul.mubr.f32.gmra.mrb[0].mxu0 %v6823
      %v6825 = vpop.f32.mrb[0].mxu0
      %v6826 = vadd.f32 %v6523, %v6825
      %v6827 = vpop.f32.mrb[0].mxu0
      %6828 = vmatprep.mubr.f32.mxu0 0.0
      %v6829 = vand.u32 %v5636, 4294901760
      %v6830 = vsub.f32 %v5636, %v6829
      %v6831 = vand.u32 %v6830, 4294901760
      %6832 = vmatmul.mubr.f32.gmra.mrb[0].mxu0 %v6831
      %v6833 = vpop.f32.mrb[0].mxu0
      %v6834 = vadd.f32 %v6530, %v6833
      %v6835 = vpop.f32.mrb[0].mxu0
      %6836 = vmatprep.mubr.f32.mxu0 0.0
      %v6837 = vand.u32 %v5639, 4294901760
      %v6838 = vsub.f32 %v5639, %v6837
      %v6839 = vand.u32 %v6838, 4294901760
      %6840 = vmatmul.mubr.f32.gmra.mrb[0].mxu0 %v6839
      %v6841 = vpop.f32.mrb[0].mxu0
      %v6842 = vadd.f32 %v6537, %v6841
      %v6843 = vpop.f32.mrb[0].mxu0
      %6844 = vmatprep.mubr.f32.mxu0 0.0
      %v6845 = vand.u32 %v5642, 4294901760
      %v6846 = vsub.f32 %v5642, %v6845
      %v6847 = vand.u32 %v6846, 4294901760
      %6848 = vmatmul.mubr.f32.gmra.mrb[0].mxu0 %v6847
      %v6849 = vpop.f32.mrb[0].mxu0
      %v6850 = vadd.f32 %v6544, %v6849
      %v6851 = vpop.f32.mrb[0].mxu0
      %6852 = vmatprep.mubr.f32.mxu0 0.0
      %v6853 = vand.u32 %v5645, 4294901760
      %v6854 = vsub.f32 %v5645, %v6853
      %v6855 = vand.u32 %v6854, 4294901760
      %6856 = vmatmul.mubr.f32.gmra.mrb[0].mxu0 %v6855
      %v6857 = vpop.f32.mrb[0].mxu0
      %v6858 = vadd.f32 %v6551, %v6857
      %v6859 = vpop.f32.mrb[0].mxu0
      %6860 = vmatprep.mubr.f32.mxu0 0.0
      %v6861 = vand.u32 %v5648, 4294901760
      %v6862 = vsub.f32 %v5648, %v6861
      %v6863 = vand.u32 %v6862, 4294901760
      %6864 = vmatmul.mubr.f32.gmra.mrb[0].mxu0 %v6863
      %v6865 = vpop.f32.mrb[0].mxu0
      %v6866 = vadd.f32 %v6558, %v6865
      %v6867 = vpop.f32.mrb[0].mxu0
      %6868 = vmatprep.mubr.f32.mxu0 0.0
      %v6869 = vand.u32 %v5651, 4294901760
      %v6870 = vsub.f32 %v5651, %v6869
      %v6871 = vand.u32 %v6870, 4294901760
      %6872 = vmatmul.mubr.f32.gmra.mrb[0].mxu0 %v6871
      %v6873 = vpop.f32.mrb[0].mxu0
      %v6874 = vadd.f32 %v6565, %v6873
      %v6875 = vpop.f32.mrb[0].mxu0
      %6876 = vmatprep.mubr.f32.mxu0 0.0
      %v6877 = vand.u32 %v5654, 4294901760
      %v6878 = vsub.f32 %v5654, %v6877
      %v6879 = vand.u32 %v6878, 4294901760
      %6880 = vmatmul.mubr.f32.gmra.mrb[0].mxu0 %v6879
      %v6881 = vpop.f32.mrb[0].mxu0
      %v6882 = vadd.f32 %v6572, %v6881
      %v6883 = vpop.f32.mrb[0].mxu0
      %6884 = vmatprep.mubr.f32.mxu0 0.0
      %v6885 = vand.u32 %v5657, 4294901760
      %v6886 = vsub.f32 %v5657, %v6885
      %v6887 = vand.u32 %v6886, 4294901760
      %6888 = vmatmul.mubr.f32.gmra.mrb[0].mxu0 %v6887
      %v6889 = vpop.f32.mrb[0].mxu0
      %v6890 = vadd.f32 %v6579, %v6889
      %v6891 = vpop.f32.mrb[0].mxu0
      %6892 = vmatprep.mubr.f32.mxu0 0.0
      %v6893 = vand.u32 %v5660, 4294901760
      %v6894 = vsub.f32 %v5660, %v6893
      %v6895 = vand.u32 %v6894, 4294901760
      %6896 = vmatmul.mubr.f32.gmra.mrb[0].mxu0 %v6895
      %v6897 = vpop.f32.mrb[0].mxu0
      %v6898 = vadd.f32 %v6586, %v6897
      %v6899 = vpop.f32.mrb[0].mxu0
      %6900 = vmatprep.mubr.f32.mxu0 0.0
      %v6901 = vand.u32 %v5663, 4294901760
      %v6902 = vsub.f32 %v5663, %v6901
      %v6903 = vand.u32 %v6902, 4294901760
      %6904 = vmatmul.mubr.f32.gmra.mrb[0].mxu0 %v6903
      %v6905 = vpop.f32.mrb[0].mxu0
      %v6906 = vadd.f32 %v6593, %v6905
      %v6907 = vpop.f32.mrb[0].mxu0
      %6908 = vmatprep.mubr.f32.mxu0 0.0
      %v6909 = vand.u32 %v5666, 4294901760
      %v6910 = vsub.f32 %v5666, %v6909
      %v6911 = vand.u32 %v6910, 4294901760
      %6912 = vmatmul.mubr.f32.gmra.mrb[0].mxu0 %v6911
      %v6913 = vpop.f32.mrb[0].mxu0
      %v6914 = vadd.f32 %v6600, %v6913
      %v6915 = vpop.f32.mrb[0].mxu0
      %6916 = vmatprep.mubr.f32.mxu0 0.0
      %v6917 = vand.u32 %v5669, 4294901760
      %v6918 = vsub.f32 %v5669, %v6917
      %v6919 = vand.u32 %v6918, 4294901760
      %6920 = vmatmul.mubr.f32.gmra.mrb[0].mxu0 %v6919
      %v6921 = vpop.f32.mrb[0].mxu0
      %v6922 = vadd.f32 %v6607, %v6921
      %v6923 = vpop.f32.mrb[0].mxu0
      %6924 = vmatprep.mubr.f32.mxu0 0.0
      %v6925 = vand.u32 %v5672, 4294901760
      %v6926 = vsub.f32 %v5672, %v6925
      %v6927 = vand.u32 %v6926, 4294901760
      %6928 = vmatmul.mubr.f32.gmra.mrb[0].mxu0 %v6927
      %v6929 = vpop.f32.mrb[0].mxu0
      %v6930 = vadd.f32 %v6614, %v6929
      %v6931 = vpop.f32.mrb[0].mxu0
      %6932 = vmatprep.mubr.f32.mxu0 0.0
      %v6933 = vand.u32 %v5675, 4294901760
      %v6934 = vsub.f32 %v5675, %v6933
      %v6935 = vand.u32 %v6934, 4294901760
      %6936 = vmatmul.mubr.f32.gmra.mrb[0].mxu0 %v6935
      %v6937 = vpop.f32.mrb[0].mxu0
      %v6938 = vadd.f32 %v6621, %v6937
      %v6939 = vpop.f32.mrb[0].mxu0
      %6940 = vmatprep.mubr.f32.mxu0 0.0
      %v6941 = vand.u32 %v5678, 4294901760
      %v6942 = vsub.f32 %v5678, %v6941
      %v6943 = vand.u32 %v6942, 4294901760
      %6944 = vmatmul.mubr.f32.gmra.mrb[0].mxu0 %v6943
      %v6945 = vpop.f32.mrb[0].mxu0
      %v6946 = vadd.f32 %v6628, %v6945
      %v6947 = vpop.f32.mrb[0].mxu0
      %6948 = vmatprep.mubr.f32.mxu0 0.0
      %v6949 = vand.u32 %v5681, 4294901760
      %v6950 = vsub.f32 %v5681, %v6949
      %v6951 = vand.u32 %v6950, 4294901760
      %6952 = vmatmul.mubr.f32.gmra.mrb[0].mxu0 %v6951
      %v6953 = vpop.f32.mrb[0].mxu0
      %v6954 = vadd.f32 %v6635, %v6953
      %v6955 = vpop.f32.mrb[0].mxu0
      %6956 = vmatprep.mubr.f32.mxu0 0.0
      %v6957 = vand.u32 %v5684, 4294901760
      %v6958 = vsub.f32 %v5684, %v6957
      %v6959 = vand.u32 %v6958, 4294901760
      %6960 = vmatmul.mubr.f32.gmra.mrb[0].mxu0 %v6959
      %v6961 = vpop.f32.mrb[0].mxu0
      %v6962 = vadd.f32 %v6642, %v6961
      %v6963 = vpop.f32.mrb[0].mxu0
      %6964 = vmatprep.mubr.f32.mxu0 0.0
      %v6965 = vand.u32 %v5687, 4294901760
      %v6966 = vsub.f32 %v5687, %v6965
      %v6967 = vand.u32 %v6966, 4294901760
      %6968 = vmatmul.mubr.f32.gmra.mrb[0].mxu0 %v6967
      %v6969 = vpop.f32.mrb[0].mxu0
      %v6970 = vadd.f32 %v6649, %v6969
      %v6971 = vpop.f32.mrb[0].mxu0
      %6972 = vmatprep.mubr.f32.mxu0 0.0
      %v6973 = vand.u32 %v5690, 4294901760
      %v6974 = vsub.f32 %v5690, %v6973
      %v6975 = vand.u32 %v6974, 4294901760
      %6976 = vmatmul.mubr.f32.gmra.mrb[0].mxu0 %v6975
      %v6977 = vpop.f32.mrb[0].mxu0
      %v6978 = vadd.f32 %v6656, %v6977
      %v6979 = vpop.f32.mrb[0].mxu0
      %6980 = vmatprep.mubr.f32.mxu0 0.0
      %v6981 = vand.u32 %v5693, 4294901760
      %v6982 = vsub.f32 %v5693, %v6981
      %v6983 = vand.u32 %v6982, 4294901760
      %6984 = vmatmul.mubr.f32.gmra.mrb[0].mxu0 %v6983
      %v6985 = vpop.f32.mrb[0].mxu0
      %v6986 = vadd.f32 %v6663, %v6985
      %v6987 = vpop.f32.mrb[0].mxu0
      %6988 = vmatprep.mubr.f32.mxu0 0.0
      %v6989 = vand.u32 %v5696, 4294901760
      %v6990 = vsub.f32 %v5696, %v6989
      %v6991 = vand.u32 %v6990, 4294901760
      %6992 = vmatmul.mubr.f32.gmra.mrb[0].mxu0 %v6991
      %v6993 = vpop.f32.mrb[0].mxu0
      %v6994 = vadd.f32 %v6670, %v6993
      %v6995 = vpop.f32.mrb[0].mxu0
      %6996 = vmatprep.mubr.f32.mxu0 0.0
      %v6997 = vand.u32 %v5699, 4294901760
      %v6998 = vsub.f32 %v5699, %v6997
      %v6999 = vand.u32 %v6998, 4294901760
      %7000 = vmatmul.mubr.f32.gmra.mrb[0].mxu0 %v6999
      %v7001 = vpop.f32.mrb[0].mxu0
      %v7002 = vadd.f32 %v6677, %v7001
      %v7003 = vpop.f32.mrb[0].mxu0
      %7004 = vmatprep.mubr.f32.mxu0 0.0
      %v7005 = vand.u32 %v5702, 4294901760
      %v7006 = vsub.f32 %v5702, %v7005
      %v7007 = vand.u32 %v7006, 4294901760
      %7008 = vmatmul.mubr.f32.gmra.mrb[0].mxu0 %v7007
      %v7009 = vpop.f32.mrb[0].mxu0
      %v7010 = vadd.f32 %v6684, %v7009
      %v7011 = vpop.f32.mrb[0].mxu0
      %7012 = vmatprep.mubr.f32.mxu0 0.0
      %v7013 = vand.u32 %v5705, 4294901760
      %v7014 = vsub.f32 %v5705, %v7013
      %v7015 = vand.u32 %v7014, 4294901760
      %7016 = vmatmul.mubr.f32.gmra.mrb[0].mxu0 %v7015
      %v7017 = vpop.f32.mrb[0].mxu0
      %v7018 = vadd.f32 %v6691, %v7017
      %v7019 = vpop.f32.mrb[0].mxu0
      %7020 = vmatprep.mubr.f32.mxu0 0.0
      %v7021 = vand.u32 %v5708, 4294901760
      %v7022 = vsub.f32 %v5708, %v7021
      %v7023 = vand.u32 %v7022, 4294901760
      %7024 = vmatmul.mubr.f32.gmra.mrb[0].mxu0 %v7023
      %v7025 = vpop.f32.mrb[0].mxu0
      %v7026 = vadd.f32 %v6698, %v7025
      %v7027 = vpop.f32.mrb[0].mxu0
      %7028 = vmatprep.mubr.f32.mxu0 0.0
      %v7029 = vand.u32 %v5711, 4294901760
      %v7030 = vsub.f32 %v5711, %v7029
      %v7031 = vand.u32 %v7030, 4294901760
      %7032 = vmatmul.mubr.f32.gmra.mrb[0].mxu0 %v7031
      %v7033 = vpop.f32.mrb[0].mxu0
      %v7034 = vadd.f32 %v6705, %v7033
      %v7035 = vpop.f32.mrb[0].mxu0
      %7036 = vdwg.mxu0
      %7037 = vmatprep.subr.mxu0 0.0
      %v7038 = vand.u32 %v5608, 4294901760
      %v7039 = vsub.f32 %v5608, %v7038
      %v7040 = vand.u32 %v7039, 4294901760
      %7041 = vmatpush1.msra.mxu0 %v7040
      %7042 = vmatprep.subr.mxu0 0.0
      %v7043 = vand.u32 %v5609, 4294901760
      %v7044 = vsub.f32 %v5609, %v7043
      %v7045 = vand.u32 %v7044, 4294901760
      %7046 = vmatpush1.msra.mxu0 %v7045
      %7047 = vmatprep.subr.mxu0 0.0
      %v7048 = vand.u32 %v5610, 4294901760
      %v7049 = vsub.f32 %v5610, %v7048
      %v7050 = vand.u32 %v7049, 4294901760
      %7051 = vmatpush1.msra.mxu0 %v7050
      %7052 = vmatprep.subr.mxu0 0.0
      %v7053 = vand.u32 %v5611, 4294901760
      %v7054 = vsub.f32 %v5611, %v7053
      %v7055 = vand.u32 %v7054, 4294901760
      %7056 = vmatpush1.msra.mxu0 %v7055
      %7057 = vmatprep.subr.mxu0 0.0
      %v7058 = vand.u32 %v5612, 4294901760
      %v7059 = vsub.f32 %v5612, %v7058
      %v7060 = vand.u32 %v7059, 4294901760
      %7061 = vmatpush1.msra.mxu0 %v7060
      %7062 = vmatprep.subr.mxu0 0.0
      %v7063 = vand.u32 %v5613, 4294901760
      %v7064 = vsub.f32 %v5613, %v7063
      %v7065 = vand.u32 %v7064, 4294901760
      %7066 = vmatpush1.msra.mxu0 %v7065
      %7067 = vmatprep.subr.mxu0 0.0
      %v7068 = vand.u32 %v5614, 4294901760
      %v7069 = vsub.f32 %v5614, %v7068
      %v7070 = vand.u32 %v7069, 4294901760
      %7071 = vmatpush1.msra.mxu0 %v7070
      %7072 = vmatprep.subr.mxu0 0.0
      %v7073 = vand.u32 %v5615, 4294901760
      %v7074 = vsub.f32 %v5615, %v7073
      %v7075 = vand.u32 %v7074, 4294901760
      %7076 = vmatpush1.msra.mxu0 %v7075
      %7077 = vmatprep.subr.mxu0 0.0
      %7078 = vmatpush1.msra.mxu0 0.0
      %7079 = vmatprep.subr.mxu0 0.0
      %7080 = vmatpush1.msra.mxu0 0.0
      %7081 = vmatprep.subr.mxu0 0.0
      %7082 = vmatpush1.msra.mxu0 0.0
      %7083 = vmatprep.subr.mxu0 0.0
      %7084 = vmatpush1.msra.mxu0 0.0
      %7085 = vmatprep.subr.mxu0 0.0
      %7086 = vmatpush1.msra.mxu0 0.0
      %7087 = vmatprep.subr.mxu0 0.0
      %7088 = vmatpush1.msra.mxu0 0.0
      %7089 = vmatprep.subr.mxu0 0.0
      %7090 = vmatpush1.msra.mxu0 0.0
      %7091 = vmatprep.subr.mxu0 0.0
      %7092 = vmatpush1.msra.mxu0 0.0
      %7093 = vmatprep.subr.mxu0 0.0
      %7094 = vmatpush1.msra.mxu0 0.0
      %7095 = vmatprep.subr.mxu0 0.0
      %7096 = vmatpush1.msra.mxu0 0.0
      %7097 = vmatprep.subr.mxu0 0.0
      %7098 = vmatpush1.msra.mxu0 0.0
      %7099 = vmatprep.subr.mxu0 0.0
      %7100 = vmatpush1.msra.mxu0 0.0
      %7101 = vmatprep.subr.mxu0 0.0
      %7102 = vmatpush1.msra.mxu0 0.0
      %7103 = vmatprep.subr.mxu0 0.0
      %7104 = vmatpush1.msra.mxu0 0.0
      %7105 = vmatprep.subr.mxu0 0.0
      %7106 = vmatpush1.msra.mxu0 0.0
      %7107 = vmatprep.subr.mxu0 0.0
      %7108 = vmatpush1.msra.mxu0 0.0
      %7109 = vmatprep.subr.mxu0 0.0
      %7110 = vmatpush1.msra.mxu0 0.0
      %7111 = vmatprep.subr.mxu0 0.0
      %7112 = vmatpush1.msra.mxu0 0.0
      %7113 = vmatprep.subr.mxu0 0.0
      %7114 = vmatpush1.msra.mxu0 0.0
      %7115 = vmatprep.subr.mxu0 0.0
      %7116 = vmatpush1.msra.mxu0 0.0
      %7117 = vmatprep.subr.mxu0 0.0
      %7118 = vmatpush1.msra.mxu0 0.0
      %7119 = vmatprep.subr.mxu0 0.0
      %7120 = vmatpush1.msra.mxu0 0.0
      %7121 = vmatprep.subr.mxu0 0.0
      %7122 = vmatpush1.msra.mxu0 0.0
      %7123 = vmatprep.subr.mxu0 0.0
      %7124 = vmatpush1.msra.mxu0 0.0
      %7125 = vmatprep.mubr.f32.mxu0 0.0
      %v7126 = vand.u32 %v5618, 4294901760
      %7127 = vmatmul.mubr.f32.gmra.mrb[0].mxu0 %v7126
      %v7128 = vpop.f32.mrb[0].mxu0
      %v7129 = vadd.f32 %v6786, %v7128
      %v7130 = vpop.f32.mrb[0].mxu0
      %7131 = vmatprep.mubr.f32.mxu0 0.0
      %v7132 = vand.u32 %v5621, 4294901760
      %7133 = vmatmul.mubr.f32.gmra.mrb[0].mxu0 %v7132
      %v7134 = vpop.f32.mrb[0].mxu0
      %v7135 = vadd.f32 %v6794, %v7134
      %v7136 = vpop.f32.mrb[0].mxu0
      %7137 = vmatprep.mubr.f32.mxu0 0.0
      %v7138 = vand.u32 %v5624, 4294901760
      %7139 = vmatmul.mubr.f32.gmra.mrb[0].mxu0 %v7138
      %v7140 = vpop.f32.mrb[0].mxu0
      %v7141 = vadd.f32 %v6802, %v7140
      %v7142 = vpop.f32.mrb[0].mxu0
      %7143 = vmatprep.mubr.f32.mxu0 0.0
      %v7144 = vand.u32 %v5627, 4294901760
      %7145 = vmatmul.mubr.f32.gmra.mrb[0].mxu0 %v7144
      %v7146 = vpop.f32.mrb[0].mxu0
      %v7147 = vadd.f32 %v6810, %v7146
      %v7148 = vpop.f32.mrb[0].mxu0
      %7149 = vmatprep.mubr.f32.mxu0 0.0
      %v7150 = vand.u32 %v5630, 4294901760
      %7151 = vmatmul.mubr.f32.gmra.mrb[0].mxu0 %v7150
      %v7152 = vpop.f32.mrb[0].mxu0
      %v7153 = vadd.f32 %v6818, %v7152
      %v7154 = vpop.f32.mrb[0].mxu0
      %7155 = vmatprep.mubr.f32.mxu0 0.0
      %v7156 = vand.u32 %v5633, 4294901760
      %7157 = vmatmul.mubr.f32.gmra.mrb[0].mxu0 %v7156
      %v7158 = vpop.f32.mrb[0].mxu0
      %v7159 = vadd.f32 %v6826, %v7158
      %v7160 = vpop.f32.mrb[0].mxu0
      %7161 = vmatprep.mubr.f32.mxu0 0.0
      %v7162 = vand.u32 %v5636, 4294901760
      %7163 = vmatmul.mubr.f32.gmra.mrb[0].mxu0 %v7162
      %v7164 = vpop.f32.mrb[0].mxu0
      %v7165 = vadd.f32 %v6834, %v7164
      %v7166 = vpop.f32.mrb[0].mxu0
      %7167 = vmatprep.mubr.f32.mxu0 0.0
      %v7168 = vand.u32 %v5639, 4294901760
      %7169 = vmatmul.mubr.f32.gmra.mrb[0].mxu0 %v7168
      %v7170 = vpop.f32.mrb[0].mxu0
      %v7171 = vadd.f32 %v6842, %v7170
      %v7172 = vpop.f32.mrb[0].mxu0
      %7173 = vmatprep.mubr.f32.mxu0 0.0
      %v7174 = vand.u32 %v5642, 4294901760
      %7175 = vmatmul.mubr.f32.gmra.mrb[0].mxu0 %v7174
      %v7176 = vpop.f32.mrb[0].mxu0
      %v7177 = vadd.f32 %v6850, %v7176
      %v7178 = vpop.f32.mrb[0].mxu0
      %7179 = vmatprep.mubr.f32.mxu0 0.0
      %v7180 = vand.u32 %v5645, 4294901760
      %7181 = vmatmul.mubr.f32.gmra.mrb[0].mxu0 %v7180
      %v7182 = vpop.f32.mrb[0].mxu0
      %v7183 = vadd.f32 %v6858, %v7182
      %v7184 = vpop.f32.mrb[0].mxu0
      %7185 = vmatprep.mubr.f32.mxu0 0.0
      %v7186 = vand.u32 %v5648, 4294901760
      %7187 = vmatmul.mubr.f32.gmra.mrb[0].mxu0 %v7186
      %v7188 = vpop.f32.mrb[0].mxu0
      %v7189 = vadd.f32 %v6866, %v7188
      %v7190 = vpop.f32.mrb[0].mxu0
      %7191 = vmatprep.mubr.f32.mxu0 0.0
      %v7192 = vand.u32 %v5651, 4294901760
      %7193 = vmatmul.mubr.f32.gmra.mrb[0].mxu0 %v7192
      %v7194 = vpop.f32.mrb[0].mxu0
      %v7195 = vadd.f32 %v6874, %v7194
      %v7196 = vpop.f32.mrb[0].mxu0
      %7197 = vmatprep.mubr.f32.mxu0 0.0
      %v7198 = vand.u32 %v5654, 4294901760
      %7199 = vmatmul.mubr.f32.gmra.mrb[0].mxu0 %v7198
      %v7200 = vpop.f32.mrb[0].mxu0
      %v7201 = vadd.f32 %v6882, %v7200
      %v7202 = vpop.f32.mrb[0].mxu0
      %7203 = vmatprep.mubr.f32.mxu0 0.0
      %v7204 = vand.u32 %v5657, 4294901760
      %7205 = vmatmul.mubr.f32.gmra.mrb[0].mxu0 %v7204
      %v7206 = vpop.f32.mrb[0].mxu0
      %v7207 = vadd.f32 %v6890, %v7206
      %v7208 = vpop.f32.mrb[0].mxu0
      %7209 = vmatprep.mubr.f32.mxu0 0.0
      %v7210 = vand.u32 %v5660, 4294901760
      %7211 = vmatmul.mubr.f32.gmra.mrb[0].mxu0 %v7210
      %v7212 = vpop.f32.mrb[0].mxu0
      %v7213 = vadd.f32 %v6898, %v7212
      %v7214 = vpop.f32.mrb[0].mxu0
      %7215 = vmatprep.mubr.f32.mxu0 0.0
      %v7216 = vand.u32 %v5663, 4294901760
      %7217 = vmatmul.mubr.f32.gmra.mrb[0].mxu0 %v7216
      %v7218 = vpop.f32.mrb[0].mxu0
      %v7219 = vadd.f32 %v6906, %v7218
      %v7220 = vpop.f32.mrb[0].mxu0
      %7221 = vmatprep.mubr.f32.mxu0 0.0
      %v7222 = vand.u32 %v5666, 4294901760
      %7223 = vmatmul.mubr.f32.gmra.mrb[0].mxu0 %v7222
      %v7224 = vpop.f32.mrb[0].mxu0
      %v7225 = vadd.f32 %v6914, %v7224
      %v7226 = vpop.f32.mrb[0].mxu0
      %7227 = vmatprep.mubr.f32.mxu0 0.0
      %v7228 = vand.u32 %v5669, 4294901760
      %7229 = vmatmul.mubr.f32.gmra.mrb[0].mxu0 %v7228
      %v7230 = vpop.f32.mrb[0].mxu0
      %v7231 = vadd.f32 %v6922, %v7230
      %v7232 = vpop.f32.mrb[0].mxu0
      %7233 = vmatprep.mubr.f32.mxu0 0.0
      %v7234 = vand.u32 %v5672, 4294901760
      %7235 = vmatmul.mubr.f32.gmra.mrb[0].mxu0 %v7234
      %v7236 = vpop.f32.mrb[0].mxu0
      %v7237 = vadd.f32 %v6930, %v7236
      %v7238 = vpop.f32.mrb[0].mxu0
      %7239 = vmatprep.mubr.f32.mxu0 0.0
      %v7240 = vand.u32 %v5675, 4294901760
      %7241 = vmatmul.mubr.f32.gmra.mrb[0].mxu0 %v7240
      %v7242 = vpop.f32.mrb[0].mxu0
      %v7243 = vadd.f32 %v6938, %v7242
      %v7244 = vpop.f32.mrb[0].mxu0
      %7245 = vmatprep.mubr.f32.mxu0 0.0
      %v7246 = vand.u32 %v5678, 4294901760
      %7247 = vmatmul.mubr.f32.gmra.mrb[0].mxu0 %v7246
      %v7248 = vpop.f32.mrb[0].mxu0
      %v7249 = vadd.f32 %v6946, %v7248
      %v7250 = vpop.f32.mrb[0].mxu0
      %7251 = vmatprep.mubr.f32.mxu0 0.0
      %v7252 = vand.u32 %v5681, 4294901760
      %7253 = vmatmul.mubr.f32.gmra.mrb[0].mxu0 %v7252
      %v7254 = vpop.f32.mrb[0].mxu0
      %v7255 = vadd.f32 %v6954, %v7254
      %v7256 = vpop.f32.mrb[0].mxu0
      %7257 = vmatprep.mubr.f32.mxu0 0.0
      %v7258 = vand.u32 %v5684, 4294901760
      %7259 = vmatmul.mubr.f32.gmra.mrb[0].mxu0 %v7258
      %v7260 = vpop.f32.mrb[0].mxu0
      %v7261 = vadd.f32 %v6962, %v7260
      %v7262 = vpop.f32.mrb[0].mxu0
      %7263 = vmatprep.mubr.f32.mxu0 0.0
      %v7264 = vand.u32 %v5687, 4294901760
      %7265 = vmatmul.mubr.f32.gmra.mrb[0].mxu0 %v7264
      %v7266 = vpop.f32.mrb[0].mxu0
      %v7267 = vadd.f32 %v6970, %v7266
      %v7268 = vpop.f32.mrb[0].mxu0
      %7269 = vmatprep.mubr.f32.mxu0 0.0
      %v7270 = vand.u32 %v5690, 4294901760
      %7271 = vmatmul.mubr.f32.gmra.mrb[0].mxu0 %v7270
      %v7272 = vpop.f32.mrb[0].mxu0
      %v7273 = vadd.f32 %v6978, %v7272
      %v7274 = vpop.f32.mrb[0].mxu0
      %7275 = vmatprep.mubr.f32.mxu0 0.0
      %v7276 = vand.u32 %v5693, 4294901760
      %7277 = vmatmul.mubr.f32.gmra.mrb[0].mxu0 %v7276
      %v7278 = vpop.f32.mrb[0].mxu0
      %v7279 = vadd.f32 %v6986, %v7278
      %v7280 = vpop.f32.mrb[0].mxu0
      %7281 = vmatprep.mubr.f32.mxu0 0.0
      %v7282 = vand.u32 %v5696, 4294901760
      %7283 = vmatmul.mubr.f32.gmra.mrb[0].mxu0 %v7282
      %v7284 = vpop.f32.mrb[0].mxu0
      %v7285 = vadd.f32 %v6994, %v7284
      %v7286 = vpop.f32.mrb[0].mxu0
      %7287 = vmatprep.mubr.f32.mxu0 0.0
      %v7288 = vand.u32 %v5699, 4294901760
      %7289 = vmatmul.mubr.f32.gmra.mrb[0].mxu0 %v7288
      %v7290 = vpop.f32.mrb[0].mxu0
      %v7291 = vadd.f32 %v7002, %v7290
      %v7292 = vpop.f32.mrb[0].mxu0
      %7293 = vmatprep.mubr.f32.mxu0 0.0
      %v7294 = vand.u32 %v5702, 4294901760
      %7295 = vmatmul.mubr.f32.gmra.mrb[0].mxu0 %v7294
      %v7296 = vpop.f32.mrb[0].mxu0
      %v7297 = vadd.f32 %v7010, %v7296
      %v7298 = vpop.f32.mrb[0].mxu0
      %7299 = vmatprep.mubr.f32.mxu0 0.0
      %v7300 = vand.u32 %v5705, 4294901760
      %7301 = vmatmul.mubr.f32.gmra.mrb[0].mxu0 %v7300
      %v7302 = vpop.f32.mrb[0].mxu0
      %v7303 = vadd.f32 %v7018, %v7302
      %v7304 = vpop.f32.mrb[0].mxu0
      %7305 = vmatprep.mubr.f32.mxu0 0.0
      %v7306 = vand.u32 %v5708, 4294901760
      %7307 = vmatmul.mubr.f32.gmra.mrb[0].mxu0 %v7306
      %v7308 = vpop.f32.mrb[0].mxu0
      %v7309 = vadd.f32 %v7026, %v7308
      %v7310 = vpop.f32.mrb[0].mxu0
      %7311 = vmatprep.mubr.f32.mxu0 0.0
      %v7312 = vand.u32 %v5711, 4294901760
      %7313 = vmatmul.mubr.f32.gmra.mrb[0].mxu0 %v7312
      %v7314 = vpop.f32.mrb[0].mxu0
      %v7315 = vadd.f32 %v7034, %v7314
      %v7316 = vpop.f32.mrb[0].mxu0
      %7317 = vdwg.mxu0
      %7318 = vmatprep.subr.mxu0 0.0
      %v7319 = vand.u32 %v5608, 4294901760
      %7320 = vmatpush1.msra.mxu0 %v7319
      %7321 = vmatprep.subr.mxu0 0.0
      %v7322 = vand.u32 %v5609, 4294901760
      %7323 = vmatpush1.msra.mxu0 %v7322
      %7324 = vmatprep.subr.mxu0 0.0
      %v7325 = vand.u32 %v5610, 4294901760
      %7326 = vmatpush1.msra.mxu0 %v7325
      %7327 = vmatprep.subr.mxu0 0.0
      %v7328 = vand.u32 %v5611, 4294901760
      %7329 = vmatpush1.msra.mxu0 %v7328
      %7330 = vmatprep.subr.mxu0 0.0
      %v7331 = vand.u32 %v5612, 4294901760
      %7332 = vmatpush1.msra.mxu0 %v7331
      %7333 = vmatprep.subr.mxu0 0.0
      %v7334 = vand.u32 %v5613, 4294901760
      %7335 = vmatpush1.msra.mxu0 %v7334
      %7336 = vmatprep.subr.mxu0 0.0
      %v7337 = vand.u32 %v5614, 4294901760
      %7338 = vmatpush1.msra.mxu0 %v7337
      %7339 = vmatprep.subr.mxu0 0.0
      %v7340 = vand.u32 %v5615, 4294901760
      %7341 = vmatpush1.msra.mxu0 %v7340
      %7342 = vmatprep.subr.mxu0 0.0
      %7343 = vmatpush1.msra.mxu0 0.0
      %7344 = vmatprep.subr.mxu0 0.0
      %7345 = vmatpush1.msra.mxu0 0.0
      %7346 = vmatprep.subr.mxu0 0.0
      %7347 = vmatpush1.msra.mxu0 0.0
      %7348 = vmatprep.subr.mxu0 0.0
      %7349 = vmatpush1.msra.mxu0 0.0
      %7350 = vmatprep.subr.mxu0 0.0
      %7351 = vmatpush1.msra.mxu0 0.0
      %7352 = vmatprep.subr.mxu0 0.0
      %7353 = vmatpush1.msra.mxu0 0.0
      %7354 = vmatprep.subr.mxu0 0.0
      %7355 = vmatpush1.msra.mxu0 0.0
      %7356 = vmatprep.subr.mxu0 0.0
      %7357 = vmatpush1.msra.mxu0 0.0
      %7358 = vmatprep.subr.mxu0 0.0
      %7359 = vmatpush1.msra.mxu0 0.0
      %7360 = vmatprep.subr.mxu0 0.0
      %7361 = vmatpush1.msra.mxu0 0.0
      %7362 = vmatprep.subr.mxu0 0.0
      %7363 = vmatpush1.msra.mxu0 0.0
      %7364 = vmatprep.subr.mxu0 0.0
      %7365 = vmatpush1.msra.mxu0 0.0
      %7366 = vmatprep.subr.mxu0 0.0
      %7367 = vmatpush1.msra.mxu0 0.0
      %7368 = vmatprep.subr.mxu0 0.0
      %7369 = vmatpush1.msra.mxu0 0.0
      %7370 = vmatprep.subr.mxu0 0.0
      %7371 = vmatpush1.msra.mxu0 0.0
      %7372 = vmatprep.subr.mxu0 0.0
      %7373 = vmatpush1.msra.mxu0 0.0
      %7374 = vmatprep.subr.mxu0 0.0
      %7375 = vmatpush1.msra.mxu0 0.0
      %7376 = vmatprep.subr.mxu0 0.0
      %7377 = vmatpush1.msra.mxu0 0.0
      %7378 = vmatprep.subr.mxu0 0.0
      %7379 = vmatpush1.msra.mxu0 0.0
      %7380 = vmatprep.subr.mxu0 0.0
      %7381 = vmatpush1.msra.mxu0 0.0
      %7382 = vmatprep.subr.mxu0 0.0
      %7383 = vmatpush1.msra.mxu0 0.0
      %7384 = vmatprep.subr.mxu0 0.0
      %7385 = vmatpush1.msra.mxu0 0.0
      %7386 = vmatprep.subr.mxu0 0.0
      %7387 = vmatpush1.msra.mxu0 0.0
      %7388 = vmatprep.subr.mxu0 0.0
      %7389 = vmatpush1.msra.mxu0 0.0
      %7390 = vmatprep.mubr.f32.mxu0 0.0
      %v7391 = vand.u32 %v5618, 4294901760
      %7392 = vmatmul.mubr.f32.gmra.mrb[0].mxu0 %v7391
      %v7393 = vpop.f32.mrb[0].mxu0
      %v7394 = vadd.f32 %v7129, %v7393
      %v7395 = vpop.f32.mrb[0].mxu0
      %7396 = vmatprep.mubr.f32.mxu0 0.0
      %v7397 = vand.u32 %v5621, 4294901760
      %7398 = vmatmul.mubr.f32.gmra.mrb[0].mxu0 %v7397
      %v7399 = vpop.f32.mrb[0].mxu0
      %v7400 = vadd.f32 %v7135, %v7399
      %v7401 = vpop.f32.mrb[0].mxu0
      %7402 = vmatprep.mubr.f32.mxu0 0.0
      %v7403 = vand.u32 %v5624, 4294901760
      %7404 = vmatmul.mubr.f32.gmra.mrb[0].mxu0 %v7403
      %v7405 = vpop.f32.mrb[0].mxu0
      %v7406 = vadd.f32 %v7141, %v7405
      %v7407 = vpop.f32.mrb[0].mxu0
      %7408 = vmatprep.mubr.f32.mxu0 0.0
      %v7409 = vand.u32 %v5627, 4294901760
      %7410 = vmatmul.mubr.f32.gmra.mrb[0].mxu0 %v7409
      %v7411 = vpop.f32.mrb[0].mxu0
      %v7412 = vadd.f32 %v7147, %v7411
      %v7413 = vpop.f32.mrb[0].mxu0
      %7414 = vmatprep.mubr.f32.mxu0 0.0
      %v7415 = vand.u32 %v5630, 4294901760
      %7416 = vmatmul.mubr.f32.gmra.mrb[0].mxu0 %v7415
      %v7417 = vpop.f32.mrb[0].mxu0
      %v7418 = vadd.f32 %v7153, %v7417
      %v7419 = vpop.f32.mrb[0].mxu0
      %7420 = vmatprep.mubr.f32.mxu0 0.0
      %v7421 = vand.u32 %v5633, 4294901760
      %7422 = vmatmul.mubr.f32.gmra.mrb[0].mxu0 %v7421
      %v7423 = vpop.f32.mrb[0].mxu0
      %v7424 = vadd.f32 %v7159, %v7423
      %v7425 = vpop.f32.mrb[0].mxu0
      %7426 = vmatprep.mubr.f32.mxu0 0.0
      %v7427 = vand.u32 %v5636, 4294901760
      %7428 = vmatmul.mubr.f32.gmra.mrb[0].mxu0 %v7427
      %v7429 = vpop.f32.mrb[0].mxu0
      %v7430 = vadd.f32 %v7165, %v7429
      %v7431 = vpop.f32.mrb[0].mxu0
      %7432 = vmatprep.mubr.f32.mxu0 0.0
      %v7433 = vand.u32 %v5639, 4294901760
      %7434 = vmatmul.mubr.f32.gmra.mrb[0].mxu0 %v7433
      %v7435 = vpop.f32.mrb[0].mxu0
      %v7436 = vadd.f32 %v7171, %v7435
      %v7437 = vpop.f32.mrb[0].mxu0
      %7438 = vmatprep.mubr.f32.mxu0 0.0
      %v7439 = vand.u32 %v5642, 4294901760
      %7440 = vmatmul.mubr.f32.gmra.mrb[0].mxu0 %v7439
      %v7441 = vpop.f32.mrb[0].mxu0
      %v7442 = vadd.f32 %v7177, %v7441
      %v7443 = vpop.f32.mrb[0].mxu0
      %7444 = vmatprep.mubr.f32.mxu0 0.0
      %v7445 = vand.u32 %v5645, 4294901760
      %7446 = vmatmul.mubr.f32.gmra.mrb[0].mxu0 %v7445
      %v7447 = vpop.f32.mrb[0].mxu0
      %v7448 = vadd.f32 %v7183, %v7447
      %v7449 = vpop.f32.mrb[0].mxu0
      %7450 = vmatprep.mubr.f32.mxu0 0.0
      %v7451 = vand.u32 %v5648, 4294901760
      %7452 = vmatmul.mubr.f32.gmra.mrb[0].mxu0 %v7451
      %v7453 = vpop.f32.mrb[0].mxu0
      %v7454 = vadd.f32 %v7189, %v7453
      %v7455 = vpop.f32.mrb[0].mxu0
      %7456 = vmatprep.mubr.f32.mxu0 0.0
      %v7457 = vand.u32 %v5651, 4294901760
      %7458 = vmatmul.mubr.f32.gmra.mrb[0].mxu0 %v7457
      %v7459 = vpop.f32.mrb[0].mxu0
      %v7460 = vadd.f32 %v7195, %v7459
      %v7461 = vpop.f32.mrb[0].mxu0
      %7462 = vmatprep.mubr.f32.mxu0 0.0
      %v7463 = vand.u32 %v5654, 4294901760
      %7464 = vmatmul.mubr.f32.gmra.mrb[0].mxu0 %v7463
      %v7465 = vpop.f32.mrb[0].mxu0
      %v7466 = vadd.f32 %v7201, %v7465
      %v7467 = vpop.f32.mrb[0].mxu0
      %7468 = vmatprep.mubr.f32.mxu0 0.0
      %v7469 = vand.u32 %v5657, 4294901760
      %7470 = vmatmul.mubr.f32.gmra.mrb[0].mxu0 %v7469
      %v7471 = vpop.f32.mrb[0].mxu0
      %v7472 = vadd.f32 %v7207, %v7471
      %v7473 = vpop.f32.mrb[0].mxu0
      %7474 = vmatprep.mubr.f32.mxu0 0.0
      %v7475 = vand.u32 %v5660, 4294901760
      %7476 = vmatmul.mubr.f32.gmra.mrb[0].mxu0 %v7475
      %v7477 = vpop.f32.mrb[0].mxu0
      %v7478 = vadd.f32 %v7213, %v7477
      %v7479 = vpop.f32.mrb[0].mxu0
      %7480 = vmatprep.mubr.f32.mxu0 0.0
      %v7481 = vand.u32 %v5663, 4294901760
      %7482 = vmatmul.mubr.f32.gmra.mrb[0].mxu0 %v7481
      %v7483 = vpop.f32.mrb[0].mxu0
      %v7484 = vadd.f32 %v7219, %v7483
      %v7485 = vpop.f32.mrb[0].mxu0
      %7486 = vmatprep.mubr.f32.mxu0 0.0
      %v7487 = vand.u32 %v5666, 4294901760
      %7488 = vmatmul.mubr.f32.gmra.mrb[0].mxu0 %v7487
      %v7489 = vpop.f32.mrb[0].mxu0
      %v7490 = vadd.f32 %v7225, %v7489
      %v7491 = vpop.f32.mrb[0].mxu0
      %7492 = vmatprep.mubr.f32.mxu0 0.0
      %v7493 = vand.u32 %v5669, 4294901760
      %7494 = vmatmul.mubr.f32.gmra.mrb[0].mxu0 %v7493
      %v7495 = vpop.f32.mrb[0].mxu0
      %v7496 = vadd.f32 %v7231, %v7495
      %v7497 = vpop.f32.mrb[0].mxu0
      %7498 = vmatprep.mubr.f32.mxu0 0.0
      %v7499 = vand.u32 %v5672, 4294901760
      %7500 = vmatmul.mubr.f32.gmra.mrb[0].mxu0 %v7499
      %v7501 = vpop.f32.mrb[0].mxu0
      %v7502 = vadd.f32 %v7237, %v7501
      %v7503 = vpop.f32.mrb[0].mxu0
      %7504 = vmatprep.mubr.f32.mxu0 0.0
      %v7505 = vand.u32 %v5675, 4294901760
      %7506 = vmatmul.mubr.f32.gmra.mrb[0].mxu0 %v7505
      %v7507 = vpop.f32.mrb[0].mxu0
      %v7508 = vadd.f32 %v7243, %v7507
      %v7509 = vpop.f32.mrb[0].mxu0
      %7510 = vmatprep.mubr.f32.mxu0 0.0
      %v7511 = vand.u32 %v5678, 4294901760
      %7512 = vmatmul.mubr.f32.gmra.mrb[0].mxu0 %v7511
      %v7513 = vpop.f32.mrb[0].mxu0
      %v7514 = vadd.f32 %v7249, %v7513
      %v7515 = vpop.f32.mrb[0].mxu0
      %7516 = vmatprep.mubr.f32.mxu0 0.0
      %v7517 = vand.u32 %v5681, 4294901760
      %7518 = vmatmul.mubr.f32.gmra.mrb[0].mxu0 %v7517
      %v7519 = vpop.f32.mrb[0].mxu0
      %v7520 = vadd.f32 %v7255, %v7519
      %v7521 = vpop.f32.mrb[0].mxu0
      %7522 = vmatprep.mubr.f32.mxu0 0.0
      %v7523 = vand.u32 %v5684, 4294901760
      %7524 = vmatmul.mubr.f32.gmra.mrb[0].mxu0 %v7523
      %v7525 = vpop.f32.mrb[0].mxu0
      %v7526 = vadd.f32 %v7261, %v7525
      %v7527 = vpop.f32.mrb[0].mxu0
      %7528 = vmatprep.mubr.f32.mxu0 0.0
      %v7529 = vand.u32 %v5687, 4294901760
      %7530 = vmatmul.mubr.f32.gmra.mrb[0].mxu0 %v7529
      %v7531 = vpop.f32.mrb[0].mxu0
      %v7532 = vadd.f32 %v7267, %v7531
      %v7533 = vpop.f32.mrb[0].mxu0
      %7534 = vmatprep.mubr.f32.mxu0 0.0
      %v7535 = vand.u32 %v5690, 4294901760
      %7536 = vmatmul.mubr.f32.gmra.mrb[0].mxu0 %v7535
      %v7537 = vpop.f32.mrb[0].mxu0
      %v7538 = vadd.f32 %v7273, %v7537
      %v7539 = vpop.f32.mrb[0].mxu0
      %7540 = vmatprep.mubr.f32.mxu0 0.0
      %v7541 = vand.u32 %v5693, 4294901760
      %7542 = vmatmul.mubr.f32.gmra.mrb[0].mxu0 %v7541
      %v7543 = vpop.f32.mrb[0].mxu0
      %v7544 = vadd.f32 %v7279, %v7543
      %v7545 = vpop.f32.mrb[0].mxu0
      %7546 = vmatprep.mubr.f32.mxu0 0.0
      %v7547 = vand.u32 %v5696, 4294901760
      %7548 = vmatmul.mubr.f32.gmra.mrb[0].mxu0 %v7547
      %v7549 = vpop.f32.mrb[0].mxu0
      %v7550 = vadd.f32 %v7285, %v7549
      %v7551 = vpop.f32.mrb[0].mxu0
      %7552 = vmatprep.mubr.f32.mxu0 0.0
      %v7553 = vand.u32 %v5699, 4294901760
      %7554 = vmatmul.mubr.f32.gmra.mrb[0].mxu0 %v7553
      %v7555 = vpop.f32.mrb[0].mxu0
      %v7556 = vadd.f32 %v7291, %v7555
      %v7557 = vpop.f32.mrb[0].mxu0
      %7558 = vmatprep.mubr.f32.mxu0 0.0
      %v7559 = vand.u32 %v5702, 4294901760
      %7560 = vmatmul.mubr.f32.gmra.mrb[0].mxu0 %v7559
      %v7561 = vpop.f32.mrb[0].mxu0
      %v7562 = vadd.f32 %v7297, %v7561
      %v7563 = vpop.f32.mrb[0].mxu0
      %7564 = vmatprep.mubr.f32.mxu0 0.0
      %v7565 = vand.u32 %v5705, 4294901760
      %7566 = vmatmul.mubr.f32.gmra.mrb[0].mxu0 %v7565
      %v7567 = vpop.f32.mrb[0].mxu0
      %v7568 = vadd.f32 %v7303, %v7567
      %v7569 = vpop.f32.mrb[0].mxu0
      %7570 = vmatprep.mubr.f32.mxu0 0.0
      %v7571 = vand.u32 %v5708, 4294901760
      %7572 = vmatmul.mubr.f32.gmra.mrb[0].mxu0 %v7571
      %v7573 = vpop.f32.mrb[0].mxu0
      %v7574 = vadd.f32 %v7309, %v7573
      %v7575 = vpop.f32.mrb[0].mxu0
      %7576 = vmatprep.mubr.f32.mxu0 0.0
      %v7577 = vand.u32 %v5711, 4294901760
      %7578 = vmatmul.mubr.f32.gmra.mrb[0].mxu0 %v7577
      %v7579 = vpop.f32.mrb[0].mxu0
      %v7580 = vadd.f32 %v7315, %v7579
      %v7581 = vpop.f32.mrb[0].mxu0
      %7582 = vdwg.mxu0
      %vm7583 = vcmask 31744
      %7584 = vst.msk [vmem:[%s221] sm:$0xff] %vm7583, %v7394
      %7585 = vst.msk [vmem:[%s221 + $0x8] sm:$0xff] %vm7583, %v7400
      %7586 = vst.msk [vmem:[%s221 + $0x10] sm:$0xff] %vm7583, %v7406
      %7587 = vst.msk [vmem:[%s221 + $0x18] sm:$0xff] %vm7583, %v7412
      %7588 = vst.msk [vmem:[%s221 + $0x20] sm:$0xff] %vm7583, %v7418
      %7589 = vst.msk [vmem:[%s221 + $0x28] sm:$0xff] %vm7583, %v7424
      %7590 = vst.msk [vmem:[%s221 + $0x30] sm:$0xff] %vm7583, %v7430
      %7591 = vst.msk [vmem:[%s221 + $0x38] sm:$0xff] %vm7583, %v7436
      %7592 = vst.msk [vmem:[%s221 + $0x40] sm:$0xff] %vm7583, %v7442
      %7593 = vst.msk [vmem:[%s221 + $0x48] sm:$0xff] %vm7583, %v7448
      %7594 = vst.msk [vmem:[%s221 + $0x50] sm:$0xff] %vm7583, %v7454
      %7595 = vst.msk [vmem:[%s221 + $0x58] sm:$0xff] %vm7583, %v7460
      %7596 = vst.msk [vmem:[%s221 + $0x60] sm:$0xff] %vm7583, %v7466
      %7597 = vst.msk [vmem:[%s221 + $0x68] sm:$0xff] %vm7583, %v7472
      %7598 = vst.msk [vmem:[%s221 + $0x70] sm:$0xff] %vm7583, %v7478
      %7599 = vst.msk [vmem:[%s221 + $0x78] sm:$0xff] %vm7583, %v7484
      %7600 = vst.msk [vmem:[%s221 + $0x80] sm:$0xff] %vm7583, %v7490
      %7601 = vst.msk [vmem:[%s221 + $0x88] sm:$0xff] %vm7583, %v7496
      %7602 = vst.msk [vmem:[%s221 + $0x90] sm:$0xff] %vm7583, %v7502
      %7603 = vst.msk [vmem:[%s221 + $0x98] sm:$0xff] %vm7583, %v7508
      %7604 = vst.msk [vmem:[%s221 + $0xa0] sm:$0xff] %vm7583, %v7514
      %7605 = vst.msk [vmem:[%s221 + $0xa8] sm:$0xff] %vm7583, %v7520
      %7606 = vst.msk [vmem:[%s221 + $0xb0] sm:$0xff] %vm7583, %v7526
      %7607 = vst.msk [vmem:[%s221 + $0xb8] sm:$0xff] %vm7583, %v7532
      %7608 = vst.msk [vmem:[%s221 + $0xc0] sm:$0xff] %vm7583, %v7538
      %7609 = vst.msk [vmem:[%s221 + $0xc8] sm:$0xff] %vm7583, %v7544
      %7610 = vst.msk [vmem:[%s221 + $0xd0] sm:$0xff] %vm7583, %v7550
      %7611 = vst.msk [vmem:[%s221 + $0xd8] sm:$0xff] %vm7583, %v7556
      %7612 = vst.msk [vmem:[%s221 + $0xe0] sm:$0xff] %vm7583, %v7562
      %7613 = vst.msk [vmem:[%s221 + $0xe8] sm:$0xff] %vm7583, %v7568
      %7614 = vst.msk [vmem:[%s221 + $0xf0] sm:$0xff] %vm7583, %v7574
      %7615 = vst.msk [vmem:[%s221 + $0xf8] sm:$0xff] %vm7583, %v7580
      %s7616 = smul.u32 32, %s15
      %p7617 = scmp.lt.s32.totalorder %s7616, 63
      %s7618 = scalar_select %p7617, %s7616, 63
      %s7619 = smul.addr %s7618, 8
      %s7620 = scalar_lea.vmem %s4, %s7619
      // Predicated region
      $region37: #{tpu_custom_call.1} parent=35 // pred_check
        %p7621 = pneg %p127
      $region38: #{tpu_custom_call.1} parent=35 // pred_check_branch
        %7623 = sbr.rel (%p7621) target = $region40
      $region39: #{tpu_custom_call.1} parent=35 // pred_region
        %s7624 = smul.u32 32, %s15
      $region40: #{tpu_custom_call.1} parent=35 // pred_fallthru
        _
    $region36: #{tpu_custom_call.1} parent=5 // pred_fallthru
      _
    %p7625 = scmp.le.s32.totalorder 2, %s10
    // Predicated region
    $region41: #{tpu_custom_call.1} parent=5 // pred_check
      %p7626 = pneg %p7625
    $region42: #{tpu_custom_call.1} parent=5 // pred_check_branch
      %7628 = sbr.rel (%p7626) target = $region44
    $region43: #{tpu_custom_call.1} parent=5 // pred_region
      %s7629 = ssub.s32 %s10, 2
      // Predicated region
      $region45: #{tpu_custom_call.1} parent=43 // pred_check
        %p7630 = pneg %p133
      $region46: #{tpu_custom_call.1} parent=43 // pred_check_branch
        %7632 = sbr.rel (%p7630) target = $region48
      $region47: #{tpu_custom_call.1} parent=43 // pred_region
        %s7633 = smul.u32 32, %s16
        %p7634 = scmp.lt.s32.totalorder %s7633, 63
        %s7635 = scalar_select %p7634, %s7633, 63
        %s7636 = smul.addr %s7635, 8
        %s7637 = scalar_lea.vmem %s4, %s7636
      $region48: #{tpu_custom_call.1} parent=43 // pred_fallthru
        _
    $region44: #{tpu_custom_call.1} parent=5 // pred_fallthru
      _
  $region6: #{tpu_custom_call.1} parent=0 // loop_footer
    %s14 = sadd.s32 1, %s10
  $region7: #{tpu_custom_call.1} parent=0 // loop_footer_branch
    %9 = sbr.rel target = $region3
  $region8: #{tpu_custom_call.1} parent=0 // loop_exit
    _

</llo_original>
